<compile_context>
chip_gen: v6e
topology: v6e:2x2x1
jax: 0.10.0
libtpu: 0.0.40
codegen_flags: <defaults>
</compile_context>

<pallas_src>
import functools
import numpy as np
import jax
import jax.numpy as jnp
from jax.experimental import pallas as pl
from jax.experimental.pallas import tpu as pltpu

# ----------------------------------------------------------------------------
# Model configuration (small, but structurally a real Swin)
# ----------------------------------------------------------------------------
CFG = dict(
    img_size=16, patch=4, in_chans=3, embed_dim=32,
    depths=(2, 2), num_heads=(2, 4), window=2, mlp_ratio=4,
    backbone_classes=1000,   # timm swin ImageNet-1k head ("_1k")
    num_classes=5,
)
HEAD_PAD = 1024   # 1000 -> 1024 lane-dense
CLS_PAD = 128     # num_classes -> 128 lane-dense

# ----------------------------------------------------------------------------
# Small helpers used inside kernels (f32 elementwise, bf16 into the MXU)
# ----------------------------------------------------------------------------
def _ln(x, g, b, eps=1e-5):
    mu = jnp.mean(x, axis=-1, keepdims=True)
    var = jnp.mean(jnp.square(x - mu), axis=-1, keepdims=True)
    return (x - mu) * jax.lax.rsqrt(var + eps) * g + b


def _mm(x, w_bf16):
    return jnp.dot(x.astype(jnp.bfloat16), w_bf16,
                   preferred_element_type=jnp.float32)


def _pcall(kernel, out_shape, *args):
    """Grid-free pallas_call: every operand is one full VMEM-resident block."""
    return pl.pallas_call(
        kernel,
        out_shape=out_shape,
        in_specs=[pl.BlockSpec(memory_space=pltpu.MemorySpace.VMEM)] * len(args),
        out_specs=pl.BlockSpec(memory_space=pltpu.MemorySpace.VMEM),
    )(*args)


# ----------------------------------------------------------------------------
# Fused Pallas kernels
# ----------------------------------------------------------------------------
def _embed_kernel(x_ref, w_ref, b_ref, g_ref, nb_ref, o_ref):
    # patch-embed conv(k=p, s=p) as matmul, fused with the embed LayerNorm.
    y = _mm(x_ref[...], w_ref[...]) + b_ref[...]
    o_ref[...] = _ln(y, g_ref[...], nb_ref[...])


def _ln_qkv_kernel(x_ref, g_ref, b_ref, w_ref, qb_ref, o_ref):
    # LN1 + QKV projection (both per-token, so they commute with roll/windowing).
    h = _ln(x_ref[...], g_ref[...], b_ref[...])
    o_ref[...] = _mm(h, w_ref[...]) + qb_ref[...]


def _attn_kernel(scale, batch, n_wh, q_ref, k_ref, v_ref, bias_ref, o_ref):
    # All windows / heads of one block in a single invocation.
    # q/k/v: (G, T, D) with G = batch * nW * heads; bias: (nW*heads, T, T).
    T = q_ref.shape[1]
    q = q_ref[...].astype(jnp.bfloat16)
    k = k_ref[...].astype(jnp.bfloat16)
    v = v_ref[...].astype(jnp.bfloat16)
    s = jnp.einsum("gtd,gsd->gts", q, k,
                   preferred_element_type=jnp.float32) * scale
    s = s.reshape(batch, n_wh, T, T) + bias_ref[...][None]
    s = s - jnp.max(s, axis=-1, keepdims=True)
    p = jnp.exp(s)
    p = p * pl.reciprocal(jnp.sum(p, axis=-1, keepdims=True), approx=True)
    p = p.reshape(-1, T, T)
    o_ref[...] = jnp.einsum("gts,gsd->gtd", p.astype(jnp.bfloat16), v,
                            preferred_element_type=jnp.float32)


def _proj_mlp_kernel(x_ref, a_ref, pw_ref, pb_ref, g2_ref, nb2_ref,
                     w1_ref, b1_ref, w2_ref, b2_ref, o_ref):
    # attention output proj + residual + LN2 + fc1 + GELU + fc2 + residual.
    x = x_ref[...] + _mm(a_ref[...], pw_ref[...]) + pb_ref[...]
    h = _ln(x, g2_ref[...], nb2_ref[...])
    h = _mm(h, w1_ref[...]) + b1_ref[...]
    # TODO(synk): tanh-approx GELU; timm's nn.GELU is the exact erf form.
    h = jax.nn.gelu(h, approximate=True)
    o_ref[...] = x + _mm(h, w2_ref[...]) + b2_ref[...]


def _merge_kernel(x_ref, g_ref, b_ref, w_ref, o_ref):
    # PatchMerging: LN(4C) + reduction matmul (bias-free).
    h = _ln(x_ref[...], g_ref[...], b_ref[...])
    o_ref[...] = _mm(h, w_ref[...])


def _tail_kernel(x_ref, g_ref, b_ref, hw_ref, hb_ref,
                 w1_ref, b1_ref, w2_ref, b2_ref, o_ref):
    # final LN -> mean pool over tokens -> 1000-way head (padded to 1024)
    # -> [dropout = identity] -> fc1 -> LeakyReLU -> fc2 (padded to 128 lanes).
    x = _ln(x_ref[...], g_ref[...], b_ref[...])        # (B, L, C)
    pooled = jnp.mean(x, axis=1)                       # (B, C)
    feats = _mm(pooled, hw_ref[...]) + hb_ref[...]     # backbone logits (padded)
    # TODO(synk): nn.Dropout is a no-op at inference; treated as identity here.
    h = _mm(feats, w1_ref[...]) + b1_ref[...]
    h = jnp.where(h >= 0, h, 0.01 * h)                 # LeakyReLU, default slope
    o_ref[...] = _mm(h, w2_ref[...]) + b2_ref[...]


# ----------------------------------------------------------------------------
# Swin glue (window partition / reverse, masks, relative position index)
# ----------------------------------------------------------------------------
def window_partition(x, ws):
    B, H, W, C = x.shape
    x = x.reshape(B, H // ws, ws, W // ws, ws, C)
    return x.transpose(0, 1, 3, 2, 4, 5).reshape(-1, ws * ws, C)


def window_reverse(xw, ws, H, W):
    B = xw.shape[0] // ((H // ws) * (W // ws))
    x = xw.reshape(B, H // ws, W // ws, ws, ws, -1)
    return x.transpose(0, 1, 3, 2, 4, 5).reshape(B, H, W, -1)


def relative_position_index(ws):
    coords = np.stack(np.meshgrid(np.arange(ws), np.arange(ws), indexing="ij"))
    coords = coords.reshape(2, -1)
    rel = coords[:, :, None] - coords[:, None, :]
    rel = rel.transpose(1, 2, 0).copy()
    rel[:, :, 0] += ws - 1
    rel[:, :, 1] += ws - 1
    rel[:, :, 0] *= 2 * ws - 1
    return rel.sum(-1)  # (T, T) ints


def shift_attn_mask(H, W, ws, shift):
    img_mask = np.zeros((1, H, W, 1), np.float32)
    cnt = 0
    for hs in (slice(0, -ws), slice(-ws, -shift), slice(-shift, None)):
        for wsl in (slice(0, -ws), slice(-ws, -shift), slice(-shift, None)):
            img_mask[:, hs, wsl, :] = cnt
            cnt += 1
    m = img_mask.reshape(1, H // ws, ws, W // ws, ws, 1).transpose(0, 1, 3, 2, 4, 5)
    mw = m.reshape(-1, ws * ws)
    attn_mask = mw[:, None, :] - mw[:, :, None]
    return np.where(attn_mask != 0, -100.0, 0.0).astype(np.float32)  # (nW, T, T)


# ----------------------------------------------------------------------------
# Swin modules (JAX glue around the fused kernels)
# ----------------------------------------------------------------------------
def patch_embed(img, p, patch):
    B, Cin, Himg, Wimg = img.shape
    Hp, Wp = Himg // patch, Wimg // patch
    x = img.transpose(0, 2, 3, 1)                                   # NCHW -> NHWC
    x = x.reshape(B, Hp, patch, Wp, patch, Cin).transpose(0, 1, 3, 2, 4, 5)
    x = x.reshape(B * Hp * Wp, patch * patch * Cin).astype(jnp.float32)
    C = p["proj_w"].shape[1]
    x = _pcall(_embed_kernel, jax.ShapeDtypeStruct((B * Hp * Wp, C), jnp.float32),
               x, p["proj_w"], p["proj_b"], p["norm_g"], p["norm_b"])
    return x.reshape(B, Hp * Wp, C), (Hp, Wp)


def swin_block(x, p, res, num_heads, ws, shift):
    H, W = res
    B, L, C = x.shape
    T = ws * ws
    D = C // num_heads
    M = B * L
    shortcut = x.reshape(M, C)

    # [LN1 + QKV] fused, per-token (commutes with roll / window partition).
    qkv = _pcall(_ln_qkv_kernel, jax.ShapeDtypeStruct((M, 3 * C), jnp.float32),
                 shortcut, p["norm1_g"], p["norm1_b"], p["qkv_w"], p["qkv_b"])

    h = qkv.reshape(B, H, W, 3 * C)
    if shift > 0:
        h = jnp.roll(h, shift=(-shift, -shift), axis=(1, 2))
    hw = window_partition(h, ws)                                    # (BW, T, 3C)
    BW = hw.shape[0]
    nW = BW // B
    qkv = hw.reshape(BW, T, 3, num_heads, D).transpose(2, 0, 3, 1, 4)  # (3,BW,H,T,D)
    q = qkv[0].reshape(BW * num_heads, T, D)
    k = qkv[1].reshape(BW * num_heads, T, D)
    v = qkv[2].reshape(BW * num_heads, T, D)

    # attention core for ALL windows/heads in one call; bias table added inside.
    scale = D ** -0.5
    attn = _pcall(functools.partial(_attn_kernel, scale, B, nW * num_heads),
                  jax.ShapeDtypeStruct((BW * num_heads, T, D), jnp.float32),
                  q, k, v, p["attn_bias"])

    attn = attn.reshape(BW, num_heads, T, D).transpose(0, 2, 1, 3).reshape(BW, T, C)
    a = window_reverse(attn, ws, H, W)
    if shift > 0:
        a = jnp.roll(a, shift=(shift, shift), axis=(1, 2))
    a = a.reshape(M, C)

    # [proj + residual + LN2 + MLP + residual] fused.
    out = _pcall(_proj_mlp_kernel, jax.ShapeDtypeStruct((M, C), jnp.float32),
                 shortcut, a, p["proj_w"], p["proj_b"],
                 p["norm2_g"], p["norm2_b"],
                 p["fc1_w"], p["fc1_b"], p["fc2_w"], p["fc2_b"])
    return out.reshape(B, L, C)


def patch_merging(x, p, res):
    H, W = res
    B, L, C = x.shape
    x = x.reshape(B, H, W, C)
    x0 = x[:, 0::2, 0::2]
    x1 = x[:, 1::2, 0::2]
    x2 = x[:, 0::2, 1::2]
    x3 = x[:, 1::2, 1::2]
    x = jnp.concatenate([x0, x1, x2, x3], axis=-1)
    x = x.reshape(B * (H // 2) * (W // 2), 4 * C)
    x = _pcall(_merge_kernel, jax.ShapeDtypeStruct((x.shape[0], 2 * C), jnp.float32),
               x, p["norm_g"], p["norm_b"], p["reduction_w"])
    return x.reshape(B, (H // 2) * (W // 2), 2 * C), (H // 2, W // 2)


# ----------------------------------------------------------------------------
# Full forward (Swin backbone + classification head + dropout + fc)
# ----------------------------------------------------------------------------
def forward(params, image):
    cfg = CFG
    x, res = patch_embed(image, params["patch_embed"], cfg["patch"])
    for s, depth in enumerate(cfg["depths"]):
        heads = cfg["num_heads"][s]
        ws = min(cfg["window"], min(res))
        for blk in range(depth):
            shift = 0 if (blk % 2 == 0 or ws >= min(res)) else cfg["window"] // 2
            x = swin_block(x, params["stages"][s]["blocks"][blk],
                           res, heads, ws, shift)
        if s < len(cfg["depths"]) - 1:
            x, res = patch_merging(x, params["stages"][s]["merge"], res)

    # fused tail: LN + mean pool + backbone head + (dropout=id) + fc1+LeakyReLU+fc2
    B = x.shape[0]
    out = _pcall(_tail_kernel, jax.ShapeDtypeStruct((B, CLS_PAD), jnp.float32),
                 x, params["norm_g"], params["norm_b"],
                 params["head_w"], params["head_b"],
                 params["fc1_w"], params["fc1_b"],
                 params["fc2_w"], params["fc2_b"])
    return out[:, :CFG["num_classes"]]   # drop the lane padding


# ----------------------------------------------------------------------------
# Deterministic parameter init (kernel-ready shapes/dtypes, no per-call casts)
# ----------------------------------------------------------------------------
def _dense(key, fan_in, fan_out):
    return jax.random.normal(key, (fan_in, fan_out), jnp.float32) * 0.02


def init_params(key):
    cfg = CFG
    f32, bf16 = jnp.float32, jnp.bfloat16
    keys = iter(jax.random.split(key, 256))
    nk = lambda: next(keys)
    params = {}

    patch_dim = cfg["patch"] * cfg["patch"] * cfg["in_chans"]
    C = cfg["embed_dim"]
    params["patch_embed"] = dict(
        proj_w=_dense(nk(), patch_dim, C).astype(bf16),
        proj_b=jnp.zeros((1, C), f32),
        norm_g=jnp.ones((1, C), f32), norm_b=jnp.zeros((1, C), f32))

    stages = []
    res = (cfg["img_size"] // cfg["patch"],) * 2
    for s, depth in enumerate(cfg["depths"]):
        heads = cfg["num_heads"][s]
        ws = min(cfg["window"], min(res))
        T = ws * ws
        nW = (res[0] // ws) * (res[1] // ws)
        rel_index = relative_position_index(ws)
        blocks = []
        for blk in range(depth):
            shift = 0 if (blk % 2 == 0 or ws >= min(res)) else cfg["window"] // 2
            rel_table = jax.random.normal(nk(), ((2 * ws - 1) ** 2, heads), f32) * 0.02
            rel_bias = rel_table[rel_index.reshape(-1)].reshape(T, T, heads)
            rel_bias = rel_bias.transpose(2, 0, 1)                     # (H, T, T)
            if shift > 0:
                mask = jnp.asarray(shift_attn_mask(res[0], res[1], ws, shift))
                bias = rel_bias[None, :, :, :] + mask[:, None, :, :]   # (nW, H, T, T)
            else:
                bias = jnp.broadcast_to(rel_bias[None], (nW, heads, T, T))
            blocks.append(dict(
                norm1_g=jnp.ones((1, C), f32), norm1_b=jnp.zeros((1, C), f32),
                qkv_w=_dense(nk(), C, 3 * C).astype(bf16),
                qkv_b=jnp.zeros((1, 3 * C), f32),
                proj_w=_dense(nk(), C, C).astype(bf16),
                proj_b=jnp.zeros((1, C), f32),
                attn_bias=bias.reshape(nW * heads, T, T).astype(f32),
                norm2_g=jnp.ones((1, C), f32), norm2_b=jnp.zeros((1, C), f32),
                fc1_w=_dense(nk(), C, cfg["mlp_ratio"] * C).astype(bf16),
                fc1_b=jnp.zeros((1, cfg["mlp_ratio"] * C), f32),
                fc2_w=_dense(nk(), cfg["mlp_ratio"] * C, C).astype(bf16),
                fc2_b=jnp.zeros((1, C), f32)))
        stage = dict(blocks=blocks)
        if s < len(cfg["depths"]) - 1:
            stage["merge"] = dict(
                norm_g=jnp.ones((1, 4 * C), f32), norm_b=jnp.zeros((1, 4 * C), f32),
                reduction_w=_dense(nk(), 4 * C, 2 * C).astype(bf16))
            C *= 2
            res = (res[0] // 2, res[1] // 2)
        stages.append(stage)
    params["stages"] = stages

    params["norm_g"] = jnp.ones((1, C), f32)
    params["norm_b"] = jnp.zeros((1, C), f32)
    # 1000-way backbone head padded to 1024 lanes; classifier padded to 128 lanes.
    nb = cfg["backbone_classes"]
    params["head_w"] = jnp.pad(_dense(nk(), C, nb),
                               ((0, 0), (0, HEAD_PAD - nb))).astype(bf16)
    params["head_b"] = jnp.zeros((1, HEAD_PAD), f32)
    params["fc1_w"] = jnp.pad(_dense(nk(), nb, 1024),
                              ((0, HEAD_PAD - nb), (0, 0))).astype(bf16)
    params["fc1_b"] = jnp.zeros((1, 1024), f32)
    params["fc2_w"] = jnp.pad(_dense(nk(), 1024, cfg["num_classes"]),
                              ((0, 0), (0, CLS_PAD - cfg["num_classes"]))).astype(bf16)
    params["fc2_b"] = jnp.zeros((1, CLS_PAD), f32)
    return params


if __name__ == "__main__":
    key = jax.random.PRNGKey(0)
    pkey, xkey = jax.random.split(key)
    params = init_params(pkey)
    image = jax.random.normal(
        xkey, (2, CFG["in_chans"], CFG["img_size"], CFG["img_size"]), jnp.float32)
    fwd = jax.jit(forward)
    out = fwd(params, image)
    out = jax.block_until_ready(out)
    assert out.shape == (2, CFG["num_classes"]) and out.dtype == jnp.float32
    print("KERNEL_OK")
</pallas_src>

<mosaic_0001>
module attributes {stable_mosaic.version = 11 : i64} {
  func.func @_embed_kernel(%arg0: memref<32x48xf32, #tpu.memory_space<vmem>>, %arg1: memref<48x32xbf16, #tpu.memory_space<vmem>>, %arg2: memref<1x32xf32, #tpu.memory_space<vmem>>, %arg3: memref<1x32xf32, #tpu.memory_space<vmem>>, %arg4: memref<1x32xf32, #tpu.memory_space<vmem>>, %arg5: memref<32x32xf32, #tpu.memory_space<vmem>>) attributes {dimension_semantics = [], scalar_prefetch = 0 : i64, scratch_operands = 0 : i64, tpu.core_type = #tpu.core_type<tc>} {
    %c0 = arith.constant 0 : index
    %c0_0 = arith.constant 0 : index
    %0 = vector.load %arg0[%c0, %c0_0] : memref<32x48xf32, #tpu.memory_space<vmem>>, vector<32x48xf32>
    %c0_1 = arith.constant 0 : index
    %c0_2 = arith.constant 0 : index
    %1 = vector.load %arg1[%c0_1, %c0_2] : memref<48x32xbf16, #tpu.memory_space<vmem>>, vector<48x32xbf16>
    %2 = arith.truncf %0 : vector<32x48xf32> to vector<32x48xbf16>
    %cst = arith.constant dense<0.000000e+00> : vector<32x32xf32>
    %3 = tpu.matmul %2, %1, %cst {dimension_numbers = #tpu.dot_dimension_numbers<[1], [0], [0], [1], [0, 0, 1, 1], [], []>} : vector<32x48xbf16>, vector<48x32xbf16>, vector<32x32xf32> -> vector<32x32xf32>
    %c0_3 = arith.constant 0 : index
    %c0_4 = arith.constant 0 : index
    %4 = vector.load %arg2[%c0_3, %c0_4] : memref<1x32xf32, #tpu.memory_space<vmem>>, vector<1x32xf32>
    %5 = vector.broadcast %4 : vector<1x32xf32> to vector<32x32xf32>
    %6 = arith.addf %3, %5 : vector<32x32xf32>
    %c0_5 = arith.constant 0 : index
    %c0_6 = arith.constant 0 : index
    %7 = vector.load %arg3[%c0_5, %c0_6] : memref<1x32xf32, #tpu.memory_space<vmem>>, vector<1x32xf32>
    %c0_7 = arith.constant 0 : index
    %c0_8 = arith.constant 0 : index
    %8 = vector.load %arg4[%c0_7, %c0_8] : memref<1x32xf32, #tpu.memory_space<vmem>>, vector<1x32xf32>
    %cst_9 = arith.constant dense<0.000000e+00> : vector<32xf32>
    %9 = vector.multi_reduction <add>, %6, %cst_9 [1] : vector<32x32xf32> to vector<32xf32>
    %10 = vector.shape_cast %9 : vector<32xf32> to vector<32x1xf32>
    %cst_10 = arith.constant 3.200000e+01 : f32
    %11 = vector.broadcast %cst_10 : f32 to vector<32x1xf32>
    %12 = arith.divf %10, %11 : vector<32x1xf32>
    %13 = vector.broadcast %12 : vector<32x1xf32> to vector<32x32xf32>
    %14 = arith.subf %6, %13 : vector<32x32xf32>
    %15 = arith.mulf %14, %14 : vector<32x32xf32>
    %cst_11 = arith.constant dense<0.000000e+00> : vector<32xf32>
    %16 = vector.multi_reduction <add>, %15, %cst_11 [1] : vector<32x32xf32> to vector<32xf32>
    %17 = vector.shape_cast %16 : vector<32xf32> to vector<32x1xf32>
    %cst_12 = arith.constant 3.200000e+01 : f32
    %18 = vector.broadcast %cst_12 : f32 to vector<32x1xf32>
    %19 = arith.divf %17, %18 : vector<32x1xf32>
    %20 = vector.broadcast %12 : vector<32x1xf32> to vector<32x32xf32>
    %21 = arith.subf %6, %20 : vector<32x32xf32>
    %cst_13 = arith.constant 9.99999974E-6 : f32
    %22 = vector.broadcast %cst_13 : f32 to vector<32x1xf32>
    %23 = arith.addf %19, %22 : vector<32x1xf32>
    %24 = math.rsqrt %23 : vector<32x1xf32>
    %25 = vector.broadcast %24 : vector<32x1xf32> to vector<32x32xf32>
    %26 = arith.mulf %21, %25 : vector<32x32xf32>
    %27 = vector.broadcast %7 : vector<1x32xf32> to vector<32x32xf32>
    %28 = arith.mulf %26, %27 : vector<32x32xf32>
    %29 = vector.broadcast %8 : vector<1x32xf32> to vector<32x32xf32>
    %30 = arith.addf %28, %29 : vector<32x32xf32>
    %c0_14 = arith.constant 0 : index
    %c0_15 = arith.constant 0 : index
    %31 = vector.load %arg5[%c0_14, %c0_15] : memref<32x32xf32, #tpu.memory_space<vmem>>, vector<32x32xf32>
    tpu.vector_store %arg5[%c0_14, %c0_15], %30 {strides = array<i32>} : memref<32x32xf32, #tpu.memory_space<vmem>>, vector<32x32xf32>,
    return
  }
}

module attributes {stable_mosaic.version = 11 : i64} {
  func.func @_ln_qkv_kernel(%arg0: memref<32x32xf32, #tpu.memory_space<vmem>>, %arg1: memref<1x32xf32, #tpu.memory_space<vmem>>, %arg2: memref<1x32xf32, #tpu.memory_space<vmem>>, %arg3: memref<32x96xbf16, #tpu.memory_space<vmem>>, %arg4: memref<1x96xf32, #tpu.memory_space<vmem>>, %arg5: memref<32x96xf32, #tpu.memory_space<vmem>>) attributes {dimension_semantics = [], scalar_prefetch = 0 : i64, scratch_operands = 0 : i64, tpu.core_type = #tpu.core_type<tc>} {
    %c0 = arith.constant 0 : index
    %c0_0 = arith.constant 0 : index
    %0 = vector.load %arg0[%c0, %c0_0] : memref<32x32xf32, #tpu.memory_space<vmem>>, vector<32x32xf32>
    %c0_1 = arith.constant 0 : index
    %c0_2 = arith.constant 0 : index
    %1 = vector.load %arg1[%c0_1, %c0_2] : memref<1x32xf32, #tpu.memory_space<vmem>>, vector<1x32xf32>
    %c0_3 = arith.constant 0 : index
    %c0_4 = arith.constant 0 : index
    %2 = vector.load %arg2[%c0_3, %c0_4] : memref<1x32xf32, #tpu.memory_space<vmem>>, vector<1x32xf32>
    %cst = arith.constant dense<0.000000e+00> : vector<32xf32>
    %3 = vector.multi_reduction <add>, %0, %cst [1] : vector<32x32xf32> to vector<32xf32>
    %4 = vector.shape_cast %3 : vector<32xf32> to vector<32x1xf32>
    %cst_5 = arith.constant 3.200000e+01 : f32
    %5 = vector.broadcast %cst_5 : f32 to vector<32x1xf32>
    %6 = arith.divf %4, %5 : vector<32x1xf32>
    %7 = vector.broadcast %6 : vector<32x1xf32> to vector<32x32xf32>
    %8 = arith.subf %0, %7 : vector<32x32xf32>
    %9 = arith.mulf %8, %8 : vector<32x32xf32>
    %cst_6 = arith.constant dense<0.000000e+00> : vector<32xf32>
    %10 = vector.multi_reduction <add>, %9, %cst_6 [1] : vector<32x32xf32> to vector<32xf32>
    %11 = vector.shape_cast %10 : vector<32xf32> to vector<32x1xf32>
    %cst_7 = arith.constant 3.200000e+01 : f32
    %12 = vector.broadcast %cst_7 : f32 to vector<32x1xf32>
    %13 = arith.divf %11, %12 : vector<32x1xf32>
    %14 = vector.broadcast %6 : vector<32x1xf32> to vector<32x32xf32>
    %15 = arith.subf %0, %14 : vector<32x32xf32>
    %cst_8 = arith.constant 9.99999974E-6 : f32
    %16 = vector.broadcast %cst_8 : f32 to vector<32x1xf32>
    %17 = arith.addf %13, %16 : vector<32x1xf32>
    %18 = math.rsqrt %17 : vector<32x1xf32>
    %19 = vector.broadcast %18 : vector<32x1xf32> to vector<32x32xf32>
    %20 = arith.mulf %15, %19 : vector<32x32xf32>
    %21 = vector.broadcast %1 : vector<1x32xf32> to vector<32x32xf32>
    %22 = arith.mulf %20, %21 : vector<32x32xf32>
    %23 = vector.broadcast %2 : vector<1x32xf32> to vector<32x32xf32>
    %24 = arith.addf %22, %23 : vector<32x32xf32>
    %c0_9 = arith.constant 0 : index
    %c0_10 = arith.constant 0 : index
    %25 = vector.load %arg3[%c0_9, %c0_10] : memref<32x96xbf16, #tpu.memory_space<vmem>>, vector<32x96xbf16>
    %26 = arith.truncf %24 : vector<32x32xf32> to vector<32x32xbf16>
    %cst_11 = arith.constant dense<0.000000e+00> : vector<32x96xf32>
    %27 = tpu.matmul %26, %25, %cst_11 {dimension_numbers = #tpu.dot_dimension_numbers<[1], [0], [0], [1], [0, 0, 1, 1], [], []>} : vector<32x32xbf16>, vector<32x96xbf16>, vector<32x96xf32> -> vector<32x96xf32>
    %c0_12 = arith.constant 0 : index
    %c0_13 = arith.constant 0 : index
    %28 = vector.load %arg4[%c0_12, %c0_13] : memref<1x96xf32, #tpu.memory_space<vmem>>, vector<1x96xf32>
    %29 = vector.broadcast %28 : vector<1x96xf32> to vector<32x96xf32>
    %30 = arith.addf %27, %29 : vector<32x96xf32>
    %c0_14 = arith.constant 0 : index
    %c0_15 = arith.constant 0 : index
    %31 = vector.load %arg5[%c0_14, %c0_15] : memref<32x96xf32, #tpu.memory_space<vmem>>, vector<32x96xf32>
    tpu.vector_store %arg5[%c0_14, %c0_15], %30 {strides = array<i32>} : memref<32x96xf32, #tpu.memory_space<vmem>>, vector<32x96xf32>,
    return
  }
}

module attributes {stable_mosaic.version = 11 : i64} {
  func.func @_attn_kernel(%arg0: memref<16x4x16xf32, #tpu.memory_space<vmem>>, %arg1: memref<16x4x16xf32, #tpu.memory_space<vmem>>, %arg2: memref<16x4x16xf32, #tpu.memory_space<vmem>>, %arg3: memref<8x4x4xf32, #tpu.memory_space<vmem>>, %arg4: memref<16x4x16xf32, #tpu.memory_space<vmem>>) attributes {dimension_semantics = [], scalar_prefetch = 0 : i64, scratch_operands = 0 : i64, tpu.core_type = #tpu.core_type<tc>} {
    %c0 = arith.constant 0 : index
    %c0_0 = arith.constant 0 : index
    %c0_1 = arith.constant 0 : index
    %0 = vector.load %arg0[%c0, %c0_0, %c0_1] : memref<16x4x16xf32, #tpu.memory_space<vmem>>, vector<16x4x16xf32>
    %1 = arith.truncf %0 : vector<16x4x16xf32> to vector<16x4x16xbf16>
    %c0_2 = arith.constant 0 : index
    %c0_3 = arith.constant 0 : index
    %c0_4 = arith.constant 0 : index
    %2 = vector.load %arg1[%c0_2, %c0_3, %c0_4] : memref<16x4x16xf32, #tpu.memory_space<vmem>>, vector<16x4x16xf32>
    %3 = arith.truncf %2 : vector<16x4x16xf32> to vector<16x4x16xbf16>
    %c0_5 = arith.constant 0 : index
    %c0_6 = arith.constant 0 : index
    %c0_7 = arith.constant 0 : index
    %4 = vector.load %arg2[%c0_5, %c0_6, %c0_7] : memref<16x4x16xf32, #tpu.memory_space<vmem>>, vector<16x4x16xf32>
    %5 = arith.truncf %4 : vector<16x4x16xf32> to vector<16x4x16xbf16>
    "tpu.trace_start"() <{level = 10 : i32, message = "gtd,gsd->gts"}> : () -> ()
    %cst = arith.constant dense<0.000000e+00> : vector<16x4x4xf32>
    %6 = tpu.matmul %1, %3, %cst {dimension_numbers = #tpu.dot_dimension_numbers<[2], [2], [1], [1], [0, 0, 0, 1, 1, 1], [0], [0]>} : vector<16x4x16xbf16>, vector<16x4x16xbf16>, vector<16x4x4xf32> -> vector<16x4x4xf32>
    "tpu.trace_stop"() : () -> ()
    %cst_8 = arith.constant 2.500000e-01 : f32
    %7 = vector.broadcast %cst_8 : f32 to vector<16x4x4xf32>
    %8 = arith.mulf %6, %7 : vector<16x4x4xf32>
    %9 = vector.shape_cast %8 : vector<16x4x4xf32> to vector<2x8x4x4xf32>
    %c0_9 = arith.constant 0 : index
    %c0_10 = arith.constant 0 : index
    %c0_11 = arith.constant 0 : index
    %10 = vector.load %arg3[%c0_9, %c0_10, %c0_11] : memref<8x4x4xf32, #tpu.memory_space<vmem>>, vector<8x4x4xf32>
    %11 = vector.shape_cast %10 : vector<8x4x4xf32> to vector<1x8x4x4xf32>
    %12 = vector.broadcast %11 : vector<1x8x4x4xf32> to vector<2x8x4x4xf32>
    %13 = arith.addf %9, %12 : vector<2x8x4x4xf32>
    %cst_12 = arith.constant dense<0xFF800000> : vector<2x8x4xf32>
    %14 = vector.multi_reduction <maximumf>, %13, %cst_12 [3] : vector<2x8x4x4xf32> to vector<2x8x4xf32>
    %15 = vector.shape_cast %14 : vector<2x8x4xf32> to vector<2x8x4x1xf32>
    %16 = vector.broadcast %15 : vector<2x8x4x1xf32> to vector<2x8x4x4xf32>
    %17 = arith.subf %13, %16 : vector<2x8x4x4xf32>
    %18 = math.exp %17 : vector<2x8x4x4xf32>
    %cst_13 = arith.constant dense<0.000000e+00> : vector<2x8x4xf32>
    %19 = vector.multi_reduction <add>, %18, %cst_13 [3] : vector<2x8x4x4xf32> to vector<2x8x4xf32>
    %20 = vector.shape_cast %19 : vector<2x8x4xf32> to vector<2x8x4x1xf32>
    %21 = tpu.reciprocal %20 {approx = true} : vector<2x8x4x1xf32> -> vector<2x8x4x1xf32>
    %22 = vector.broadcast %21 : vector<2x8x4x1xf32> to vector<2x8x4x4xf32>
    %23 = arith.mulf %18, %22 : vector<2x8x4x4xf32>
    %24 = vector.shape_cast %23 : vector<2x8x4x4xf32> to vector<16x4x4xf32>
    %25 = arith.truncf %24 : vector<16x4x4xf32> to vector<16x4x4xbf16>
    "tpu.trace_start"() <{level = 10 : i32, message = "gts,gsd->gtd"}> : () -> ()
    %cst_14 = arith.constant dense<0.000000e+00> : vector<16x4x16xf32>
    %26 = tpu.matmul %25, %5, %cst_14 {dimension_numbers = #tpu.dot_dimension_numbers<[2], [1], [1], [2], [0, 0, 0, 1, 1, 2], [0], [0]>} : vector<16x4x4xbf16>, vector<16x4x16xbf16>, vector<16x4x16xf32> -> vector<16x4x16xf32>
    "tpu.trace_stop"() : () -> ()
    %c0_15 = arith.constant 0 : index
    %c0_16 = arith.constant 0 : index
    %c0_17 = arith.constant 0 : index
    %27 = vector.load %arg4[%c0_15, %c0_16, %c0_17] : memref<16x4x16xf32, #tpu.memory_space<vmem>>, vector<16x4x16xf32>
    tpu.vector_store %arg4[%c0_15, %c0_16, %c0_17], %26 {strides = array<i32>} : memref<16x4x16xf32, #tpu.memory_space<vmem>>, vector<16x4x16xf32>,
    return
  }
}

module attributes {stable_mosaic.version = 11 : i64} {
  func.func @_proj_mlp_kernel(%arg0: memref<32x32xf32, #tpu.memory_space<vmem>>, %arg1: memref<32x32xf32, #tpu.memory_space<vmem>>, %arg2: memref<32x32xbf16, #tpu.memory_space<vmem>>, %arg3: memref<1x32xf32, #tpu.memory_space<vmem>>, %arg4: memref<1x32xf32, #tpu.memory_space<vmem>>, %arg5: memref<1x32xf32, #tpu.memory_space<vmem>>, %arg6: memref<32x128xbf16, #tpu.memory_space<vmem>>, %arg7: memref<1x128xf32, #tpu.memory_space<vmem>>, %arg8: memref<128x32xbf16, #tpu.memory_space<vmem>>, %arg9: memref<1x32xf32, #tpu.memory_space<vmem>>, %arg10: memref<32x32xf32, #tpu.memory_space<vmem>>) attributes {dimension_semantics = [], scalar_prefetch = 0 : i64, scratch_operands = 0 : i64, tpu.core_type = #tpu.core_type<tc>} {
    %c0 = arith.constant 0 : index
    %c0_0 = arith.constant 0 : index
    %0 = vector.load %arg0[%c0, %c0_0] : memref<32x32xf32, #tpu.memory_space<vmem>>, vector<32x32xf32>
    %c0_1 = arith.constant 0 : index
    %c0_2 = arith.constant 0 : index
    %1 = vector.load %arg1[%c0_1, %c0_2] : memref<32x32xf32, #tpu.memory_space<vmem>>, vector<32x32xf32>
    %c0_3 = arith.constant 0 : index
    %c0_4 = arith.constant 0 : index
    %2 = vector.load %arg2[%c0_3, %c0_4] : memref<32x32xbf16, #tpu.memory_space<vmem>>, vector<32x32xbf16>
    %3 = arith.truncf %1 : vector<32x32xf32> to vector<32x32xbf16>
    %cst = arith.constant dense<0.000000e+00> : vector<32x32xf32>
    %4 = tpu.matmul %3, %2, %cst {dimension_numbers = #tpu.dot_dimension_numbers<[1], [0], [0], [1], [0, 0, 1, 1], [], []>} : vector<32x32xbf16>, vector<32x32xbf16>, vector<32x32xf32> -> vector<32x32xf32>
    %5 = arith.addf %0, %4 : vector<32x32xf32>
    %c0_5 = arith.constant 0 : index
    %c0_6 = arith.constant 0 : index
    %6 = vector.load %arg3[%c0_5, %c0_6] : memref<1x32xf32, #tpu.memory_space<vmem>>, vector<1x32xf32>
    %7 = vector.broadcast %6 : vector<1x32xf32> to vector<32x32xf32>
    %8 = arith.addf %5, %7 : vector<32x32xf32>
    %c0_7 = arith.constant 0 : index
    %c0_8 = arith.constant 0 : index
    %9 = vector.load %arg4[%c0_7, %c0_8] : memref<1x32xf32, #tpu.memory_space<vmem>>, vector<1x32xf32>
    %c0_9 = arith.constant 0 : index
    %c0_10 = arith.constant 0 : index
    %10 = vector.load %arg5[%c0_9, %c0_10] : memref<1x32xf32, #tpu.memory_space<vmem>>, vector<1x32xf32>
    %cst_11 = arith.constant dense<0.000000e+00> : vector<32xf32>
    %11 = vector.multi_reduction <add>, %8, %cst_11 [1] : vector<32x32xf32> to vector<32xf32>
    %12 = vector.shape_cast %11 : vector<32xf32> to vector<32x1xf32>
    %cst_12 = arith.constant 3.200000e+01 : f32
    %13 = vector.broadcast %cst_12 : f32 to vector<32x1xf32>
    %14 = arith.divf %12, %13 : vector<32x1xf32>
    %15 = vector.broadcast %14 : vector<32x1xf32> to vector<32x32xf32>
    %16 = arith.subf %8, %15 : vector<32x32xf32>
    %17 = arith.mulf %16, %16 : vector<32x32xf32>
    %cst_13 = arith.constant dense<0.000000e+00> : vector<32xf32>
    %18 = vector.multi_reduction <add>, %17, %cst_13 [1] : vector<32x32xf32> to vector<32xf32>
    %19 = vector.shape_cast %18 : vector<32xf32> to vector<32x1xf32>
    %cst_14 = arith.constant 3.200000e+01 : f32
    %20 = vector.broadcast %cst_14 : f32 to vector<32x1xf32>
    %21 = arith.divf %19, %20 : vector<32x1xf32>
    %22 = vector.broadcast %14 : vector<32x1xf32> to vector<32x32xf32>
    %23 = arith.subf %8, %22 : vector<32x32xf32>
    %cst_15 = arith.constant 9.99999974E-6 : f32
    %24 = vector.broadcast %cst_15 : f32 to vector<32x1xf32>
    %25 = arith.addf %21, %24 : vector<32x1xf32>
    %26 = math.rsqrt %25 : vector<32x1xf32>
    %27 = vector.broadcast %26 : vector<32x1xf32> to vector<32x32xf32>
    %28 = arith.mulf %23, %27 : vector<32x32xf32>
    %29 = vector.broadcast %9 : vector<1x32xf32> to vector<32x32xf32>
    %30 = arith.mulf %28, %29 : vector<32x32xf32>
    %31 = vector.broadcast %10 : vector<1x32xf32> to vector<32x32xf32>
    %32 = arith.addf %30, %31 : vector<32x32xf32>
    %c0_16 = arith.constant 0 : index
    %c0_17 = arith.constant 0 : index
    %33 = vector.load %arg6[%c0_16, %c0_17] : memref<32x128xbf16, #tpu.memory_space<vmem>>, vector<32x128xbf16>
    %34 = arith.truncf %32 : vector<32x32xf32> to vector<32x32xbf16>
    %cst_18 = arith.constant dense<0.000000e+00> : vector<32x128xf32>
    %35 = tpu.matmul %34, %33, %cst_18 {dimension_numbers = #tpu.dot_dimension_numbers<[1], [0], [0], [1], [0, 0, 1, 1], [], []>} : vector<32x32xbf16>, vector<32x128xbf16>, vector<32x128xf32> -> vector<32x128xf32>
    %c0_19 = arith.constant 0 : index
    %c0_20 = arith.constant 0 : index
    %36 = vector.load %arg7[%c0_19, %c0_20] : memref<1x128xf32, #tpu.memory_space<vmem>>, vector<1x128xf32>
    %37 = vector.broadcast %36 : vector<1x128xf32> to vector<32x128xf32>
    %38 = arith.addf %35, %37 : vector<32x128xf32>
    %39 = arith.mulf %38, %38 : vector<32x128xf32>
    %40 = arith.mulf %38, %39 : vector<32x128xf32>
    %cst_21 = arith.constant 4.471500e-02 : f32
    %41 = vector.broadcast %cst_21 : f32 to vector<32x128xf32>
    %42 = arith.mulf %41, %40 : vector<32x128xf32>
    %43 = arith.addf %38, %42 : vector<32x128xf32>
    %cst_22 = arith.constant 0.797884583 : f32
    %44 = vector.broadcast %cst_22 : f32 to vector<32x128xf32>
    %45 = arith.mulf %44, %43 : vector<32x128xf32>
    %46 = math.tanh %45 : vector<32x128xf32>
    %cst_23 = arith.constant 1.000000e+00 : f32
    %47 = vector.broadcast %cst_23 : f32 to vector<32x128xf32>
    %48 = arith.addf %47, %46 : vector<32x128xf32>
    %cst_24 = arith.constant 5.000000e-01 : f32
    %49 = vector.broadcast %cst_24 : f32 to vector<32x128xf32>
    %50 = arith.mulf %49, %48 : vector<32x128xf32>
    %51 = arith.mulf %38, %50 : vector<32x128xf32>
    %c0_25 = arith.constant 0 : index
    %c0_26 = arith.constant 0 : index
    %52 = vector.load %arg8[%c0_25, %c0_26] : memref<128x32xbf16, #tpu.memory_space<vmem>>, vector<128x32xbf16>
    %53 = arith.truncf %51 : vector<32x128xf32> to vector<32x128xbf16>
    %cst_27 = arith.constant dense<0.000000e+00> : vector<32x32xf32>
    %54 = tpu.matmul %53, %52, %cst_27 {dimension_numbers = #tpu.dot_dimension_numbers<[1], [0], [0], [1], [0, 0, 1, 1], [], []>} : vector<32x128xbf16>, vector<128x32xbf16>, vector<32x32xf32> -> vector<32x32xf32>
    %55 = arith.addf %8, %54 : vector<32x32xf32>
    %c0_28 = arith.constant 0 : index
    %c0_29 = arith.constant 0 : index
    %56 = vector.load %arg9[%c0_28, %c0_29] : memref<1x32xf32, #tpu.memory_space<vmem>>, vector<1x32xf32>
    %57 = vector.broadcast %56 : vector<1x32xf32> to vector<32x32xf32>
    %58 = arith.addf %55, %57 : vector<32x32xf32>
    %c0_30 = arith.constant 0 : index
    %c0_31 = arith.constant 0 : index
    %59 = vector.load %arg10[%c0_30, %c0_31] : memref<32x32xf32, #tpu.memory_space<vmem>>, vector<32x32xf32>
    tpu.vector_store %arg10[%c0_30, %c0_31], %58 {strides = array<i32>} : memref<32x32xf32, #tpu.memory_space<vmem>>, vector<32x32xf32>,
    return
  }
}

module attributes {stable_mosaic.version = 11 : i64} {
  func.func @_proj_mlp_kernel(%arg0: memref<32x32xf32, #tpu.memory_space<vmem>>, %arg1: memref<32x32xf32, #tpu.memory_space<vmem>>, %arg2: memref<32x32xbf16, #tpu.memory_space<vmem>>, %arg3: memref<1x32xf32, #tpu.memory_space<vmem>>, %arg4: memref<1x32xf32, #tpu.memory_space<vmem>>, %arg5: memref<1x32xf32, #tpu.memory_space<vmem>>, %arg6: memref<32x128xbf16, #tpu.memory_space<vmem>>, %arg7: memref<1x128xf32, #tpu.memory_space<vmem>>, %arg8: memref<128x32xbf16, #tpu.memory_space<vmem>>, %arg9: memref<1x32xf32, #tpu.memory_space<vmem>>, %arg10: memref<32x32xf32, #tpu.memory_space<vmem>>) attributes {dimension_semantics = [], scalar_prefetch = 0 : i64, scratch_operands = 0 : i64, tpu.core_type = #tpu.core_type<tc>} {
    %c0 = arith.constant 0 : index
    %c0_0 = arith.constant 0 : index
    %0 = vector.load %arg0[%c0, %c0_0] : memref<32x32xf32, #tpu.memory_space<vmem>>, vector<32x32xf32>
    %c0_1 = arith.constant 0 : index
    %c0_2 = arith.constant 0 : index
    %1 = vector.load %arg1[%c0_1, %c0_2] : memref<32x32xf32, #tpu.memory_space<vmem>>, vector<32x32xf32>
    %c0_3 = arith.constant 0 : index
    %c0_4 = arith.constant 0 : index
    %2 = vector.load %arg2[%c0_3, %c0_4] : memref<32x32xbf16, #tpu.memory_space<vmem>>, vector<32x32xbf16>
    %3 = arith.truncf %1 : vector<32x32xf32> to vector<32x32xbf16>
    %cst = arith.constant dense<0.000000e+00> : vector<32x32xf32>
    %4 = tpu.matmul %3, %2, %cst {dimension_numbers = #tpu.dot_dimension_numbers<[1], [0], [0], [1], [0, 0, 1, 1], [], []>} : vector<32x32xbf16>, vector<32x32xbf16>, vector<32x32xf32> -> vector<32x32xf32>
    %5 = arith.addf %0, %4 : vector<32x32xf32>
    %c0_5 = arith.constant 0 : index
    %c0_6 = arith.constant 0 : index
    %6 = vector.load %arg3[%c0_5, %c0_6] : memref<1x32xf32, #tpu.memory_space<vmem>>, vector<1x32xf32>
    %7 = vector.broadcast %6 : vector<1x32xf32> to vector<32x32xf32>
    %8 = arith.addf %5, %7 : vector<32x32xf32>
    %c0_7 = arith.constant 0 : index
    %c0_8 = arith.constant 0 : index
    %9 = vector.load %arg4[%c0_7, %c0_8] : memref<1x32xf32, #tpu.memory_space<vmem>>, vector<1x32xf32>
    %c0_9 = arith.constant 0 : index
    %c0_10 = arith.constant 0 : index
    %10 = vector.load %arg5[%c0_9, %c0_10] : memref<1x32xf32, #tpu.memory_space<vmem>>, vector<1x32xf32>
    %cst_11 = arith.constant dense<0.000000e+00> : vector<32xf32>
    %11 = vector.multi_reduction <add>, %8, %cst_11 [1] : vector<32x32xf32> to vector<32xf32>
    %12 = vector.shape_cast %11 : vector<32xf32> to vector<32x1xf32>
    %cst_12 = arith.constant 3.200000e+01 : f32
    %13 = vector.broadcast %cst_12 : f32 to vector<32x1xf32>
    %14 = arith.divf %12, %13 : vector<32x1xf32>
    %15 = vector.broadcast %14 : vector<32x1xf32> to vector<32x32xf32>
    %16 = arith.subf %8, %15 : vector<32x32xf32>
    %17 = arith.mulf %16, %16 : vector<32x32xf32>
    %cst_13 = arith.constant dense<0.000000e+00> : vector<32xf32>
    %18 = vector.multi_reduction <add>, %17, %cst_13 [1] : vector<32x32xf32> to vector<32xf32>
    %19 = vector.shape_cast %18 : vector<32xf32> to vector<32x1xf32>
    %cst_14 = arith.constant 3.200000e+01 : f32
    %20 = vector.broadcast %cst_14 : f32 to vector<32x1xf32>
    %21 = arith.divf %19, %20 : vector<32x1xf32>
    %22 = vector.broadcast %14 : vector<32x1xf32> to vector<32x32xf32>
    %23 = arith.subf %8, %22 : vector<32x32xf32>
    %cst_15 = arith.constant 9.99999974E-6 : f32
    %24 = vector.broadcast %cst_15 : f32 to vector<32x1xf32>
    %25 = arith.addf %21, %24 : vector<32x1xf32>
    %26 = math.rsqrt %25 : vector<32x1xf32>
    %27 = vector.broadcast %26 : vector<32x1xf32> to vector<32x32xf32>
    %28 = arith.mulf %23, %27 : vector<32x32xf32>
    %29 = vector.broadcast %9 : vector<1x32xf32> to vector<32x32xf32>
    %30 = arith.mulf %28, %29 : vector<32x32xf32>
    %31 = vector.broadcast %10 : vector<1x32xf32> to vector<32x32xf32>
    %32 = arith.addf %30, %31 : vector<32x32xf32>
    %c0_16 = arith.constant 0 : index
    %c0_17 = arith.constant 0 : index
    %33 = vector.load %arg6[%c0_16, %c0_17] : memref<32x128xbf16, #tpu.memory_space<vmem>>, vector<32x128xbf16>
    %34 = arith.truncf %32 : vector<32x32xf32> to vector<32x32xbf16>
    %cst_18 = arith.constant dense<0.000000e+00> : vector<32x128xf32>
    %35 = tpu.matmul %34, %33, %cst_18 {dimension_numbers = #tpu.dot_dimension_numbers<[1], [0], [0], [1], [0, 0, 1, 1], [], []>} : vector<32x32xbf16>, vector<32x128xbf16>, vector<32x128xf32> -> vector<32x128xf32>
    %c0_19 = arith.constant 0 : index
    %c0_20 = arith.constant 0 : index
    %36 = vector.load %arg7[%c0_19, %c0_20] : memref<1x128xf32, #tpu.memory_space<vmem>>, vector<1x128xf32>
    %37 = vector.broadcast %36 : vector<1x128xf32> to vector<32x128xf32>
    %38 = arith.addf %35, %37 : vector<32x128xf32>
    %39 = arith.mulf %38, %38 : vector<32x128xf32>
    %40 = arith.mulf %38, %39 : vector<32x128xf32>
    %cst_21 = arith.constant 4.471500e-02 : f32
    %41 = vector.broadcast %cst_21 : f32 to vector<32x128xf32>
    %42 = arith.mulf %41, %40 : vector<32x128xf32>
    %43 = arith.addf %38, %42 : vector<32x128xf32>
    %cst_22 = arith.constant 0.797884583 : f32
    %44 = vector.broadcast %cst_22 : f32 to vector<32x128xf32>
    %45 = arith.mulf %44, %43 : vector<32x128xf32>
    %46 = math.tanh %45 : vector<32x128xf32>
    %cst_23 = arith.constant 1.000000e+00 : f32
    %47 = vector.broadcast %cst_23 : f32 to vector<32x128xf32>
    %48 = arith.addf %47, %46 : vector<32x128xf32>
    %cst_24 = arith.constant 5.000000e-01 : f32
    %49 = vector.broadcast %cst_24 : f32 to vector<32x128xf32>
    %50 = arith.mulf %49, %48 : vector<32x128xf32>
    %51 = arith.mulf %38, %50 : vector<32x128xf32>
    %c0_25 = arith.constant 0 : index
    %c0_26 = arith.constant 0 : index
    %52 = vector.load %arg8[%c0_25, %c0_26] : memref<128x32xbf16, #tpu.memory_space<vmem>>, vector<128x32xbf16>
    %53 = arith.truncf %51 : vector<32x128xf32> to vector<32x128xbf16>
    %cst_27 = arith.constant dense<0.000000e+00> : vector<32x32xf32>
    %54 = tpu.matmul %53, %52, %cst_27 {dimension_numbers = #tpu.dot_dimension_numbers<[1], [0], [0], [1], [0, 0, 1, 1], [], []>} : vector<32x128xbf16>, vector<128x32xbf16>, vector<32x32xf32> -> vector<32x32xf32>
    %55 = arith.addf %8, %54 : vector<32x32xf32>
    %c0_28 = arith.constant 0 : index
    %c0_29 = arith.constant 0 : index
    %56 = vector.load %arg9[%c0_28, %c0_29] : memref<1x32xf32, #tpu.memory_space<vmem>>, vector<1x32xf32>
    %57 = vector.broadcast %56 : vector<1x32xf32> to vector<32x32xf32>
    %58 = arith.addf %55, %57 : vector<32x32xf32>
    %c0_30 = arith.constant 0 : index
    %c0_31 = arith.constant 0 : index
    %59 = vector.load %arg10[%c0_30, %c0_31] : memref<32x32xf32, #tpu.memory_space<vmem>>, vector<32x32xf32>
    tpu.vector_store %arg10[%c0_30, %c0_31], %58 {strides = array<i32>} : memref<32x32xf32, #tpu.memory_space<vmem>>, vector<32x32xf32>,
    return
  }
}

module attributes {stable_mosaic.version = 11 : i64} {
  func.func @_merge_kernel(%arg0: memref<8x128xf32, #tpu.memory_space<vmem>>, %arg1: memref<1x128xf32, #tpu.memory_space<vmem>>, %arg2: memref<1x128xf32, #tpu.memory_space<vmem>>, %arg3: memref<128x64xbf16, #tpu.memory_space<vmem>>, %arg4: memref<8x64xf32, #tpu.memory_space<vmem>>) attributes {dimension_semantics = [], scalar_prefetch = 0 : i64, scratch_operands = 0 : i64, tpu.core_type = #tpu.core_type<tc>} {
    %c0 = arith.constant 0 : index
    %c0_0 = arith.constant 0 : index
    %0 = vector.load %arg0[%c0, %c0_0] : memref<8x128xf32, #tpu.memory_space<vmem>>, vector<8x128xf32>
    %c0_1 = arith.constant 0 : index
    %c0_2 = arith.constant 0 : index
    %1 = vector.load %arg1[%c0_1, %c0_2] : memref<1x128xf32, #tpu.memory_space<vmem>>, vector<1x128xf32>
    %c0_3 = arith.constant 0 : index
    %c0_4 = arith.constant 0 : index
    %2 = vector.load %arg2[%c0_3, %c0_4] : memref<1x128xf32, #tpu.memory_space<vmem>>, vector<1x128xf32>
    %cst = arith.constant dense<0.000000e+00> : vector<8xf32>
    %3 = vector.multi_reduction <add>, %0, %cst [1] : vector<8x128xf32> to vector<8xf32>
    %4 = vector.shape_cast %3 : vector<8xf32> to vector<8x1xf32>
    %cst_5 = arith.constant 1.280000e+02 : f32
    %5 = vector.broadcast %cst_5 : f32 to vector<8x1xf32>
    %6 = arith.divf %4, %5 : vector<8x1xf32>
    %7 = vector.broadcast %6 : vector<8x1xf32> to vector<8x128xf32>
    %8 = arith.subf %0, %7 : vector<8x128xf32>
    %9 = arith.mulf %8, %8 : vector<8x128xf32>
    %cst_6 = arith.constant dense<0.000000e+00> : vector<8xf32>
    %10 = vector.multi_reduction <add>, %9, %cst_6 [1] : vector<8x128xf32> to vector<8xf32>
    %11 = vector.shape_cast %10 : vector<8xf32> to vector<8x1xf32>
    %cst_7 = arith.constant 1.280000e+02 : f32
    %12 = vector.broadcast %cst_7 : f32 to vector<8x1xf32>
    %13 = arith.divf %11, %12 : vector<8x1xf32>
    %14 = vector.broadcast %6 : vector<8x1xf32> to vector<8x128xf32>
    %15 = arith.subf %0, %14 : vector<8x128xf32>
    %cst_8 = arith.constant 9.99999974E-6 : f32
    %16 = vector.broadcast %cst_8 : f32 to vector<8x1xf32>
    %17 = arith.addf %13, %16 : vector<8x1xf32>
    %18 = math.rsqrt %17 : vector<8x1xf32>
    %19 = vector.broadcast %18 : vector<8x1xf32> to vector<8x128xf32>
    %20 = arith.mulf %15, %19 : vector<8x128xf32>
    %21 = vector.broadcast %1 : vector<1x128xf32> to vector<8x128xf32>
    %22 = arith.mulf %20, %21 : vector<8x128xf32>
    %23 = vector.broadcast %2 : vector<1x128xf32> to vector<8x128xf32>
    %24 = arith.addf %22, %23 : vector<8x128xf32>
    %c0_9 = arith.constant 0 : index
    %c0_10 = arith.constant 0 : index
    %25 = vector.load %arg3[%c0_9, %c0_10] : memref<128x64xbf16, #tpu.memory_space<vmem>>, vector<128x64xbf16>
    %26 = arith.truncf %24 : vector<8x128xf32> to vector<8x128xbf16>
    %cst_11 = arith.constant dense<0.000000e+00> : vector<8x64xf32>
    %27 = tpu.matmul %26, %25, %cst_11 {dimension_numbers = #tpu.dot_dimension_numbers<[1], [0], [0], [1], [0, 0, 1, 1], [], []>} : vector<8x128xbf16>, vector<128x64xbf16>, vector<8x64xf32> -> vector<8x64xf32>
    %c0_12 = arith.constant 0 : index
    %c0_13 = arith.constant 0 : index
    %28 = vector.load %arg4[%c0_12, %c0_13] : memref<8x64xf32, #tpu.memory_space<vmem>>, vector<8x64xf32>
    tpu.vector_store %arg4[%c0_12, %c0_13], %27 {strides = array<i32>} : memref<8x64xf32, #tpu.memory_space<vmem>>, vector<8x64xf32>,
    return
  }
}

module attributes {stable_mosaic.version = 11 : i64} {
  func.func @_ln_qkv_kernel(%arg0: memref<8x64xf32, #tpu.memory_space<vmem>>, %arg1: memref<1x64xf32, #tpu.memory_space<vmem>>, %arg2: memref<1x64xf32, #tpu.memory_space<vmem>>, %arg3: memref<64x192xbf16, #tpu.memory_space<vmem>>, %arg4: memref<1x192xf32, #tpu.memory_space<vmem>>, %arg5: memref<8x192xf32, #tpu.memory_space<vmem>>) attributes {dimension_semantics = [], scalar_prefetch = 0 : i64, scratch_operands = 0 : i64, tpu.core_type = #tpu.core_type<tc>} {
    %c0 = arith.constant 0 : index
    %c0_0 = arith.constant 0 : index
    %0 = vector.load %arg0[%c0, %c0_0] : memref<8x64xf32, #tpu.memory_space<vmem>>, vector<8x64xf32>
    %c0_1 = arith.constant 0 : index
    %c0_2 = arith.constant 0 : index
    %1 = vector.load %arg1[%c0_1, %c0_2] : memref<1x64xf32, #tpu.memory_space<vmem>>, vector<1x64xf32>
    %c0_3 = arith.constant 0 : index
    %c0_4 = arith.constant 0 : index
    %2 = vector.load %arg2[%c0_3, %c0_4] : memref<1x64xf32, #tpu.memory_space<vmem>>, vector<1x64xf32>
    %cst = arith.constant dense<0.000000e+00> : vector<8xf32>
    %3 = vector.multi_reduction <add>, %0, %cst [1] : vector<8x64xf32> to vector<8xf32>
    %4 = vector.shape_cast %3 : vector<8xf32> to vector<8x1xf32>
    %cst_5 = arith.constant 6.400000e+01 : f32
    %5 = vector.broadcast %cst_5 : f32 to vector<8x1xf32>
    %6 = arith.divf %4, %5 : vector<8x1xf32>
    %7 = vector.broadcast %6 : vector<8x1xf32> to vector<8x64xf32>
    %8 = arith.subf %0, %7 : vector<8x64xf32>
    %9 = arith.mulf %8, %8 : vector<8x64xf32>
    %cst_6 = arith.constant dense<0.000000e+00> : vector<8xf32>
    %10 = vector.multi_reduction <add>, %9, %cst_6 [1] : vector<8x64xf32> to vector<8xf32>
    %11 = vector.shape_cast %10 : vector<8xf32> to vector<8x1xf32>
    %cst_7 = arith.constant 6.400000e+01 : f32
    %12 = vector.broadcast %cst_7 : f32 to vector<8x1xf32>
    %13 = arith.divf %11, %12 : vector<8x1xf32>
    %14 = vector.broadcast %6 : vector<8x1xf32> to vector<8x64xf32>
    %15 = arith.subf %0, %14 : vector<8x64xf32>
    %cst_8 = arith.constant 9.99999974E-6 : f32
    %16 = vector.broadcast %cst_8 : f32 to vector<8x1xf32>
    %17 = arith.addf %13, %16 : vector<8x1xf32>
    %18 = math.rsqrt %17 : vector<8x1xf32>
    %19 = vector.broadcast %18 : vector<8x1xf32> to vector<8x64xf32>
    %20 = arith.mulf %15, %19 : vector<8x64xf32>
    %21 = vector.broadcast %1 : vector<1x64xf32> to vector<8x64xf32>
    %22 = arith.mulf %20, %21 : vector<8x64xf32>
    %23 = vector.broadcast %2 : vector<1x64xf32> to vector<8x64xf32>
    %24 = arith.addf %22, %23 : vector<8x64xf32>
    %c0_9 = arith.constant 0 : index
    %c0_10 = arith.constant 0 : index
    %25 = vector.load %arg3[%c0_9, %c0_10] : memref<64x192xbf16, #tpu.memory_space<vmem>>, vector<64x192xbf16>
    %26 = arith.truncf %24 : vector<8x64xf32> to vector<8x64xbf16>
    %cst_11 = arith.constant dense<0.000000e+00> : vector<8x192xf32>
    %27 = tpu.matmul %26, %25, %cst_11 {dimension_numbers = #tpu.dot_dimension_numbers<[1], [0], [0], [1], [0, 0, 1, 1], [], []>} : vector<8x64xbf16>, vector<64x192xbf16>, vector<8x192xf32> -> vector<8x192xf32>
    %c0_12 = arith.constant 0 : index
    %c0_13 = arith.constant 0 : index
    %28 = vector.load %arg4[%c0_12, %c0_13] : memref<1x192xf32, #tpu.memory_space<vmem>>, vector<1x192xf32>
    %29 = vector.broadcast %28 : vector<1x192xf32> to vector<8x192xf32>
    %30 = arith.addf %27, %29 : vector<8x192xf32>
    %c0_14 = arith.constant 0 : index
    %c0_15 = arith.constant 0 : index
    %31 = vector.load %arg5[%c0_14, %c0_15] : memref<8x192xf32, #tpu.memory_space<vmem>>, vector<8x192xf32>
    tpu.vector_store %arg5[%c0_14, %c0_15], %30 {strides = array<i32>} : memref<8x192xf32, #tpu.memory_space<vmem>>, vector<8x192xf32>,
    return
  }
}

module attributes {stable_mosaic.version = 11 : i64} {
  func.func @_attn_kernel(%arg0: memref<8x4x16xf32, #tpu.memory_space<vmem>>, %arg1: memref<8x4x16xf32, #tpu.memory_space<vmem>>, %arg2: memref<8x4x16xf32, #tpu.memory_space<vmem>>, %arg3: memref<4x4x4xf32, #tpu.memory_space<vmem>>, %arg4: memref<8x4x16xf32, #tpu.memory_space<vmem>>) attributes {dimension_semantics = [], scalar_prefetch = 0 : i64, scratch_operands = 0 : i64, tpu.core_type = #tpu.core_type<tc>} {
    %c0 = arith.constant 0 : index
    %c0_0 = arith.constant 0 : index
    %c0_1 = arith.constant 0 : index
    %0 = vector.load %arg0[%c0, %c0_0, %c0_1] : memref<8x4x16xf32, #tpu.memory_space<vmem>>, vector<8x4x16xf32>
    %1 = arith.truncf %0 : vector<8x4x16xf32> to vector<8x4x16xbf16>
    %c0_2 = arith.constant 0 : index
    %c0_3 = arith.constant 0 : index
    %c0_4 = arith.constant 0 : index
    %2 = vector.load %arg1[%c0_2, %c0_3, %c0_4] : memref<8x4x16xf32, #tpu.memory_space<vmem>>, vector<8x4x16xf32>
    %3 = arith.truncf %2 : vector<8x4x16xf32> to vector<8x4x16xbf16>
    %c0_5 = arith.constant 0 : index
    %c0_6 = arith.constant 0 : index
    %c0_7 = arith.constant 0 : index
    %4 = vector.load %arg2[%c0_5, %c0_6, %c0_7] : memref<8x4x16xf32, #tpu.memory_space<vmem>>, vector<8x4x16xf32>
    %5 = arith.truncf %4 : vector<8x4x16xf32> to vector<8x4x16xbf16>
    "tpu.trace_start"() <{level = 10 : i32, message = "gtd,gsd->gts"}> : () -> ()
    %cst = arith.constant dense<0.000000e+00> : vector<8x4x4xf32>
    %6 = tpu.matmul %1, %3, %cst {dimension_numbers = #tpu.dot_dimension_numbers<[2], [2], [1], [1], [0, 0, 0, 1, 1, 1], [0], [0]>} : vector<8x4x16xbf16>, vector<8x4x16xbf16>, vector<8x4x4xf32> -> vector<8x4x4xf32>
    "tpu.trace_stop"() : () -> ()
    %cst_8 = arith.constant 2.500000e-01 : f32
    %7 = vector.broadcast %cst_8 : f32 to vector<8x4x4xf32>
    %8 = arith.mulf %6, %7 : vector<8x4x4xf32>
    %9 = vector.shape_cast %8 : vector<8x4x4xf32> to vector<2x4x4x4xf32>
    %c0_9 = arith.constant 0 : index
    %c0_10 = arith.constant 0 : index
    %c0_11 = arith.constant 0 : index
    %10 = vector.load %arg3[%c0_9, %c0_10, %c0_11] : memref<4x4x4xf32, #tpu.memory_space<vmem>>, vector<4x4x4xf32>
    %11 = vector.shape_cast %10 : vector<4x4x4xf32> to vector<1x4x4x4xf32>
    %12 = vector.broadcast %11 : vector<1x4x4x4xf32> to vector<2x4x4x4xf32>
    %13 = arith.addf %9, %12 : vector<2x4x4x4xf32>
    %cst_12 = arith.constant dense<0xFF800000> : vector<2x4x4xf32>
    %14 = vector.multi_reduction <maximumf>, %13, %cst_12 [3] : vector<2x4x4x4xf32> to vector<2x4x4xf32>
    %15 = vector.shape_cast %14 : vector<2x4x4xf32> to vector<2x4x4x1xf32>
    %16 = vector.broadcast %15 : vector<2x4x4x1xf32> to vector<2x4x4x4xf32>
    %17 = arith.subf %13, %16 : vector<2x4x4x4xf32>
    %18 = math.exp %17 : vector<2x4x4x4xf32>
    %cst_13 = arith.constant dense<0.000000e+00> : vector<2x4x4xf32>
    %19 = vector.multi_reduction <add>, %18, %cst_13 [3] : vector<2x4x4x4xf32> to vector<2x4x4xf32>
    %20 = vector.shape_cast %19 : vector<2x4x4xf32> to vector<2x4x4x1xf32>
    %21 = tpu.reciprocal %20 {approx = true} : vector<2x4x4x1xf32> -> vector<2x4x4x1xf32>
    %22 = vector.broadcast %21 : vector<2x4x4x1xf32> to vector<2x4x4x4xf32>
    %23 = arith.mulf %18, %22 : vector<2x4x4x4xf32>
    %24 = vector.shape_cast %23 : vector<2x4x4x4xf32> to vector<8x4x4xf32>
    %25 = arith.truncf %24 : vector<8x4x4xf32> to vector<8x4x4xbf16>
    "tpu.trace_start"() <{level = 10 : i32, message = "gts,gsd->gtd"}> : () -> ()
    %cst_14 = arith.constant dense<0.000000e+00> : vector<8x4x16xf32>
    %26 = tpu.matmul %25, %5, %cst_14 {dimension_numbers = #tpu.dot_dimension_numbers<[2], [1], [1], [2], [0, 0, 0, 1, 1, 2], [0], [0]>} : vector<8x4x4xbf16>, vector<8x4x16xbf16>, vector<8x4x16xf32> -> vector<8x4x16xf32>
    "tpu.trace_stop"() : () -> ()
    %c0_15 = arith.constant 0 : index
    %c0_16 = arith.constant 0 : index
    %c0_17 = arith.constant 0 : index
    %27 = vector.load %arg4[%c0_15, %c0_16, %c0_17] : memref<8x4x16xf32, #tpu.memory_space<vmem>>, vector<8x4x16xf32>
    tpu.vector_store %arg4[%c0_15, %c0_16, %c0_17], %26 {strides = array<i32>} : memref<8x4x16xf32, #tpu.memory_space<vmem>>, vector<8x4x16xf32>,
    return
  }
}

module attributes {stable_mosaic.version = 11 : i64} {
  func.func @_proj_mlp_kernel(%arg0: memref<8x64xf32, #tpu.memory_space<vmem>>, %arg1: memref<8x64xf32, #tpu.memory_space<vmem>>, %arg2: memref<64x64xbf16, #tpu.memory_space<vmem>>, %arg3: memref<1x64xf32, #tpu.memory_space<vmem>>, %arg4: memref<1x64xf32, #tpu.memory_space<vmem>>, %arg5: memref<1x64xf32, #tpu.memory_space<vmem>>, %arg6: memref<64x256xbf16, #tpu.memory_space<vmem>>, %arg7: memref<1x256xf32, #tpu.memory_space<vmem>>, %arg8: memref<256x64xbf16, #tpu.memory_space<vmem>>, %arg9: memref<1x64xf32, #tpu.memory_space<vmem>>, %arg10: memref<8x64xf32, #tpu.memory_space<vmem>>) attributes {dimension_semantics = [], scalar_prefetch = 0 : i64, scratch_operands = 0 : i64, tpu.core_type = #tpu.core_type<tc>} {
    %c0 = arith.constant 0 : index
    %c0_0 = arith.constant 0 : index
    %0 = vector.load %arg0[%c0, %c0_0] : memref<8x64xf32, #tpu.memory_space<vmem>>, vector<8x64xf32>
    %c0_1 = arith.constant 0 : index
    %c0_2 = arith.constant 0 : index
    %1 = vector.load %arg1[%c0_1, %c0_2] : memref<8x64xf32, #tpu.memory_space<vmem>>, vector<8x64xf32>
    %c0_3 = arith.constant 0 : index
    %c0_4 = arith.constant 0 : index
    %2 = vector.load %arg2[%c0_3, %c0_4] : memref<64x64xbf16, #tpu.memory_space<vmem>>, vector<64x64xbf16>
    %3 = arith.truncf %1 : vector<8x64xf32> to vector<8x64xbf16>
    %cst = arith.constant dense<0.000000e+00> : vector<8x64xf32>
    %4 = tpu.matmul %3, %2, %cst {dimension_numbers = #tpu.dot_dimension_numbers<[1], [0], [0], [1], [0, 0, 1, 1], [], []>} : vector<8x64xbf16>, vector<64x64xbf16>, vector<8x64xf32> -> vector<8x64xf32>
    %5 = arith.addf %0, %4 : vector<8x64xf32>
    %c0_5 = arith.constant 0 : index
    %c0_6 = arith.constant 0 : index
    %6 = vector.load %arg3[%c0_5, %c0_6] : memref<1x64xf32, #tpu.memory_space<vmem>>, vector<1x64xf32>
    %7 = vector.broadcast %6 : vector<1x64xf32> to vector<8x64xf32>
    %8 = arith.addf %5, %7 : vector<8x64xf32>
    %c0_7 = arith.constant 0 : index
    %c0_8 = arith.constant 0 : index
    %9 = vector.load %arg4[%c0_7, %c0_8] : memref<1x64xf32, #tpu.memory_space<vmem>>, vector<1x64xf32>
    %c0_9 = arith.constant 0 : index
    %c0_10 = arith.constant 0 : index
    %10 = vector.load %arg5[%c0_9, %c0_10] : memref<1x64xf32, #tpu.memory_space<vmem>>, vector<1x64xf32>
    %cst_11 = arith.constant dense<0.000000e+00> : vector<8xf32>
    %11 = vector.multi_reduction <add>, %8, %cst_11 [1] : vector<8x64xf32> to vector<8xf32>
    %12 = vector.shape_cast %11 : vector<8xf32> to vector<8x1xf32>
    %cst_12 = arith.constant 6.400000e+01 : f32
    %13 = vector.broadcast %cst_12 : f32 to vector<8x1xf32>
    %14 = arith.divf %12, %13 : vector<8x1xf32>
    %15 = vector.broadcast %14 : vector<8x1xf32> to vector<8x64xf32>
    %16 = arith.subf %8, %15 : vector<8x64xf32>
    %17 = arith.mulf %16, %16 : vector<8x64xf32>
    %cst_13 = arith.constant dense<0.000000e+00> : vector<8xf32>
    %18 = vector.multi_reduction <add>, %17, %cst_13 [1] : vector<8x64xf32> to vector<8xf32>
    %19 = vector.shape_cast %18 : vector<8xf32> to vector<8x1xf32>
    %cst_14 = arith.constant 6.400000e+01 : f32
    %20 = vector.broadcast %cst_14 : f32 to vector<8x1xf32>
    %21 = arith.divf %19, %20 : vector<8x1xf32>
    %22 = vector.broadcast %14 : vector<8x1xf32> to vector<8x64xf32>
    %23 = arith.subf %8, %22 : vector<8x64xf32>
    %cst_15 = arith.constant 9.99999974E-6 : f32
    %24 = vector.broadcast %cst_15 : f32 to vector<8x1xf32>
    %25 = arith.addf %21, %24 : vector<8x1xf32>
    %26 = math.rsqrt %25 : vector<8x1xf32>
    %27 = vector.broadcast %26 : vector<8x1xf32> to vector<8x64xf32>
    %28 = arith.mulf %23, %27 : vector<8x64xf32>
    %29 = vector.broadcast %9 : vector<1x64xf32> to vector<8x64xf32>
    %30 = arith.mulf %28, %29 : vector<8x64xf32>
    %31 = vector.broadcast %10 : vector<1x64xf32> to vector<8x64xf32>
    %32 = arith.addf %30, %31 : vector<8x64xf32>
    %c0_16 = arith.constant 0 : index
    %c0_17 = arith.constant 0 : index
    %33 = vector.load %arg6[%c0_16, %c0_17] : memref<64x256xbf16, #tpu.memory_space<vmem>>, vector<64x256xbf16>
    %34 = arith.truncf %32 : vector<8x64xf32> to vector<8x64xbf16>
    %cst_18 = arith.constant dense<0.000000e+00> : vector<8x256xf32>
    %35 = tpu.matmul %34, %33, %cst_18 {dimension_numbers = #tpu.dot_dimension_numbers<[1], [0], [0], [1], [0, 0, 1, 1], [], []>} : vector<8x64xbf16>, vector<64x256xbf16>, vector<8x256xf32> -> vector<8x256xf32>
    %c0_19 = arith.constant 0 : index
    %c0_20 = arith.constant 0 : index
    %36 = vector.load %arg7[%c0_19, %c0_20] : memref<1x256xf32, #tpu.memory_space<vmem>>, vector<1x256xf32>
    %37 = vector.broadcast %36 : vector<1x256xf32> to vector<8x256xf32>
    %38 = arith.addf %35, %37 : vector<8x256xf32>
    %39 = arith.mulf %38, %38 : vector<8x256xf32>
    %40 = arith.mulf %38, %39 : vector<8x256xf32>
    %cst_21 = arith.constant 4.471500e-02 : f32
    %41 = vector.broadcast %cst_21 : f32 to vector<8x256xf32>
    %42 = arith.mulf %41, %40 : vector<8x256xf32>
    %43 = arith.addf %38, %42 : vector<8x256xf32>
    %cst_22 = arith.constant 0.797884583 : f32
    %44 = vector.broadcast %cst_22 : f32 to vector<8x256xf32>
    %45 = arith.mulf %44, %43 : vector<8x256xf32>
    %46 = math.tanh %45 : vector<8x256xf32>
    %cst_23 = arith.constant 1.000000e+00 : f32
    %47 = vector.broadcast %cst_23 : f32 to vector<8x256xf32>
    %48 = arith.addf %47, %46 : vector<8x256xf32>
    %cst_24 = arith.constant 5.000000e-01 : f32
    %49 = vector.broadcast %cst_24 : f32 to vector<8x256xf32>
    %50 = arith.mulf %49, %48 : vector<8x256xf32>
    %51 = arith.mulf %38, %50 : vector<8x256xf32>
    %c0_25 = arith.constant 0 : index
    %c0_26 = arith.constant 0 : index
    %52 = vector.load %arg8[%c0_25, %c0_26] : memref<256x64xbf16, #tpu.memory_space<vmem>>, vector<256x64xbf16>
    %53 = arith.truncf %51 : vector<8x256xf32> to vector<8x256xbf16>
    %cst_27 = arith.constant dense<0.000000e+00> : vector<8x64xf32>
    %54 = tpu.matmul %53, %52, %cst_27 {dimension_numbers = #tpu.dot_dimension_numbers<[1], [0], [0], [1], [0, 0, 1, 1], [], []>} : vector<8x256xbf16>, vector<256x64xbf16>, vector<8x64xf32> -> vector<8x64xf32>
    %55 = arith.addf %8, %54 : vector<8x64xf32>
    %c0_28 = arith.constant 0 : index
    %c0_29 = arith.constant 0 : index
    %56 = vector.load %arg9[%c0_28, %c0_29] : memref<1x64xf32, #tpu.memory_space<vmem>>, vector<1x64xf32>
    %57 = vector.broadcast %56 : vector<1x64xf32> to vector<8x64xf32>
    %58 = arith.addf %55, %57 : vector<8x64xf32>
    %c0_30 = arith.constant 0 : index
    %c0_31 = arith.constant 0 : index
    %59 = vector.load %arg10[%c0_30, %c0_31] : memref<8x64xf32, #tpu.memory_space<vmem>>, vector<8x64xf32>
    tpu.vector_store %arg10[%c0_30, %c0_31], %58 {strides = array<i32>} : memref<8x64xf32, #tpu.memory_space<vmem>>, vector<8x64xf32>,
    return
  }
}

module attributes {stable_mosaic.version = 11 : i64} {
  func.func @_ln_qkv_kernel(%arg0: memref<8x64xf32, #tpu.memory_space<vmem>>, %arg1: memref<1x64xf32, #tpu.memory_space<vmem>>, %arg2: memref<1x64xf32, #tpu.memory_space<vmem>>, %arg3: memref<64x192xbf16, #tpu.memory_space<vmem>>, %arg4: memref<1x192xf32, #tpu.memory_space<vmem>>, %arg5: memref<8x192xf32, #tpu.memory_space<vmem>>) attributes {dimension_semantics = [], scalar_prefetch = 0 : i64, scratch_operands = 0 : i64, tpu.core_type = #tpu.core_type<tc>} {
    %c0 = arith.constant 0 : index
    %c0_0 = arith.constant 0 : index
    %0 = vector.load %arg0[%c0, %c0_0] : memref<8x64xf32, #tpu.memory_space<vmem>>, vector<8x64xf32>
    %c0_1 = arith.constant 0 : index
    %c0_2 = arith.constant 0 : index
    %1 = vector.load %arg1[%c0_1, %c0_2] : memref<1x64xf32, #tpu.memory_space<vmem>>, vector<1x64xf32>
    %c0_3 = arith.constant 0 : index
    %c0_4 = arith.constant 0 : index
    %2 = vector.load %arg2[%c0_3, %c0_4] : memref<1x64xf32, #tpu.memory_space<vmem>>, vector<1x64xf32>
    %cst = arith.constant dense<0.000000e+00> : vector<8xf32>
    %3 = vector.multi_reduction <add>, %0, %cst [1] : vector<8x64xf32> to vector<8xf32>
    %4 = vector.shape_cast %3 : vector<8xf32> to vector<8x1xf32>
    %cst_5 = arith.constant 6.400000e+01 : f32
    %5 = vector.broadcast %cst_5 : f32 to vector<8x1xf32>
    %6 = arith.divf %4, %5 : vector<8x1xf32>
    %7 = vector.broadcast %6 : vector<8x1xf32> to vector<8x64xf32>
    %8 = arith.subf %0, %7 : vector<8x64xf32>
    %9 = arith.mulf %8, %8 : vector<8x64xf32>
    %cst_6 = arith.constant dense<0.000000e+00> : vector<8xf32>
    %10 = vector.multi_reduction <add>, %9, %cst_6 [1] : vector<8x64xf32> to vector<8xf32>
    %11 = vector.shape_cast %10 : vector<8xf32> to vector<8x1xf32>
    %cst_7 = arith.constant 6.400000e+01 : f32
    %12 = vector.broadcast %cst_7 : f32 to vector<8x1xf32>
    %13 = arith.divf %11, %12 : vector<8x1xf32>
    %14 = vector.broadcast %6 : vector<8x1xf32> to vector<8x64xf32>
    %15 = arith.subf %0, %14 : vector<8x64xf32>
    %cst_8 = arith.constant 9.99999974E-6 : f32
    %16 = vector.broadcast %cst_8 : f32 to vector<8x1xf32>
    %17 = arith.addf %13, %16 : vector<8x1xf32>
    %18 = math.rsqrt %17 : vector<8x1xf32>
    %19 = vector.broadcast %18 : vector<8x1xf32> to vector<8x64xf32>
    %20 = arith.mulf %15, %19 : vector<8x64xf32>
    %21 = vector.broadcast %1 : vector<1x64xf32> to vector<8x64xf32>
    %22 = arith.mulf %20, %21 : vector<8x64xf32>
    %23 = vector.broadcast %2 : vector<1x64xf32> to vector<8x64xf32>
    %24 = arith.addf %22, %23 : vector<8x64xf32>
    %c0_9 = arith.constant 0 : index
    %c0_10 = arith.constant 0 : index
    %25 = vector.load %arg3[%c0_9, %c0_10] : memref<64x192xbf16, #tpu.memory_space<vmem>>, vector<64x192xbf16>
    %26 = arith.truncf %24 : vector<8x64xf32> to vector<8x64xbf16>
    %cst_11 = arith.constant dense<0.000000e+00> : vector<8x192xf32>
    %27 = tpu.matmul %26, %25, %cst_11 {dimension_numbers = #tpu.dot_dimension_numbers<[1], [0], [0], [1], [0, 0, 1, 1], [], []>} : vector<8x64xbf16>, vector<64x192xbf16>, vector<8x192xf32> -> vector<8x192xf32>
    %c0_12 = arith.constant 0 : index
    %c0_13 = arith.constant 0 : index
    %28 = vector.load %arg4[%c0_12, %c0_13] : memref<1x192xf32, #tpu.memory_space<vmem>>, vector<1x192xf32>
    %29 = vector.broadcast %28 : vector<1x192xf32> to vector<8x192xf32>
    %30 = arith.addf %27, %29 : vector<8x192xf32>
    %c0_14 = arith.constant 0 : index
    %c0_15 = arith.constant 0 : index
    %31 = vector.load %arg5[%c0_14, %c0_15] : memref<8x192xf32, #tpu.memory_space<vmem>>, vector<8x192xf32>
    tpu.vector_store %arg5[%c0_14, %c0_15], %30 {strides = array<i32>} : memref<8x192xf32, #tpu.memory_space<vmem>>, vector<8x192xf32>,
    return
  }
}

module attributes {stable_mosaic.version = 11 : i64} {
  func.func @_proj_mlp_kernel(%arg0: memref<8x64xf32, #tpu.memory_space<vmem>>, %arg1: memref<8x64xf32, #tpu.memory_space<vmem>>, %arg2: memref<64x64xbf16, #tpu.memory_space<vmem>>, %arg3: memref<1x64xf32, #tpu.memory_space<vmem>>, %arg4: memref<1x64xf32, #tpu.memory_space<vmem>>, %arg5: memref<1x64xf32, #tpu.memory_space<vmem>>, %arg6: memref<64x256xbf16, #tpu.memory_space<vmem>>, %arg7: memref<1x256xf32, #tpu.memory_space<vmem>>, %arg8: memref<256x64xbf16, #tpu.memory_space<vmem>>, %arg9: memref<1x64xf32, #tpu.memory_space<vmem>>, %arg10: memref<8x64xf32, #tpu.memory_space<vmem>>) attributes {dimension_semantics = [], scalar_prefetch = 0 : i64, scratch_operands = 0 : i64, tpu.core_type = #tpu.core_type<tc>} {
    %c0 = arith.constant 0 : index
    %c0_0 = arith.constant 0 : index
    %0 = vector.load %arg0[%c0, %c0_0] : memref<8x64xf32, #tpu.memory_space<vmem>>, vector<8x64xf32>
    %c0_1 = arith.constant 0 : index
    %c0_2 = arith.constant 0 : index
    %1 = vector.load %arg1[%c0_1, %c0_2] : memref<8x64xf32, #tpu.memory_space<vmem>>, vector<8x64xf32>
    %c0_3 = arith.constant 0 : index
    %c0_4 = arith.constant 0 : index
    %2 = vector.load %arg2[%c0_3, %c0_4] : memref<64x64xbf16, #tpu.memory_space<vmem>>, vector<64x64xbf16>
    %3 = arith.truncf %1 : vector<8x64xf32> to vector<8x64xbf16>
    %cst = arith.constant dense<0.000000e+00> : vector<8x64xf32>
    %4 = tpu.matmul %3, %2, %cst {dimension_numbers = #tpu.dot_dimension_numbers<[1], [0], [0], [1], [0, 0, 1, 1], [], []>} : vector<8x64xbf16>, vector<64x64xbf16>, vector<8x64xf32> -> vector<8x64xf32>
    %5 = arith.addf %0, %4 : vector<8x64xf32>
    %c0_5 = arith.constant 0 : index
    %c0_6 = arith.constant 0 : index
    %6 = vector.load %arg3[%c0_5, %c0_6] : memref<1x64xf32, #tpu.memory_space<vmem>>, vector<1x64xf32>
    %7 = vector.broadcast %6 : vector<1x64xf32> to vector<8x64xf32>
    %8 = arith.addf %5, %7 : vector<8x64xf32>
    %c0_7 = arith.constant 0 : index
    %c0_8 = arith.constant 0 : index
    %9 = vector.load %arg4[%c0_7, %c0_8] : memref<1x64xf32, #tpu.memory_space<vmem>>, vector<1x64xf32>
    %c0_9 = arith.constant 0 : index
    %c0_10 = arith.constant 0 : index
    %10 = vector.load %arg5[%c0_9, %c0_10] : memref<1x64xf32, #tpu.memory_space<vmem>>, vector<1x64xf32>
    %cst_11 = arith.constant dense<0.000000e+00> : vector<8xf32>
    %11 = vector.multi_reduction <add>, %8, %cst_11 [1] : vector<8x64xf32> to vector<8xf32>
    %12 = vector.shape_cast %11 : vector<8xf32> to vector<8x1xf32>
    %cst_12 = arith.constant 6.400000e+01 : f32
    %13 = vector.broadcast %cst_12 : f32 to vector<8x1xf32>
    %14 = arith.divf %12, %13 : vector<8x1xf32>
    %15 = vector.broadcast %14 : vector<8x1xf32> to vector<8x64xf32>
    %16 = arith.subf %8, %15 : vector<8x64xf32>
    %17 = arith.mulf %16, %16 : vector<8x64xf32>
    %cst_13 = arith.constant dense<0.000000e+00> : vector<8xf32>
    %18 = vector.multi_reduction <add>, %17, %cst_13 [1] : vector<8x64xf32> to vector<8xf32>
    %19 = vector.shape_cast %18 : vector<8xf32> to vector<8x1xf32>
    %cst_14 = arith.constant 6.400000e+01 : f32
    %20 = vector.broadcast %cst_14 : f32 to vector<8x1xf32>
    %21 = arith.divf %19, %20 : vector<8x1xf32>
    %22 = vector.broadcast %14 : vector<8x1xf32> to vector<8x64xf32>
    %23 = arith.subf %8, %22 : vector<8x64xf32>
    %cst_15 = arith.constant 9.99999974E-6 : f32
    %24 = vector.broadcast %cst_15 : f32 to vector<8x1xf32>
    %25 = arith.addf %21, %24 : vector<8x1xf32>
    %26 = math.rsqrt %25 : vector<8x1xf32>
    %27 = vector.broadcast %26 : vector<8x1xf32> to vector<8x64xf32>
    %28 = arith.mulf %23, %27 : vector<8x64xf32>
    %29 = vector.broadcast %9 : vector<1x64xf32> to vector<8x64xf32>
    %30 = arith.mulf %28, %29 : vector<8x64xf32>
    %31 = vector.broadcast %10 : vector<1x64xf32> to vector<8x64xf32>
    %32 = arith.addf %30, %31 : vector<8x64xf32>
    %c0_16 = arith.constant 0 : index
    %c0_17 = arith.constant 0 : index
    %33 = vector.load %arg6[%c0_16, %c0_17] : memref<64x256xbf16, #tpu.memory_space<vmem>>, vector<64x256xbf16>
    %34 = arith.truncf %32 : vector<8x64xf32> to vector<8x64xbf16>
    %cst_18 = arith.constant dense<0.000000e+00> : vector<8x256xf32>
    %35 = tpu.matmul %34, %33, %cst_18 {dimension_numbers = #tpu.dot_dimension_numbers<[1], [0], [0], [1], [0, 0, 1, 1], [], []>} : vector<8x64xbf16>, vector<64x256xbf16>, vector<8x256xf32> -> vector<8x256xf32>
    %c0_19 = arith.constant 0 : index
    %c0_20 = arith.constant 0 : index
    %36 = vector.load %arg7[%c0_19, %c0_20] : memref<1x256xf32, #tpu.memory_space<vmem>>, vector<1x256xf32>
    %37 = vector.broadcast %36 : vector<1x256xf32> to vector<8x256xf32>
    %38 = arith.addf %35, %37 : vector<8x256xf32>
    %39 = arith.mulf %38, %38 : vector<8x256xf32>
    %40 = arith.mulf %38, %39 : vector<8x256xf32>
    %cst_21 = arith.constant 4.471500e-02 : f32
    %41 = vector.broadcast %cst_21 : f32 to vector<8x256xf32>
    %42 = arith.mulf %41, %40 : vector<8x256xf32>
    %43 = arith.addf %38, %42 : vector<8x256xf32>
    %cst_22 = arith.constant 0.797884583 : f32
    %44 = vector.broadcast %cst_22 : f32 to vector<8x256xf32>
    %45 = arith.mulf %44, %43 : vector<8x256xf32>
    %46 = math.tanh %45 : vector<8x256xf32>
    %cst_23 = arith.constant 1.000000e+00 : f32
    %47 = vector.broadcast %cst_23 : f32 to vector<8x256xf32>
    %48 = arith.addf %47, %46 : vector<8x256xf32>
    %cst_24 = arith.constant 5.000000e-01 : f32
    %49 = vector.broadcast %cst_24 : f32 to vector<8x256xf32>
    %50 = arith.mulf %49, %48 : vector<8x256xf32>
    %51 = arith.mulf %38, %50 : vector<8x256xf32>
    %c0_25 = arith.constant 0 : index
    %c0_26 = arith.constant 0 : index
    %52 = vector.load %arg8[%c0_25, %c0_26] : memref<256x64xbf16, #tpu.memory_space<vmem>>, vector<256x64xbf16>
    %53 = arith.truncf %51 : vector<8x256xf32> to vector<8x256xbf16>
    %cst_27 = arith.constant dense<0.000000e+00> : vector<8x64xf32>
    %54 = tpu.matmul %53, %52, %cst_27 {dimension_numbers = #tpu.dot_dimension_numbers<[1], [0], [0], [1], [0, 0, 1, 1], [], []>} : vector<8x256xbf16>, vector<256x64xbf16>, vector<8x64xf32> -> vector<8x64xf32>
    %55 = arith.addf %8, %54 : vector<8x64xf32>
    %c0_28 = arith.constant 0 : index
    %c0_29 = arith.constant 0 : index
    %56 = vector.load %arg9[%c0_28, %c0_29] : memref<1x64xf32, #tpu.memory_space<vmem>>, vector<1x64xf32>
    %57 = vector.broadcast %56 : vector<1x64xf32> to vector<8x64xf32>
    %58 = arith.addf %55, %57 : vector<8x64xf32>
    %c0_30 = arith.constant 0 : index
    %c0_31 = arith.constant 0 : index
    %59 = vector.load %arg10[%c0_30, %c0_31] : memref<8x64xf32, #tpu.memory_space<vmem>>, vector<8x64xf32>
    tpu.vector_store %arg10[%c0_30, %c0_31], %58 {strides = array<i32>} : memref<8x64xf32, #tpu.memory_space<vmem>>, vector<8x64xf32>,
    return
  }
}

module attributes {stable_mosaic.version = 11 : i64} {
  func.func @_tail_kernel(%arg0: memref<2x4x64xf32, #tpu.memory_space<vmem>>, %arg1: memref<1x64xf32, #tpu.memory_space<vmem>>, %arg2: memref<1x64xf32, #tpu.memory_space<vmem>>, %arg3: memref<64x1024xbf16, #tpu.memory_space<vmem>>, %arg4: memref<1x1024xf32, #tpu.memory_space<vmem>>, %arg5: memref<1024x1024xbf16, #tpu.memory_space<vmem>>, %arg6: memref<1x1024xf32, #tpu.memory_space<vmem>>, %arg7: memref<1024x128xbf16, #tpu.memory_space<vmem>>, %arg8: memref<1x128xf32, #tpu.memory_space<vmem>>, %arg9: memref<2x128xf32, #tpu.memory_space<vmem>>) attributes {dimension_semantics = [], scalar_prefetch = 0 : i64, scratch_operands = 0 : i64, tpu.core_type = #tpu.core_type<tc>} {
    %c0 = arith.constant 0 : index
    %c0_0 = arith.constant 0 : index
    %c0_1 = arith.constant 0 : index
    %0 = vector.load %arg0[%c0, %c0_0, %c0_1] : memref<2x4x64xf32, #tpu.memory_space<vmem>>, vector<2x4x64xf32>
    %c0_2 = arith.constant 0 : index
    %c0_3 = arith.constant 0 : index
    %1 = vector.load %arg1[%c0_2, %c0_3] : memref<1x64xf32, #tpu.memory_space<vmem>>, vector<1x64xf32>
    %c0_4 = arith.constant 0 : index
    %c0_5 = arith.constant 0 : index
    %2 = vector.load %arg2[%c0_4, %c0_5] : memref<1x64xf32, #tpu.memory_space<vmem>>, vector<1x64xf32>
    %cst = arith.constant dense<0.000000e+00> : vector<2x4xf32>
    %3 = vector.multi_reduction <add>, %0, %cst [2] : vector<2x4x64xf32> to vector<2x4xf32>
    %4 = vector.shape_cast %3 : vector<2x4xf32> to vector<2x4x1xf32>
    %cst_6 = arith.constant 6.400000e+01 : f32
    %5 = vector.broadcast %cst_6 : f32 to vector<2x4x1xf32>
    %6 = arith.divf %4, %5 : vector<2x4x1xf32>
    %7 = vector.broadcast %6 : vector<2x4x1xf32> to vector<2x4x64xf32>
    %8 = arith.subf %0, %7 : vector<2x4x64xf32>
    %9 = arith.mulf %8, %8 : vector<2x4x64xf32>
    %cst_7 = arith.constant dense<0.000000e+00> : vector<2x4xf32>
    %10 = vector.multi_reduction <add>, %9, %cst_7 [2] : vector<2x4x64xf32> to vector<2x4xf32>
    %11 = vector.shape_cast %10 : vector<2x4xf32> to vector<2x4x1xf32>
    %cst_8 = arith.constant 6.400000e+01 : f32
    %12 = vector.broadcast %cst_8 : f32 to vector<2x4x1xf32>
    %13 = arith.divf %11, %12 : vector<2x4x1xf32>
    %14 = vector.broadcast %6 : vector<2x4x1xf32> to vector<2x4x64xf32>
    %15 = arith.subf %0, %14 : vector<2x4x64xf32>
    %cst_9 = arith.constant 9.99999974E-6 : f32
    %16 = vector.broadcast %cst_9 : f32 to vector<2x4x1xf32>
    %17 = arith.addf %13, %16 : vector<2x4x1xf32>
    %18 = math.rsqrt %17 : vector<2x4x1xf32>
    %19 = vector.broadcast %18 : vector<2x4x1xf32> to vector<2x4x64xf32>
    %20 = arith.mulf %15, %19 : vector<2x4x64xf32>
    %21 = vector.shape_cast %1 : vector<1x64xf32> to vector<1x1x64xf32>
    %22 = vector.broadcast %21 : vector<1x1x64xf32> to vector<2x4x64xf32>
    %23 = arith.mulf %20, %22 : vector<2x4x64xf32>
    %24 = vector.shape_cast %2 : vector<1x64xf32> to vector<1x1x64xf32>
    %25 = vector.broadcast %24 : vector<1x1x64xf32> to vector<2x4x64xf32>
    %26 = arith.addf %23, %25 : vector<2x4x64xf32>
    %cst_10 = arith.constant dense<0.000000e+00> : vector<2x64xf32>
    %27 = vector.multi_reduction <add>, %26, %cst_10 [1] : vector<2x4x64xf32> to vector<2x64xf32>
    %cst_11 = arith.constant 4.000000e+00 : f32
    %28 = vector.broadcast %cst_11 : f32 to vector<2x64xf32>
    %29 = arith.divf %27, %28 : vector<2x64xf32>
    %c0_12 = arith.constant 0 : index
    %c0_13 = arith.constant 0 : index
    %30 = vector.load %arg3[%c0_12, %c0_13] : memref<64x1024xbf16, #tpu.memory_space<vmem>>, vector<64x1024xbf16>
    %31 = arith.truncf %29 : vector<2x64xf32> to vector<2x64xbf16>
    %cst_14 = arith.constant dense<0.000000e+00> : vector<2x1024xf32>
    %32 = tpu.matmul %31, %30, %cst_14 {dimension_numbers = #tpu.dot_dimension_numbers<[1], [0], [0], [1], [0, 0, 1, 1], [], []>} : vector<2x64xbf16>, vector<64x1024xbf16>, vector<2x1024xf32> -> vector<2x1024xf32>
    %c0_15 = arith.constant 0 : index
    %c0_16 = arith.constant 0 : index
    %33 = vector.load %arg4[%c0_15, %c0_16] : memref<1x1024xf32, #tpu.memory_space<vmem>>, vector<1x1024xf32>
    %34 = vector.broadcast %33 : vector<1x1024xf32> to vector<2x1024xf32>
    %35 = arith.addf %32, %34 : vector<2x1024xf32>
    %c0_17 = arith.constant 0 : index
    %c0_18 = arith.constant 0 : index
    %36 = vector.load %arg5[%c0_17, %c0_18] : memref<1024x1024xbf16, #tpu.memory_space<vmem>>, vector<1024x1024xbf16>
    %37 = arith.truncf %35 : vector<2x1024xf32> to vector<2x1024xbf16>
    %cst_19 = arith.constant dense<0.000000e+00> : vector<2x1024xf32>
    %38 = tpu.matmul %37, %36, %cst_19 {dimension_numbers = #tpu.dot_dimension_numbers<[1], [0], [0], [1], [0, 0, 1, 1], [], []>} : vector<2x1024xbf16>, vector<1024x1024xbf16>, vector<2x1024xf32> -> vector<2x1024xf32>
    %c0_20 = arith.constant 0 : index
    %c0_21 = arith.constant 0 : index
    %39 = vector.load %arg6[%c0_20, %c0_21] : memref<1x1024xf32, #tpu.memory_space<vmem>>, vector<1x1024xf32>
    %40 = vector.broadcast %39 : vector<1x1024xf32> to vector<2x1024xf32>
    %41 = arith.addf %38, %40 : vector<2x1024xf32>
    %cst_22 = arith.constant 0.000000e+00 : f32
    %42 = vector.broadcast %cst_22 : f32 to vector<2x1024xf32>
    %43 = arith.cmpf oge, %41, %42 : vector<2x1024xf32>
    %cst_23 = arith.constant 0.00999999977 : f32
    %44 = vector.broadcast %cst_23 : f32 to vector<2x1024xf32>
    %45 = arith.mulf %44, %41 : vector<2x1024xf32>
    %46 = arith.select %43, %41, %45 : vector<2x1024xi1>, vector<2x1024xf32>
    %c0_24 = arith.constant 0 : index
    %c0_25 = arith.constant 0 : index
    %47 = vector.load %arg7[%c0_24, %c0_25] : memref<1024x128xbf16, #tpu.memory_space<vmem>>, vector<1024x128xbf16>
    %48 = arith.truncf %46 : vector<2x1024xf32> to vector<2x1024xbf16>
    %cst_26 = arith.constant dense<0.000000e+00> : vector<2x128xf32>
    %49 = tpu.matmul %48, %47, %cst_26 {dimension_numbers = #tpu.dot_dimension_numbers<[1], [0], [0], [1], [0, 0, 1, 1], [], []>} : vector<2x1024xbf16>, vector<1024x128xbf16>, vector<2x128xf32> -> vector<2x128xf32>
    %c0_27 = arith.constant 0 : index
    %c0_28 = arith.constant 0 : index
    %50 = vector.load %arg8[%c0_27, %c0_28] : memref<1x128xf32, #tpu.memory_space<vmem>>, vector<1x128xf32>
    %51 = vector.broadcast %50 : vector<1x128xf32> to vector<2x128xf32>
    %52 = arith.addf %49, %51 : vector<2x128xf32>
    %c0_29 = arith.constant 0 : index
    %c0_30 = arith.constant 0 : index
    %53 = vector.load %arg9[%c0_29, %c0_30] : memref<2x128xf32, #tpu.memory_space<vmem>>, vector<2x128xf32>
    tpu.vector_store %arg9[%c0_29, %c0_30], %52 {strides = array<i32>} : memref<2x128xf32, #tpu.memory_space<vmem>>, vector<2x128xf32>,
    return
  }
}

</mosaic_0001>

<llo_original>
// kernel: forward.16
$region0: #{forward.16}
  #allocation0 [shape = 'u32[]', space=smem, size = 0x4, offset = 0x4, fixed_abs, tag = 'smem constant byte address 0x4 - core index']
  #allocation1 [shape = 'u32[144,128]{1,0:T(1,128)}', space=vmem, size = 0x12000, scoped, tag = 'internal scratch']
  %s0 = inlined_call_operand.vmem [shape: f32[32,32], index: 0, kind: input, shape index: {}]
  %s1 = inlined_call_operand.hbm [shape: f32[1,32], index: 1, kind: input, shape index: {}]
  %s2 = inlined_call_operand.hbm [shape: f32[1,32], index: 2, kind: input, shape index: {}]
  %s3 = inlined_call_operand.hbm [shape: bf16[32,96], index: 3, kind: input, shape index: {}]
  %s4 = inlined_call_operand.hbm [shape: f32[1,96], index: 4, kind: input, shape index: {}]
  %s5 = inlined_call_operand.vmem [shape: f32[32,96], index: 5, kind: output, shape index: {}]
  %s6 = sld [smem:[#allocation0]]
  $region46: #{forward.16} parent=0
    _
  %s8 = ssub.s32 1, %s6
  %s9 = scalar_select 0, %s8, %s6
  $region1: #{forward.16} parent=0
    #allocation2 [shape = 'u8[512]{0}', space=vmem, size = 0x400, scoped, tag = 'input window, operand 1, single buffered']
    #allocation3 [shape = 's32[1]{0}', space=sflag, size = 0x4, scoped, tag = 'scoped memory for forward.16']
    #allocation4 [shape = 'u8[512]{0}', space=vmem, size = 0x400, scoped, tag = 'input window, operand 2, single buffered']
    #allocation5 [shape = 's32[1]{0}', space=sflag, size = 0x4, scoped, tag = 'scoped memory for forward.16']
    #allocation6 [shape = 'u8[8192]{0}', space=vmem, size = 0x2000, scoped, tag = 'input window, operand 3, single buffered']
    #allocation7 [shape = 'u8[512]{0}', space=vmem, size = 0x400, scoped, tag = 'input window, operand 4, single buffered']
    #allocation8 [shape = 's32[1]{0}', space=sflag, size = 0x4, scoped, tag = 'scoped memory for forward.16']
    %10 = vsyncpa [#allocation3], 0
    %11 = vsyncpa [#allocation5], 0
    %12 = vsyncpa [#allocation8], 0
    // Predicated region
    $region2: #{forward.16} parent=1 // pred_check
      _
    $region3: #{forward.16} parent=1 // pred_check_branch
      %14 = sbr.rel (0) target = $region5
    $region4: #{forward.16} parent=1 // pred_region
      _
    $region5: #{forward.16} parent=1 // pred_fallthru
      _
    // Predicated region
    $region6: #{forward.16} parent=1 // pred_check
      _
    $region7: #{forward.16} parent=1 // pred_check_branch
      %16 = sbr.rel (0) target = $region9
    $region8: #{forward.16} parent=1 // pred_region
      %s18 = ssub.s32 16, 16
      %19 = vsyncadd [#allocation3], %s18
      %s21 = sshll.u32 [#allocation2], 4
      %s22 = int_to_ptr.vmem [resolvable:$true] %s21
      %24 = dma.hbm_to_vmem [thread:$0]  %s1, 16, %s22, [#allocation3]
    $region9: #{forward.16} parent=1 // pred_fallthru
      _
    // Predicated region
    $region10: #{forward.16} parent=1 // pred_check
      _
    $region11: #{forward.16} parent=1 // pred_check_branch
      %26 = sbr.rel (0) target = $region13
    $region12: #{forward.16} parent=1 // pred_region
      %s28 = ssub.s32 16, 16
      %29 = vsyncadd [#allocation5], %s28
      %s31 = sshll.u32 [#allocation4], 4
      %s32 = int_to_ptr.vmem [resolvable:$true] %s31
      %34 = dma.hbm_to_vmem [thread:$0]  %s2, 16, %s32, [#allocation5]
    $region13: #{forward.16} parent=1 // pred_fallthru
      _
    // Predicated region
    $region14: #{forward.16} parent=1 // pred_check
      _
    $region15: #{forward.16} parent=1 // pred_check_branch
      %36 = sbr.rel (0) target = $region17
    $region16: #{forward.16} parent=1 // pred_region
      %s38 = ssub.s32 256, 256
      %39 = vsyncadd [#allocation5], %s38
      %s40 = sshll.u32 [#allocation6], 4
      %s41 = int_to_ptr.vmem [resolvable:$true] %s40
      %46 = dma.hbm_to_vmem [thread:$0]  %s3, 256, %s41, [#allocation5], 64, 64, 4
    $region17: #{forward.16} parent=1 // pred_fallthru
      _
    // Predicated region
    $region18: #{forward.16} parent=1 // pred_check
      _
    $region19: #{forward.16} parent=1 // pred_check_branch
      %48 = sbr.rel (0) target = $region21
    $region20: #{forward.16} parent=1 // pred_region
      %s50 = ssub.s32 16, 16
      %51 = vsyncadd [#allocation8], %s50
      %s53 = sshll.u32 [#allocation7], 4
      %s54 = int_to_ptr.vmem [resolvable:$true] %s53
      %56 = dma.hbm_to_vmem [thread:$0]  %s4, 16, %s54, [#allocation8]
    $region21: #{forward.16} parent=1 // pred_fallthru
      _
    // Predicated region
    $region22: #{forward.16} parent=1 // pred_check
      _
    $region23: #{forward.16} parent=1 // pred_check_branch
      %58 = sbr.rel (0) target = $region25
    $region24: #{forward.16} parent=1 // pred_region
      %59 = dma.done [#allocation3], 16
    $region25: #{forward.16} parent=1 // pred_fallthru
      _
    // Predicated region
    $region26: #{forward.16} parent=1 // pred_check
      _
    $region27: #{forward.16} parent=1 // pred_check_branch
      %61 = sbr.rel (0) target = $region29
    $region28: #{forward.16} parent=1 // pred_region
      %62 = dma.done [#allocation5], 16
    $region29: #{forward.16} parent=1 // pred_fallthru
      _
    // Predicated region
    $region30: #{forward.16} parent=1 // pred_check
      _
    $region31: #{forward.16} parent=1 // pred_check_branch
      %64 = sbr.rel (0) target = $region33
    $region32: #{forward.16} parent=1 // pred_region
      %65 = dma.done [#allocation5], 256
    $region33: #{forward.16} parent=1 // pred_fallthru
      _
    // Predicated region
    $region34: #{forward.16} parent=1 // pred_check
      _
    $region35: #{forward.16} parent=1 // pred_check_branch
      %67 = sbr.rel (0) target = $region37
    $region36: #{forward.16} parent=1 // pred_region
      %68 = dma.done [#allocation8], 16
    $region37: #{forward.16} parent=1 // pred_fallthru
      _
    %v70 = vld [vmem:[%s0] sm:$0xff]
    %v71 = vld [vmem:[%s0 + $0x8] sm:$0xff]
    %v72 = vld [vmem:[%s0 + $0x10] sm:$0xff]
    %v73 = vld [vmem:[%s0 + $0x18] sm:$0xff]
    %v74 = vld [vmem:[#allocation2] sm:$0x1]
    %v75 = vld [vmem:[#allocation4] sm:$0x1]
    %vm76 = vcmask 261120
    %v77 = vsel %vm76, %v70, 0.0
    %78 = vadd.xlane.f32.xlu0 %v77
    %v79 = vpop.xlane.xlu0 %78
    %v80 = vsel %vm76, %v71, 0.0
    %81 = vadd.xlane.f32.xlu0 %v80
    %v82 = vpop.xlane.xlu0 %81
    %v83 = vsel %vm76, %v72, 0.0
    %84 = vadd.xlane.f32.xlu0 %v83
    %v85 = vpop.xlane.xlu0 %84
    %v86 = vsel %vm76, %v73, 0.0
    %87 = vadd.xlane.f32.xlu0 %v86
    %v88 = vpop.xlane.xlu0 %87
    %v89 = vrcp.pop 32.0
    %v90 = vmul.f32 %v79, %v89
    %v91 = vmul.f32 %v82, %v89
    %v92 = vmul.f32 %v85, %v89
    %v93 = vmul.f32 %v88, %v89
    %v94 = vsub.f32 %v70, %v90
    %v95 = vsub.f32 %v71, %v91
    %v96 = vsub.f32 %v72, %v92
    %v97 = vsub.f32 %v73, %v93
    %v98 = vmul.f32 %v94, %v94
    %v99 = vmul.f32 %v95, %v95
    %v100 = vmul.f32 %v96, %v96
    %v101 = vmul.f32 %v97, %v97
    %v102 = vsel %vm76, %v98, 0.0
    %103 = vadd.xlane.f32.xlu0 %v102
    %v104 = vpop.xlane.xlu0 %103
    %v105 = vsel %vm76, %v99, 0.0
    %106 = vadd.xlane.f32.xlu0 %v105
    %v107 = vpop.xlane.xlu0 %106
    %v108 = vsel %vm76, %v100, 0.0
    %109 = vadd.xlane.f32.xlu0 %v108
    %v110 = vpop.xlane.xlu0 %109
    %v111 = vsel %vm76, %v101, 0.0
    %112 = vadd.xlane.f32.xlu0 %v111
    %v113 = vpop.xlane.xlu0 %112
    %v114 = vmul.f32 %v104, %v89
    %v115 = vmul.f32 %v107, %v89
    %v116 = vmul.f32 %v110, %v89
    %v117 = vmul.f32 %v113, %v89
    %v118 = vadd.f32 %v114, 1e-05
    %v119 = vadd.f32 %v115, 1e-05
    %v120 = vadd.f32 %v116, 1e-05
    %v121 = vadd.f32 %v117, 1e-05
    %v122 = vrsqrt.pop %v118
    %v123 = vrsqrt.pop %v119
    %v124 = vrsqrt.pop %v120
    %v125 = vrsqrt.pop %v121
    %v126 = vmul.f32 %v94, %v122
    %v127 = vmul.f32 %v95, %v123
    %v128 = vmul.f32 %v96, %v124
    %v129 = vmul.f32 %v97, %v125
    %v131 = vlaneseq
    %v132 = vshrl.u32 %v131, 7
    %v133 = vsub.s32 0, %v132
    %v134 = vrot.slane %v74, %v133
    %v136 = vmul.f32 %v126, %v134
    %v137 = vmul.f32 %v127, %v134
    %v138 = vmul.f32 %v128, %v134
    %v139 = vmul.f32 %v129, %v134
    %v141 = vlaneseq
    %v142 = vshrl.u32 %v141, 7
    %v143 = vsub.s32 0, %v142
    %v144 = vrot.slane %v75, %v143
    %v146 = vadd.f32 %v136, %v144
    %v147 = vadd.f32 %v137, %v144
    %v148 = vadd.f32 %v138, %v144
    %v149 = vadd.f32 %v139, %v144
    %v150 = vld [vmem:[#allocation6] sm:$0xf]
    %v151 = vld [vmem:[#allocation6 + $0x4] sm:$0xf]
    %v152 = vld [vmem:[#allocation6 + $0x8] sm:$0xf]
    %v153 = vld [vmem:[#allocation6 + $0xc] sm:$0xf]
    %v154 = vpack.c.bf16 %v147, %v146
    %v155 = vpack.c.bf16 %v149, %v148
    %v156 = vld [vmem:[#allocation7] sm:$0x1]
    %v158 = vlaneseq
    %v159 = vshrl.u32 %v158, 7
    %v160 = vsub.s32 0, %v159
    %v161 = vrot.slane %v156, %v160
    %v167 = vunpack.c.l.b16 %v150
    %v168 = vunpack.c.l.b16 %v151
    %v169 = vunpack.c.l.b16 %v152
    %v170 = vunpack.c.l.b16 %v153
    %v171 = vpack.c.b16 %v168, %v167
    %v172 = vpack.c.b16 %v170, %v169
    %v176 = vsel %vm76, %v154, 0
    %v179 = vsel %vm76, %v155, 0
    %181 = vmatprep.subr.bf16.mxu0 0
    %182 = vmatpush1.bf16.msra.mxu0 0
    %183 = vmatprep.subr.bf16.mxu0 0
    %184 = vmatpush1.bf16.msra.mxu0 0
    %185 = vmatprep.subr.bf16.mxu0 0
    %186 = vmatpush1.bf16.msra.mxu0 0
    %187 = vmatprep.subr.bf16.mxu0 0
    %188 = vmatpush1.bf16.msra.mxu0 0
    %189 = vmatprep.subr.bf16.mxu0 0
    %190 = vmatpush1.bf16.msra.mxu0 0
    %191 = vmatprep.subr.bf16.mxu0 0
    %192 = vmatpush1.bf16.msra.mxu0 0
    %193 = vmatprep.subr.bf16.mxu0 0
    %194 = vmatpush1.bf16.msra.mxu0 %v172
    %195 = vmatprep.subr.bf16.mxu0 0
    %196 = vmatpush1.bf16.msra.mxu0 %v171
    %197 = vmatprep.subr.bf16.mxu0 0
    %198 = vmatpush2.bf16.msra.mxu0 0
    %199 = vmatprep.subr.bf16.mxu0 0
    %200 = vmatpush2.bf16.msra.mxu0 0
    %201 = vmatprep.subr.bf16.mxu0 0
    %202 = vmatpush2.bf16.msra.mxu0 0
    %203 = vmatprep.subr.bf16.mxu0 0
    %204 = vmatpush2.bf16.msra.mxu0 0
    %205 = vmatprep.subr.bf16.mxu0 0
    %206 = vmatpush2.bf16.msra.mxu0 0
    %207 = vmatprep.subr.bf16.mxu0 0
    %208 = vmatpush2.bf16.msra.mxu0 0
    %209 = vmatprep.subr.bf16.mxu0 0
    %210 = vmatpush2.bf16.msra.mxu0 0
    %211 = vmatprep.subr.bf16.mxu0 0
    %212 = vmatpush2.bf16.msra.mxu0 0
    %213 = vmatprep.mubr.bf16.mxu0 0
    %214 = vmatmul.mubr.bf16.gmra.mxu0 %v176
    %v215 = vpop.f32.mrf.mxu0
    %v216 = vadd.f32 %v161, %v215
    %v217 = vpop.f32.mrf.mxu0
    %v218 = vpop.f32.mrf.mxu0
    %v219 = vadd.f32 %v161, %v218
    %v220 = vpop.f32.mrf.mxu0
    %221 = vmatprep.mubr.bf16.mxu0 0
    %222 = vmatmul.mubr.bf16.gmra.mxu0 %v179
    %v223 = vpop.f32.mrf.mxu0
    %v224 = vadd.f32 %v161, %v223
    %v225 = vpop.f32.mrf.mxu0
    %v226 = vpop.f32.mrf.mxu0
    %v227 = vadd.f32 %v161, %v226
    %v228 = vpop.f32.mrf.mxu0
    %229 = vdwg.mxu0
    %vm230 = vcmask 785408
    %231 = vst.msk [vmem:[%s5] sm:$0xff] %vm230, %v216
    %232 = vst.msk [vmem:[%s5 + $0x8] sm:$0xff] %vm230, %v219
    %233 = vst.msk [vmem:[%s5 + $0x10] sm:$0xff] %vm230, %v224
    %234 = vst.msk [vmem:[%s5 + $0x18] sm:$0xff] %vm230, %v227
    // Predicated region
    $region38: #{forward.16} parent=1 // pred_check
      _
    $region39: #{forward.16} parent=1 // pred_check_branch
      %236 = sbr.rel (0) target = $region41
    $region40: #{forward.16} parent=1 // pred_region
      _
    $region41: #{forward.16} parent=1 // pred_fallthru
      _
    // Predicated region
    $region42: #{forward.16} parent=1 // pred_check
      _
    $region43: #{forward.16} parent=1 // pred_check_branch
      %238 = sbr.rel (0) target = $region45
    $region44: #{forward.16} parent=1 // pred_region
      _
    $region45: #{forward.16} parent=1 // pred_fallthru
      _
    %239 = vsyncpa [#allocation3], 1
    %240 = vsyncpa [#allocation5], 1
    %241 = vsyncpa [#allocation8], 1

// kernel: forward.15
$region0: #{forward.15}
  #allocation0 [shape = 'u32[]', space=smem, size = 0x4, offset = 0x4, fixed_abs, tag = 'smem constant byte address 0x4 - core index']
  #allocation1 [shape = 'u32[144,128]{1,0:T(1,128)}', space=vmem, size = 0x12000, scoped, tag = 'internal scratch']
  %s0 = inlined_call_operand.vmem [shape: f32[32,48], index: 0, kind: input, shape index: {}]
  %s1 = inlined_call_operand.vmem [shape: bf16[48,32], index: 1, kind: input, shape index: {}]
  %s2 = inlined_call_operand.hbm [shape: f32[1,32], index: 2, kind: input, shape index: {}]
  %s3 = inlined_call_operand.hbm [shape: f32[1,32], index: 3, kind: input, shape index: {}]
  %s4 = inlined_call_operand.hbm [shape: f32[1,32], index: 4, kind: input, shape index: {}]
  %s5 = inlined_call_operand.vmem [shape: f32[32,32], index: 5, kind: output, shape index: {}]
  %s6 = sld [smem:[#allocation0]]
  $region42: #{forward.15} parent=0
    _
  %s8 = ssub.s32 1, %s6
  %s9 = scalar_select 0, %s8, %s6
  $region1: #{forward.15} parent=0
    #allocation2 [shape = 'u8[512]{0}', space=vmem, size = 0x400, scoped, tag = 'input window, operand 2, single buffered']
    #allocation3 [shape = 's32[1]{0}', space=sflag, size = 0x4, scoped, tag = 'scoped memory for forward.15']
    #allocation4 [shape = 'u8[512]{0}', space=vmem, size = 0x400, scoped, tag = 'input window, operand 3, single buffered']
    #allocation5 [shape = 's32[1]{0}', space=sflag, size = 0x4, scoped, tag = 'scoped memory for forward.15']
    #allocation6 [shape = 'u8[512]{0}', space=vmem, size = 0x400, scoped, tag = 'input window, operand 4, single buffered']
    %10 = vsyncpa [#allocation3], 0
    %11 = vsyncpa [#allocation5], 0
    // Predicated region
    $region2: #{forward.15} parent=1 // pred_check
      _
    $region3: #{forward.15} parent=1 // pred_check_branch
      %13 = sbr.rel (0) target = $region5
    $region4: #{forward.15} parent=1 // pred_region
      _
    $region5: #{forward.15} parent=1 // pred_fallthru
      _
    // Predicated region
    $region6: #{forward.15} parent=1 // pred_check
      _
    $region7: #{forward.15} parent=1 // pred_check_branch
      %15 = sbr.rel (0) target = $region9
    $region8: #{forward.15} parent=1 // pred_region
      _
    $region9: #{forward.15} parent=1 // pred_fallthru
      _
    // Predicated region
    $region10: #{forward.15} parent=1 // pred_check
      _
    $region11: #{forward.15} parent=1 // pred_check_branch
      %17 = sbr.rel (0) target = $region13
    $region12: #{forward.15} parent=1 // pred_region
      %s19 = ssub.s32 16, 16
      %20 = vsyncadd [#allocation3], %s19
      %s22 = sshll.u32 [#allocation2], 4
      %s23 = int_to_ptr.vmem [resolvable:$true] %s22
      %25 = dma.hbm_to_vmem [thread:$0]  %s2, 16, %s23, [#allocation3]
    $region13: #{forward.15} parent=1 // pred_fallthru
      _
    // Predicated region
    $region14: #{forward.15} parent=1 // pred_check
      _
    $region15: #{forward.15} parent=1 // pred_check_branch
      %27 = sbr.rel (0) target = $region17
    $region16: #{forward.15} parent=1 // pred_region
      %s29 = ssub.s32 16, 16
      %30 = vsyncadd [#allocation5], %s29
      %s32 = sshll.u32 [#allocation4], 4
      %s33 = int_to_ptr.vmem [resolvable:$true] %s32
      %35 = dma.hbm_to_vmem [thread:$0]  %s3, 16, %s33, [#allocation5]
    $region17: #{forward.15} parent=1 // pred_fallthru
      _
    // Predicated region
    $region18: #{forward.15} parent=1 // pred_check
      _
    $region19: #{forward.15} parent=1 // pred_check_branch
      %37 = sbr.rel (0) target = $region21
    $region20: #{forward.15} parent=1 // pred_region
      %s39 = ssub.s32 16, 16
      %40 = vsyncadd [#allocation5], %s39
      %s42 = sshll.u32 [#allocation6], 4
      %s43 = int_to_ptr.vmem [resolvable:$true] %s42
      %45 = dma.hbm_to_vmem [thread:$0]  %s4, 16, %s43, [#allocation5]
    $region21: #{forward.15} parent=1 // pred_fallthru
      _
    // Predicated region
    $region22: #{forward.15} parent=1 // pred_check
      _
    $region23: #{forward.15} parent=1 // pred_check_branch
      %47 = sbr.rel (0) target = $region25
    $region24: #{forward.15} parent=1 // pred_region
      %48 = dma.done [#allocation3], 16
    $region25: #{forward.15} parent=1 // pred_fallthru
      _
    // Predicated region
    $region26: #{forward.15} parent=1 // pred_check
      _
    $region27: #{forward.15} parent=1 // pred_check_branch
      %50 = sbr.rel (0) target = $region29
    $region28: #{forward.15} parent=1 // pred_region
      %51 = dma.done [#allocation5], 16
    $region29: #{forward.15} parent=1 // pred_fallthru
      _
    // Predicated region
    $region30: #{forward.15} parent=1 // pred_check
      _
    $region31: #{forward.15} parent=1 // pred_check_branch
      %53 = sbr.rel (0) target = $region33
    $region32: #{forward.15} parent=1 // pred_region
      %54 = dma.done [#allocation5], 16
    $region33: #{forward.15} parent=1 // pred_fallthru
      _
    %v56 = vld [vmem:[%s0] sm:$0xff]
    %v57 = vld [vmem:[%s0 + $0x8] sm:$0xff]
    %v58 = vld [vmem:[%s0 + $0x10] sm:$0xff]
    %v59 = vld [vmem:[%s0 + $0x18] sm:$0xff]
    %v60 = vld [vmem:[%s1] sm:$0xf]
    %v61 = vld [vmem:[%s1 + $0x4] sm:$0xf]
    %v62 = vld [vmem:[%s1 + $0x8] sm:$0xf]
    %v63 = vld [vmem:[%s1 + $0xc] sm:$0xf]
    %v64 = vld [vmem:[%s1 + $0x10] sm:$0xf]
    %v65 = vld [vmem:[%s1 + $0x14] sm:$0xf]
    %v66 = vpack.c.bf16 %v57, %v56
    %v67 = vpack.c.bf16 %v59, %v58
    %v68 = vld [vmem:[#allocation2] sm:$0x1]
    %v70 = vlaneseq
    %v71 = vshrl.u32 %v70, 7
    %v72 = vsub.s32 0, %v71
    %v73 = vrot.slane %v68, %v72
    %v81 = vunpack.c.l.b16 %v60
    %v82 = vunpack.c.l.b16 %v61
    %v83 = vunpack.c.l.b16 %v62
    %v84 = vunpack.c.l.b16 %v63
    %v85 = vunpack.c.l.b16 %v64
    %v86 = vunpack.c.l.b16 %v65
    %v87 = vpack.c.b16 %v82, %v81
    %v88 = vpack.c.b16 %v84, %v83
    %v89 = vpack.c.b16 %v86, %v85
    %vm93 = vcmask 392192
    %v95 = vsel %vm93, %v66, 0
    %v98 = vsel %vm93, %v67, 0
    %100 = vmatprep.subr.bf16.mxu0 0
    %101 = vmatpush1.bf16.msra.mxu0 0
    %102 = vmatprep.subr.bf16.mxu0 0
    %103 = vmatpush1.bf16.msra.mxu0 0
    %104 = vmatprep.subr.bf16.mxu0 0
    %105 = vmatpush1.bf16.msra.mxu0 0
    %106 = vmatprep.subr.bf16.mxu0 0
    %107 = vmatpush1.bf16.msra.mxu0 0
    %108 = vmatprep.subr.bf16.mxu0 0
    %109 = vmatpush1.bf16.msra.mxu0 0
    %110 = vmatprep.subr.bf16.mxu0 0
    %111 = vmatpush1.bf16.msra.mxu0 %v89
    %112 = vmatprep.subr.bf16.mxu0 0
    %113 = vmatpush1.bf16.msra.mxu0 %v88
    %114 = vmatprep.subr.bf16.mxu0 0
    %115 = vmatpush1.bf16.msra.mxu0 %v87
    %116 = vmatprep.subr.bf16.mxu0 0
    %117 = vmatpush2.bf16.msra.mxu0 0
    %118 = vmatprep.subr.bf16.mxu0 0
    %119 = vmatpush2.bf16.msra.mxu0 0
    %120 = vmatprep.subr.bf16.mxu0 0
    %121 = vmatpush2.bf16.msra.mxu0 0
    %122 = vmatprep.subr.bf16.mxu0 0
    %123 = vmatpush2.bf16.msra.mxu0 0
    %124 = vmatprep.subr.bf16.mxu0 0
    %125 = vmatpush2.bf16.msra.mxu0 0
    %126 = vmatprep.subr.bf16.mxu0 0
    %127 = vmatpush2.bf16.msra.mxu0 0
    %128 = vmatprep.subr.bf16.mxu0 0
    %129 = vmatpush2.bf16.msra.mxu0 0
    %130 = vmatprep.subr.bf16.mxu0 0
    %131 = vmatpush2.bf16.msra.mxu0 0
    %132 = vmatprep.mubr.bf16.mxu0 0
    %133 = vmatmul.mubr.bf16.gmra.mxu0 %v95
    %v134 = vpop.f32.mrf.mxu0
    %v135 = vadd.f32 %v73, %v134
    %v136 = vpop.f32.mrf.mxu0
    %v137 = vpop.f32.mrf.mxu0
    %v138 = vadd.f32 %v73, %v137
    %v139 = vpop.f32.mrf.mxu0
    %140 = vmatprep.mubr.bf16.mxu0 0
    %141 = vmatmul.mubr.bf16.gmra.mxu0 %v98
    %v142 = vpop.f32.mrf.mxu0
    %v143 = vadd.f32 %v73, %v142
    %v144 = vpop.f32.mrf.mxu0
    %v145 = vpop.f32.mrf.mxu0
    %v146 = vadd.f32 %v73, %v145
    %v147 = vpop.f32.mrf.mxu0
    %148 = vdwg.mxu0
    %v149 = vld [vmem:[#allocation4] sm:$0x1]
    %v150 = vld [vmem:[#allocation6] sm:$0x1]
    %vm151 = vcmask 261120
    %v152 = vsel %vm151, %v135, 0.0
    %153 = vadd.xlane.f32.xlu0 %v152
    %v154 = vpop.xlane.xlu0 %153
    %v155 = vsel %vm151, %v138, 0.0
    %156 = vadd.xlane.f32.xlu0 %v155
    %v157 = vpop.xlane.xlu0 %156
    %v158 = vsel %vm151, %v143, 0.0
    %159 = vadd.xlane.f32.xlu0 %v158
    %v160 = vpop.xlane.xlu0 %159
    %v161 = vsel %vm151, %v146, 0.0
    %162 = vadd.xlane.f32.xlu0 %v161
    %v163 = vpop.xlane.xlu0 %162
    %v164 = vrcp.pop 32.0
    %v165 = vmul.f32 %v154, %v164
    %v166 = vmul.f32 %v157, %v164
    %v167 = vmul.f32 %v160, %v164
    %v168 = vmul.f32 %v163, %v164
    %v169 = vsub.f32 %v135, %v165
    %v170 = vsub.f32 %v138, %v166
    %v171 = vsub.f32 %v143, %v167
    %v172 = vsub.f32 %v146, %v168
    %v173 = vmul.f32 %v169, %v169
    %v174 = vmul.f32 %v170, %v170
    %v175 = vmul.f32 %v171, %v171
    %v176 = vmul.f32 %v172, %v172
    %v177 = vsel %vm151, %v173, 0.0
    %178 = vadd.xlane.f32.xlu0 %v177
    %v179 = vpop.xlane.xlu0 %178
    %v180 = vsel %vm151, %v174, 0.0
    %181 = vadd.xlane.f32.xlu0 %v180
    %v182 = vpop.xlane.xlu0 %181
    %v183 = vsel %vm151, %v175, 0.0
    %184 = vadd.xlane.f32.xlu0 %v183
    %v185 = vpop.xlane.xlu0 %184
    %v186 = vsel %vm151, %v176, 0.0
    %187 = vadd.xlane.f32.xlu0 %v186
    %v188 = vpop.xlane.xlu0 %187
    %v189 = vmul.f32 %v179, %v164
    %v190 = vmul.f32 %v182, %v164
    %v191 = vmul.f32 %v185, %v164
    %v192 = vmul.f32 %v188, %v164
    %v193 = vadd.f32 %v189, 1e-05
    %v194 = vadd.f32 %v190, 1e-05
    %v195 = vadd.f32 %v191, 1e-05
    %v196 = vadd.f32 %v192, 1e-05
    %v197 = vrsqrt.pop %v193
    %v198 = vrsqrt.pop %v194
    %v199 = vrsqrt.pop %v195
    %v200 = vrsqrt.pop %v196
    %v201 = vmul.f32 %v169, %v197
    %v202 = vmul.f32 %v170, %v198
    %v203 = vmul.f32 %v171, %v199
    %v204 = vmul.f32 %v172, %v200
    %v206 = vlaneseq
    %v207 = vshrl.u32 %v206, 7
    %v208 = vsub.s32 0, %v207
    %v209 = vrot.slane %v149, %v208
    %v211 = vmul.f32 %v201, %v209
    %v212 = vmul.f32 %v202, %v209
    %v213 = vmul.f32 %v203, %v209
    %v214 = vmul.f32 %v204, %v209
    %v216 = vlaneseq
    %v217 = vshrl.u32 %v216, 7
    %v218 = vsub.s32 0, %v217
    %v219 = vrot.slane %v150, %v218
    %v221 = vadd.f32 %v211, %v219
    %v222 = vadd.f32 %v212, %v219
    %v223 = vadd.f32 %v213, %v219
    %v224 = vadd.f32 %v214, %v219
    %225 = vst.msk [vmem:[%s5] sm:$0xff] %vm151, %v221
    %226 = vst.msk [vmem:[%s5 + $0x8] sm:$0xff] %vm151, %v222
    %227 = vst.msk [vmem:[%s5 + $0x10] sm:$0xff] %vm151, %v223
    %228 = vst.msk [vmem:[%s5 + $0x18] sm:$0xff] %vm151, %v224
    // Predicated region
    $region34: #{forward.15} parent=1 // pred_check
      _
    $region35: #{forward.15} parent=1 // pred_check_branch
      %230 = sbr.rel (0) target = $region37
    $region36: #{forward.15} parent=1 // pred_region
      _
    $region37: #{forward.15} parent=1 // pred_fallthru
      _
    // Predicated region
    $region38: #{forward.15} parent=1 // pred_check
      _
    $region39: #{forward.15} parent=1 // pred_check_branch
      %232 = sbr.rel (0) target = $region41
    $region40: #{forward.15} parent=1 // pred_region
      _
    $region41: #{forward.15} parent=1 // pred_fallthru
      _
    %233 = vsyncpa [#allocation3], 1
    %234 = vsyncpa [#allocation5], 1

// kernel: forward.18
$region0: #{forward.18}
  #allocation0 [shape = 'u32[]', space=smem, size = 0x4, offset = 0x4, fixed_abs, tag = 'smem constant byte address 0x4 - core index']
  #allocation1 [shape = 'u32[144,128]{1,0:T(1,128)}', space=vmem, size = 0x12000, scoped, tag = 'internal scratch']
  %s0 = inlined_call_operand.vmem [shape: f32[32,32], index: 0, kind: input, shape index: {}]
  %s1 = inlined_call_operand.vmem [shape: f32[32,32], index: 1, kind: input, shape index: {}]
  %s2 = inlined_call_operand.hbm [shape: bf16[32,32], index: 2, kind: input, shape index: {}]
  %s3 = inlined_call_operand.hbm [shape: f32[1,32], index: 3, kind: input, shape index: {}]
  %s4 = inlined_call_operand.hbm [shape: f32[1,32], index: 4, kind: input, shape index: {}]
  %s5 = inlined_call_operand.hbm [shape: f32[1,32], index: 5, kind: input, shape index: {}]
  %s6 = inlined_call_operand.hbm [shape: bf16[32,128], index: 6, kind: input, shape index: {}]
  %s7 = inlined_call_operand.hbm [shape: f32[1,128], index: 7, kind: input, shape index: {}]
  %s8 = inlined_call_operand.vmem [shape: bf16[128,32], index: 8, kind: input, shape index: {}]
  %s9 = inlined_call_operand.hbm [shape: f32[1,32], index: 9, kind: input, shape index: {}]
  %s10 = inlined_call_operand.vmem [shape: f32[32,32], index: 10, kind: output, shape index: {}]
  %s11 = sld [smem:[#allocation0]]
  $region78: #{forward.18} parent=0
    _
  %s13 = ssub.s32 1, %s11
  %s14 = scalar_select 0, %s13, %s11
  $region1: #{forward.18} parent=0
    #allocation2 [shape = 'u8[8192]{0}', space=vmem, size = 0x2000, scoped, tag = 'input window, operand 2, single buffered']
    #allocation3 [shape = 's32[1]{0}', space=sflag, size = 0x4, scoped, tag = 'scoped memory for forward.18']
    #allocation4 [shape = 'u8[512]{0}', space=vmem, size = 0x400, scoped, tag = 'input window, operand 3, single buffered']
    #allocation5 [shape = 's32[1]{0}', space=sflag, size = 0x4, scoped, tag = 'scoped memory for forward.18']
    #allocation6 [shape = 'u8[512]{0}', space=vmem, size = 0x400, scoped, tag = 'input window, operand 4, single buffered']
    #allocation7 [shape = 'u8[512]{0}', space=vmem, size = 0x400, scoped, tag = 'input window, operand 5, single buffered']
    #allocation8 [shape = 's32[1]{0}', space=sflag, size = 0x4, scoped, tag = 'scoped memory for forward.18']
    #allocation9 [shape = 'u8[8192]{0}', space=vmem, size = 0x2000, scoped, tag = 'input window, operand 6, single buffered']
    #allocation10 [shape = 'u8[512]{0}', space=vmem, size = 0x400, scoped, tag = 'input window, operand 7, single buffered']
    #allocation11 [shape = 's32[1]{0}', space=sflag, size = 0x4, scoped, tag = 'scoped memory for forward.18']
    #allocation12 [shape = 'u8[512]{0}', space=vmem, size = 0x400, scoped, tag = 'input window, operand 9, single buffered']
    %15 = vsyncpa [#allocation3], 0
    %16 = vsyncpa [#allocation5], 0
    %17 = vsyncpa [#allocation8], 0
    %18 = vsyncpa [#allocation11], 0
    // Predicated region
    $region2: #{forward.18} parent=1 // pred_check
      _
    $region3: #{forward.18} parent=1 // pred_check_branch
      %20 = sbr.rel (0) target = $region5
    $region4: #{forward.18} parent=1 // pred_region
      _
    $region5: #{forward.18} parent=1 // pred_fallthru
      _
    // Predicated region
    $region6: #{forward.18} parent=1 // pred_check
      _
    $region7: #{forward.18} parent=1 // pred_check_branch
      %22 = sbr.rel (0) target = $region9
    $region8: #{forward.18} parent=1 // pred_region
      _
    $region9: #{forward.18} parent=1 // pred_fallthru
      _
    // Predicated region
    $region10: #{forward.18} parent=1 // pred_check
      _
    $region11: #{forward.18} parent=1 // pred_check_branch
      %24 = sbr.rel (0) target = $region13
    $region12: #{forward.18} parent=1 // pred_region
      %s26 = ssub.s32 256, 256
      %27 = vsyncadd [#allocation3], %s26
      %s28 = sshll.u32 [#allocation2], 4
      %s29 = int_to_ptr.vmem [resolvable:$true] %s28
      %34 = dma.hbm_to_vmem [thread:$0]  %s2, 256, %s29, [#allocation3], 64, 64, 4
    $region13: #{forward.18} parent=1 // pred_fallthru
      _
    // Predicated region
    $region14: #{forward.18} parent=1 // pred_check
      _
    $region15: #{forward.18} parent=1 // pred_check_branch
      %36 = sbr.rel (0) target = $region17
    $region16: #{forward.18} parent=1 // pred_region
      %s38 = ssub.s32 16, 16
      %39 = vsyncadd [#allocation5], %s38
      %s41 = sshll.u32 [#allocation4], 4
      %s42 = int_to_ptr.vmem [resolvable:$true] %s41
      %44 = dma.hbm_to_vmem [thread:$0]  %s3, 16, %s42, [#allocation5]
    $region17: #{forward.18} parent=1 // pred_fallthru
      _
    // Predicated region
    $region18: #{forward.18} parent=1 // pred_check
      _
    $region19: #{forward.18} parent=1 // pred_check_branch
      %46 = sbr.rel (0) target = $region21
    $region20: #{forward.18} parent=1 // pred_region
      %s48 = ssub.s32 16, 16
      %49 = vsyncadd [#allocation5], %s48
      %s51 = sshll.u32 [#allocation6], 4
      %s52 = int_to_ptr.vmem [resolvable:$true] %s51
      %54 = dma.hbm_to_vmem [thread:$0]  %s4, 16, %s52, [#allocation5]
    $region21: #{forward.18} parent=1 // pred_fallthru
      _
    // Predicated region
    $region22: #{forward.18} parent=1 // pred_check
      _
    $region23: #{forward.18} parent=1 // pred_check_branch
      %56 = sbr.rel (0) target = $region25
    $region24: #{forward.18} parent=1 // pred_region
      %s58 = ssub.s32 16, 16
      %59 = vsyncadd [#allocation8], %s58
      %s61 = sshll.u32 [#allocation7], 4
      %s62 = int_to_ptr.vmem [resolvable:$true] %s61
      %64 = dma.hbm_to_vmem [thread:$0]  %s5, 16, %s62, [#allocation8]
    $region25: #{forward.18} parent=1 // pred_fallthru
      _
    // Predicated region
    $region26: #{forward.18} parent=1 // pred_check
      _
    $region27: #{forward.18} parent=1 // pred_check_branch
      %66 = sbr.rel (0) target = $region29
    $region28: #{forward.18} parent=1 // pred_region
      %s68 = ssub.s32 256, 256
      %69 = vsyncadd [#allocation8], %s68
      %s70 = sshll.u32 [#allocation9], 4
      %s71 = int_to_ptr.vmem [resolvable:$true] %s70
      %76 = dma.hbm_to_vmem [thread:$0]  %s6, 256, %s71, [#allocation8], 64, 64, 4
    $region29: #{forward.18} parent=1 // pred_fallthru
      _
    // Predicated region
    $region30: #{forward.18} parent=1 // pred_check
      _
    $region31: #{forward.18} parent=1 // pred_check_branch
      %78 = sbr.rel (0) target = $region33
    $region32: #{forward.18} parent=1 // pred_region
      %s80 = ssub.s32 16, 16
      %81 = vsyncadd [#allocation11], %s80
      %s83 = sshll.u32 [#allocation10], 4
      %s84 = int_to_ptr.vmem [resolvable:$true] %s83
      %86 = dma.hbm_to_vmem [thread:$0]  %s7, 16, %s84, [#allocation11]
    $region33: #{forward.18} parent=1 // pred_fallthru
      _
    // Predicated region
    $region34: #{forward.18} parent=1 // pred_check
      _
    $region35: #{forward.18} parent=1 // pred_check_branch
      %88 = sbr.rel (0) target = $region37
    $region36: #{forward.18} parent=1 // pred_region
      _
    $region37: #{forward.18} parent=1 // pred_fallthru
      _
    // Predicated region
    $region38: #{forward.18} parent=1 // pred_check
      _
    $region39: #{forward.18} parent=1 // pred_check_branch
      %90 = sbr.rel (0) target = $region41
    $region40: #{forward.18} parent=1 // pred_region
      %s92 = ssub.s32 16, 16
      %93 = vsyncadd [#allocation11], %s92
      %s95 = sshll.u32 [#allocation12], 4
      %s96 = int_to_ptr.vmem [resolvable:$true] %s95
      %98 = dma.hbm_to_vmem [thread:$0]  %s9, 16, %s96, [#allocation11]
    $region41: #{forward.18} parent=1 // pred_fallthru
      _
    // Predicated region
    $region42: #{forward.18} parent=1 // pred_check
      _
    $region43: #{forward.18} parent=1 // pred_check_branch
      %100 = sbr.rel (0) target = $region45
    $region44: #{forward.18} parent=1 // pred_region
      %101 = dma.done [#allocation3], 256
    $region45: #{forward.18} parent=1 // pred_fallthru
      _
    // Predicated region
    $region46: #{forward.18} parent=1 // pred_check
      _
    $region47: #{forward.18} parent=1 // pred_check_branch
      %103 = sbr.rel (0) target = $region49
    $region48: #{forward.18} parent=1 // pred_region
      %104 = dma.done [#allocation5], 16
    $region49: #{forward.18} parent=1 // pred_fallthru
      _
    // Predicated region
    $region50: #{forward.18} parent=1 // pred_check
      _
    $region51: #{forward.18} parent=1 // pred_check_branch
      %106 = sbr.rel (0) target = $region53
    $region52: #{forward.18} parent=1 // pred_region
      %107 = dma.done [#allocation5], 16
    $region53: #{forward.18} parent=1 // pred_fallthru
      _
    // Predicated region
    $region54: #{forward.18} parent=1 // pred_check
      _
    $region55: #{forward.18} parent=1 // pred_check_branch
      %109 = sbr.rel (0) target = $region57
    $region56: #{forward.18} parent=1 // pred_region
      %110 = dma.done [#allocation8], 16
    $region57: #{forward.18} parent=1 // pred_fallthru
      _
    // Predicated region
    $region58: #{forward.18} parent=1 // pred_check
      _
    $region59: #{forward.18} parent=1 // pred_check_branch
      %112 = sbr.rel (0) target = $region61
    $region60: #{forward.18} parent=1 // pred_region
      %113 = dma.done [#allocation8], 256
    $region61: #{forward.18} parent=1 // pred_fallthru
      _
    // Predicated region
    $region62: #{forward.18} parent=1 // pred_check
      _
    $region63: #{forward.18} parent=1 // pred_check_branch
      %115 = sbr.rel (0) target = $region65
    $region64: #{forward.18} parent=1 // pred_region
      %116 = dma.done [#allocation11], 16
    $region65: #{forward.18} parent=1 // pred_fallthru
      _
    // Predicated region
    $region66: #{forward.18} parent=1 // pred_check
      _
    $region67: #{forward.18} parent=1 // pred_check_branch
      %118 = sbr.rel (0) target = $region69
    $region68: #{forward.18} parent=1 // pred_region
      %119 = dma.done [#allocation11], 16
    $region69: #{forward.18} parent=1 // pred_fallthru
      _
    %v121 = vld [vmem:[%s0] sm:$0xff]
    %v122 = vld [vmem:[%s0 + $0x8] sm:$0xff]
    %v123 = vld [vmem:[%s0 + $0x10] sm:$0xff]
    %v124 = vld [vmem:[%s0 + $0x18] sm:$0xff]
    %v125 = vld [vmem:[%s1] sm:$0xff]
    %v126 = vld [vmem:[%s1 + $0x8] sm:$0xff]
    %v127 = vld [vmem:[%s1 + $0x10] sm:$0xff]
    %v128 = vld [vmem:[%s1 + $0x18] sm:$0xff]
    %v129 = vld [vmem:[#allocation2] sm:$0xf]
    %v130 = vld [vmem:[#allocation2 + $0x4] sm:$0xf]
    %v131 = vld [vmem:[#allocation2 + $0x8] sm:$0xf]
    %v132 = vld [vmem:[#allocation2 + $0xc] sm:$0xf]
    %v133 = vpack.c.bf16 %v126, %v125
    %v134 = vpack.c.bf16 %v128, %v127
    %v139 = vunpack.c.l.b16 %v129
    %v140 = vunpack.c.l.b16 %v130
    %v141 = vunpack.c.l.b16 %v131
    %v142 = vunpack.c.l.b16 %v132
    %v143 = vpack.c.b16 %v140, %v139
    %v144 = vpack.c.b16 %v142, %v141
    %vm147 = vcmask 261120
    %v149 = vsel %vm147, %v133, 0
    %v152 = vsel %vm147, %v134, 0
    %154 = vmatprep.subr.bf16.mxu0 0
    %155 = vmatpush1.bf16.msra.mxu0 0
    %156 = vmatprep.subr.bf16.mxu0 0
    %157 = vmatpush1.bf16.msra.mxu0 0
    %158 = vmatprep.subr.bf16.mxu0 0
    %159 = vmatpush1.bf16.msra.mxu0 0
    %160 = vmatprep.subr.bf16.mxu0 0
    %161 = vmatpush1.bf16.msra.mxu0 0
    %162 = vmatprep.subr.bf16.mxu0 0
    %163 = vmatpush1.bf16.msra.mxu0 0
    %164 = vmatprep.subr.bf16.mxu0 0
    %165 = vmatpush1.bf16.msra.mxu0 0
    %166 = vmatprep.subr.bf16.mxu0 0
    %167 = vmatpush1.bf16.msra.mxu0 %v144
    %168 = vmatprep.subr.bf16.mxu0 0
    %169 = vmatpush1.bf16.msra.mxu0 %v143
    %170 = vmatprep.subr.bf16.mxu0 0
    %171 = vmatpush2.bf16.msra.mxu0 0
    %172 = vmatprep.subr.bf16.mxu0 0
    %173 = vmatpush2.bf16.msra.mxu0 0
    %174 = vmatprep.subr.bf16.mxu0 0
    %175 = vmatpush2.bf16.msra.mxu0 0
    %176 = vmatprep.subr.bf16.mxu0 0
    %177 = vmatpush2.bf16.msra.mxu0 0
    %178 = vmatprep.subr.bf16.mxu0 0
    %179 = vmatpush2.bf16.msra.mxu0 0
    %180 = vmatprep.subr.bf16.mxu0 0
    %181 = vmatpush2.bf16.msra.mxu0 0
    %182 = vmatprep.subr.bf16.mxu0 0
    %183 = vmatpush2.bf16.msra.mxu0 0
    %184 = vmatprep.subr.bf16.mxu0 0
    %185 = vmatpush2.bf16.msra.mxu0 0
    %186 = vmatprep.mubr.bf16.mxu0 0
    %187 = vmatmul.mubr.bf16.gmra.mxu0 %v149
    %v188 = vpop.f32.mrf.mxu0
    %v189 = vadd.f32 0.0, %v188
    %v190 = vpop.f32.mrf.mxu0
    %v191 = vpop.f32.mrf.mxu0
    %v192 = vadd.f32 0.0, %v191
    %v193 = vpop.f32.mrf.mxu0
    %194 = vmatprep.mubr.bf16.mxu0 0
    %195 = vmatmul.mubr.bf16.gmra.mxu0 %v152
    %v196 = vpop.f32.mrf.mxu0
    %v197 = vadd.f32 0.0, %v196
    %v198 = vpop.f32.mrf.mxu0
    %v199 = vpop.f32.mrf.mxu0
    %v200 = vadd.f32 0.0, %v199
    %v201 = vpop.f32.mrf.mxu0
    %202 = vdwg.mxu0
    %v203 = vadd.f32 %v121, %v189
    %v204 = vadd.f32 %v122, %v192
    %v205 = vadd.f32 %v123, %v197
    %v206 = vadd.f32 %v124, %v200
    %v207 = vld [vmem:[#allocation4] sm:$0x1]
    %v209 = vlaneseq
    %v210 = vshrl.u32 %v209, 7
    %v211 = vsub.s32 0, %v210
    %v212 = vrot.slane %v207, %v211
    %v214 = vadd.f32 %v203, %v212
    %v215 = vadd.f32 %v204, %v212
    %v216 = vadd.f32 %v205, %v212
    %v217 = vadd.f32 %v206, %v212
    %v218 = vld [vmem:[#allocation6] sm:$0x1]
    %v219 = vld [vmem:[#allocation7] sm:$0x1]
    %v220 = vsel %vm147, %v214, 0.0
    %221 = vadd.xlane.f32.xlu0 %v220
    %v222 = vpop.xlane.xlu0 %221
    %v223 = vsel %vm147, %v215, 0.0
    %224 = vadd.xlane.f32.xlu0 %v223
    %v225 = vpop.xlane.xlu0 %224
    %v226 = vsel %vm147, %v216, 0.0
    %227 = vadd.xlane.f32.xlu0 %v226
    %v228 = vpop.xlane.xlu0 %227
    %v229 = vsel %vm147, %v217, 0.0
    %230 = vadd.xlane.f32.xlu0 %v229
    %v231 = vpop.xlane.xlu0 %230
    %v232 = vrcp.pop 32.0
    %v233 = vmul.f32 %v222, %v232
    %v234 = vmul.f32 %v225, %v232
    %v235 = vmul.f32 %v228, %v232
    %v236 = vmul.f32 %v231, %v232
    %v237 = vsub.f32 %v214, %v233
    %v238 = vsub.f32 %v215, %v234
    %v239 = vsub.f32 %v216, %v235
    %v240 = vsub.f32 %v217, %v236
    %v241 = vmul.f32 %v237, %v237
    %v242 = vmul.f32 %v238, %v238
    %v243 = vmul.f32 %v239, %v239
    %v244 = vmul.f32 %v240, %v240
    %v245 = vsel %vm147, %v241, 0.0
    %246 = vadd.xlane.f32.xlu0 %v245
    %v247 = vpop.xlane.xlu0 %246
    %v248 = vsel %vm147, %v242, 0.0
    %249 = vadd.xlane.f32.xlu0 %v248
    %v250 = vpop.xlane.xlu0 %249
    %v251 = vsel %vm147, %v243, 0.0
    %252 = vadd.xlane.f32.xlu0 %v251
    %v253 = vpop.xlane.xlu0 %252
    %v254 = vsel %vm147, %v244, 0.0
    %255 = vadd.xlane.f32.xlu0 %v254
    %v256 = vpop.xlane.xlu0 %255
    %v257 = vmul.f32 %v247, %v232
    %v258 = vmul.f32 %v250, %v232
    %v259 = vmul.f32 %v253, %v232
    %v260 = vmul.f32 %v256, %v232
    %v261 = vadd.f32 %v257, 1e-05
    %v262 = vadd.f32 %v258, 1e-05
    %v263 = vadd.f32 %v259, 1e-05
    %v264 = vadd.f32 %v260, 1e-05
    %v265 = vrsqrt.pop %v261
    %v266 = vrsqrt.pop %v262
    %v267 = vrsqrt.pop %v263
    %v268 = vrsqrt.pop %v264
    %v269 = vmul.f32 %v237, %v265
    %v270 = vmul.f32 %v238, %v266
    %v271 = vmul.f32 %v239, %v267
    %v272 = vmul.f32 %v240, %v268
    %v274 = vlaneseq
    %v275 = vshrl.u32 %v274, 7
    %v276 = vsub.s32 0, %v275
    %v277 = vrot.slane %v218, %v276
    %v279 = vmul.f32 %v269, %v277
    %v280 = vmul.f32 %v270, %v277
    %v281 = vmul.f32 %v271, %v277
    %v282 = vmul.f32 %v272, %v277
    %v284 = vlaneseq
    %v285 = vshrl.u32 %v284, 7
    %v286 = vsub.s32 0, %v285
    %v287 = vrot.slane %v219, %v286
    %v289 = vadd.f32 %v279, %v287
    %v290 = vadd.f32 %v280, %v287
    %v291 = vadd.f32 %v281, %v287
    %v292 = vadd.f32 %v282, %v287
    %v293 = vld [vmem:[#allocation9] sm:$0xf]
    %v294 = vld [vmem:[#allocation9 + $0x4] sm:$0xf]
    %v295 = vld [vmem:[#allocation9 + $0x8] sm:$0xf]
    %v296 = vld [vmem:[#allocation9 + $0xc] sm:$0xf]
    %v297 = vpack.c.bf16 %v290, %v289
    %v298 = vpack.c.bf16 %v292, %v291
    %v299 = vld [vmem:[#allocation10] sm:$0x1]
    %v301 = vlaneseq
    %v302 = vshrl.u32 %v301, 7
    %v303 = vsub.s32 0, %v302
    %v304 = vrot.slane %v299, %v303
    %v310 = vunpack.c.l.b16 %v293
    %v311 = vunpack.c.l.b16 %v294
    %v312 = vunpack.c.l.b16 %v295
    %v313 = vunpack.c.l.b16 %v296
    %v314 = vpack.c.b16 %v311, %v310
    %v315 = vpack.c.b16 %v313, %v312
    %v319 = vsel %vm147, %v297, 0
    %v322 = vsel %vm147, %v298, 0
    %324 = vmatprep.subr.bf16.mxu0 0
    %325 = vmatpush1.bf16.msra.mxu0 0
    %326 = vmatprep.subr.bf16.mxu0 0
    %327 = vmatpush1.bf16.msra.mxu0 0
    %328 = vmatprep.subr.bf16.mxu0 0
    %329 = vmatpush1.bf16.msra.mxu0 0
    %330 = vmatprep.subr.bf16.mxu0 0
    %331 = vmatpush1.bf16.msra.mxu0 0
    %332 = vmatprep.subr.bf16.mxu0 0
    %333 = vmatpush1.bf16.msra.mxu0 0
    %334 = vmatprep.subr.bf16.mxu0 0
    %335 = vmatpush1.bf16.msra.mxu0 0
    %336 = vmatprep.subr.bf16.mxu0 0
    %337 = vmatpush1.bf16.msra.mxu0 %v315
    %338 = vmatprep.subr.bf16.mxu0 0
    %339 = vmatpush1.bf16.msra.mxu0 %v314
    %340 = vmatprep.subr.bf16.mxu0 0
    %341 = vmatpush2.bf16.msra.mxu0 0
    %342 = vmatprep.subr.bf16.mxu0 0
    %343 = vmatpush2.bf16.msra.mxu0 0
    %344 = vmatprep.subr.bf16.mxu0 0
    %345 = vmatpush2.bf16.msra.mxu0 0
    %346 = vmatprep.subr.bf16.mxu0 0
    %347 = vmatpush2.bf16.msra.mxu0 0
    %348 = vmatprep.subr.bf16.mxu0 0
    %349 = vmatpush2.bf16.msra.mxu0 0
    %350 = vmatprep.subr.bf16.mxu0 0
    %351 = vmatpush2.bf16.msra.mxu0 0
    %352 = vmatprep.subr.bf16.mxu0 0
    %353 = vmatpush2.bf16.msra.mxu0 0
    %354 = vmatprep.subr.bf16.mxu0 0
    %355 = vmatpush2.bf16.msra.mxu0 0
    %356 = vmatprep.mubr.bf16.mxu0 0
    %357 = vmatmul.mubr.bf16.gmra.mxu0 %v319
    %v358 = vpop.f32.mrf.mxu0
    %v359 = vadd.f32 %v304, %v358
    %v360 = vpop.f32.mrf.mxu0
    %v361 = vpop.f32.mrf.mxu0
    %v362 = vadd.f32 %v304, %v361
    %v363 = vpop.f32.mrf.mxu0
    %364 = vmatprep.mubr.bf16.mxu0 0
    %365 = vmatmul.mubr.bf16.gmra.mxu0 %v322
    %v366 = vpop.f32.mrf.mxu0
    %v367 = vadd.f32 %v304, %v366
    %v368 = vpop.f32.mrf.mxu0
    %v369 = vpop.f32.mrf.mxu0
    %v370 = vadd.f32 %v304, %v369
    %v371 = vpop.f32.mrf.mxu0
    %372 = vdwg.mxu0
    %v373 = vmul.f32 %v359, %v359
    %v374 = vmul.f32 %v362, %v362
    %v375 = vmul.f32 %v367, %v367
    %v376 = vmul.f32 %v370, %v370
    %v377 = vmul.f32 %v359, %v373
    %v378 = vmul.f32 %v362, %v374
    %v379 = vmul.f32 %v367, %v375
    %v380 = vmul.f32 %v370, %v376
    %v381 = vmul.f32 %v377, 0.044715
    %v382 = vmul.f32 %v378, 0.044715
    %v383 = vmul.f32 %v379, 0.044715
    %v384 = vmul.f32 %v380, 0.044715
    %v385 = vadd.f32 %v359, %v381
    %v386 = vadd.f32 %v362, %v382
    %v387 = vadd.f32 %v367, %v383
    %v388 = vadd.f32 %v370, %v384
    %v389 = vmul.f32 %v385, 0.7978846
    %v390 = vmul.f32 %v386, 0.7978846
    %v391 = vmul.f32 %v387, 0.7978846
    %v392 = vmul.f32 %v388, 0.7978846
    %v393 = vtanh.pop %v389
    %v394 = vtanh.pop %v390
    %v395 = vtanh.pop %v391
    %v396 = vtanh.pop %v392
    %v397 = vadd.f32 %v393, 1.0
    %v398 = vadd.f32 %v394, 1.0
    %v399 = vadd.f32 %v395, 1.0
    %v400 = vadd.f32 %v396, 1.0
    %v401 = vmul.f32 %v397, 0.5
    %v402 = vmul.f32 %v398, 0.5
    %v403 = vmul.f32 %v399, 0.5
    %v404 = vmul.f32 %v400, 0.5
    %v405 = vmul.f32 %v359, %v401
    %v406 = vmul.f32 %v362, %v402
    %v407 = vmul.f32 %v367, %v403
    %v408 = vmul.f32 %v370, %v404
    %v409 = vld [vmem:[%s8] sm:$0xf]
    %v410 = vld [vmem:[%s8 + $0x4] sm:$0xf]
    %v411 = vld [vmem:[%s8 + $0x8] sm:$0xf]
    %v412 = vld [vmem:[%s8 + $0xc] sm:$0xf]
    %v413 = vld [vmem:[%s8 + $0x10] sm:$0xf]
    %v414 = vld [vmem:[%s8 + $0x14] sm:$0xf]
    %v415 = vld [vmem:[%s8 + $0x18] sm:$0xf]
    %v416 = vld [vmem:[%s8 + $0x1c] sm:$0xf]
    %v417 = vld [vmem:[%s8 + $0x20] sm:$0xf]
    %v418 = vld [vmem:[%s8 + $0x24] sm:$0xf]
    %v419 = vld [vmem:[%s8 + $0x28] sm:$0xf]
    %v420 = vld [vmem:[%s8 + $0x2c] sm:$0xf]
    %v421 = vld [vmem:[%s8 + $0x30] sm:$0xf]
    %v422 = vld [vmem:[%s8 + $0x34] sm:$0xf]
    %v423 = vld [vmem:[%s8 + $0x38] sm:$0xf]
    %v424 = vld [vmem:[%s8 + $0x3c] sm:$0xf]
    %v425 = vpack.c.bf16 %v406, %v405
    %v426 = vpack.c.bf16 %v408, %v407
    %v443 = vunpack.c.l.b16 %v409
    %v444 = vunpack.c.l.b16 %v410
    %v445 = vunpack.c.l.b16 %v411
    %v446 = vunpack.c.l.b16 %v412
    %v447 = vunpack.c.l.b16 %v413
    %v448 = vunpack.c.l.b16 %v414
    %v449 = vunpack.c.l.b16 %v415
    %v450 = vunpack.c.l.b16 %v416
    %v451 = vunpack.c.l.b16 %v417
    %v452 = vunpack.c.l.b16 %v418
    %v453 = vunpack.c.l.b16 %v419
    %v454 = vunpack.c.l.b16 %v420
    %v455 = vunpack.c.l.b16 %v421
    %v456 = vunpack.c.l.b16 %v422
    %v457 = vunpack.c.l.b16 %v423
    %v458 = vunpack.c.l.b16 %v424
    %v459 = vpack.c.b16 %v444, %v443
    %v460 = vpack.c.b16 %v446, %v445
    %v461 = vpack.c.b16 %v448, %v447
    %v462 = vpack.c.b16 %v450, %v449
    %v463 = vpack.c.b16 %v452, %v451
    %v464 = vpack.c.b16 %v454, %v453
    %v465 = vpack.c.b16 %v456, %v455
    %v466 = vpack.c.b16 %v458, %v457
    %475 = vmatprep.subr.bf16.mxu0 0
    %476 = vmatpush1.bf16.msra.mxu0 %v466
    %477 = vmatprep.subr.bf16.mxu0 0
    %478 = vmatpush1.bf16.msra.mxu0 %v465
    %479 = vmatprep.subr.bf16.mxu0 0
    %480 = vmatpush1.bf16.msra.mxu0 %v464
    %481 = vmatprep.subr.bf16.mxu0 0
    %482 = vmatpush1.bf16.msra.mxu0 %v463
    %483 = vmatprep.subr.bf16.mxu0 0
    %484 = vmatpush1.bf16.msra.mxu0 %v462
    %485 = vmatprep.subr.bf16.mxu0 0
    %486 = vmatpush1.bf16.msra.mxu0 %v461
    %487 = vmatprep.subr.bf16.mxu0 0
    %488 = vmatpush1.bf16.msra.mxu0 %v460
    %489 = vmatprep.subr.bf16.mxu0 0
    %490 = vmatpush1.bf16.msra.mxu0 %v459
    %491 = vmatprep.subr.bf16.mxu0 0
    %492 = vmatpush2.bf16.msra.mxu0 0
    %493 = vmatprep.subr.bf16.mxu0 0
    %494 = vmatpush2.bf16.msra.mxu0 0
    %495 = vmatprep.subr.bf16.mxu0 0
    %496 = vmatpush2.bf16.msra.mxu0 0
    %497 = vmatprep.subr.bf16.mxu0 0
    %498 = vmatpush2.bf16.msra.mxu0 0
    %499 = vmatprep.subr.bf16.mxu0 0
    %500 = vmatpush2.bf16.msra.mxu0 0
    %501 = vmatprep.subr.bf16.mxu0 0
    %502 = vmatpush2.bf16.msra.mxu0 0
    %503 = vmatprep.subr.bf16.mxu0 0
    %504 = vmatpush2.bf16.msra.mxu0 0
    %505 = vmatprep.subr.bf16.mxu0 0
    %506 = vmatpush2.bf16.msra.mxu0 0
    %507 = vmatprep.mubr.bf16.mxu0 0
    %508 = vmatmul.mubr.bf16.gmra.mxu0 %v425
    %v509 = vpop.f32.mrf.mxu0
    %v510 = vadd.f32 0.0, %v509
    %v511 = vpop.f32.mrf.mxu0
    %v512 = vpop.f32.mrf.mxu0
    %v513 = vadd.f32 0.0, %v512
    %v514 = vpop.f32.mrf.mxu0
    %515 = vmatprep.mubr.bf16.mxu0 0
    %516 = vmatmul.mubr.bf16.gmra.mxu0 %v426
    %v517 = vpop.f32.mrf.mxu0
    %v518 = vadd.f32 0.0, %v517
    %v519 = vpop.f32.mrf.mxu0
    %v520 = vpop.f32.mrf.mxu0
    %v521 = vadd.f32 0.0, %v520
    %v522 = vpop.f32.mrf.mxu0
    %523 = vdwg.mxu0
    %v524 = vadd.f32 %v214, %v510
    %v525 = vadd.f32 %v215, %v513
    %v526 = vadd.f32 %v216, %v518
    %v527 = vadd.f32 %v217, %v521
    %v528 = vld [vmem:[#allocation12] sm:$0x1]
    %v530 = vlaneseq
    %v531 = vshrl.u32 %v530, 7
    %v532 = vsub.s32 0, %v531
    %v533 = vrot.slane %v528, %v532
    %v535 = vadd.f32 %v524, %v533
    %v536 = vadd.f32 %v525, %v533
    %v537 = vadd.f32 %v526, %v533
    %v538 = vadd.f32 %v527, %v533
    %539 = vst.msk [vmem:[%s10] sm:$0xff] %vm147, %v535
    %540 = vst.msk [vmem:[%s10 + $0x8] sm:$0xff] %vm147, %v536
    %541 = vst.msk [vmem:[%s10 + $0x10] sm:$0xff] %vm147, %v537
    %542 = vst.msk [vmem:[%s10 + $0x18] sm:$0xff] %vm147, %v538
    // Predicated region
    $region70: #{forward.18} parent=1 // pred_check
      _
    $region71: #{forward.18} parent=1 // pred_check_branch
      %544 = sbr.rel (0) target = $region73
    $region72: #{forward.18} parent=1 // pred_region
      _
    $region73: #{forward.18} parent=1 // pred_fallthru
      _
    // Predicated region
    $region74: #{forward.18} parent=1 // pred_check
      _
    $region75: #{forward.18} parent=1 // pred_check_branch
      %546 = sbr.rel (0) target = $region77
    $region76: #{forward.18} parent=1 // pred_region
      _
    $region77: #{forward.18} parent=1 // pred_fallthru
      _
    %547 = vsyncpa [#allocation3], 1
    %548 = vsyncpa [#allocation5], 1
    %549 = vsyncpa [#allocation8], 1
    %550 = vsyncpa [#allocation11], 1

// kernel: forward.21
$region0: #{forward.21}
  #allocation0 [shape = 'u32[]', space=smem, size = 0x4, offset = 0x4, fixed_abs, tag = 'smem constant byte address 0x4 - core index']
  #allocation1 [shape = 'u32[144,128]{1,0:T(1,128)}', space=vmem, size = 0x12000, scoped, tag = 'internal scratch']
  %s0 = inlined_call_operand.vmem [shape: f32[32,32], index: 0, kind: input, shape index: {}]
  %s1 = inlined_call_operand.vmem [shape: f32[32,32], index: 1, kind: input, shape index: {}]
  %s2 = inlined_call_operand.vmem [shape: bf16[32,32], index: 2, kind: input, shape index: {}]
  %s3 = inlined_call_operand.vmem [shape: f32[1,32], index: 3, kind: input, shape index: {}]
  %s4 = inlined_call_operand.vmem [shape: f32[1,32], index: 4, kind: input, shape index: {}]
  %s5 = inlined_call_operand.vmem [shape: f32[1,32], index: 5, kind: input, shape index: {}]
  %s6 = inlined_call_operand.vmem [shape: bf16[32,128], index: 6, kind: input, shape index: {}]
  %s7 = inlined_call_operand.vmem [shape: f32[1,128], index: 7, kind: input, shape index: {}]
  %s8 = inlined_call_operand.vmem [shape: bf16[128,32], index: 8, kind: input, shape index: {}]
  %s9 = inlined_call_operand.vmem [shape: f32[1,32], index: 9, kind: input, shape index: {}]
  %s10 = inlined_call_operand.vmem [shape: f32[32,32], index: 10, kind: output, shape index: {}]
  %s11 = sld [smem:[#allocation0]]
  $region50: #{forward.21} parent=0
    _
  %s13 = ssub.s32 1, %s11
  %s14 = scalar_select 0, %s13, %s11
  // Predicated region
  $region2: #{forward.21} parent=0 // pred_check
    _
  $region3: #{forward.21} parent=0 // pred_check_branch
    %16 = sbr.rel (0) target = $region5
  $region4: #{forward.21} parent=0 // pred_region
    _
  $region5: #{forward.21} parent=0 // pred_fallthru
    _
  // Predicated region
  $region6: #{forward.21} parent=0 // pred_check
    _
  $region7: #{forward.21} parent=0 // pred_check_branch
    %18 = sbr.rel (0) target = $region9
  $region8: #{forward.21} parent=0 // pred_region
    _
  $region9: #{forward.21} parent=0 // pred_fallthru
    _
  // Predicated region
  $region10: #{forward.21} parent=0 // pred_check
    _
  $region11: #{forward.21} parent=0 // pred_check_branch
    %20 = sbr.rel (0) target = $region13
  $region12: #{forward.21} parent=0 // pred_region
    _
  $region13: #{forward.21} parent=0 // pred_fallthru
    _
  // Predicated region
  $region14: #{forward.21} parent=0 // pred_check
    _
  $region15: #{forward.21} parent=0 // pred_check_branch
    %22 = sbr.rel (0) target = $region17
  $region16: #{forward.21} parent=0 // pred_region
    _
  $region17: #{forward.21} parent=0 // pred_fallthru
    _
  // Predicated region
  $region18: #{forward.21} parent=0 // pred_check
    _
  $region19: #{forward.21} parent=0 // pred_check_branch
    %24 = sbr.rel (0) target = $region21
  $region20: #{forward.21} parent=0 // pred_region
    _
  $region21: #{forward.21} parent=0 // pred_fallthru
    _
  // Predicated region
  $region22: #{forward.21} parent=0 // pred_check
    _
  $region23: #{forward.21} parent=0 // pred_check_branch
    %26 = sbr.rel (0) target = $region25
  $region24: #{forward.21} parent=0 // pred_region
    _
  $region25: #{forward.21} parent=0 // pred_fallthru
    _
  // Predicated region
  $region26: #{forward.21} parent=0 // pred_check
    _
  $region27: #{forward.21} parent=0 // pred_check_branch
    %28 = sbr.rel (0) target = $region29
  $region28: #{forward.21} parent=0 // pred_region
    _
  $region29: #{forward.21} parent=0 // pred_fallthru
    _
  // Predicated region
  $region30: #{forward.21} parent=0 // pred_check
    _
  $region31: #{forward.21} parent=0 // pred_check_branch
    %30 = sbr.rel (0) target = $region33
  $region32: #{forward.21} parent=0 // pred_region
    _
  $region33: #{forward.21} parent=0 // pred_fallthru
    _
  // Predicated region
  $region34: #{forward.21} parent=0 // pred_check
    _
  $region35: #{forward.21} parent=0 // pred_check_branch
    %32 = sbr.rel (0) target = $region37
  $region36: #{forward.21} parent=0 // pred_region
    _
  $region37: #{forward.21} parent=0 // pred_fallthru
    _
  // Predicated region
  $region38: #{forward.21} parent=0 // pred_check
    _
  $region39: #{forward.21} parent=0 // pred_check_branch
    %34 = sbr.rel (0) target = $region41
  $region40: #{forward.21} parent=0 // pred_region
    _
  $region41: #{forward.21} parent=0 // pred_fallthru
    _
  %v36 = vld [vmem:[%s0] sm:$0xff]
  %v37 = vld [vmem:[%s0 + $0x8] sm:$0xff]
  %v38 = vld [vmem:[%s0 + $0x10] sm:$0xff]
  %v39 = vld [vmem:[%s0 + $0x18] sm:$0xff]
  %v40 = vld [vmem:[%s1] sm:$0xff]
  %v41 = vld [vmem:[%s1 + $0x8] sm:$0xff]
  %v42 = vld [vmem:[%s1 + $0x10] sm:$0xff]
  %v43 = vld [vmem:[%s1 + $0x18] sm:$0xff]
  %v44 = vld [vmem:[%s2] sm:$0xf]
  %v45 = vld [vmem:[%s2 + $0x4] sm:$0xf]
  %v46 = vld [vmem:[%s2 + $0x8] sm:$0xf]
  %v47 = vld [vmem:[%s2 + $0xc] sm:$0xf]
  %v48 = vpack.c.bf16 %v41, %v40
  %v49 = vpack.c.bf16 %v43, %v42
  %v54 = vunpack.c.l.b16 %v44
  %v55 = vunpack.c.l.b16 %v45
  %v56 = vunpack.c.l.b16 %v46
  %v57 = vunpack.c.l.b16 %v47
  %v58 = vpack.c.b16 %v55, %v54
  %v59 = vpack.c.b16 %v57, %v56
  %vm62 = vcmask 261120
  %v64 = vsel %vm62, %v48, 0
  %v67 = vsel %vm62, %v49, 0
  %69 = vmatprep.subr.bf16.mxu0 0
  %70 = vmatpush1.bf16.msra.mxu0 0
  %71 = vmatprep.subr.bf16.mxu0 0
  %72 = vmatpush1.bf16.msra.mxu0 0
  %73 = vmatprep.subr.bf16.mxu0 0
  %74 = vmatpush1.bf16.msra.mxu0 0
  %75 = vmatprep.subr.bf16.mxu0 0
  %76 = vmatpush1.bf16.msra.mxu0 0
  %77 = vmatprep.subr.bf16.mxu0 0
  %78 = vmatpush1.bf16.msra.mxu0 0
  %79 = vmatprep.subr.bf16.mxu0 0
  %80 = vmatpush1.bf16.msra.mxu0 0
  %81 = vmatprep.subr.bf16.mxu0 0
  %82 = vmatpush1.bf16.msra.mxu0 %v59
  %83 = vmatprep.subr.bf16.mxu0 0
  %84 = vmatpush1.bf16.msra.mxu0 %v58
  %85 = vmatprep.subr.bf16.mxu0 0
  %86 = vmatpush2.bf16.msra.mxu0 0
  %87 = vmatprep.subr.bf16.mxu0 0
  %88 = vmatpush2.bf16.msra.mxu0 0
  %89 = vmatprep.subr.bf16.mxu0 0
  %90 = vmatpush2.bf16.msra.mxu0 0
  %91 = vmatprep.subr.bf16.mxu0 0
  %92 = vmatpush2.bf16.msra.mxu0 0
  %93 = vmatprep.subr.bf16.mxu0 0
  %94 = vmatpush2.bf16.msra.mxu0 0
  %95 = vmatprep.subr.bf16.mxu0 0
  %96 = vmatpush2.bf16.msra.mxu0 0
  %97 = vmatprep.subr.bf16.mxu0 0
  %98 = vmatpush2.bf16.msra.mxu0 0
  %99 = vmatprep.subr.bf16.mxu0 0
  %100 = vmatpush2.bf16.msra.mxu0 0
  %101 = vmatprep.mubr.bf16.mxu0 0
  %102 = vmatmul.mubr.bf16.gmra.mxu0 %v64
  %v103 = vpop.f32.mrf.mxu0
  %v104 = vadd.f32 0.0, %v103
  %v105 = vpop.f32.mrf.mxu0
  %v106 = vpop.f32.mrf.mxu0
  %v107 = vadd.f32 0.0, %v106
  %v108 = vpop.f32.mrf.mxu0
  %109 = vmatprep.mubr.bf16.mxu0 0
  %110 = vmatmul.mubr.bf16.gmra.mxu0 %v67
  %v111 = vpop.f32.mrf.mxu0
  %v112 = vadd.f32 0.0, %v111
  %v113 = vpop.f32.mrf.mxu0
  %v114 = vpop.f32.mrf.mxu0
  %v115 = vadd.f32 0.0, %v114
  %v116 = vpop.f32.mrf.mxu0
  %117 = vdwg.mxu0
  %v118 = vadd.f32 %v36, %v104
  %v119 = vadd.f32 %v37, %v107
  %v120 = vadd.f32 %v38, %v112
  %v121 = vadd.f32 %v39, %v115
  %v122 = vld [vmem:[%s3] sm:$0x1]
  %v124 = vlaneseq
  %v125 = vshrl.u32 %v124, 7
  %v126 = vsub.s32 0, %v125
  %v127 = vrot.slane %v122, %v126
  %v129 = vadd.f32 %v118, %v127
  %v130 = vadd.f32 %v119, %v127
  %v131 = vadd.f32 %v120, %v127
  %v132 = vadd.f32 %v121, %v127
  %v133 = vld [vmem:[%s4] sm:$0x1]
  %v134 = vld [vmem:[%s5] sm:$0x1]
  %v135 = vsel %vm62, %v129, 0.0
  %136 = vadd.xlane.f32.xlu0 %v135
  %v137 = vpop.xlane.xlu0 %136
  %v138 = vsel %vm62, %v130, 0.0
  %139 = vadd.xlane.f32.xlu0 %v138
  %v140 = vpop.xlane.xlu0 %139
  %v141 = vsel %vm62, %v131, 0.0
  %142 = vadd.xlane.f32.xlu0 %v141
  %v143 = vpop.xlane.xlu0 %142
  %v144 = vsel %vm62, %v132, 0.0
  %145 = vadd.xlane.f32.xlu0 %v144
  %v146 = vpop.xlane.xlu0 %145
  %v147 = vrcp.pop 32.0
  %v148 = vmul.f32 %v137, %v147
  %v149 = vmul.f32 %v140, %v147
  %v150 = vmul.f32 %v143, %v147
  %v151 = vmul.f32 %v146, %v147
  %v152 = vsub.f32 %v129, %v148
  %v153 = vsub.f32 %v130, %v149
  %v154 = vsub.f32 %v131, %v150
  %v155 = vsub.f32 %v132, %v151
  %v156 = vmul.f32 %v152, %v152
  %v157 = vmul.f32 %v153, %v153
  %v158 = vmul.f32 %v154, %v154
  %v159 = vmul.f32 %v155, %v155
  %v160 = vsel %vm62, %v156, 0.0
  %161 = vadd.xlane.f32.xlu0 %v160
  %v162 = vpop.xlane.xlu0 %161
  %v163 = vsel %vm62, %v157, 0.0
  %164 = vadd.xlane.f32.xlu0 %v163
  %v165 = vpop.xlane.xlu0 %164
  %v166 = vsel %vm62, %v158, 0.0
  %167 = vadd.xlane.f32.xlu0 %v166
  %v168 = vpop.xlane.xlu0 %167
  %v169 = vsel %vm62, %v159, 0.0
  %170 = vadd.xlane.f32.xlu0 %v169
  %v171 = vpop.xlane.xlu0 %170
  %v172 = vmul.f32 %v162, %v147
  %v173 = vmul.f32 %v165, %v147
  %v174 = vmul.f32 %v168, %v147
  %v175 = vmul.f32 %v171, %v147
  %v176 = vadd.f32 %v172, 1e-05
  %v177 = vadd.f32 %v173, 1e-05
  %v178 = vadd.f32 %v174, 1e-05
  %v179 = vadd.f32 %v175, 1e-05
  %v180 = vrsqrt.pop %v176
  %v181 = vrsqrt.pop %v177
  %v182 = vrsqrt.pop %v178
  %v183 = vrsqrt.pop %v179
  %v184 = vmul.f32 %v152, %v180
  %v185 = vmul.f32 %v153, %v181
  %v186 = vmul.f32 %v154, %v182
  %v187 = vmul.f32 %v155, %v183
  %v189 = vlaneseq
  %v190 = vshrl.u32 %v189, 7
  %v191 = vsub.s32 0, %v190
  %v192 = vrot.slane %v133, %v191
  %v194 = vmul.f32 %v184, %v192
  %v195 = vmul.f32 %v185, %v192
  %v196 = vmul.f32 %v186, %v192
  %v197 = vmul.f32 %v187, %v192
  %v199 = vlaneseq
  %v200 = vshrl.u32 %v199, 7
  %v201 = vsub.s32 0, %v200
  %v202 = vrot.slane %v134, %v201
  %v204 = vadd.f32 %v194, %v202
  %v205 = vadd.f32 %v195, %v202
  %v206 = vadd.f32 %v196, %v202
  %v207 = vadd.f32 %v197, %v202
  %v208 = vld [vmem:[%s6] sm:$0xf]
  %v209 = vld [vmem:[%s6 + $0x4] sm:$0xf]
  %v210 = vld [vmem:[%s6 + $0x8] sm:$0xf]
  %v211 = vld [vmem:[%s6 + $0xc] sm:$0xf]
  %v212 = vpack.c.bf16 %v205, %v204
  %v213 = vpack.c.bf16 %v207, %v206
  %v214 = vld [vmem:[%s7] sm:$0x1]
  %v216 = vlaneseq
  %v217 = vshrl.u32 %v216, 7
  %v218 = vsub.s32 0, %v217
  %v219 = vrot.slane %v214, %v218
  %v225 = vunpack.c.l.b16 %v208
  %v226 = vunpack.c.l.b16 %v209
  %v227 = vunpack.c.l.b16 %v210
  %v228 = vunpack.c.l.b16 %v211
  %v229 = vpack.c.b16 %v226, %v225
  %v230 = vpack.c.b16 %v228, %v227
  %v234 = vsel %vm62, %v212, 0
  %v237 = vsel %vm62, %v213, 0
  %239 = vmatprep.subr.bf16.mxu0 0
  %240 = vmatpush1.bf16.msra.mxu0 0
  %241 = vmatprep.subr.bf16.mxu0 0
  %242 = vmatpush1.bf16.msra.mxu0 0
  %243 = vmatprep.subr.bf16.mxu0 0
  %244 = vmatpush1.bf16.msra.mxu0 0
  %245 = vmatprep.subr.bf16.mxu0 0
  %246 = vmatpush1.bf16.msra.mxu0 0
  %247 = vmatprep.subr.bf16.mxu0 0
  %248 = vmatpush1.bf16.msra.mxu0 0
  %249 = vmatprep.subr.bf16.mxu0 0
  %250 = vmatpush1.bf16.msra.mxu0 0
  %251 = vmatprep.subr.bf16.mxu0 0
  %252 = vmatpush1.bf16.msra.mxu0 %v230
  %253 = vmatprep.subr.bf16.mxu0 0
  %254 = vmatpush1.bf16.msra.mxu0 %v229
  %255 = vmatprep.subr.bf16.mxu0 0
  %256 = vmatpush2.bf16.msra.mxu0 0
  %257 = vmatprep.subr.bf16.mxu0 0
  %258 = vmatpush2.bf16.msra.mxu0 0
  %259 = vmatprep.subr.bf16.mxu0 0
  %260 = vmatpush2.bf16.msra.mxu0 0
  %261 = vmatprep.subr.bf16.mxu0 0
  %262 = vmatpush2.bf16.msra.mxu0 0
  %263 = vmatprep.subr.bf16.mxu0 0
  %264 = vmatpush2.bf16.msra.mxu0 0
  %265 = vmatprep.subr.bf16.mxu0 0
  %266 = vmatpush2.bf16.msra.mxu0 0
  %267 = vmatprep.subr.bf16.mxu0 0
  %268 = vmatpush2.bf16.msra.mxu0 0
  %269 = vmatprep.subr.bf16.mxu0 0
  %270 = vmatpush2.bf16.msra.mxu0 0
  %271 = vmatprep.mubr.bf16.mxu0 0
  %272 = vmatmul.mubr.bf16.gmra.mxu0 %v234
  %v273 = vpop.f32.mrf.mxu0
  %v274 = vadd.f32 %v219, %v273
  %v275 = vpop.f32.mrf.mxu0
  %v276 = vpop.f32.mrf.mxu0
  %v277 = vadd.f32 %v219, %v276
  %v278 = vpop.f32.mrf.mxu0
  %279 = vmatprep.mubr.bf16.mxu0 0
  %280 = vmatmul.mubr.bf16.gmra.mxu0 %v237
  %v281 = vpop.f32.mrf.mxu0
  %v282 = vadd.f32 %v219, %v281
  %v283 = vpop.f32.mrf.mxu0
  %v284 = vpop.f32.mrf.mxu0
  %v285 = vadd.f32 %v219, %v284
  %v286 = vpop.f32.mrf.mxu0
  %287 = vdwg.mxu0
  %v288 = vmul.f32 %v274, %v274
  %v289 = vmul.f32 %v277, %v277
  %v290 = vmul.f32 %v282, %v282
  %v291 = vmul.f32 %v285, %v285
  %v292 = vmul.f32 %v274, %v288
  %v293 = vmul.f32 %v277, %v289
  %v294 = vmul.f32 %v282, %v290
  %v295 = vmul.f32 %v285, %v291
  %v296 = vmul.f32 %v292, 0.044715
  %v297 = vmul.f32 %v293, 0.044715
  %v298 = vmul.f32 %v294, 0.044715
  %v299 = vmul.f32 %v295, 0.044715
  %v300 = vadd.f32 %v274, %v296
  %v301 = vadd.f32 %v277, %v297
  %v302 = vadd.f32 %v282, %v298
  %v303 = vadd.f32 %v285, %v299
  %v304 = vmul.f32 %v300, 0.7978846
  %v305 = vmul.f32 %v301, 0.7978846
  %v306 = vmul.f32 %v302, 0.7978846
  %v307 = vmul.f32 %v303, 0.7978846
  %v308 = vtanh.pop %v304
  %v309 = vtanh.pop %v305
  %v310 = vtanh.pop %v306
  %v311 = vtanh.pop %v307
  %v312 = vadd.f32 %v308, 1.0
  %v313 = vadd.f32 %v309, 1.0
  %v314 = vadd.f32 %v310, 1.0
  %v315 = vadd.f32 %v311, 1.0
  %v316 = vmul.f32 %v312, 0.5
  %v317 = vmul.f32 %v313, 0.5
  %v318 = vmul.f32 %v314, 0.5
  %v319 = vmul.f32 %v315, 0.5
  %v320 = vmul.f32 %v274, %v316
  %v321 = vmul.f32 %v277, %v317
  %v322 = vmul.f32 %v282, %v318
  %v323 = vmul.f32 %v285, %v319
  %v324 = vld [vmem:[%s8] sm:$0xf]
  %v325 = vld [vmem:[%s8 + $0x4] sm:$0xf]
  %v326 = vld [vmem:[%s8 + $0x8] sm:$0xf]
  %v327 = vld [vmem:[%s8 + $0xc] sm:$0xf]
  %v328 = vld [vmem:[%s8 + $0x10] sm:$0xf]
  %v329 = vld [vmem:[%s8 + $0x14] sm:$0xf]
  %v330 = vld [vmem:[%s8 + $0x18] sm:$0xf]
  %v331 = vld [vmem:[%s8 + $0x1c] sm:$0xf]
  %v332 = vld [vmem:[%s8 + $0x20] sm:$0xf]
  %v333 = vld [vmem:[%s8 + $0x24] sm:$0xf]
  %v334 = vld [vmem:[%s8 + $0x28] sm:$0xf]
  %v335 = vld [vmem:[%s8 + $0x2c] sm:$0xf]
  %v336 = vld [vmem:[%s8 + $0x30] sm:$0xf]
  %v337 = vld [vmem:[%s8 + $0x34] sm:$0xf]
  %v338 = vld [vmem:[%s8 + $0x38] sm:$0xf]
  %v339 = vld [vmem:[%s8 + $0x3c] sm:$0xf]
  %v340 = vpack.c.bf16 %v321, %v320
  %v341 = vpack.c.bf16 %v323, %v322
  %v358 = vunpack.c.l.b16 %v324
  %v359 = vunpack.c.l.b16 %v325
  %v360 = vunpack.c.l.b16 %v326
  %v361 = vunpack.c.l.b16 %v327
  %v362 = vunpack.c.l.b16 %v328
  %v363 = vunpack.c.l.b16 %v329
  %v364 = vunpack.c.l.b16 %v330
  %v365 = vunpack.c.l.b16 %v331
  %v366 = vunpack.c.l.b16 %v332
  %v367 = vunpack.c.l.b16 %v333
  %v368 = vunpack.c.l.b16 %v334
  %v369 = vunpack.c.l.b16 %v335
  %v370 = vunpack.c.l.b16 %v336
  %v371 = vunpack.c.l.b16 %v337
  %v372 = vunpack.c.l.b16 %v338
  %v373 = vunpack.c.l.b16 %v339
  %v374 = vpack.c.b16 %v359, %v358
  %v375 = vpack.c.b16 %v361, %v360
  %v376 = vpack.c.b16 %v363, %v362
  %v377 = vpack.c.b16 %v365, %v364
  %v378 = vpack.c.b16 %v367, %v366
  %v379 = vpack.c.b16 %v369, %v368
  %v380 = vpack.c.b16 %v371, %v370
  %v381 = vpack.c.b16 %v373, %v372
  %390 = vmatprep.subr.bf16.mxu0 0
  %391 = vmatpush1.bf16.msra.mxu0 %v381
  %392 = vmatprep.subr.bf16.mxu0 0
  %393 = vmatpush1.bf16.msra.mxu0 %v380
  %394 = vmatprep.subr.bf16.mxu0 0
  %395 = vmatpush1.bf16.msra.mxu0 %v379
  %396 = vmatprep.subr.bf16.mxu0 0
  %397 = vmatpush1.bf16.msra.mxu0 %v378
  %398 = vmatprep.subr.bf16.mxu0 0
  %399 = vmatpush1.bf16.msra.mxu0 %v377
  %400 = vmatprep.subr.bf16.mxu0 0
  %401 = vmatpush1.bf16.msra.mxu0 %v376
  %402 = vmatprep.subr.bf16.mxu0 0
  %403 = vmatpush1.bf16.msra.mxu0 %v375
  %404 = vmatprep.subr.bf16.mxu0 0
  %405 = vmatpush1.bf16.msra.mxu0 %v374
  %406 = vmatprep.subr.bf16.mxu0 0
  %407 = vmatpush2.bf16.msra.mxu0 0
  %408 = vmatprep.subr.bf16.mxu0 0
  %409 = vmatpush2.bf16.msra.mxu0 0
  %410 = vmatprep.subr.bf16.mxu0 0
  %411 = vmatpush2.bf16.msra.mxu0 0
  %412 = vmatprep.subr.bf16.mxu0 0
  %413 = vmatpush2.bf16.msra.mxu0 0
  %414 = vmatprep.subr.bf16.mxu0 0
  %415 = vmatpush2.bf16.msra.mxu0 0
  %416 = vmatprep.subr.bf16.mxu0 0
  %417 = vmatpush2.bf16.msra.mxu0 0
  %418 = vmatprep.subr.bf16.mxu0 0
  %419 = vmatpush2.bf16.msra.mxu0 0
  %420 = vmatprep.subr.bf16.mxu0 0
  %421 = vmatpush2.bf16.msra.mxu0 0
  %422 = vmatprep.mubr.bf16.mxu0 0
  %423 = vmatmul.mubr.bf16.gmra.mxu0 %v340
  %v424 = vpop.f32.mrf.mxu0
  %v425 = vadd.f32 0.0, %v424
  %v426 = vpop.f32.mrf.mxu0
  %v427 = vpop.f32.mrf.mxu0
  %v428 = vadd.f32 0.0, %v427
  %v429 = vpop.f32.mrf.mxu0
  %430 = vmatprep.mubr.bf16.mxu0 0
  %431 = vmatmul.mubr.bf16.gmra.mxu0 %v341
  %v432 = vpop.f32.mrf.mxu0
  %v433 = vadd.f32 0.0, %v432
  %v434 = vpop.f32.mrf.mxu0
  %v435 = vpop.f32.mrf.mxu0
  %v436 = vadd.f32 0.0, %v435
  %v437 = vpop.f32.mrf.mxu0
  %438 = vdwg.mxu0
  %v439 = vadd.f32 %v129, %v425
  %v440 = vadd.f32 %v130, %v428
  %v441 = vadd.f32 %v131, %v433
  %v442 = vadd.f32 %v132, %v436
  %v443 = vld [vmem:[%s9] sm:$0x1]
  %v445 = vlaneseq
  %v446 = vshrl.u32 %v445, 7
  %v447 = vsub.s32 0, %v446
  %v448 = vrot.slane %v443, %v447
  %v450 = vadd.f32 %v439, %v448
  %v451 = vadd.f32 %v440, %v448
  %v452 = vadd.f32 %v441, %v448
  %v453 = vadd.f32 %v442, %v448
  %454 = vst.msk [vmem:[%s10] sm:$0xff] %vm62, %v450
  %455 = vst.msk [vmem:[%s10 + $0x8] sm:$0xff] %vm62, %v451
  %456 = vst.msk [vmem:[%s10 + $0x10] sm:$0xff] %vm62, %v452
  %457 = vst.msk [vmem:[%s10 + $0x18] sm:$0xff] %vm62, %v453
  // Predicated region
  $region42: #{forward.21} parent=0 // pred_check
    _
  $region43: #{forward.21} parent=0 // pred_check_branch
    %459 = sbr.rel (0) target = $region45
  $region44: #{forward.21} parent=0 // pred_region
    _
  $region45: #{forward.21} parent=0 // pred_fallthru
    _
  // Predicated region
  $region46: #{forward.21} parent=0 // pred_check
    _
  $region47: #{forward.21} parent=0 // pred_check_branch
    %461 = sbr.rel (0) target = $region49
  $region48: #{forward.21} parent=0 // pred_region
    _
  $region49: #{forward.21} parent=0 // pred_fallthru
    _

// kernel: forward.17
$region0: #{forward.17}
  #allocation0 [shape = 'u32[]', space=smem, size = 0x4, offset = 0x4, fixed_abs, tag = 'smem constant byte address 0x4 - core index']
  #allocation1 [shape = 'u32[144,128]{1,0:T(1,128)}', space=vmem, size = 0x12000, scoped, tag = 'internal scratch']
  %s0 = inlined_call_operand.vmem [shape: f32[16,4,16], index: 0, kind: input, shape index: {}]
  %s1 = inlined_call_operand.vmem [shape: f32[16,4,16], index: 1, kind: input, shape index: {}]
  %s2 = inlined_call_operand.vmem [shape: f32[16,4,16], index: 2, kind: input, shape index: {}]
  %s3 = inlined_call_operand.vmem [shape: f32[8,4,4], index: 3, kind: input, shape index: {}]
  %s4 = inlined_call_operand.vmem [shape: f32[16,4,16], index: 4, kind: output, shape index: {}]
  %s5 = sld [smem:[#allocation0]]
  $region26: #{forward.17} parent=0
    _
  %s7 = ssub.s32 1, %s5
  %s8 = scalar_select 0, %s7, %s5
  // Predicated region
  $region2: #{forward.17} parent=0 // pred_check
    _
  $region3: #{forward.17} parent=0 // pred_check_branch
    %10 = sbr.rel (0) target = $region5
  $region4: #{forward.17} parent=0 // pred_region
    _
  $region5: #{forward.17} parent=0 // pred_fallthru
    _
  // Predicated region
  $region6: #{forward.17} parent=0 // pred_check
    _
  $region7: #{forward.17} parent=0 // pred_check_branch
    %12 = sbr.rel (0) target = $region9
  $region8: #{forward.17} parent=0 // pred_region
    _
  $region9: #{forward.17} parent=0 // pred_fallthru
    _
  // Predicated region
  $region10: #{forward.17} parent=0 // pred_check
    _
  $region11: #{forward.17} parent=0 // pred_check_branch
    %14 = sbr.rel (0) target = $region13
  $region12: #{forward.17} parent=0 // pred_region
    _
  $region13: #{forward.17} parent=0 // pred_fallthru
    _
  // Predicated region
  $region14: #{forward.17} parent=0 // pred_check
    _
  $region15: #{forward.17} parent=0 // pred_check_branch
    %16 = sbr.rel (0) target = $region17
  $region16: #{forward.17} parent=0 // pred_region
    _
  $region17: #{forward.17} parent=0 // pred_fallthru
    _
  %v18 = vld [vmem:[%s0] sm:$0xf]
  %v19 = vld [vmem:[%s0 + $0x4] sm:$0xf]
  %v20 = vld [vmem:[%s0 + $0x8] sm:$0xf]
  %v21 = vld [vmem:[%s0 + $0xc] sm:$0xf]
  %v22 = vld [vmem:[%s0 + $0x10] sm:$0xf]
  %v23 = vld [vmem:[%s0 + $0x14] sm:$0xf]
  %v24 = vld [vmem:[%s0 + $0x18] sm:$0xf]
  %v25 = vld [vmem:[%s0 + $0x1c] sm:$0xf]
  %v26 = vld [vmem:[%s0 + $0x20] sm:$0xf]
  %v27 = vld [vmem:[%s0 + $0x24] sm:$0xf]
  %v28 = vld [vmem:[%s0 + $0x28] sm:$0xf]
  %v29 = vld [vmem:[%s0 + $0x2c] sm:$0xf]
  %v30 = vld [vmem:[%s0 + $0x30] sm:$0xf]
  %v31 = vld [vmem:[%s0 + $0x34] sm:$0xf]
  %v32 = vld [vmem:[%s0 + $0x38] sm:$0xf]
  %v33 = vld [vmem:[%s0 + $0x3c] sm:$0xf]
  %v34 = vpack.c.bf16 %v18, %v18
  %v35 = vpack.c.bf16 %v19, %v19
  %v36 = vpack.c.bf16 %v20, %v20
  %v37 = vpack.c.bf16 %v21, %v21
  %v38 = vpack.c.bf16 %v22, %v22
  %v39 = vpack.c.bf16 %v23, %v23
  %v40 = vpack.c.bf16 %v24, %v24
  %v41 = vpack.c.bf16 %v25, %v25
  %v42 = vpack.c.bf16 %v26, %v26
  %v43 = vpack.c.bf16 %v27, %v27
  %v44 = vpack.c.bf16 %v28, %v28
  %v45 = vpack.c.bf16 %v29, %v29
  %v46 = vpack.c.bf16 %v30, %v30
  %v47 = vpack.c.bf16 %v31, %v31
  %v48 = vpack.c.bf16 %v32, %v32
  %v49 = vpack.c.bf16 %v33, %v33
  %v50 = vld [vmem:[%s1] sm:$0xf]
  %v51 = vld [vmem:[%s1 + $0x4] sm:$0xf]
  %v52 = vld [vmem:[%s1 + $0x8] sm:$0xf]
  %v53 = vld [vmem:[%s1 + $0xc] sm:$0xf]
  %v54 = vld [vmem:[%s1 + $0x10] sm:$0xf]
  %v55 = vld [vmem:[%s1 + $0x14] sm:$0xf]
  %v56 = vld [vmem:[%s1 + $0x18] sm:$0xf]
  %v57 = vld [vmem:[%s1 + $0x1c] sm:$0xf]
  %v58 = vld [vmem:[%s1 + $0x20] sm:$0xf]
  %v59 = vld [vmem:[%s1 + $0x24] sm:$0xf]
  %v60 = vld [vmem:[%s1 + $0x28] sm:$0xf]
  %v61 = vld [vmem:[%s1 + $0x2c] sm:$0xf]
  %v62 = vld [vmem:[%s1 + $0x30] sm:$0xf]
  %v63 = vld [vmem:[%s1 + $0x34] sm:$0xf]
  %v64 = vld [vmem:[%s1 + $0x38] sm:$0xf]
  %v65 = vld [vmem:[%s1 + $0x3c] sm:$0xf]
  %v66 = vpack.c.bf16 %v50, %v50
  %v67 = vpack.c.bf16 %v51, %v51
  %v68 = vpack.c.bf16 %v52, %v52
  %v69 = vpack.c.bf16 %v53, %v53
  %v70 = vpack.c.bf16 %v54, %v54
  %v71 = vpack.c.bf16 %v55, %v55
  %v72 = vpack.c.bf16 %v56, %v56
  %v73 = vpack.c.bf16 %v57, %v57
  %v74 = vpack.c.bf16 %v58, %v58
  %v75 = vpack.c.bf16 %v59, %v59
  %v76 = vpack.c.bf16 %v60, %v60
  %v77 = vpack.c.bf16 %v61, %v61
  %v78 = vpack.c.bf16 %v62, %v62
  %v79 = vpack.c.bf16 %v63, %v63
  %v80 = vpack.c.bf16 %v64, %v64
  %v81 = vpack.c.bf16 %v65, %v65
  %v82 = vld [vmem:[%s2] sm:$0xf]
  %v83 = vld [vmem:[%s2 + $0x4] sm:$0xf]
  %v84 = vld [vmem:[%s2 + $0x8] sm:$0xf]
  %v85 = vld [vmem:[%s2 + $0xc] sm:$0xf]
  %v86 = vld [vmem:[%s2 + $0x10] sm:$0xf]
  %v87 = vld [vmem:[%s2 + $0x14] sm:$0xf]
  %v88 = vld [vmem:[%s2 + $0x18] sm:$0xf]
  %v89 = vld [vmem:[%s2 + $0x1c] sm:$0xf]
  %v90 = vld [vmem:[%s2 + $0x20] sm:$0xf]
  %v91 = vld [vmem:[%s2 + $0x24] sm:$0xf]
  %v92 = vld [vmem:[%s2 + $0x28] sm:$0xf]
  %v93 = vld [vmem:[%s2 + $0x2c] sm:$0xf]
  %v94 = vld [vmem:[%s2 + $0x30] sm:$0xf]
  %v95 = vld [vmem:[%s2 + $0x34] sm:$0xf]
  %v96 = vld [vmem:[%s2 + $0x38] sm:$0xf]
  %v97 = vld [vmem:[%s2 + $0x3c] sm:$0xf]
  %v98 = vpack.c.bf16 %v82, %v82
  %v99 = vpack.c.bf16 %v83, %v83
  %v100 = vpack.c.bf16 %v84, %v84
  %v101 = vpack.c.bf16 %v85, %v85
  %v102 = vpack.c.bf16 %v86, %v86
  %v103 = vpack.c.bf16 %v87, %v87
  %v104 = vpack.c.bf16 %v88, %v88
  %v105 = vpack.c.bf16 %v89, %v89
  %v106 = vpack.c.bf16 %v90, %v90
  %v107 = vpack.c.bf16 %v91, %v91
  %v108 = vpack.c.bf16 %v92, %v92
  %v109 = vpack.c.bf16 %v93, %v93
  %v110 = vpack.c.bf16 %v94, %v94
  %v111 = vpack.c.bf16 %v95, %v95
  %v112 = vpack.c.bf16 %v96, %v96
  %v113 = vpack.c.bf16 %v97, %v97
  %vm114 = vcmask 130048
  %v116 = vsel %vm114, %v34, 0
  %v119 = vsel %vm114, %v66, 0
  %121 = vmatprep.subr.bf16.mxu0 0
  %122 = vmatpush1.bf16.xpose.msra.mxu0 0
  %123 = vmatprep.subr.bf16.mxu0 0
  %124 = vmatpush1.bf16.xpose.msra.mxu0 0
  %125 = vmatprep.subr.bf16.mxu0 0
  %126 = vmatpush1.bf16.xpose.msra.mxu0 0
  %127 = vmatprep.subr.bf16.mxu0 0
  %128 = vmatpush1.bf16.xpose.msra.mxu0 0
  %129 = vmatprep.subr.bf16.mxu0 0
  %130 = vmatpush1.bf16.xpose.msra.mxu0 0
  %131 = vmatprep.subr.bf16.mxu0 0
  %132 = vmatpush1.bf16.xpose.msra.mxu0 0
  %133 = vmatprep.subr.bf16.mxu0 0
  %134 = vmatpush1.bf16.xpose.msra.mxu0 0
  %135 = vmatprep.subr.bf16.mxu0 0
  %136 = vmatpush1.bf16.xpose.msra.mxu0 %v119
  %137 = vmatprep.subr.bf16.mxu0 0
  %138 = vmatpush2.bf16.xpose.msra.mxu0 0
  %139 = vmatprep.subr.bf16.mxu0 0
  %140 = vmatpush2.bf16.xpose.msra.mxu0 0
  %141 = vmatprep.subr.bf16.mxu0 0
  %142 = vmatpush2.bf16.xpose.msra.mxu0 0
  %143 = vmatprep.subr.bf16.mxu0 0
  %144 = vmatpush2.bf16.xpose.msra.mxu0 0
  %145 = vmatprep.subr.bf16.mxu0 0
  %146 = vmatpush2.bf16.xpose.msra.mxu0 0
  %147 = vmatprep.subr.bf16.mxu0 0
  %148 = vmatpush2.bf16.xpose.msra.mxu0 0
  %149 = vmatprep.subr.bf16.mxu0 0
  %150 = vmatpush2.bf16.xpose.msra.mxu0 0
  %151 = vmatprep.subr.bf16.mxu0 0
  %152 = vmatpush2.bf16.xpose.msra.mxu0 0
  %153 = vmatprep.mubr.bf16.mxu0 0
  %154 = vmatmul.mubr.bf16.gmra.mxu0 %v116
  %v155 = vpop.f32.mrf.mxu0
  %v156 = vadd.f32 0.0, %v155
  %v157 = vpop.f32.mrf.mxu0
  %v158 = vpop.f32.mrf.mxu0
  %v159 = vpop.f32.mrf.mxu0
  %160 = vdwg.mxu0
  %v162 = vsel %vm114, %v35, 0
  %v165 = vsel %vm114, %v67, 0
  %167 = vmatprep.subr.bf16.mxu0 0
  %168 = vmatpush1.bf16.xpose.msra.mxu0 0
  %169 = vmatprep.subr.bf16.mxu0 0
  %170 = vmatpush1.bf16.xpose.msra.mxu0 0
  %171 = vmatprep.subr.bf16.mxu0 0
  %172 = vmatpush1.bf16.xpose.msra.mxu0 0
  %173 = vmatprep.subr.bf16.mxu0 0
  %174 = vmatpush1.bf16.xpose.msra.mxu0 0
  %175 = vmatprep.subr.bf16.mxu0 0
  %176 = vmatpush1.bf16.xpose.msra.mxu0 0
  %177 = vmatprep.subr.bf16.mxu0 0
  %178 = vmatpush1.bf16.xpose.msra.mxu0 0
  %179 = vmatprep.subr.bf16.mxu0 0
  %180 = vmatpush1.bf16.xpose.msra.mxu0 0
  %181 = vmatprep.subr.bf16.mxu0 0
  %182 = vmatpush1.bf16.xpose.msra.mxu0 %v165
  %183 = vmatprep.subr.bf16.mxu0 0
  %184 = vmatpush2.bf16.xpose.msra.mxu0 0
  %185 = vmatprep.subr.bf16.mxu0 0
  %186 = vmatpush2.bf16.xpose.msra.mxu0 0
  %187 = vmatprep.subr.bf16.mxu0 0
  %188 = vmatpush2.bf16.xpose.msra.mxu0 0
  %189 = vmatprep.subr.bf16.mxu0 0
  %190 = vmatpush2.bf16.xpose.msra.mxu0 0
  %191 = vmatprep.subr.bf16.mxu0 0
  %192 = vmatpush2.bf16.xpose.msra.mxu0 0
  %193 = vmatprep.subr.bf16.mxu0 0
  %194 = vmatpush2.bf16.xpose.msra.mxu0 0
  %195 = vmatprep.subr.bf16.mxu0 0
  %196 = vmatpush2.bf16.xpose.msra.mxu0 0
  %197 = vmatprep.subr.bf16.mxu0 0
  %198 = vmatpush2.bf16.xpose.msra.mxu0 0
  %199 = vmatprep.mubr.bf16.mxu0 0
  %200 = vmatmul.mubr.bf16.gmra.mxu0 %v162
  %v201 = vpop.f32.mrf.mxu0
  %v202 = vadd.f32 0.0, %v201
  %v203 = vpop.f32.mrf.mxu0
  %v204 = vpop.f32.mrf.mxu0
  %v205 = vpop.f32.mrf.mxu0
  %206 = vdwg.mxu0
  %v208 = vsel %vm114, %v36, 0
  %v211 = vsel %vm114, %v68, 0
  %213 = vmatprep.subr.bf16.mxu0 0
  %214 = vmatpush1.bf16.xpose.msra.mxu0 0
  %215 = vmatprep.subr.bf16.mxu0 0
  %216 = vmatpush1.bf16.xpose.msra.mxu0 0
  %217 = vmatprep.subr.bf16.mxu0 0
  %218 = vmatpush1.bf16.xpose.msra.mxu0 0
  %219 = vmatprep.subr.bf16.mxu0 0
  %220 = vmatpush1.bf16.xpose.msra.mxu0 0
  %221 = vmatprep.subr.bf16.mxu0 0
  %222 = vmatpush1.bf16.xpose.msra.mxu0 0
  %223 = vmatprep.subr.bf16.mxu0 0
  %224 = vmatpush1.bf16.xpose.msra.mxu0 0
  %225 = vmatprep.subr.bf16.mxu0 0
  %226 = vmatpush1.bf16.xpose.msra.mxu0 0
  %227 = vmatprep.subr.bf16.mxu0 0
  %228 = vmatpush1.bf16.xpose.msra.mxu0 %v211
  %229 = vmatprep.subr.bf16.mxu0 0
  %230 = vmatpush2.bf16.xpose.msra.mxu0 0
  %231 = vmatprep.subr.bf16.mxu0 0
  %232 = vmatpush2.bf16.xpose.msra.mxu0 0
  %233 = vmatprep.subr.bf16.mxu0 0
  %234 = vmatpush2.bf16.xpose.msra.mxu0 0
  %235 = vmatprep.subr.bf16.mxu0 0
  %236 = vmatpush2.bf16.xpose.msra.mxu0 0
  %237 = vmatprep.subr.bf16.mxu0 0
  %238 = vmatpush2.bf16.xpose.msra.mxu0 0
  %239 = vmatprep.subr.bf16.mxu0 0
  %240 = vmatpush2.bf16.xpose.msra.mxu0 0
  %241 = vmatprep.subr.bf16.mxu0 0
  %242 = vmatpush2.bf16.xpose.msra.mxu0 0
  %243 = vmatprep.subr.bf16.mxu0 0
  %244 = vmatpush2.bf16.xpose.msra.mxu0 0
  %245 = vmatprep.mubr.bf16.mxu0 0
  %246 = vmatmul.mubr.bf16.gmra.mxu0 %v208
  %v247 = vpop.f32.mrf.mxu0
  %v248 = vadd.f32 0.0, %v247
  %v249 = vpop.f32.mrf.mxu0
  %v250 = vpop.f32.mrf.mxu0
  %v251 = vpop.f32.mrf.mxu0
  %252 = vdwg.mxu0
  %v254 = vsel %vm114, %v37, 0
  %v257 = vsel %vm114, %v69, 0
  %259 = vmatprep.subr.bf16.mxu0 0
  %260 = vmatpush1.bf16.xpose.msra.mxu0 0
  %261 = vmatprep.subr.bf16.mxu0 0
  %262 = vmatpush1.bf16.xpose.msra.mxu0 0
  %263 = vmatprep.subr.bf16.mxu0 0
  %264 = vmatpush1.bf16.xpose.msra.mxu0 0
  %265 = vmatprep.subr.bf16.mxu0 0
  %266 = vmatpush1.bf16.xpose.msra.mxu0 0
  %267 = vmatprep.subr.bf16.mxu0 0
  %268 = vmatpush1.bf16.xpose.msra.mxu0 0
  %269 = vmatprep.subr.bf16.mxu0 0
  %270 = vmatpush1.bf16.xpose.msra.mxu0 0
  %271 = vmatprep.subr.bf16.mxu0 0
  %272 = vmatpush1.bf16.xpose.msra.mxu0 0
  %273 = vmatprep.subr.bf16.mxu0 0
  %274 = vmatpush1.bf16.xpose.msra.mxu0 %v257
  %275 = vmatprep.subr.bf16.mxu0 0
  %276 = vmatpush2.bf16.xpose.msra.mxu0 0
  %277 = vmatprep.subr.bf16.mxu0 0
  %278 = vmatpush2.bf16.xpose.msra.mxu0 0
  %279 = vmatprep.subr.bf16.mxu0 0
  %280 = vmatpush2.bf16.xpose.msra.mxu0 0
  %281 = vmatprep.subr.bf16.mxu0 0
  %282 = vmatpush2.bf16.xpose.msra.mxu0 0
  %283 = vmatprep.subr.bf16.mxu0 0
  %284 = vmatpush2.bf16.xpose.msra.mxu0 0
  %285 = vmatprep.subr.bf16.mxu0 0
  %286 = vmatpush2.bf16.xpose.msra.mxu0 0
  %287 = vmatprep.subr.bf16.mxu0 0
  %288 = vmatpush2.bf16.xpose.msra.mxu0 0
  %289 = vmatprep.subr.bf16.mxu0 0
  %290 = vmatpush2.bf16.xpose.msra.mxu0 0
  %291 = vmatprep.mubr.bf16.mxu0 0
  %292 = vmatmul.mubr.bf16.gmra.mxu0 %v254
  %v293 = vpop.f32.mrf.mxu0
  %v294 = vadd.f32 0.0, %v293
  %v295 = vpop.f32.mrf.mxu0
  %v296 = vpop.f32.mrf.mxu0
  %v297 = vpop.f32.mrf.mxu0
  %298 = vdwg.mxu0
  %v300 = vsel %vm114, %v38, 0
  %v303 = vsel %vm114, %v70, 0
  %305 = vmatprep.subr.bf16.mxu0 0
  %306 = vmatpush1.bf16.xpose.msra.mxu0 0
  %307 = vmatprep.subr.bf16.mxu0 0
  %308 = vmatpush1.bf16.xpose.msra.mxu0 0
  %309 = vmatprep.subr.bf16.mxu0 0
  %310 = vmatpush1.bf16.xpose.msra.mxu0 0
  %311 = vmatprep.subr.bf16.mxu0 0
  %312 = vmatpush1.bf16.xpose.msra.mxu0 0
  %313 = vmatprep.subr.bf16.mxu0 0
  %314 = vmatpush1.bf16.xpose.msra.mxu0 0
  %315 = vmatprep.subr.bf16.mxu0 0
  %316 = vmatpush1.bf16.xpose.msra.mxu0 0
  %317 = vmatprep.subr.bf16.mxu0 0
  %318 = vmatpush1.bf16.xpose.msra.mxu0 0
  %319 = vmatprep.subr.bf16.mxu0 0
  %320 = vmatpush1.bf16.xpose.msra.mxu0 %v303
  %321 = vmatprep.subr.bf16.mxu0 0
  %322 = vmatpush2.bf16.xpose.msra.mxu0 0
  %323 = vmatprep.subr.bf16.mxu0 0
  %324 = vmatpush2.bf16.xpose.msra.mxu0 0
  %325 = vmatprep.subr.bf16.mxu0 0
  %326 = vmatpush2.bf16.xpose.msra.mxu0 0
  %327 = vmatprep.subr.bf16.mxu0 0
  %328 = vmatpush2.bf16.xpose.msra.mxu0 0
  %329 = vmatprep.subr.bf16.mxu0 0
  %330 = vmatpush2.bf16.xpose.msra.mxu0 0
  %331 = vmatprep.subr.bf16.mxu0 0
  %332 = vmatpush2.bf16.xpose.msra.mxu0 0
  %333 = vmatprep.subr.bf16.mxu0 0
  %334 = vmatpush2.bf16.xpose.msra.mxu0 0
  %335 = vmatprep.subr.bf16.mxu0 0
  %336 = vmatpush2.bf16.xpose.msra.mxu0 0
  %337 = vmatprep.mubr.bf16.mxu0 0
  %338 = vmatmul.mubr.bf16.gmra.mxu0 %v300
  %v339 = vpop.f32.mrf.mxu0
  %v340 = vadd.f32 0.0, %v339
  %v341 = vpop.f32.mrf.mxu0
  %v342 = vpop.f32.mrf.mxu0
  %v343 = vpop.f32.mrf.mxu0
  %344 = vdwg.mxu0
  %v346 = vsel %vm114, %v39, 0
  %v349 = vsel %vm114, %v71, 0
  %351 = vmatprep.subr.bf16.mxu0 0
  %352 = vmatpush1.bf16.xpose.msra.mxu0 0
  %353 = vmatprep.subr.bf16.mxu0 0
  %354 = vmatpush1.bf16.xpose.msra.mxu0 0
  %355 = vmatprep.subr.bf16.mxu0 0
  %356 = vmatpush1.bf16.xpose.msra.mxu0 0
  %357 = vmatprep.subr.bf16.mxu0 0
  %358 = vmatpush1.bf16.xpose.msra.mxu0 0
  %359 = vmatprep.subr.bf16.mxu0 0
  %360 = vmatpush1.bf16.xpose.msra.mxu0 0
  %361 = vmatprep.subr.bf16.mxu0 0
  %362 = vmatpush1.bf16.xpose.msra.mxu0 0
  %363 = vmatprep.subr.bf16.mxu0 0
  %364 = vmatpush1.bf16.xpose.msra.mxu0 0
  %365 = vmatprep.subr.bf16.mxu0 0
  %366 = vmatpush1.bf16.xpose.msra.mxu0 %v349
  %367 = vmatprep.subr.bf16.mxu0 0
  %368 = vmatpush2.bf16.xpose.msra.mxu0 0
  %369 = vmatprep.subr.bf16.mxu0 0
  %370 = vmatpush2.bf16.xpose.msra.mxu0 0
  %371 = vmatprep.subr.bf16.mxu0 0
  %372 = vmatpush2.bf16.xpose.msra.mxu0 0
  %373 = vmatprep.subr.bf16.mxu0 0
  %374 = vmatpush2.bf16.xpose.msra.mxu0 0
  %375 = vmatprep.subr.bf16.mxu0 0
  %376 = vmatpush2.bf16.xpose.msra.mxu0 0
  %377 = vmatprep.subr.bf16.mxu0 0
  %378 = vmatpush2.bf16.xpose.msra.mxu0 0
  %379 = vmatprep.subr.bf16.mxu0 0
  %380 = vmatpush2.bf16.xpose.msra.mxu0 0
  %381 = vmatprep.subr.bf16.mxu0 0
  %382 = vmatpush2.bf16.xpose.msra.mxu0 0
  %383 = vmatprep.mubr.bf16.mxu0 0
  %384 = vmatmul.mubr.bf16.gmra.mxu0 %v346
  %v385 = vpop.f32.mrf.mxu0
  %v386 = vadd.f32 0.0, %v385
  %v387 = vpop.f32.mrf.mxu0
  %v388 = vpop.f32.mrf.mxu0
  %v389 = vpop.f32.mrf.mxu0
  %390 = vdwg.mxu0
  %v392 = vsel %vm114, %v40, 0
  %v395 = vsel %vm114, %v72, 0
  %397 = vmatprep.subr.bf16.mxu0 0
  %398 = vmatpush1.bf16.xpose.msra.mxu0 0
  %399 = vmatprep.subr.bf16.mxu0 0
  %400 = vmatpush1.bf16.xpose.msra.mxu0 0
  %401 = vmatprep.subr.bf16.mxu0 0
  %402 = vmatpush1.bf16.xpose.msra.mxu0 0
  %403 = vmatprep.subr.bf16.mxu0 0
  %404 = vmatpush1.bf16.xpose.msra.mxu0 0
  %405 = vmatprep.subr.bf16.mxu0 0
  %406 = vmatpush1.bf16.xpose.msra.mxu0 0
  %407 = vmatprep.subr.bf16.mxu0 0
  %408 = vmatpush1.bf16.xpose.msra.mxu0 0
  %409 = vmatprep.subr.bf16.mxu0 0
  %410 = vmatpush1.bf16.xpose.msra.mxu0 0
  %411 = vmatprep.subr.bf16.mxu0 0
  %412 = vmatpush1.bf16.xpose.msra.mxu0 %v395
  %413 = vmatprep.subr.bf16.mxu0 0
  %414 = vmatpush2.bf16.xpose.msra.mxu0 0
  %415 = vmatprep.subr.bf16.mxu0 0
  %416 = vmatpush2.bf16.xpose.msra.mxu0 0
  %417 = vmatprep.subr.bf16.mxu0 0
  %418 = vmatpush2.bf16.xpose.msra.mxu0 0
  %419 = vmatprep.subr.bf16.mxu0 0
  %420 = vmatpush2.bf16.xpose.msra.mxu0 0
  %421 = vmatprep.subr.bf16.mxu0 0
  %422 = vmatpush2.bf16.xpose.msra.mxu0 0
  %423 = vmatprep.subr.bf16.mxu0 0
  %424 = vmatpush2.bf16.xpose.msra.mxu0 0
  %425 = vmatprep.subr.bf16.mxu0 0
  %426 = vmatpush2.bf16.xpose.msra.mxu0 0
  %427 = vmatprep.subr.bf16.mxu0 0
  %428 = vmatpush2.bf16.xpose.msra.mxu0 0
  %429 = vmatprep.mubr.bf16.mxu0 0
  %430 = vmatmul.mubr.bf16.gmra.mxu0 %v392
  %v431 = vpop.f32.mrf.mxu0
  %v432 = vadd.f32 0.0, %v431
  %v433 = vpop.f32.mrf.mxu0
  %v434 = vpop.f32.mrf.mxu0
  %v435 = vpop.f32.mrf.mxu0
  %436 = vdwg.mxu0
  %v438 = vsel %vm114, %v41, 0
  %v441 = vsel %vm114, %v73, 0
  %443 = vmatprep.subr.bf16.mxu0 0
  %444 = vmatpush1.bf16.xpose.msra.mxu0 0
  %445 = vmatprep.subr.bf16.mxu0 0
  %446 = vmatpush1.bf16.xpose.msra.mxu0 0
  %447 = vmatprep.subr.bf16.mxu0 0
  %448 = vmatpush1.bf16.xpose.msra.mxu0 0
  %449 = vmatprep.subr.bf16.mxu0 0
  %450 = vmatpush1.bf16.xpose.msra.mxu0 0
  %451 = vmatprep.subr.bf16.mxu0 0
  %452 = vmatpush1.bf16.xpose.msra.mxu0 0
  %453 = vmatprep.subr.bf16.mxu0 0
  %454 = vmatpush1.bf16.xpose.msra.mxu0 0
  %455 = vmatprep.subr.bf16.mxu0 0
  %456 = vmatpush1.bf16.xpose.msra.mxu0 0
  %457 = vmatprep.subr.bf16.mxu0 0
  %458 = vmatpush1.bf16.xpose.msra.mxu0 %v441
  %459 = vmatprep.subr.bf16.mxu0 0
  %460 = vmatpush2.bf16.xpose.msra.mxu0 0
  %461 = vmatprep.subr.bf16.mxu0 0
  %462 = vmatpush2.bf16.xpose.msra.mxu0 0
  %463 = vmatprep.subr.bf16.mxu0 0
  %464 = vmatpush2.bf16.xpose.msra.mxu0 0
  %465 = vmatprep.subr.bf16.mxu0 0
  %466 = vmatpush2.bf16.xpose.msra.mxu0 0
  %467 = vmatprep.subr.bf16.mxu0 0
  %468 = vmatpush2.bf16.xpose.msra.mxu0 0
  %469 = vmatprep.subr.bf16.mxu0 0
  %470 = vmatpush2.bf16.xpose.msra.mxu0 0
  %471 = vmatprep.subr.bf16.mxu0 0
  %472 = vmatpush2.bf16.xpose.msra.mxu0 0
  %473 = vmatprep.subr.bf16.mxu0 0
  %474 = vmatpush2.bf16.xpose.msra.mxu0 0
  %475 = vmatprep.mubr.bf16.mxu0 0
  %476 = vmatmul.mubr.bf16.gmra.mxu0 %v438
  %v477 = vpop.f32.mrf.mxu0
  %v478 = vadd.f32 0.0, %v477
  %v479 = vpop.f32.mrf.mxu0
  %v480 = vpop.f32.mrf.mxu0
  %v481 = vpop.f32.mrf.mxu0
  %482 = vdwg.mxu0
  %v484 = vsel %vm114, %v42, 0
  %v487 = vsel %vm114, %v74, 0
  %489 = vmatprep.subr.bf16.mxu0 0
  %490 = vmatpush1.bf16.xpose.msra.mxu0 0
  %491 = vmatprep.subr.bf16.mxu0 0
  %492 = vmatpush1.bf16.xpose.msra.mxu0 0
  %493 = vmatprep.subr.bf16.mxu0 0
  %494 = vmatpush1.bf16.xpose.msra.mxu0 0
  %495 = vmatprep.subr.bf16.mxu0 0
  %496 = vmatpush1.bf16.xpose.msra.mxu0 0
  %497 = vmatprep.subr.bf16.mxu0 0
  %498 = vmatpush1.bf16.xpose.msra.mxu0 0
  %499 = vmatprep.subr.bf16.mxu0 0
  %500 = vmatpush1.bf16.xpose.msra.mxu0 0
  %501 = vmatprep.subr.bf16.mxu0 0
  %502 = vmatpush1.bf16.xpose.msra.mxu0 0
  %503 = vmatprep.subr.bf16.mxu0 0
  %504 = vmatpush1.bf16.xpose.msra.mxu0 %v487
  %505 = vmatprep.subr.bf16.mxu0 0
  %506 = vmatpush2.bf16.xpose.msra.mxu0 0
  %507 = vmatprep.subr.bf16.mxu0 0
  %508 = vmatpush2.bf16.xpose.msra.mxu0 0
  %509 = vmatprep.subr.bf16.mxu0 0
  %510 = vmatpush2.bf16.xpose.msra.mxu0 0
  %511 = vmatprep.subr.bf16.mxu0 0
  %512 = vmatpush2.bf16.xpose.msra.mxu0 0
  %513 = vmatprep.subr.bf16.mxu0 0
  %514 = vmatpush2.bf16.xpose.msra.mxu0 0
  %515 = vmatprep.subr.bf16.mxu0 0
  %516 = vmatpush2.bf16.xpose.msra.mxu0 0
  %517 = vmatprep.subr.bf16.mxu0 0
  %518 = vmatpush2.bf16.xpose.msra.mxu0 0
  %519 = vmatprep.subr.bf16.mxu0 0
  %520 = vmatpush2.bf16.xpose.msra.mxu0 0
  %521 = vmatprep.mubr.bf16.mxu0 0
  %522 = vmatmul.mubr.bf16.gmra.mxu0 %v484
  %v523 = vpop.f32.mrf.mxu0
  %v524 = vadd.f32 0.0, %v523
  %v525 = vpop.f32.mrf.mxu0
  %v526 = vpop.f32.mrf.mxu0
  %v527 = vpop.f32.mrf.mxu0
  %528 = vdwg.mxu0
  %v530 = vsel %vm114, %v43, 0
  %v533 = vsel %vm114, %v75, 0
  %535 = vmatprep.subr.bf16.mxu0 0
  %536 = vmatpush1.bf16.xpose.msra.mxu0 0
  %537 = vmatprep.subr.bf16.mxu0 0
  %538 = vmatpush1.bf16.xpose.msra.mxu0 0
  %539 = vmatprep.subr.bf16.mxu0 0
  %540 = vmatpush1.bf16.xpose.msra.mxu0 0
  %541 = vmatprep.subr.bf16.mxu0 0
  %542 = vmatpush1.bf16.xpose.msra.mxu0 0
  %543 = vmatprep.subr.bf16.mxu0 0
  %544 = vmatpush1.bf16.xpose.msra.mxu0 0
  %545 = vmatprep.subr.bf16.mxu0 0
  %546 = vmatpush1.bf16.xpose.msra.mxu0 0
  %547 = vmatprep.subr.bf16.mxu0 0
  %548 = vmatpush1.bf16.xpose.msra.mxu0 0
  %549 = vmatprep.subr.bf16.mxu0 0
  %550 = vmatpush1.bf16.xpose.msra.mxu0 %v533
  %551 = vmatprep.subr.bf16.mxu0 0
  %552 = vmatpush2.bf16.xpose.msra.mxu0 0
  %553 = vmatprep.subr.bf16.mxu0 0
  %554 = vmatpush2.bf16.xpose.msra.mxu0 0
  %555 = vmatprep.subr.bf16.mxu0 0
  %556 = vmatpush2.bf16.xpose.msra.mxu0 0
  %557 = vmatprep.subr.bf16.mxu0 0
  %558 = vmatpush2.bf16.xpose.msra.mxu0 0
  %559 = vmatprep.subr.bf16.mxu0 0
  %560 = vmatpush2.bf16.xpose.msra.mxu0 0
  %561 = vmatprep.subr.bf16.mxu0 0
  %562 = vmatpush2.bf16.xpose.msra.mxu0 0
  %563 = vmatprep.subr.bf16.mxu0 0
  %564 = vmatpush2.bf16.xpose.msra.mxu0 0
  %565 = vmatprep.subr.bf16.mxu0 0
  %566 = vmatpush2.bf16.xpose.msra.mxu0 0
  %567 = vmatprep.mubr.bf16.mxu0 0
  %568 = vmatmul.mubr.bf16.gmra.mxu0 %v530
  %v569 = vpop.f32.mrf.mxu0
  %v570 = vadd.f32 0.0, %v569
  %v571 = vpop.f32.mrf.mxu0
  %v572 = vpop.f32.mrf.mxu0
  %v573 = vpop.f32.mrf.mxu0
  %574 = vdwg.mxu0
  %v576 = vsel %vm114, %v44, 0
  %v579 = vsel %vm114, %v76, 0
  %581 = vmatprep.subr.bf16.mxu0 0
  %582 = vmatpush1.bf16.xpose.msra.mxu0 0
  %583 = vmatprep.subr.bf16.mxu0 0
  %584 = vmatpush1.bf16.xpose.msra.mxu0 0
  %585 = vmatprep.subr.bf16.mxu0 0
  %586 = vmatpush1.bf16.xpose.msra.mxu0 0
  %587 = vmatprep.subr.bf16.mxu0 0
  %588 = vmatpush1.bf16.xpose.msra.mxu0 0
  %589 = vmatprep.subr.bf16.mxu0 0
  %590 = vmatpush1.bf16.xpose.msra.mxu0 0
  %591 = vmatprep.subr.bf16.mxu0 0
  %592 = vmatpush1.bf16.xpose.msra.mxu0 0
  %593 = vmatprep.subr.bf16.mxu0 0
  %594 = vmatpush1.bf16.xpose.msra.mxu0 0
  %595 = vmatprep.subr.bf16.mxu0 0
  %596 = vmatpush1.bf16.xpose.msra.mxu0 %v579
  %597 = vmatprep.subr.bf16.mxu0 0
  %598 = vmatpush2.bf16.xpose.msra.mxu0 0
  %599 = vmatprep.subr.bf16.mxu0 0
  %600 = vmatpush2.bf16.xpose.msra.mxu0 0
  %601 = vmatprep.subr.bf16.mxu0 0
  %602 = vmatpush2.bf16.xpose.msra.mxu0 0
  %603 = vmatprep.subr.bf16.mxu0 0
  %604 = vmatpush2.bf16.xpose.msra.mxu0 0
  %605 = vmatprep.subr.bf16.mxu0 0
  %606 = vmatpush2.bf16.xpose.msra.mxu0 0
  %607 = vmatprep.subr.bf16.mxu0 0
  %608 = vmatpush2.bf16.xpose.msra.mxu0 0
  %609 = vmatprep.subr.bf16.mxu0 0
  %610 = vmatpush2.bf16.xpose.msra.mxu0 0
  %611 = vmatprep.subr.bf16.mxu0 0
  %612 = vmatpush2.bf16.xpose.msra.mxu0 0
  %613 = vmatprep.mubr.bf16.mxu0 0
  %614 = vmatmul.mubr.bf16.gmra.mxu0 %v576
  %v615 = vpop.f32.mrf.mxu0
  %v616 = vadd.f32 0.0, %v615
  %v617 = vpop.f32.mrf.mxu0
  %v618 = vpop.f32.mrf.mxu0
  %v619 = vpop.f32.mrf.mxu0
  %620 = vdwg.mxu0
  %v622 = vsel %vm114, %v45, 0
  %v625 = vsel %vm114, %v77, 0
  %627 = vmatprep.subr.bf16.mxu0 0
  %628 = vmatpush1.bf16.xpose.msra.mxu0 0
  %629 = vmatprep.subr.bf16.mxu0 0
  %630 = vmatpush1.bf16.xpose.msra.mxu0 0
  %631 = vmatprep.subr.bf16.mxu0 0
  %632 = vmatpush1.bf16.xpose.msra.mxu0 0
  %633 = vmatprep.subr.bf16.mxu0 0
  %634 = vmatpush1.bf16.xpose.msra.mxu0 0
  %635 = vmatprep.subr.bf16.mxu0 0
  %636 = vmatpush1.bf16.xpose.msra.mxu0 0
  %637 = vmatprep.subr.bf16.mxu0 0
  %638 = vmatpush1.bf16.xpose.msra.mxu0 0
  %639 = vmatprep.subr.bf16.mxu0 0
  %640 = vmatpush1.bf16.xpose.msra.mxu0 0
  %641 = vmatprep.subr.bf16.mxu0 0
  %642 = vmatpush1.bf16.xpose.msra.mxu0 %v625
  %643 = vmatprep.subr.bf16.mxu0 0
  %644 = vmatpush2.bf16.xpose.msra.mxu0 0
  %645 = vmatprep.subr.bf16.mxu0 0
  %646 = vmatpush2.bf16.xpose.msra.mxu0 0
  %647 = vmatprep.subr.bf16.mxu0 0
  %648 = vmatpush2.bf16.xpose.msra.mxu0 0
  %649 = vmatprep.subr.bf16.mxu0 0
  %650 = vmatpush2.bf16.xpose.msra.mxu0 0
  %651 = vmatprep.subr.bf16.mxu0 0
  %652 = vmatpush2.bf16.xpose.msra.mxu0 0
  %653 = vmatprep.subr.bf16.mxu0 0
  %654 = vmatpush2.bf16.xpose.msra.mxu0 0
  %655 = vmatprep.subr.bf16.mxu0 0
  %656 = vmatpush2.bf16.xpose.msra.mxu0 0
  %657 = vmatprep.subr.bf16.mxu0 0
  %658 = vmatpush2.bf16.xpose.msra.mxu0 0
  %659 = vmatprep.mubr.bf16.mxu0 0
  %660 = vmatmul.mubr.bf16.gmra.mxu0 %v622
  %v661 = vpop.f32.mrf.mxu0
  %v662 = vadd.f32 0.0, %v661
  %v663 = vpop.f32.mrf.mxu0
  %v664 = vpop.f32.mrf.mxu0
  %v665 = vpop.f32.mrf.mxu0
  %666 = vdwg.mxu0
  %v668 = vsel %vm114, %v46, 0
  %v671 = vsel %vm114, %v78, 0
  %673 = vmatprep.subr.bf16.mxu0 0
  %674 = vmatpush1.bf16.xpose.msra.mxu0 0
  %675 = vmatprep.subr.bf16.mxu0 0
  %676 = vmatpush1.bf16.xpose.msra.mxu0 0
  %677 = vmatprep.subr.bf16.mxu0 0
  %678 = vmatpush1.bf16.xpose.msra.mxu0 0
  %679 = vmatprep.subr.bf16.mxu0 0
  %680 = vmatpush1.bf16.xpose.msra.mxu0 0
  %681 = vmatprep.subr.bf16.mxu0 0
  %682 = vmatpush1.bf16.xpose.msra.mxu0 0
  %683 = vmatprep.subr.bf16.mxu0 0
  %684 = vmatpush1.bf16.xpose.msra.mxu0 0
  %685 = vmatprep.subr.bf16.mxu0 0
  %686 = vmatpush1.bf16.xpose.msra.mxu0 0
  %687 = vmatprep.subr.bf16.mxu0 0
  %688 = vmatpush1.bf16.xpose.msra.mxu0 %v671
  %689 = vmatprep.subr.bf16.mxu0 0
  %690 = vmatpush2.bf16.xpose.msra.mxu0 0
  %691 = vmatprep.subr.bf16.mxu0 0
  %692 = vmatpush2.bf16.xpose.msra.mxu0 0
  %693 = vmatprep.subr.bf16.mxu0 0
  %694 = vmatpush2.bf16.xpose.msra.mxu0 0
  %695 = vmatprep.subr.bf16.mxu0 0
  %696 = vmatpush2.bf16.xpose.msra.mxu0 0
  %697 = vmatprep.subr.bf16.mxu0 0
  %698 = vmatpush2.bf16.xpose.msra.mxu0 0
  %699 = vmatprep.subr.bf16.mxu0 0
  %700 = vmatpush2.bf16.xpose.msra.mxu0 0
  %701 = vmatprep.subr.bf16.mxu0 0
  %702 = vmatpush2.bf16.xpose.msra.mxu0 0
  %703 = vmatprep.subr.bf16.mxu0 0
  %704 = vmatpush2.bf16.xpose.msra.mxu0 0
  %705 = vmatprep.mubr.bf16.mxu0 0
  %706 = vmatmul.mubr.bf16.gmra.mxu0 %v668
  %v707 = vpop.f32.mrf.mxu0
  %v708 = vadd.f32 0.0, %v707
  %v709 = vpop.f32.mrf.mxu0
  %v710 = vpop.f32.mrf.mxu0
  %v711 = vpop.f32.mrf.mxu0
  %712 = vdwg.mxu0
  %v714 = vsel %vm114, %v47, 0
  %v717 = vsel %vm114, %v79, 0
  %719 = vmatprep.subr.bf16.mxu0 0
  %720 = vmatpush1.bf16.xpose.msra.mxu0 0
  %721 = vmatprep.subr.bf16.mxu0 0
  %722 = vmatpush1.bf16.xpose.msra.mxu0 0
  %723 = vmatprep.subr.bf16.mxu0 0
  %724 = vmatpush1.bf16.xpose.msra.mxu0 0
  %725 = vmatprep.subr.bf16.mxu0 0
  %726 = vmatpush1.bf16.xpose.msra.mxu0 0
  %727 = vmatprep.subr.bf16.mxu0 0
  %728 = vmatpush1.bf16.xpose.msra.mxu0 0
  %729 = vmatprep.subr.bf16.mxu0 0
  %730 = vmatpush1.bf16.xpose.msra.mxu0 0
  %731 = vmatprep.subr.bf16.mxu0 0
  %732 = vmatpush1.bf16.xpose.msra.mxu0 0
  %733 = vmatprep.subr.bf16.mxu0 0
  %734 = vmatpush1.bf16.xpose.msra.mxu0 %v717
  %735 = vmatprep.subr.bf16.mxu0 0
  %736 = vmatpush2.bf16.xpose.msra.mxu0 0
  %737 = vmatprep.subr.bf16.mxu0 0
  %738 = vmatpush2.bf16.xpose.msra.mxu0 0
  %739 = vmatprep.subr.bf16.mxu0 0
  %740 = vmatpush2.bf16.xpose.msra.mxu0 0
  %741 = vmatprep.subr.bf16.mxu0 0
  %742 = vmatpush2.bf16.xpose.msra.mxu0 0
  %743 = vmatprep.subr.bf16.mxu0 0
  %744 = vmatpush2.bf16.xpose.msra.mxu0 0
  %745 = vmatprep.subr.bf16.mxu0 0
  %746 = vmatpush2.bf16.xpose.msra.mxu0 0
  %747 = vmatprep.subr.bf16.mxu0 0
  %748 = vmatpush2.bf16.xpose.msra.mxu0 0
  %749 = vmatprep.subr.bf16.mxu0 0
  %750 = vmatpush2.bf16.xpose.msra.mxu0 0
  %751 = vmatprep.mubr.bf16.mxu0 0
  %752 = vmatmul.mubr.bf16.gmra.mxu0 %v714
  %v753 = vpop.f32.mrf.mxu0
  %v754 = vadd.f32 0.0, %v753
  %v755 = vpop.f32.mrf.mxu0
  %v756 = vpop.f32.mrf.mxu0
  %v757 = vpop.f32.mrf.mxu0
  %758 = vdwg.mxu0
  %v760 = vsel %vm114, %v48, 0
  %v763 = vsel %vm114, %v80, 0
  %765 = vmatprep.subr.bf16.mxu0 0
  %766 = vmatpush1.bf16.xpose.msra.mxu0 0
  %767 = vmatprep.subr.bf16.mxu0 0
  %768 = vmatpush1.bf16.xpose.msra.mxu0 0
  %769 = vmatprep.subr.bf16.mxu0 0
  %770 = vmatpush1.bf16.xpose.msra.mxu0 0
  %771 = vmatprep.subr.bf16.mxu0 0
  %772 = vmatpush1.bf16.xpose.msra.mxu0 0
  %773 = vmatprep.subr.bf16.mxu0 0
  %774 = vmatpush1.bf16.xpose.msra.mxu0 0
  %775 = vmatprep.subr.bf16.mxu0 0
  %776 = vmatpush1.bf16.xpose.msra.mxu0 0
  %777 = vmatprep.subr.bf16.mxu0 0
  %778 = vmatpush1.bf16.xpose.msra.mxu0 0
  %779 = vmatprep.subr.bf16.mxu0 0
  %780 = vmatpush1.bf16.xpose.msra.mxu0 %v763
  %781 = vmatprep.subr.bf16.mxu0 0
  %782 = vmatpush2.bf16.xpose.msra.mxu0 0
  %783 = vmatprep.subr.bf16.mxu0 0
  %784 = vmatpush2.bf16.xpose.msra.mxu0 0
  %785 = vmatprep.subr.bf16.mxu0 0
  %786 = vmatpush2.bf16.xpose.msra.mxu0 0
  %787 = vmatprep.subr.bf16.mxu0 0
  %788 = vmatpush2.bf16.xpose.msra.mxu0 0
  %789 = vmatprep.subr.bf16.mxu0 0
  %790 = vmatpush2.bf16.xpose.msra.mxu0 0
  %791 = vmatprep.subr.bf16.mxu0 0
  %792 = vmatpush2.bf16.xpose.msra.mxu0 0
  %793 = vmatprep.subr.bf16.mxu0 0
  %794 = vmatpush2.bf16.xpose.msra.mxu0 0
  %795 = vmatprep.subr.bf16.mxu0 0
  %796 = vmatpush2.bf16.xpose.msra.mxu0 0
  %797 = vmatprep.mubr.bf16.mxu0 0
  %798 = vmatmul.mubr.bf16.gmra.mxu0 %v760
  %v799 = vpop.f32.mrf.mxu0
  %v800 = vadd.f32 0.0, %v799
  %v801 = vpop.f32.mrf.mxu0
  %v802 = vpop.f32.mrf.mxu0
  %v803 = vpop.f32.mrf.mxu0
  %804 = vdwg.mxu0
  %v806 = vsel %vm114, %v49, 0
  %v809 = vsel %vm114, %v81, 0
  %811 = vmatprep.subr.bf16.mxu0 0
  %812 = vmatpush1.bf16.xpose.msra.mxu0 0
  %813 = vmatprep.subr.bf16.mxu0 0
  %814 = vmatpush1.bf16.xpose.msra.mxu0 0
  %815 = vmatprep.subr.bf16.mxu0 0
  %816 = vmatpush1.bf16.xpose.msra.mxu0 0
  %817 = vmatprep.subr.bf16.mxu0 0
  %818 = vmatpush1.bf16.xpose.msra.mxu0 0
  %819 = vmatprep.subr.bf16.mxu0 0
  %820 = vmatpush1.bf16.xpose.msra.mxu0 0
  %821 = vmatprep.subr.bf16.mxu0 0
  %822 = vmatpush1.bf16.xpose.msra.mxu0 0
  %823 = vmatprep.subr.bf16.mxu0 0
  %824 = vmatpush1.bf16.xpose.msra.mxu0 0
  %825 = vmatprep.subr.bf16.mxu0 0
  %826 = vmatpush1.bf16.xpose.msra.mxu0 %v809
  %827 = vmatprep.subr.bf16.mxu0 0
  %828 = vmatpush2.bf16.xpose.msra.mxu0 0
  %829 = vmatprep.subr.bf16.mxu0 0
  %830 = vmatpush2.bf16.xpose.msra.mxu0 0
  %831 = vmatprep.subr.bf16.mxu0 0
  %832 = vmatpush2.bf16.xpose.msra.mxu0 0
  %833 = vmatprep.subr.bf16.mxu0 0
  %834 = vmatpush2.bf16.xpose.msra.mxu0 0
  %835 = vmatprep.subr.bf16.mxu0 0
  %836 = vmatpush2.bf16.xpose.msra.mxu0 0
  %837 = vmatprep.subr.bf16.mxu0 0
  %838 = vmatpush2.bf16.xpose.msra.mxu0 0
  %839 = vmatprep.subr.bf16.mxu0 0
  %840 = vmatpush2.bf16.xpose.msra.mxu0 0
  %841 = vmatprep.subr.bf16.mxu0 0
  %842 = vmatpush2.bf16.xpose.msra.mxu0 0
  %843 = vmatprep.mubr.bf16.mxu0 0
  %844 = vmatmul.mubr.bf16.gmra.mxu0 %v806
  %v845 = vpop.f32.mrf.mxu0
  %v846 = vadd.f32 0.0, %v845
  %v847 = vpop.f32.mrf.mxu0
  %v848 = vpop.f32.mrf.mxu0
  %v849 = vpop.f32.mrf.mxu0
  %850 = vdwg.mxu0
  %v851 = vmul.f32 %v156, 0.25
  %v852 = vmul.f32 %v202, 0.25
  %v853 = vmul.f32 %v248, 0.25
  %v854 = vmul.f32 %v294, 0.25
  %v855 = vmul.f32 %v340, 0.25
  %v856 = vmul.f32 %v386, 0.25
  %v857 = vmul.f32 %v432, 0.25
  %v858 = vmul.f32 %v478, 0.25
  %v859 = vmul.f32 %v524, 0.25
  %v860 = vmul.f32 %v570, 0.25
  %v861 = vmul.f32 %v616, 0.25
  %v862 = vmul.f32 %v662, 0.25
  %v863 = vmul.f32 %v708, 0.25
  %v864 = vmul.f32 %v754, 0.25
  %v865 = vmul.f32 %v800, 0.25
  %v866 = vmul.f32 %v846, 0.25
  %v867 = vld [vmem:[%s3] sm:$0xf]
  %v868 = vld [vmem:[%s3 + $0x4] sm:$0xf]
  %v869 = vld [vmem:[%s3 + $0x8] sm:$0xf]
  %v870 = vld [vmem:[%s3 + $0xc] sm:$0xf]
  %v871 = vld [vmem:[%s3 + $0x10] sm:$0xf]
  %v872 = vld [vmem:[%s3 + $0x14] sm:$0xf]
  %v873 = vld [vmem:[%s3 + $0x18] sm:$0xf]
  %v874 = vld [vmem:[%s3 + $0x1c] sm:$0xf]
  %v875 = vadd.f32 %v851, %v867
  %v876 = vadd.f32 %v852, %v868
  %v877 = vadd.f32 %v853, %v869
  %v878 = vadd.f32 %v854, %v870
  %v879 = vadd.f32 %v855, %v871
  %v880 = vadd.f32 %v856, %v872
  %v881 = vadd.f32 %v857, %v873
  %v882 = vadd.f32 %v858, %v874
  %v883 = vadd.f32 %v859, %v867
  %v884 = vadd.f32 %v860, %v868
  %v885 = vadd.f32 %v861, %v869
  %v886 = vadd.f32 %v862, %v870
  %v887 = vadd.f32 %v863, %v871
  %v888 = vadd.f32 %v864, %v872
  %v889 = vadd.f32 %v865, %v873
  %v890 = vadd.f32 %v866, %v874
  %vm891 = vcmask 27648
  %v892 = vsel %vm891, %v875, -inf
  %893 = vmax.xlane.f32.xlu0 %v892
  %v894 = vpop.xlane.xlu0 %893
  %v895 = vsel %vm891, %v876, -inf
  %896 = vmax.xlane.f32.xlu0 %v895
  %v897 = vpop.xlane.xlu0 %896
  %v898 = vsel %vm891, %v877, -inf
  %899 = vmax.xlane.f32.xlu0 %v898
  %v900 = vpop.xlane.xlu0 %899
  %v901 = vsel %vm891, %v878, -inf
  %902 = vmax.xlane.f32.xlu0 %v901
  %v903 = vpop.xlane.xlu0 %902
  %v904 = vsel %vm891, %v879, -inf
  %905 = vmax.xlane.f32.xlu0 %v904
  %v906 = vpop.xlane.xlu0 %905
  %v907 = vsel %vm891, %v880, -inf
  %908 = vmax.xlane.f32.xlu0 %v907
  %v909 = vpop.xlane.xlu0 %908
  %v910 = vsel %vm891, %v881, -inf
  %911 = vmax.xlane.f32.xlu0 %v910
  %v912 = vpop.xlane.xlu0 %911
  %v913 = vsel %vm891, %v882, -inf
  %914 = vmax.xlane.f32.xlu0 %v913
  %v915 = vpop.xlane.xlu0 %914
  %v916 = vsel %vm891, %v883, -inf
  %917 = vmax.xlane.f32.xlu0 %v916
  %v918 = vpop.xlane.xlu0 %917
  %v919 = vsel %vm891, %v884, -inf
  %920 = vmax.xlane.f32.xlu0 %v919
  %v921 = vpop.xlane.xlu0 %920
  %v922 = vsel %vm891, %v885, -inf
  %923 = vmax.xlane.f32.xlu0 %v922
  %v924 = vpop.xlane.xlu0 %923
  %v925 = vsel %vm891, %v886, -inf
  %926 = vmax.xlane.f32.xlu0 %v925
  %v927 = vpop.xlane.xlu0 %926
  %v928 = vsel %vm891, %v887, -inf
  %929 = vmax.xlane.f32.xlu0 %v928
  %v930 = vpop.xlane.xlu0 %929
  %v931 = vsel %vm891, %v888, -inf
  %932 = vmax.xlane.f32.xlu0 %v931
  %v933 = vpop.xlane.xlu0 %932
  %v934 = vsel %vm891, %v889, -inf
  %935 = vmax.xlane.f32.xlu0 %v934
  %v936 = vpop.xlane.xlu0 %935
  %v937 = vsel %vm891, %v890, -inf
  %938 = vmax.xlane.f32.xlu0 %v937
  %v939 = vpop.xlane.xlu0 %938
  %v940 = vsub.f32 %v875, %v894
  %v941 = vsub.f32 %v876, %v897
  %v942 = vsub.f32 %v877, %v900
  %v943 = vsub.f32 %v878, %v903
  %v944 = vsub.f32 %v879, %v906
  %v945 = vsub.f32 %v880, %v909
  %v946 = vsub.f32 %v881, %v912
  %v947 = vsub.f32 %v882, %v915
  %v948 = vsub.f32 %v883, %v918
  %v949 = vsub.f32 %v884, %v921
  %v950 = vsub.f32 %v885, %v924
  %v951 = vsub.f32 %v886, %v927
  %v952 = vsub.f32 %v887, %v930
  %v953 = vsub.f32 %v888, %v933
  %v954 = vsub.f32 %v889, %v936
  %v955 = vsub.f32 %v890, %v939
  %v956 = vmul.f32 %v940, 1.442695
  %v957 = vpow.pop %v956
  %v958 = vmul.f32 %v941, 1.442695
  %v959 = vpow.pop %v958
  %v960 = vmul.f32 %v942, 1.442695
  %v961 = vpow.pop %v960
  %v962 = vmul.f32 %v943, 1.442695
  %v963 = vpow.pop %v962
  %v964 = vmul.f32 %v944, 1.442695
  %v965 = vpow.pop %v964
  %v966 = vmul.f32 %v945, 1.442695
  %v967 = vpow.pop %v966
  %v968 = vmul.f32 %v946, 1.442695
  %v969 = vpow.pop %v968
  %v970 = vmul.f32 %v947, 1.442695
  %v971 = vpow.pop %v970
  %v972 = vmul.f32 %v948, 1.442695
  %v973 = vpow.pop %v972
  %v974 = vmul.f32 %v949, 1.442695
  %v975 = vpow.pop %v974
  %v976 = vmul.f32 %v950, 1.442695
  %v977 = vpow.pop %v976
  %v978 = vmul.f32 %v951, 1.442695
  %v979 = vpow.pop %v978
  %v980 = vmul.f32 %v952, 1.442695
  %v981 = vpow.pop %v980
  %v982 = vmul.f32 %v953, 1.442695
  %v983 = vpow.pop %v982
  %v984 = vmul.f32 %v954, 1.442695
  %v985 = vpow.pop %v984
  %v986 = vmul.f32 %v955, 1.442695
  %v987 = vpow.pop %v986
  %v988 = vsel %vm891, %v957, 0.0
  %989 = vadd.xlane.f32.xlu0 %v988
  %v990 = vpop.xlane.xlu0 %989
  %v991 = vsel %vm891, %v959, 0.0
  %992 = vadd.xlane.f32.xlu0 %v991
  %v993 = vpop.xlane.xlu0 %992
  %v994 = vsel %vm891, %v961, 0.0
  %995 = vadd.xlane.f32.xlu0 %v994
  %v996 = vpop.xlane.xlu0 %995
  %v997 = vsel %vm891, %v963, 0.0
  %998 = vadd.xlane.f32.xlu0 %v997
  %v999 = vpop.xlane.xlu0 %998
  %v1000 = vsel %vm891, %v965, 0.0
  %1001 = vadd.xlane.f32.xlu0 %v1000
  %v1002 = vpop.xlane.xlu0 %1001
  %v1003 = vsel %vm891, %v967, 0.0
  %1004 = vadd.xlane.f32.xlu0 %v1003
  %v1005 = vpop.xlane.xlu0 %1004
  %v1006 = vsel %vm891, %v969, 0.0
  %1007 = vadd.xlane.f32.xlu0 %v1006
  %v1008 = vpop.xlane.xlu0 %1007
  %v1009 = vsel %vm891, %v971, 0.0
  %1010 = vadd.xlane.f32.xlu0 %v1009
  %v1011 = vpop.xlane.xlu0 %1010
  %v1012 = vsel %vm891, %v973, 0.0
  %1013 = vadd.xlane.f32.xlu0 %v1012
  %v1014 = vpop.xlane.xlu0 %1013
  %v1015 = vsel %vm891, %v975, 0.0
  %1016 = vadd.xlane.f32.xlu0 %v1015
  %v1017 = vpop.xlane.xlu0 %1016
  %v1018 = vsel %vm891, %v977, 0.0
  %1019 = vadd.xlane.f32.xlu0 %v1018
  %v1020 = vpop.xlane.xlu0 %1019
  %v1021 = vsel %vm891, %v979, 0.0
  %1022 = vadd.xlane.f32.xlu0 %v1021
  %v1023 = vpop.xlane.xlu0 %1022
  %v1024 = vsel %vm891, %v981, 0.0
  %1025 = vadd.xlane.f32.xlu0 %v1024
  %v1026 = vpop.xlane.xlu0 %1025
  %v1027 = vsel %vm891, %v983, 0.0
  %1028 = vadd.xlane.f32.xlu0 %v1027
  %v1029 = vpop.xlane.xlu0 %1028
  %v1030 = vsel %vm891, %v985, 0.0
  %1031 = vadd.xlane.f32.xlu0 %v1030
  %v1032 = vpop.xlane.xlu0 %1031
  %v1033 = vsel %vm891, %v987, 0.0
  %1034 = vadd.xlane.f32.xlu0 %v1033
  %v1035 = vpop.xlane.xlu0 %1034
  %v1036 = vrcp.pop %v990
  %v1037 = vrcp.pop %v993
  %v1038 = vrcp.pop %v996
  %v1039 = vrcp.pop %v999
  %v1040 = vrcp.pop %v1002
  %v1041 = vrcp.pop %v1005
  %v1042 = vrcp.pop %v1008
  %v1043 = vrcp.pop %v1011
  %v1044 = vrcp.pop %v1014
  %v1045 = vrcp.pop %v1017
  %v1046 = vrcp.pop %v1020
  %v1047 = vrcp.pop %v1023
  %v1048 = vrcp.pop %v1026
  %v1049 = vrcp.pop %v1029
  %v1050 = vrcp.pop %v1032
  %v1051 = vrcp.pop %v1035
  %v1052 = vmul.f32 %v957, %v1036
  %v1053 = vmul.f32 %v959, %v1037
  %v1054 = vmul.f32 %v961, %v1038
  %v1055 = vmul.f32 %v963, %v1039
  %v1056 = vmul.f32 %v965, %v1040
  %v1057 = vmul.f32 %v967, %v1041
  %v1058 = vmul.f32 %v969, %v1042
  %v1059 = vmul.f32 %v971, %v1043
  %v1060 = vmul.f32 %v973, %v1044
  %v1061 = vmul.f32 %v975, %v1045
  %v1062 = vmul.f32 %v977, %v1046
  %v1063 = vmul.f32 %v979, %v1047
  %v1064 = vmul.f32 %v981, %v1048
  %v1065 = vmul.f32 %v983, %v1049
  %v1066 = vmul.f32 %v985, %v1050
  %v1067 = vmul.f32 %v987, %v1051
  %v1068 = vpack.c.bf16 %v1052, %v1052
  %v1069 = vpack.c.bf16 %v1053, %v1053
  %v1070 = vpack.c.bf16 %v1054, %v1054
  %v1071 = vpack.c.bf16 %v1055, %v1055
  %v1072 = vpack.c.bf16 %v1056, %v1056
  %v1073 = vpack.c.bf16 %v1057, %v1057
  %v1074 = vpack.c.bf16 %v1058, %v1058
  %v1075 = vpack.c.bf16 %v1059, %v1059
  %v1076 = vpack.c.bf16 %v1060, %v1060
  %v1077 = vpack.c.bf16 %v1061, %v1061
  %v1078 = vpack.c.bf16 %v1062, %v1062
  %v1079 = vpack.c.bf16 %v1063, %v1063
  %v1080 = vpack.c.bf16 %v1064, %v1064
  %v1081 = vpack.c.bf16 %v1065, %v1065
  %v1082 = vpack.c.bf16 %v1066, %v1066
  %v1083 = vpack.c.bf16 %v1067, %v1067
  %vm1084 = vcmask 31744
  %v1086 = vsel %vm1084, %v1068, 0
  %vm1088 = vcmask 1041408
  %v1090 = vsel %vm1088, %v98, 0
  %1092 = vmatprep.subr.bf16.mxu0 0
  %1093 = vmatpush1.bf16.msra.mxu0 0
  %1094 = vmatprep.subr.bf16.mxu0 0
  %1095 = vmatpush1.bf16.msra.mxu0 0
  %1096 = vmatprep.subr.bf16.mxu0 0
  %1097 = vmatpush1.bf16.msra.mxu0 0
  %1098 = vmatprep.subr.bf16.mxu0 0
  %1099 = vmatpush1.bf16.msra.mxu0 0
  %1100 = vmatprep.subr.bf16.mxu0 0
  %1101 = vmatpush1.bf16.msra.mxu0 0
  %1102 = vmatprep.subr.bf16.mxu0 0
  %1103 = vmatpush1.bf16.msra.mxu0 0
  %1104 = vmatprep.subr.bf16.mxu0 0
  %1105 = vmatpush1.bf16.msra.mxu0 0
  %1106 = vmatprep.subr.bf16.mxu0 0
  %1107 = vmatpush1.bf16.msra.mxu0 %v1090
  %1108 = vmatprep.subr.bf16.mxu0 0
  %1109 = vmatpush2.bf16.msra.mxu0 0
  %1110 = vmatprep.subr.bf16.mxu0 0
  %1111 = vmatpush2.bf16.msra.mxu0 0
  %1112 = vmatprep.subr.bf16.mxu0 0
  %1113 = vmatpush2.bf16.msra.mxu0 0
  %1114 = vmatprep.subr.bf16.mxu0 0
  %1115 = vmatpush2.bf16.msra.mxu0 0
  %1116 = vmatprep.subr.bf16.mxu0 0
  %1117 = vmatpush2.bf16.msra.mxu0 0
  %1118 = vmatprep.subr.bf16.mxu0 0
  %1119 = vmatpush2.bf16.msra.mxu0 0
  %1120 = vmatprep.subr.bf16.mxu0 0
  %1121 = vmatpush2.bf16.msra.mxu0 0
  %1122 = vmatprep.subr.bf16.mxu0 0
  %1123 = vmatpush2.bf16.msra.mxu0 0
  %1124 = vmatprep.mubr.bf16.mxu0 0
  %1125 = vmatmul.mubr.bf16.gmra.mxu0 %v1086
  %v1126 = vpop.f32.mrf.mxu0
  %v1127 = vadd.f32 0.0, %v1126
  %v1128 = vpop.f32.mrf.mxu0
  %v1129 = vpop.f32.mrf.mxu0
  %v1130 = vpop.f32.mrf.mxu0
  %1131 = vdwg.mxu0
  %v1133 = vsel %vm1084, %v1069, 0
  %v1136 = vsel %vm1088, %v99, 0
  %1138 = vmatprep.subr.bf16.mxu0 0
  %1139 = vmatpush1.bf16.msra.mxu0 0
  %1140 = vmatprep.subr.bf16.mxu0 0
  %1141 = vmatpush1.bf16.msra.mxu0 0
  %1142 = vmatprep.subr.bf16.mxu0 0
  %1143 = vmatpush1.bf16.msra.mxu0 0
  %1144 = vmatprep.subr.bf16.mxu0 0
  %1145 = vmatpush1.bf16.msra.mxu0 0
  %1146 = vmatprep.subr.bf16.mxu0 0
  %1147 = vmatpush1.bf16.msra.mxu0 0
  %1148 = vmatprep.subr.bf16.mxu0 0
  %1149 = vmatpush1.bf16.msra.mxu0 0
  %1150 = vmatprep.subr.bf16.mxu0 0
  %1151 = vmatpush1.bf16.msra.mxu0 0
  %1152 = vmatprep.subr.bf16.mxu0 0
  %1153 = vmatpush1.bf16.msra.mxu0 %v1136
  %1154 = vmatprep.subr.bf16.mxu0 0
  %1155 = vmatpush2.bf16.msra.mxu0 0
  %1156 = vmatprep.subr.bf16.mxu0 0
  %1157 = vmatpush2.bf16.msra.mxu0 0
  %1158 = vmatprep.subr.bf16.mxu0 0
  %1159 = vmatpush2.bf16.msra.mxu0 0
  %1160 = vmatprep.subr.bf16.mxu0 0
  %1161 = vmatpush2.bf16.msra.mxu0 0
  %1162 = vmatprep.subr.bf16.mxu0 0
  %1163 = vmatpush2.bf16.msra.mxu0 0
  %1164 = vmatprep.subr.bf16.mxu0 0
  %1165 = vmatpush2.bf16.msra.mxu0 0
  %1166 = vmatprep.subr.bf16.mxu0 0
  %1167 = vmatpush2.bf16.msra.mxu0 0
  %1168 = vmatprep.subr.bf16.mxu0 0
  %1169 = vmatpush2.bf16.msra.mxu0 0
  %1170 = vmatprep.mubr.bf16.mxu0 0
  %1171 = vmatmul.mubr.bf16.gmra.mxu0 %v1133
  %v1172 = vpop.f32.mrf.mxu0
  %v1173 = vadd.f32 0.0, %v1172
  %v1174 = vpop.f32.mrf.mxu0
  %v1175 = vpop.f32.mrf.mxu0
  %v1176 = vpop.f32.mrf.mxu0
  %1177 = vdwg.mxu0
  %v1179 = vsel %vm1084, %v1070, 0
  %v1182 = vsel %vm1088, %v100, 0
  %1184 = vmatprep.subr.bf16.mxu0 0
  %1185 = vmatpush1.bf16.msra.mxu0 0
  %1186 = vmatprep.subr.bf16.mxu0 0
  %1187 = vmatpush1.bf16.msra.mxu0 0
  %1188 = vmatprep.subr.bf16.mxu0 0
  %1189 = vmatpush1.bf16.msra.mxu0 0
  %1190 = vmatprep.subr.bf16.mxu0 0
  %1191 = vmatpush1.bf16.msra.mxu0 0
  %1192 = vmatprep.subr.bf16.mxu0 0
  %1193 = vmatpush1.bf16.msra.mxu0 0
  %1194 = vmatprep.subr.bf16.mxu0 0
  %1195 = vmatpush1.bf16.msra.mxu0 0
  %1196 = vmatprep.subr.bf16.mxu0 0
  %1197 = vmatpush1.bf16.msra.mxu0 0
  %1198 = vmatprep.subr.bf16.mxu0 0
  %1199 = vmatpush1.bf16.msra.mxu0 %v1182
  %1200 = vmatprep.subr.bf16.mxu0 0
  %1201 = vmatpush2.bf16.msra.mxu0 0
  %1202 = vmatprep.subr.bf16.mxu0 0
  %1203 = vmatpush2.bf16.msra.mxu0 0
  %1204 = vmatprep.subr.bf16.mxu0 0
  %1205 = vmatpush2.bf16.msra.mxu0 0
  %1206 = vmatprep.subr.bf16.mxu0 0
  %1207 = vmatpush2.bf16.msra.mxu0 0
  %1208 = vmatprep.subr.bf16.mxu0 0
  %1209 = vmatpush2.bf16.msra.mxu0 0
  %1210 = vmatprep.subr.bf16.mxu0 0
  %1211 = vmatpush2.bf16.msra.mxu0 0
  %1212 = vmatprep.subr.bf16.mxu0 0
  %1213 = vmatpush2.bf16.msra.mxu0 0
  %1214 = vmatprep.subr.bf16.mxu0 0
  %1215 = vmatpush2.bf16.msra.mxu0 0
  %1216 = vmatprep.mubr.bf16.mxu0 0
  %1217 = vmatmul.mubr.bf16.gmra.mxu0 %v1179
  %v1218 = vpop.f32.mrf.mxu0
  %v1219 = vadd.f32 0.0, %v1218
  %v1220 = vpop.f32.mrf.mxu0
  %v1221 = vpop.f32.mrf.mxu0
  %v1222 = vpop.f32.mrf.mxu0
  %1223 = vdwg.mxu0
  %v1225 = vsel %vm1084, %v1071, 0
  %v1228 = vsel %vm1088, %v101, 0
  %1230 = vmatprep.subr.bf16.mxu0 0
  %1231 = vmatpush1.bf16.msra.mxu0 0
  %1232 = vmatprep.subr.bf16.mxu0 0
  %1233 = vmatpush1.bf16.msra.mxu0 0
  %1234 = vmatprep.subr.bf16.mxu0 0
  %1235 = vmatpush1.bf16.msra.mxu0 0
  %1236 = vmatprep.subr.bf16.mxu0 0
  %1237 = vmatpush1.bf16.msra.mxu0 0
  %1238 = vmatprep.subr.bf16.mxu0 0
  %1239 = vmatpush1.bf16.msra.mxu0 0
  %1240 = vmatprep.subr.bf16.mxu0 0
  %1241 = vmatpush1.bf16.msra.mxu0 0
  %1242 = vmatprep.subr.bf16.mxu0 0
  %1243 = vmatpush1.bf16.msra.mxu0 0
  %1244 = vmatprep.subr.bf16.mxu0 0
  %1245 = vmatpush1.bf16.msra.mxu0 %v1228
  %1246 = vmatprep.subr.bf16.mxu0 0
  %1247 = vmatpush2.bf16.msra.mxu0 0
  %1248 = vmatprep.subr.bf16.mxu0 0
  %1249 = vmatpush2.bf16.msra.mxu0 0
  %1250 = vmatprep.subr.bf16.mxu0 0
  %1251 = vmatpush2.bf16.msra.mxu0 0
  %1252 = vmatprep.subr.bf16.mxu0 0
  %1253 = vmatpush2.bf16.msra.mxu0 0
  %1254 = vmatprep.subr.bf16.mxu0 0
  %1255 = vmatpush2.bf16.msra.mxu0 0
  %1256 = vmatprep.subr.bf16.mxu0 0
  %1257 = vmatpush2.bf16.msra.mxu0 0
  %1258 = vmatprep.subr.bf16.mxu0 0
  %1259 = vmatpush2.bf16.msra.mxu0 0
  %1260 = vmatprep.subr.bf16.mxu0 0
  %1261 = vmatpush2.bf16.msra.mxu0 0
  %1262 = vmatprep.mubr.bf16.mxu0 0
  %1263 = vmatmul.mubr.bf16.gmra.mxu0 %v1225
  %v1264 = vpop.f32.mrf.mxu0
  %v1265 = vadd.f32 0.0, %v1264
  %v1266 = vpop.f32.mrf.mxu0
  %v1267 = vpop.f32.mrf.mxu0
  %v1268 = vpop.f32.mrf.mxu0
  %1269 = vdwg.mxu0
  %v1271 = vsel %vm1084, %v1072, 0
  %v1274 = vsel %vm1088, %v102, 0
  %1276 = vmatprep.subr.bf16.mxu0 0
  %1277 = vmatpush1.bf16.msra.mxu0 0
  %1278 = vmatprep.subr.bf16.mxu0 0
  %1279 = vmatpush1.bf16.msra.mxu0 0
  %1280 = vmatprep.subr.bf16.mxu0 0
  %1281 = vmatpush1.bf16.msra.mxu0 0
  %1282 = vmatprep.subr.bf16.mxu0 0
  %1283 = vmatpush1.bf16.msra.mxu0 0
  %1284 = vmatprep.subr.bf16.mxu0 0
  %1285 = vmatpush1.bf16.msra.mxu0 0
  %1286 = vmatprep.subr.bf16.mxu0 0
  %1287 = vmatpush1.bf16.msra.mxu0 0
  %1288 = vmatprep.subr.bf16.mxu0 0
  %1289 = vmatpush1.bf16.msra.mxu0 0
  %1290 = vmatprep.subr.bf16.mxu0 0
  %1291 = vmatpush1.bf16.msra.mxu0 %v1274
  %1292 = vmatprep.subr.bf16.mxu0 0
  %1293 = vmatpush2.bf16.msra.mxu0 0
  %1294 = vmatprep.subr.bf16.mxu0 0
  %1295 = vmatpush2.bf16.msra.mxu0 0
  %1296 = vmatprep.subr.bf16.mxu0 0
  %1297 = vmatpush2.bf16.msra.mxu0 0
  %1298 = vmatprep.subr.bf16.mxu0 0
  %1299 = vmatpush2.bf16.msra.mxu0 0
  %1300 = vmatprep.subr.bf16.mxu0 0
  %1301 = vmatpush2.bf16.msra.mxu0 0
  %1302 = vmatprep.subr.bf16.mxu0 0
  %1303 = vmatpush2.bf16.msra.mxu0 0
  %1304 = vmatprep.subr.bf16.mxu0 0
  %1305 = vmatpush2.bf16.msra.mxu0 0
  %1306 = vmatprep.subr.bf16.mxu0 0
  %1307 = vmatpush2.bf16.msra.mxu0 0
  %1308 = vmatprep.mubr.bf16.mxu0 0
  %1309 = vmatmul.mubr.bf16.gmra.mxu0 %v1271
  %v1310 = vpop.f32.mrf.mxu0
  %v1311 = vadd.f32 0.0, %v1310
  %v1312 = vpop.f32.mrf.mxu0
  %v1313 = vpop.f32.mrf.mxu0
  %v1314 = vpop.f32.mrf.mxu0
  %1315 = vdwg.mxu0
  %v1317 = vsel %vm1084, %v1073, 0
  %v1320 = vsel %vm1088, %v103, 0
  %1322 = vmatprep.subr.bf16.mxu0 0
  %1323 = vmatpush1.bf16.msra.mxu0 0
  %1324 = vmatprep.subr.bf16.mxu0 0
  %1325 = vmatpush1.bf16.msra.mxu0 0
  %1326 = vmatprep.subr.bf16.mxu0 0
  %1327 = vmatpush1.bf16.msra.mxu0 0
  %1328 = vmatprep.subr.bf16.mxu0 0
  %1329 = vmatpush1.bf16.msra.mxu0 0
  %1330 = vmatprep.subr.bf16.mxu0 0
  %1331 = vmatpush1.bf16.msra.mxu0 0
  %1332 = vmatprep.subr.bf16.mxu0 0
  %1333 = vmatpush1.bf16.msra.mxu0 0
  %1334 = vmatprep.subr.bf16.mxu0 0
  %1335 = vmatpush1.bf16.msra.mxu0 0
  %1336 = vmatprep.subr.bf16.mxu0 0
  %1337 = vmatpush1.bf16.msra.mxu0 %v1320
  %1338 = vmatprep.subr.bf16.mxu0 0
  %1339 = vmatpush2.bf16.msra.mxu0 0
  %1340 = vmatprep.subr.bf16.mxu0 0
  %1341 = vmatpush2.bf16.msra.mxu0 0
  %1342 = vmatprep.subr.bf16.mxu0 0
  %1343 = vmatpush2.bf16.msra.mxu0 0
  %1344 = vmatprep.subr.bf16.mxu0 0
  %1345 = vmatpush2.bf16.msra.mxu0 0
  %1346 = vmatprep.subr.bf16.mxu0 0
  %1347 = vmatpush2.bf16.msra.mxu0 0
  %1348 = vmatprep.subr.bf16.mxu0 0
  %1349 = vmatpush2.bf16.msra.mxu0 0
  %1350 = vmatprep.subr.bf16.mxu0 0
  %1351 = vmatpush2.bf16.msra.mxu0 0
  %1352 = vmatprep.subr.bf16.mxu0 0
  %1353 = vmatpush2.bf16.msra.mxu0 0
  %1354 = vmatprep.mubr.bf16.mxu0 0
  %1355 = vmatmul.mubr.bf16.gmra.mxu0 %v1317
  %v1356 = vpop.f32.mrf.mxu0
  %v1357 = vadd.f32 0.0, %v1356
  %v1358 = vpop.f32.mrf.mxu0
  %v1359 = vpop.f32.mrf.mxu0
  %v1360 = vpop.f32.mrf.mxu0
  %1361 = vdwg.mxu0
  %v1363 = vsel %vm1084, %v1074, 0
  %v1366 = vsel %vm1088, %v104, 0
  %1368 = vmatprep.subr.bf16.mxu0 0
  %1369 = vmatpush1.bf16.msra.mxu0 0
  %1370 = vmatprep.subr.bf16.mxu0 0
  %1371 = vmatpush1.bf16.msra.mxu0 0
  %1372 = vmatprep.subr.bf16.mxu0 0
  %1373 = vmatpush1.bf16.msra.mxu0 0
  %1374 = vmatprep.subr.bf16.mxu0 0
  %1375 = vmatpush1.bf16.msra.mxu0 0
  %1376 = vmatprep.subr.bf16.mxu0 0
  %1377 = vmatpush1.bf16.msra.mxu0 0
  %1378 = vmatprep.subr.bf16.mxu0 0
  %1379 = vmatpush1.bf16.msra.mxu0 0
  %1380 = vmatprep.subr.bf16.mxu0 0
  %1381 = vmatpush1.bf16.msra.mxu0 0
  %1382 = vmatprep.subr.bf16.mxu0 0
  %1383 = vmatpush1.bf16.msra.mxu0 %v1366
  %1384 = vmatprep.subr.bf16.mxu0 0
  %1385 = vmatpush2.bf16.msra.mxu0 0
  %1386 = vmatprep.subr.bf16.mxu0 0
  %1387 = vmatpush2.bf16.msra.mxu0 0
  %1388 = vmatprep.subr.bf16.mxu0 0
  %1389 = vmatpush2.bf16.msra.mxu0 0
  %1390 = vmatprep.subr.bf16.mxu0 0
  %1391 = vmatpush2.bf16.msra.mxu0 0
  %1392 = vmatprep.subr.bf16.mxu0 0
  %1393 = vmatpush2.bf16.msra.mxu0 0
  %1394 = vmatprep.subr.bf16.mxu0 0
  %1395 = vmatpush2.bf16.msra.mxu0 0
  %1396 = vmatprep.subr.bf16.mxu0 0
  %1397 = vmatpush2.bf16.msra.mxu0 0
  %1398 = vmatprep.subr.bf16.mxu0 0
  %1399 = vmatpush2.bf16.msra.mxu0 0
  %1400 = vmatprep.mubr.bf16.mxu0 0
  %1401 = vmatmul.mubr.bf16.gmra.mxu0 %v1363
  %v1402 = vpop.f32.mrf.mxu0
  %v1403 = vadd.f32 0.0, %v1402
  %v1404 = vpop.f32.mrf.mxu0
  %v1405 = vpop.f32.mrf.mxu0
  %v1406 = vpop.f32.mrf.mxu0
  %1407 = vdwg.mxu0
  %v1409 = vsel %vm1084, %v1075, 0
  %v1412 = vsel %vm1088, %v105, 0
  %1414 = vmatprep.subr.bf16.mxu0 0
  %1415 = vmatpush1.bf16.msra.mxu0 0
  %1416 = vmatprep.subr.bf16.mxu0 0
  %1417 = vmatpush1.bf16.msra.mxu0 0
  %1418 = vmatprep.subr.bf16.mxu0 0
  %1419 = vmatpush1.bf16.msra.mxu0 0
  %1420 = vmatprep.subr.bf16.mxu0 0
  %1421 = vmatpush1.bf16.msra.mxu0 0
  %1422 = vmatprep.subr.bf16.mxu0 0
  %1423 = vmatpush1.bf16.msra.mxu0 0
  %1424 = vmatprep.subr.bf16.mxu0 0
  %1425 = vmatpush1.bf16.msra.mxu0 0
  %1426 = vmatprep.subr.bf16.mxu0 0
  %1427 = vmatpush1.bf16.msra.mxu0 0
  %1428 = vmatprep.subr.bf16.mxu0 0
  %1429 = vmatpush1.bf16.msra.mxu0 %v1412
  %1430 = vmatprep.subr.bf16.mxu0 0
  %1431 = vmatpush2.bf16.msra.mxu0 0
  %1432 = vmatprep.subr.bf16.mxu0 0
  %1433 = vmatpush2.bf16.msra.mxu0 0
  %1434 = vmatprep.subr.bf16.mxu0 0
  %1435 = vmatpush2.bf16.msra.mxu0 0
  %1436 = vmatprep.subr.bf16.mxu0 0
  %1437 = vmatpush2.bf16.msra.mxu0 0
  %1438 = vmatprep.subr.bf16.mxu0 0
  %1439 = vmatpush2.bf16.msra.mxu0 0
  %1440 = vmatprep.subr.bf16.mxu0 0
  %1441 = vmatpush2.bf16.msra.mxu0 0
  %1442 = vmatprep.subr.bf16.mxu0 0
  %1443 = vmatpush2.bf16.msra.mxu0 0
  %1444 = vmatprep.subr.bf16.mxu0 0
  %1445 = vmatpush2.bf16.msra.mxu0 0
  %1446 = vmatprep.mubr.bf16.mxu0 0
  %1447 = vmatmul.mubr.bf16.gmra.mxu0 %v1409
  %v1448 = vpop.f32.mrf.mxu0
  %v1449 = vadd.f32 0.0, %v1448
  %v1450 = vpop.f32.mrf.mxu0
  %v1451 = vpop.f32.mrf.mxu0
  %v1452 = vpop.f32.mrf.mxu0
  %1453 = vdwg.mxu0
  %v1455 = vsel %vm1084, %v1076, 0
  %v1458 = vsel %vm1088, %v106, 0
  %1460 = vmatprep.subr.bf16.mxu0 0
  %1461 = vmatpush1.bf16.msra.mxu0 0
  %1462 = vmatprep.subr.bf16.mxu0 0
  %1463 = vmatpush1.bf16.msra.mxu0 0
  %1464 = vmatprep.subr.bf16.mxu0 0
  %1465 = vmatpush1.bf16.msra.mxu0 0
  %1466 = vmatprep.subr.bf16.mxu0 0
  %1467 = vmatpush1.bf16.msra.mxu0 0
  %1468 = vmatprep.subr.bf16.mxu0 0
  %1469 = vmatpush1.bf16.msra.mxu0 0
  %1470 = vmatprep.subr.bf16.mxu0 0
  %1471 = vmatpush1.bf16.msra.mxu0 0
  %1472 = vmatprep.subr.bf16.mxu0 0
  %1473 = vmatpush1.bf16.msra.mxu0 0
  %1474 = vmatprep.subr.bf16.mxu0 0
  %1475 = vmatpush1.bf16.msra.mxu0 %v1458
  %1476 = vmatprep.subr.bf16.mxu0 0
  %1477 = vmatpush2.bf16.msra.mxu0 0
  %1478 = vmatprep.subr.bf16.mxu0 0
  %1479 = vmatpush2.bf16.msra.mxu0 0
  %1480 = vmatprep.subr.bf16.mxu0 0
  %1481 = vmatpush2.bf16.msra.mxu0 0
  %1482 = vmatprep.subr.bf16.mxu0 0
  %1483 = vmatpush2.bf16.msra.mxu0 0
  %1484 = vmatprep.subr.bf16.mxu0 0
  %1485 = vmatpush2.bf16.msra.mxu0 0
  %1486 = vmatprep.subr.bf16.mxu0 0
  %1487 = vmatpush2.bf16.msra.mxu0 0
  %1488 = vmatprep.subr.bf16.mxu0 0
  %1489 = vmatpush2.bf16.msra.mxu0 0
  %1490 = vmatprep.subr.bf16.mxu0 0
  %1491 = vmatpush2.bf16.msra.mxu0 0
  %1492 = vmatprep.mubr.bf16.mxu0 0
  %1493 = vmatmul.mubr.bf16.gmra.mxu0 %v1455
  %v1494 = vpop.f32.mrf.mxu0
  %v1495 = vadd.f32 0.0, %v1494
  %v1496 = vpop.f32.mrf.mxu0
  %v1497 = vpop.f32.mrf.mxu0
  %v1498 = vpop.f32.mrf.mxu0
  %1499 = vdwg.mxu0
  %v1501 = vsel %vm1084, %v1077, 0
  %v1504 = vsel %vm1088, %v107, 0
  %1506 = vmatprep.subr.bf16.mxu0 0
  %1507 = vmatpush1.bf16.msra.mxu0 0
  %1508 = vmatprep.subr.bf16.mxu0 0
  %1509 = vmatpush1.bf16.msra.mxu0 0
  %1510 = vmatprep.subr.bf16.mxu0 0
  %1511 = vmatpush1.bf16.msra.mxu0 0
  %1512 = vmatprep.subr.bf16.mxu0 0
  %1513 = vmatpush1.bf16.msra.mxu0 0
  %1514 = vmatprep.subr.bf16.mxu0 0
  %1515 = vmatpush1.bf16.msra.mxu0 0
  %1516 = vmatprep.subr.bf16.mxu0 0
  %1517 = vmatpush1.bf16.msra.mxu0 0
  %1518 = vmatprep.subr.bf16.mxu0 0
  %1519 = vmatpush1.bf16.msra.mxu0 0
  %1520 = vmatprep.subr.bf16.mxu0 0
  %1521 = vmatpush1.bf16.msra.mxu0 %v1504
  %1522 = vmatprep.subr.bf16.mxu0 0
  %1523 = vmatpush2.bf16.msra.mxu0 0
  %1524 = vmatprep.subr.bf16.mxu0 0
  %1525 = vmatpush2.bf16.msra.mxu0 0
  %1526 = vmatprep.subr.bf16.mxu0 0
  %1527 = vmatpush2.bf16.msra.mxu0 0
  %1528 = vmatprep.subr.bf16.mxu0 0
  %1529 = vmatpush2.bf16.msra.mxu0 0
  %1530 = vmatprep.subr.bf16.mxu0 0
  %1531 = vmatpush2.bf16.msra.mxu0 0
  %1532 = vmatprep.subr.bf16.mxu0 0
  %1533 = vmatpush2.bf16.msra.mxu0 0
  %1534 = vmatprep.subr.bf16.mxu0 0
  %1535 = vmatpush2.bf16.msra.mxu0 0
  %1536 = vmatprep.subr.bf16.mxu0 0
  %1537 = vmatpush2.bf16.msra.mxu0 0
  %1538 = vmatprep.mubr.bf16.mxu0 0
  %1539 = vmatmul.mubr.bf16.gmra.mxu0 %v1501
  %v1540 = vpop.f32.mrf.mxu0
  %v1541 = vadd.f32 0.0, %v1540
  %v1542 = vpop.f32.mrf.mxu0
  %v1543 = vpop.f32.mrf.mxu0
  %v1544 = vpop.f32.mrf.mxu0
  %1545 = vdwg.mxu0
  %v1547 = vsel %vm1084, %v1078, 0
  %v1550 = vsel %vm1088, %v108, 0
  %1552 = vmatprep.subr.bf16.mxu0 0
  %1553 = vmatpush1.bf16.msra.mxu0 0
  %1554 = vmatprep.subr.bf16.mxu0 0
  %1555 = vmatpush1.bf16.msra.mxu0 0
  %1556 = vmatprep.subr.bf16.mxu0 0
  %1557 = vmatpush1.bf16.msra.mxu0 0
  %1558 = vmatprep.subr.bf16.mxu0 0
  %1559 = vmatpush1.bf16.msra.mxu0 0
  %1560 = vmatprep.subr.bf16.mxu0 0
  %1561 = vmatpush1.bf16.msra.mxu0 0
  %1562 = vmatprep.subr.bf16.mxu0 0
  %1563 = vmatpush1.bf16.msra.mxu0 0
  %1564 = vmatprep.subr.bf16.mxu0 0
  %1565 = vmatpush1.bf16.msra.mxu0 0
  %1566 = vmatprep.subr.bf16.mxu0 0
  %1567 = vmatpush1.bf16.msra.mxu0 %v1550
  %1568 = vmatprep.subr.bf16.mxu0 0
  %1569 = vmatpush2.bf16.msra.mxu0 0
  %1570 = vmatprep.subr.bf16.mxu0 0
  %1571 = vmatpush2.bf16.msra.mxu0 0
  %1572 = vmatprep.subr.bf16.mxu0 0
  %1573 = vmatpush2.bf16.msra.mxu0 0
  %1574 = vmatprep.subr.bf16.mxu0 0
  %1575 = vmatpush2.bf16.msra.mxu0 0
  %1576 = vmatprep.subr.bf16.mxu0 0
  %1577 = vmatpush2.bf16.msra.mxu0 0
  %1578 = vmatprep.subr.bf16.mxu0 0
  %1579 = vmatpush2.bf16.msra.mxu0 0
  %1580 = vmatprep.subr.bf16.mxu0 0
  %1581 = vmatpush2.bf16.msra.mxu0 0
  %1582 = vmatprep.subr.bf16.mxu0 0
  %1583 = vmatpush2.bf16.msra.mxu0 0
  %1584 = vmatprep.mubr.bf16.mxu0 0
  %1585 = vmatmul.mubr.bf16.gmra.mxu0 %v1547
  %v1586 = vpop.f32.mrf.mxu0
  %v1587 = vadd.f32 0.0, %v1586
  %v1588 = vpop.f32.mrf.mxu0
  %v1589 = vpop.f32.mrf.mxu0
  %v1590 = vpop.f32.mrf.mxu0
  %1591 = vdwg.mxu0
  %v1593 = vsel %vm1084, %v1079, 0
  %v1596 = vsel %vm1088, %v109, 0
  %1598 = vmatprep.subr.bf16.mxu0 0
  %1599 = vmatpush1.bf16.msra.mxu0 0
  %1600 = vmatprep.subr.bf16.mxu0 0
  %1601 = vmatpush1.bf16.msra.mxu0 0
  %1602 = vmatprep.subr.bf16.mxu0 0
  %1603 = vmatpush1.bf16.msra.mxu0 0
  %1604 = vmatprep.subr.bf16.mxu0 0
  %1605 = vmatpush1.bf16.msra.mxu0 0
  %1606 = vmatprep.subr.bf16.mxu0 0
  %1607 = vmatpush1.bf16.msra.mxu0 0
  %1608 = vmatprep.subr.bf16.mxu0 0
  %1609 = vmatpush1.bf16.msra.mxu0 0
  %1610 = vmatprep.subr.bf16.mxu0 0
  %1611 = vmatpush1.bf16.msra.mxu0 0
  %1612 = vmatprep.subr.bf16.mxu0 0
  %1613 = vmatpush1.bf16.msra.mxu0 %v1596
  %1614 = vmatprep.subr.bf16.mxu0 0
  %1615 = vmatpush2.bf16.msra.mxu0 0
  %1616 = vmatprep.subr.bf16.mxu0 0
  %1617 = vmatpush2.bf16.msra.mxu0 0
  %1618 = vmatprep.subr.bf16.mxu0 0
  %1619 = vmatpush2.bf16.msra.mxu0 0
  %1620 = vmatprep.subr.bf16.mxu0 0
  %1621 = vmatpush2.bf16.msra.mxu0 0
  %1622 = vmatprep.subr.bf16.mxu0 0
  %1623 = vmatpush2.bf16.msra.mxu0 0
  %1624 = vmatprep.subr.bf16.mxu0 0
  %1625 = vmatpush2.bf16.msra.mxu0 0
  %1626 = vmatprep.subr.bf16.mxu0 0
  %1627 = vmatpush2.bf16.msra.mxu0 0
  %1628 = vmatprep.subr.bf16.mxu0 0
  %1629 = vmatpush2.bf16.msra.mxu0 0
  %1630 = vmatprep.mubr.bf16.mxu0 0
  %1631 = vmatmul.mubr.bf16.gmra.mxu0 %v1593
  %v1632 = vpop.f32.mrf.mxu0
  %v1633 = vadd.f32 0.0, %v1632
  %v1634 = vpop.f32.mrf.mxu0
  %v1635 = vpop.f32.mrf.mxu0
  %v1636 = vpop.f32.mrf.mxu0
  %1637 = vdwg.mxu0
  %v1639 = vsel %vm1084, %v1080, 0
  %v1642 = vsel %vm1088, %v110, 0
  %1644 = vmatprep.subr.bf16.mxu0 0
  %1645 = vmatpush1.bf16.msra.mxu0 0
  %1646 = vmatprep.subr.bf16.mxu0 0
  %1647 = vmatpush1.bf16.msra.mxu0 0
  %1648 = vmatprep.subr.bf16.mxu0 0
  %1649 = vmatpush1.bf16.msra.mxu0 0
  %1650 = vmatprep.subr.bf16.mxu0 0
  %1651 = vmatpush1.bf16.msra.mxu0 0
  %1652 = vmatprep.subr.bf16.mxu0 0
  %1653 = vmatpush1.bf16.msra.mxu0 0
  %1654 = vmatprep.subr.bf16.mxu0 0
  %1655 = vmatpush1.bf16.msra.mxu0 0
  %1656 = vmatprep.subr.bf16.mxu0 0
  %1657 = vmatpush1.bf16.msra.mxu0 0
  %1658 = vmatprep.subr.bf16.mxu0 0
  %1659 = vmatpush1.bf16.msra.mxu0 %v1642
  %1660 = vmatprep.subr.bf16.mxu0 0
  %1661 = vmatpush2.bf16.msra.mxu0 0
  %1662 = vmatprep.subr.bf16.mxu0 0
  %1663 = vmatpush2.bf16.msra.mxu0 0
  %1664 = vmatprep.subr.bf16.mxu0 0
  %1665 = vmatpush2.bf16.msra.mxu0 0
  %1666 = vmatprep.subr.bf16.mxu0 0
  %1667 = vmatpush2.bf16.msra.mxu0 0
  %1668 = vmatprep.subr.bf16.mxu0 0
  %1669 = vmatpush2.bf16.msra.mxu0 0
  %1670 = vmatprep.subr.bf16.mxu0 0
  %1671 = vmatpush2.bf16.msra.mxu0 0
  %1672 = vmatprep.subr.bf16.mxu0 0
  %1673 = vmatpush2.bf16.msra.mxu0 0
  %1674 = vmatprep.subr.bf16.mxu0 0
  %1675 = vmatpush2.bf16.msra.mxu0 0
  %1676 = vmatprep.mubr.bf16.mxu0 0
  %1677 = vmatmul.mubr.bf16.gmra.mxu0 %v1639
  %v1678 = vpop.f32.mrf.mxu0
  %v1679 = vadd.f32 0.0, %v1678
  %v1680 = vpop.f32.mrf.mxu0
  %v1681 = vpop.f32.mrf.mxu0
  %v1682 = vpop.f32.mrf.mxu0
  %1683 = vdwg.mxu0
  %v1685 = vsel %vm1084, %v1081, 0
  %v1688 = vsel %vm1088, %v111, 0
  %1690 = vmatprep.subr.bf16.mxu0 0
  %1691 = vmatpush1.bf16.msra.mxu0 0
  %1692 = vmatprep.subr.bf16.mxu0 0
  %1693 = vmatpush1.bf16.msra.mxu0 0
  %1694 = vmatprep.subr.bf16.mxu0 0
  %1695 = vmatpush1.bf16.msra.mxu0 0
  %1696 = vmatprep.subr.bf16.mxu0 0
  %1697 = vmatpush1.bf16.msra.mxu0 0
  %1698 = vmatprep.subr.bf16.mxu0 0
  %1699 = vmatpush1.bf16.msra.mxu0 0
  %1700 = vmatprep.subr.bf16.mxu0 0
  %1701 = vmatpush1.bf16.msra.mxu0 0
  %1702 = vmatprep.subr.bf16.mxu0 0
  %1703 = vmatpush1.bf16.msra.mxu0 0
  %1704 = vmatprep.subr.bf16.mxu0 0
  %1705 = vmatpush1.bf16.msra.mxu0 %v1688
  %1706 = vmatprep.subr.bf16.mxu0 0
  %1707 = vmatpush2.bf16.msra.mxu0 0
  %1708 = vmatprep.subr.bf16.mxu0 0
  %1709 = vmatpush2.bf16.msra.mxu0 0
  %1710 = vmatprep.subr.bf16.mxu0 0
  %1711 = vmatpush2.bf16.msra.mxu0 0
  %1712 = vmatprep.subr.bf16.mxu0 0
  %1713 = vmatpush2.bf16.msra.mxu0 0
  %1714 = vmatprep.subr.bf16.mxu0 0
  %1715 = vmatpush2.bf16.msra.mxu0 0
  %1716 = vmatprep.subr.bf16.mxu0 0
  %1717 = vmatpush2.bf16.msra.mxu0 0
  %1718 = vmatprep.subr.bf16.mxu0 0
  %1719 = vmatpush2.bf16.msra.mxu0 0
  %1720 = vmatprep.subr.bf16.mxu0 0
  %1721 = vmatpush2.bf16.msra.mxu0 0
  %1722 = vmatprep.mubr.bf16.mxu0 0
  %1723 = vmatmul.mubr.bf16.gmra.mxu0 %v1685
  %v1724 = vpop.f32.mrf.mxu0
  %v1725 = vadd.f32 0.0, %v1724
  %v1726 = vpop.f32.mrf.mxu0
  %v1727 = vpop.f32.mrf.mxu0
  %v1728 = vpop.f32.mrf.mxu0
  %1729 = vdwg.mxu0
  %v1731 = vsel %vm1084, %v1082, 0
  %v1734 = vsel %vm1088, %v112, 0
  %1736 = vmatprep.subr.bf16.mxu0 0
  %1737 = vmatpush1.bf16.msra.mxu0 0
  %1738 = vmatprep.subr.bf16.mxu0 0
  %1739 = vmatpush1.bf16.msra.mxu0 0
  %1740 = vmatprep.subr.bf16.mxu0 0
  %1741 = vmatpush1.bf16.msra.mxu0 0
  %1742 = vmatprep.subr.bf16.mxu0 0
  %1743 = vmatpush1.bf16.msra.mxu0 0
  %1744 = vmatprep.subr.bf16.mxu0 0
  %1745 = vmatpush1.bf16.msra.mxu0 0
  %1746 = vmatprep.subr.bf16.mxu0 0
  %1747 = vmatpush1.bf16.msra.mxu0 0
  %1748 = vmatprep.subr.bf16.mxu0 0
  %1749 = vmatpush1.bf16.msra.mxu0 0
  %1750 = vmatprep.subr.bf16.mxu0 0
  %1751 = vmatpush1.bf16.msra.mxu0 %v1734
  %1752 = vmatprep.subr.bf16.mxu0 0
  %1753 = vmatpush2.bf16.msra.mxu0 0
  %1754 = vmatprep.subr.bf16.mxu0 0
  %1755 = vmatpush2.bf16.msra.mxu0 0
  %1756 = vmatprep.subr.bf16.mxu0 0
  %1757 = vmatpush2.bf16.msra.mxu0 0
  %1758 = vmatprep.subr.bf16.mxu0 0
  %1759 = vmatpush2.bf16.msra.mxu0 0
  %1760 = vmatprep.subr.bf16.mxu0 0
  %1761 = vmatpush2.bf16.msra.mxu0 0
  %1762 = vmatprep.subr.bf16.mxu0 0
  %1763 = vmatpush2.bf16.msra.mxu0 0
  %1764 = vmatprep.subr.bf16.mxu0 0
  %1765 = vmatpush2.bf16.msra.mxu0 0
  %1766 = vmatprep.subr.bf16.mxu0 0
  %1767 = vmatpush2.bf16.msra.mxu0 0
  %1768 = vmatprep.mubr.bf16.mxu0 0
  %1769 = vmatmul.mubr.bf16.gmra.mxu0 %v1731
  %v1770 = vpop.f32.mrf.mxu0
  %v1771 = vadd.f32 0.0, %v1770
  %v1772 = vpop.f32.mrf.mxu0
  %v1773 = vpop.f32.mrf.mxu0
  %v1774 = vpop.f32.mrf.mxu0
  %1775 = vdwg.mxu0
  %v1777 = vsel %vm1084, %v1083, 0
  %v1780 = vsel %vm1088, %v113, 0
  %1782 = vmatprep.subr.bf16.mxu0 0
  %1783 = vmatpush1.bf16.msra.mxu0 0
  %1784 = vmatprep.subr.bf16.mxu0 0
  %1785 = vmatpush1.bf16.msra.mxu0 0
  %1786 = vmatprep.subr.bf16.mxu0 0
  %1787 = vmatpush1.bf16.msra.mxu0 0
  %1788 = vmatprep.subr.bf16.mxu0 0
  %1789 = vmatpush1.bf16.msra.mxu0 0
  %1790 = vmatprep.subr.bf16.mxu0 0
  %1791 = vmatpush1.bf16.msra.mxu0 0
  %1792 = vmatprep.subr.bf16.mxu0 0
  %1793 = vmatpush1.bf16.msra.mxu0 0
  %1794 = vmatprep.subr.bf16.mxu0 0
  %1795 = vmatpush1.bf16.msra.mxu0 0
  %1796 = vmatprep.subr.bf16.mxu0 0
  %1797 = vmatpush1.bf16.msra.mxu0 %v1780
  %1798 = vmatprep.subr.bf16.mxu0 0
  %1799 = vmatpush2.bf16.msra.mxu0 0
  %1800 = vmatprep.subr.bf16.mxu0 0
  %1801 = vmatpush2.bf16.msra.mxu0 0
  %1802 = vmatprep.subr.bf16.mxu0 0
  %1803 = vmatpush2.bf16.msra.mxu0 0
  %1804 = vmatprep.subr.bf16.mxu0 0
  %1805 = vmatpush2.bf16.msra.mxu0 0
  %1806 = vmatprep.subr.bf16.mxu0 0
  %1807 = vmatpush2.bf16.msra.mxu0 0
  %1808 = vmatprep.subr.bf16.mxu0 0
  %1809 = vmatpush2.bf16.msra.mxu0 0
  %1810 = vmatprep.subr.bf16.mxu0 0
  %1811 = vmatpush2.bf16.msra.mxu0 0
  %1812 = vmatprep.subr.bf16.mxu0 0
  %1813 = vmatpush2.bf16.msra.mxu0 0
  %1814 = vmatprep.mubr.bf16.mxu0 0
  %1815 = vmatmul.mubr.bf16.gmra.mxu0 %v1777
  %v1816 = vpop.f32.mrf.mxu0
  %v1817 = vadd.f32 0.0, %v1816
  %v1818 = vpop.f32.mrf.mxu0
  %v1819 = vpop.f32.mrf.mxu0
  %v1820 = vpop.f32.mrf.mxu0
  %1821 = vdwg.mxu0
  %vm1822 = vcmask 125952
  %1823 = vst.msk [vmem:[%s4] sm:$0xf] %vm1822, %v1127
  %1824 = vst.msk [vmem:[%s4 + $0x4] sm:$0xf] %vm1822, %v1173
  %1825 = vst.msk [vmem:[%s4 + $0x8] sm:$0xf] %vm1822, %v1219
  %1826 = vst.msk [vmem:[%s4 + $0xc] sm:$0xf] %vm1822, %v1265
  %1827 = vst.msk [vmem:[%s4 + $0x10] sm:$0xf] %vm1822, %v1311
  %1828 = vst.msk [vmem:[%s4 + $0x14] sm:$0xf] %vm1822, %v1357
  %1829 = vst.msk [vmem:[%s4 + $0x18] sm:$0xf] %vm1822, %v1403
  %1830 = vst.msk [vmem:[%s4 + $0x1c] sm:$0xf] %vm1822, %v1449
  %1831 = vst.msk [vmem:[%s4 + $0x20] sm:$0xf] %vm1822, %v1495
  %1832 = vst.msk [vmem:[%s4 + $0x24] sm:$0xf] %vm1822, %v1541
  %1833 = vst.msk [vmem:[%s4 + $0x28] sm:$0xf] %vm1822, %v1587
  %1834 = vst.msk [vmem:[%s4 + $0x2c] sm:$0xf] %vm1822, %v1633
  %1835 = vst.msk [vmem:[%s4 + $0x30] sm:$0xf] %vm1822, %v1679
  %1836 = vst.msk [vmem:[%s4 + $0x34] sm:$0xf] %vm1822, %v1725
  %1837 = vst.msk [vmem:[%s4 + $0x38] sm:$0xf] %vm1822, %v1771
  %1838 = vst.msk [vmem:[%s4 + $0x3c] sm:$0xf] %vm1822, %v1817
  // Predicated region
  $region18: #{forward.17} parent=0 // pred_check
    _
  $region19: #{forward.17} parent=0 // pred_check_branch
    %1840 = sbr.rel (0) target = $region21
  $region20: #{forward.17} parent=0 // pred_region
    _
  $region21: #{forward.17} parent=0 // pred_fallthru
    _
  // Predicated region
  $region22: #{forward.17} parent=0 // pred_check
    _
  $region23: #{forward.17} parent=0 // pred_check_branch
    %1842 = sbr.rel (0) target = $region25
  $region24: #{forward.17} parent=0 // pred_region
    _
  $region25: #{forward.17} parent=0 // pred_fallthru
    _

// kernel: forward.22
$region0: #{forward.22}
  #allocation0 [shape = 'u32[]', space=smem, size = 0x4, offset = 0x4, fixed_abs, tag = 'smem constant byte address 0x4 - core index']
  #allocation1 [shape = 'u32[144,128]{1,0:T(1,128)}', space=vmem, size = 0x12000, scoped, tag = 'internal scratch']
  %s0 = inlined_call_operand.vmem [shape: f32[8,128], index: 0, kind: input, shape index: {}]
  %s1 = inlined_call_operand.vmem [shape: f32[1,128], index: 1, kind: input, shape index: {}]
  %s2 = inlined_call_operand.vmem [shape: f32[1,128], index: 2, kind: input, shape index: {}]
  %s3 = inlined_call_operand.vmem [shape: bf16[128,64], index: 3, kind: input, shape index: {}]
  %s4 = inlined_call_operand.vmem [shape: f32[8,64], index: 4, kind: output, shape index: {}]
  %s5 = sld [smem:[#allocation0]]
  $region26: #{forward.22} parent=0
    _
  %s7 = ssub.s32 1, %s5
  %s8 = scalar_select 0, %s7, %s5
  // Predicated region
  $region2: #{forward.22} parent=0 // pred_check
    _
  $region3: #{forward.22} parent=0 // pred_check_branch
    %10 = sbr.rel (0) target = $region5
  $region4: #{forward.22} parent=0 // pred_region
    _
  $region5: #{forward.22} parent=0 // pred_fallthru
    _
  // Predicated region
  $region6: #{forward.22} parent=0 // pred_check
    _
  $region7: #{forward.22} parent=0 // pred_check_branch
    %12 = sbr.rel (0) target = $region9
  $region8: #{forward.22} parent=0 // pred_region
    _
  $region9: #{forward.22} parent=0 // pred_fallthru
    _
  // Predicated region
  $region10: #{forward.22} parent=0 // pred_check
    _
  $region11: #{forward.22} parent=0 // pred_check_branch
    %14 = sbr.rel (0) target = $region13
  $region12: #{forward.22} parent=0 // pred_region
    _
  $region13: #{forward.22} parent=0 // pred_fallthru
    _
  // Predicated region
  $region14: #{forward.22} parent=0 // pred_check
    _
  $region15: #{forward.22} parent=0 // pred_check_branch
    %16 = sbr.rel (0) target = $region17
  $region16: #{forward.22} parent=0 // pred_region
    _
  $region17: #{forward.22} parent=0 // pred_fallthru
    _
  %v18 = vld [vmem:[%s0] sm:$0xff]
  %v19 = vld [vmem:[%s1] sm:$0x1]
  %v20 = vld [vmem:[%s2] sm:$0x1]
  %21 = vadd.xlane.f32.xlu0 %v18
  %v22 = vpop.xlane.xlu0 %21
  %v23 = vrcp.pop 128.0
  %v24 = vmul.f32 %v22, %v23
  %v25 = vsub.f32 %v18, %v24
  %v26 = vmul.f32 %v25, %v25
  %27 = vadd.xlane.f32.xlu0 %v26
  %v28 = vpop.xlane.xlu0 %27
  %v29 = vmul.f32 %v28, %v23
  %v30 = vadd.f32 %v29, 1e-05
  %v31 = vrsqrt.pop %v30
  %v32 = vmul.f32 %v25, %v31
  %v34 = vlaneseq
  %v35 = vshrl.u32 %v34, 7
  %v36 = vsub.s32 0, %v35
  %v37 = vrot.slane %v19, %v36
  %v39 = vmul.f32 %v32, %v37
  %v41 = vlaneseq
  %v42 = vshrl.u32 %v41, 7
  %v43 = vsub.s32 0, %v42
  %v44 = vrot.slane %v20, %v43
  %v46 = vadd.f32 %v39, %v44
  %v47 = vld [vmem:[%s3] sm:$0xf]
  %v48 = vld [vmem:[%s3 + $0x4] sm:$0xf]
  %v49 = vld [vmem:[%s3 + $0x8] sm:$0xf]
  %v50 = vld [vmem:[%s3 + $0xc] sm:$0xf]
  %v51 = vld [vmem:[%s3 + $0x10] sm:$0xf]
  %v52 = vld [vmem:[%s3 + $0x14] sm:$0xf]
  %v53 = vld [vmem:[%s3 + $0x18] sm:$0xf]
  %v54 = vld [vmem:[%s3 + $0x1c] sm:$0xf]
  %v55 = vld [vmem:[%s3 + $0x20] sm:$0xf]
  %v56 = vld [vmem:[%s3 + $0x24] sm:$0xf]
  %v57 = vld [vmem:[%s3 + $0x28] sm:$0xf]
  %v58 = vld [vmem:[%s3 + $0x2c] sm:$0xf]
  %v59 = vld [vmem:[%s3 + $0x30] sm:$0xf]
  %v60 = vld [vmem:[%s3 + $0x34] sm:$0xf]
  %v61 = vld [vmem:[%s3 + $0x38] sm:$0xf]
  %v62 = vld [vmem:[%s3 + $0x3c] sm:$0xf]
  %v63 = vpack.c.bf16 %v46, %v46
  %v80 = vunpack.c.l.b16 %v47
  %v81 = vunpack.c.l.b16 %v48
  %v82 = vunpack.c.l.b16 %v49
  %v83 = vunpack.c.l.b16 %v50
  %v84 = vunpack.c.l.b16 %v51
  %v85 = vunpack.c.l.b16 %v52
  %v86 = vunpack.c.l.b16 %v53
  %v87 = vunpack.c.l.b16 %v54
  %v88 = vunpack.c.l.b16 %v55
  %v89 = vunpack.c.l.b16 %v56
  %v90 = vunpack.c.l.b16 %v57
  %v91 = vunpack.c.l.b16 %v58
  %v92 = vunpack.c.l.b16 %v59
  %v93 = vunpack.c.l.b16 %v60
  %v94 = vunpack.c.l.b16 %v61
  %v95 = vunpack.c.l.b16 %v62
  %v96 = vpack.c.b16 %v81, %v80
  %v97 = vpack.c.b16 %v83, %v82
  %v98 = vpack.c.b16 %v85, %v84
  %v99 = vpack.c.b16 %v87, %v86
  %v100 = vpack.c.b16 %v89, %v88
  %v101 = vpack.c.b16 %v91, %v90
  %v102 = vpack.c.b16 %v93, %v92
  %v103 = vpack.c.b16 %v95, %v94
  %112 = vmatprep.subr.bf16.mxu0 0
  %113 = vmatpush1.bf16.msra.mxu0 %v103
  %114 = vmatprep.subr.bf16.mxu0 0
  %115 = vmatpush1.bf16.msra.mxu0 %v102
  %116 = vmatprep.subr.bf16.mxu0 0
  %117 = vmatpush1.bf16.msra.mxu0 %v101
  %118 = vmatprep.subr.bf16.mxu0 0
  %119 = vmatpush1.bf16.msra.mxu0 %v100
  %120 = vmatprep.subr.bf16.mxu0 0
  %121 = vmatpush1.bf16.msra.mxu0 %v99
  %122 = vmatprep.subr.bf16.mxu0 0
  %123 = vmatpush1.bf16.msra.mxu0 %v98
  %124 = vmatprep.subr.bf16.mxu0 0
  %125 = vmatpush1.bf16.msra.mxu0 %v97
  %126 = vmatprep.subr.bf16.mxu0 0
  %127 = vmatpush1.bf16.msra.mxu0 %v96
  %128 = vmatprep.subr.bf16.mxu0 0
  %129 = vmatpush2.bf16.msra.mxu0 0
  %130 = vmatprep.subr.bf16.mxu0 0
  %131 = vmatpush2.bf16.msra.mxu0 0
  %132 = vmatprep.subr.bf16.mxu0 0
  %133 = vmatpush2.bf16.msra.mxu0 0
  %134 = vmatprep.subr.bf16.mxu0 0
  %135 = vmatpush2.bf16.msra.mxu0 0
  %136 = vmatprep.subr.bf16.mxu0 0
  %137 = vmatpush2.bf16.msra.mxu0 0
  %138 = vmatprep.subr.bf16.mxu0 0
  %139 = vmatpush2.bf16.msra.mxu0 0
  %140 = vmatprep.subr.bf16.mxu0 0
  %141 = vmatpush2.bf16.msra.mxu0 0
  %142 = vmatprep.subr.bf16.mxu0 0
  %143 = vmatpush2.bf16.msra.mxu0 0
  %144 = vmatprep.mubr.bf16.mxu0 0
  %145 = vmatmul.mubr.bf16.gmra.mxu0 %v63
  %v146 = vpop.f32.mrf.mxu0
  %v147 = vadd.f32 0.0, %v146
  %v148 = vpop.f32.mrf.mxu0
  %v149 = vpop.f32.mrf.mxu0
  %v150 = vpop.f32.mrf.mxu0
  %151 = vdwg.mxu0
  %vm152 = vcmask 523264
  %153 = vst.msk [vmem:[%s4] sm:$0xff] %vm152, %v147
  // Predicated region
  $region18: #{forward.22} parent=0 // pred_check
    _
  $region19: #{forward.22} parent=0 // pred_check_branch
    %155 = sbr.rel (0) target = $region21
  $region20: #{forward.22} parent=0 // pred_region
    _
  $region21: #{forward.22} parent=0 // pred_fallthru
    _
  // Predicated region
  $region22: #{forward.22} parent=0 // pred_check
    _
  $region23: #{forward.22} parent=0 // pred_check_branch
    %157 = sbr.rel (0) target = $region25
  $region24: #{forward.22} parent=0 // pred_region
    _
  $region25: #{forward.22} parent=0 // pred_fallthru
    _

// kernel: forward.23
$region0: #{forward.23}
  #allocation0 [shape = 'u32[]', space=smem, size = 0x4, offset = 0x4, fixed_abs, tag = 'smem constant byte address 0x4 - core index']
  #allocation1 [shape = 'u32[144,128]{1,0:T(1,128)}', space=vmem, size = 0x12000, scoped, tag = 'internal scratch']
  %s0 = inlined_call_operand.vmem [shape: f32[8,64], index: 0, kind: input, shape index: {}]
  %s1 = inlined_call_operand.vmem [shape: f32[1,64], index: 1, kind: input, shape index: {}]
  %s2 = inlined_call_operand.vmem [shape: f32[1,64], index: 2, kind: input, shape index: {}]
  %s3 = inlined_call_operand.vmem [shape: bf16[64,192], index: 3, kind: input, shape index: {}]
  %s4 = inlined_call_operand.vmem [shape: f32[1,192], index: 4, kind: input, shape index: {}]
  %s5 = inlined_call_operand.vmem [shape: f32[8,192], index: 5, kind: output, shape index: {}]
  %s6 = sld [smem:[#allocation0]]
  $region30: #{forward.23} parent=0
    _
  %s8 = ssub.s32 1, %s6
  %s9 = scalar_select 0, %s8, %s6
  // Predicated region
  $region2: #{forward.23} parent=0 // pred_check
    _
  $region3: #{forward.23} parent=0 // pred_check_branch
    %11 = sbr.rel (0) target = $region5
  $region4: #{forward.23} parent=0 // pred_region
    _
  $region5: #{forward.23} parent=0 // pred_fallthru
    _
  // Predicated region
  $region6: #{forward.23} parent=0 // pred_check
    _
  $region7: #{forward.23} parent=0 // pred_check_branch
    %13 = sbr.rel (0) target = $region9
  $region8: #{forward.23} parent=0 // pred_region
    _
  $region9: #{forward.23} parent=0 // pred_fallthru
    _
  // Predicated region
  $region10: #{forward.23} parent=0 // pred_check
    _
  $region11: #{forward.23} parent=0 // pred_check_branch
    %15 = sbr.rel (0) target = $region13
  $region12: #{forward.23} parent=0 // pred_region
    _
  $region13: #{forward.23} parent=0 // pred_fallthru
    _
  // Predicated region
  $region14: #{forward.23} parent=0 // pred_check
    _
  $region15: #{forward.23} parent=0 // pred_check_branch
    %17 = sbr.rel (0) target = $region17
  $region16: #{forward.23} parent=0 // pred_region
    _
  $region17: #{forward.23} parent=0 // pred_fallthru
    _
  // Predicated region
  $region18: #{forward.23} parent=0 // pred_check
    _
  $region19: #{forward.23} parent=0 // pred_check_branch
    %19 = sbr.rel (0) target = $region21
  $region20: #{forward.23} parent=0 // pred_region
    _
  $region21: #{forward.23} parent=0 // pred_fallthru
    _
  %v21 = vld [vmem:[%s0] sm:$0xff]
  %v22 = vld [vmem:[%s1] sm:$0x1]
  %v23 = vld [vmem:[%s2] sm:$0x1]
  %vm24 = vcmask 523264
  %v25 = vsel %vm24, %v21, 0.0
  %26 = vadd.xlane.f32.xlu0 %v25
  %v27 = vpop.xlane.xlu0 %26
  %v28 = vrcp.pop 64.0
  %v29 = vmul.f32 %v27, %v28
  %v30 = vsub.f32 %v21, %v29
  %v31 = vmul.f32 %v30, %v30
  %v32 = vsel %vm24, %v31, 0.0
  %33 = vadd.xlane.f32.xlu0 %v32
  %v34 = vpop.xlane.xlu0 %33
  %v35 = vmul.f32 %v34, %v28
  %v36 = vadd.f32 %v35, 1e-05
  %v37 = vrsqrt.pop %v36
  %v38 = vmul.f32 %v30, %v37
  %v40 = vlaneseq
  %v41 = vshrl.u32 %v40, 7
  %v42 = vsub.s32 0, %v41
  %v43 = vrot.slane %v22, %v42
  %v45 = vmul.f32 %v38, %v43
  %v47 = vlaneseq
  %v48 = vshrl.u32 %v47, 7
  %v49 = vsub.s32 0, %v48
  %v50 = vrot.slane %v23, %v49
  %v52 = vadd.f32 %v45, %v50
  %v53 = vld [vmem:[%s3] sm:$0xff]
  %v54 = vld [vmem:[%s3 + $0x8] sm:$0xff]
  %v55 = vld [vmem:[%s3 + $0x10] sm:$0xff]
  %v56 = vld [vmem:[%s3 + $0x18] sm:$0xff]
  %v57 = vld [vmem:[%s3 + $0x20] sm:$0xff]
  %v58 = vld [vmem:[%s3 + $0x28] sm:$0xff]
  %v59 = vld [vmem:[%s3 + $0x30] sm:$0xff]
  %v60 = vld [vmem:[%s3 + $0x38] sm:$0xff]
  %v61 = vpack.c.bf16 %v52, %v52
  %v62 = vld [vmem:[%s4] sm:$0x3]
  %v64 = vlaneseq
  %v65 = vshrl.u32 %v64, 7
  %v66 = vsub.s32 0, %v65
  %v67 = vrot.slane %v62, %v66
  %v68 = vlaneseq
  %v69 = vshrl.u32 %v68, 7
  %v70 = vsub.s32 1, %v69
  %v71 = vrot.slane %v62, %v70
  %v82 = vunpack.c.l.b16 %v53
  %v83 = vunpack.c.h.b16 %v53
  %v84 = vunpack.c.l.b16 %v54
  %v85 = vunpack.c.h.b16 %v54
  %v86 = vunpack.c.l.b16 %v55
  %v87 = vunpack.c.h.b16 %v55
  %v88 = vunpack.c.l.b16 %v56
  %v89 = vunpack.c.h.b16 %v56
  %v90 = vunpack.c.l.b16 %v57
  %v91 = vunpack.c.h.b16 %v57
  %v92 = vunpack.c.l.b16 %v58
  %v93 = vunpack.c.h.b16 %v58
  %v94 = vunpack.c.l.b16 %v59
  %v95 = vunpack.c.h.b16 %v59
  %v96 = vunpack.c.l.b16 %v60
  %v97 = vunpack.c.h.b16 %v60
  %v98 = vpack.c.b16 %v84, %v82
  %v99 = vpack.c.b16 %v85, %v83
  %v100 = vpack.c.b16 %v88, %v86
  %v101 = vpack.c.b16 %v89, %v87
  %v102 = vpack.c.b16 %v92, %v90
  %v103 = vpack.c.b16 %v93, %v91
  %v104 = vpack.c.b16 %v96, %v94
  %v105 = vpack.c.b16 %v97, %v95
  %v115 = vsel %vm24, %v61, 0
  %117 = vmatprep.subr.bf16.mxu0 0
  %118 = vmatpush1.bf16.msra.mxu0 0
  %119 = vmatprep.subr.bf16.mxu0 0
  %120 = vmatpush1.bf16.msra.mxu0 0
  %121 = vmatprep.subr.bf16.mxu0 0
  %122 = vmatpush1.bf16.msra.mxu0 0
  %123 = vmatprep.subr.bf16.mxu0 0
  %124 = vmatpush1.bf16.msra.mxu0 0
  %125 = vmatprep.subr.bf16.mxu0 %v105
  %126 = vmatpush1.bf16.msra.mxu0 %v104
  %127 = vmatprep.subr.bf16.mxu0 %v103
  %128 = vmatpush1.bf16.msra.mxu0 %v102
  %129 = vmatprep.subr.bf16.mxu0 %v101
  %130 = vmatpush1.bf16.msra.mxu0 %v100
  %131 = vmatprep.subr.bf16.mxu0 %v99
  %132 = vmatpush1.bf16.msra.mxu0 %v98
  %133 = vmatprep.subr.bf16.mxu0 0
  %134 = vmatpush2.bf16.msra.mxu0 0
  %135 = vmatprep.subr.bf16.mxu0 0
  %136 = vmatpush2.bf16.msra.mxu0 0
  %137 = vmatprep.subr.bf16.mxu0 0
  %138 = vmatpush2.bf16.msra.mxu0 0
  %139 = vmatprep.subr.bf16.mxu0 0
  %140 = vmatpush2.bf16.msra.mxu0 0
  %141 = vmatprep.subr.bf16.mxu0 0
  %142 = vmatpush2.bf16.msra.mxu0 0
  %143 = vmatprep.subr.bf16.mxu0 0
  %144 = vmatpush2.bf16.msra.mxu0 0
  %145 = vmatprep.subr.bf16.mxu0 0
  %146 = vmatpush2.bf16.msra.mxu0 0
  %147 = vmatprep.subr.bf16.mxu0 0
  %148 = vmatpush2.bf16.msra.mxu0 0
  %149 = vmatprep.mubr.bf16.mxu0 0
  %150 = vmatmul.mubr.bf16.gmra.mxu0 %v115
  %v151 = vpop.f32.mrf.mxu0
  %v152 = vadd.f32 %v67, %v151
  %v153 = vpop.f32.mrf.mxu0
  %v154 = vadd.f32 %v71, %v153
  %v155 = vpop.f32.mrf.mxu0
  %v156 = vpop.f32.mrf.mxu0
  %157 = vdwg.mxu0
  %158 = vst [vmem:[%s5] sm:$0xff] %v152
  %159 = vst.msk [vmem:[%s5 + $0x8] sm:$0xff] %vm24, %v154
  // Predicated region
  $region22: #{forward.23} parent=0 // pred_check
    _
  $region23: #{forward.23} parent=0 // pred_check_branch
    %161 = sbr.rel (0) target = $region25
  $region24: #{forward.23} parent=0 // pred_region
    _
  $region25: #{forward.23} parent=0 // pred_fallthru
    _
  // Predicated region
  $region26: #{forward.23} parent=0 // pred_check
    _
  $region27: #{forward.23} parent=0 // pred_check_branch
    %163 = sbr.rel (0) target = $region29
  $region28: #{forward.23} parent=0 // pred_region
    _
  $region29: #{forward.23} parent=0 // pred_fallthru
    _

// kernel: forward.24
$region0: #{forward.24}
  #allocation0 [shape = 'u32[]', space=smem, size = 0x4, offset = 0x4, fixed_abs, tag = 'smem constant byte address 0x4 - core index']
  #allocation1 [shape = 'u32[144,128]{1,0:T(1,128)}', space=vmem, size = 0x12000, scoped, tag = 'internal scratch']
  %s0 = inlined_call_operand.vmem [shape: f32[8,4,16], index: 0, kind: input, shape index: {}]
  %s1 = inlined_call_operand.vmem [shape: f32[8,4,16], index: 1, kind: input, shape index: {}]
  %s2 = inlined_call_operand.vmem [shape: f32[8,4,16], index: 2, kind: input, shape index: {}]
  %s3 = inlined_call_operand.vmem [shape: f32[4,4,4], index: 3, kind: input, shape index: {}]
  %s4 = inlined_call_operand.vmem [shape: f32[8,4,16], index: 4, kind: output, shape index: {}]
  %s5 = sld [smem:[#allocation0]]
  $region26: #{forward.24} parent=0
    _
  %s7 = ssub.s32 1, %s5
  %s8 = scalar_select 0, %s7, %s5
  // Predicated region
  $region2: #{forward.24} parent=0 // pred_check
    _
  $region3: #{forward.24} parent=0 // pred_check_branch
    %10 = sbr.rel (0) target = $region5
  $region4: #{forward.24} parent=0 // pred_region
    _
  $region5: #{forward.24} parent=0 // pred_fallthru
    _
  // Predicated region
  $region6: #{forward.24} parent=0 // pred_check
    _
  $region7: #{forward.24} parent=0 // pred_check_branch
    %12 = sbr.rel (0) target = $region9
  $region8: #{forward.24} parent=0 // pred_region
    _
  $region9: #{forward.24} parent=0 // pred_fallthru
    _
  // Predicated region
  $region10: #{forward.24} parent=0 // pred_check
    _
  $region11: #{forward.24} parent=0 // pred_check_branch
    %14 = sbr.rel (0) target = $region13
  $region12: #{forward.24} parent=0 // pred_region
    _
  $region13: #{forward.24} parent=0 // pred_fallthru
    _
  // Predicated region
  $region14: #{forward.24} parent=0 // pred_check
    _
  $region15: #{forward.24} parent=0 // pred_check_branch
    %16 = sbr.rel (0) target = $region17
  $region16: #{forward.24} parent=0 // pred_region
    _
  $region17: #{forward.24} parent=0 // pred_fallthru
    _
  %v18 = vld [vmem:[%s0] sm:$0xf]
  %v19 = vld [vmem:[%s0 + $0x4] sm:$0xf]
  %v20 = vld [vmem:[%s0 + $0x8] sm:$0xf]
  %v21 = vld [vmem:[%s0 + $0xc] sm:$0xf]
  %v22 = vld [vmem:[%s0 + $0x10] sm:$0xf]
  %v23 = vld [vmem:[%s0 + $0x14] sm:$0xf]
  %v24 = vld [vmem:[%s0 + $0x18] sm:$0xf]
  %v25 = vld [vmem:[%s0 + $0x1c] sm:$0xf]
  %v26 = vpack.c.bf16 %v18, %v18
  %v27 = vpack.c.bf16 %v19, %v19
  %v28 = vpack.c.bf16 %v20, %v20
  %v29 = vpack.c.bf16 %v21, %v21
  %v30 = vpack.c.bf16 %v22, %v22
  %v31 = vpack.c.bf16 %v23, %v23
  %v32 = vpack.c.bf16 %v24, %v24
  %v33 = vpack.c.bf16 %v25, %v25
  %v34 = vld [vmem:[%s1] sm:$0xf]
  %v35 = vld [vmem:[%s1 + $0x4] sm:$0xf]
  %v36 = vld [vmem:[%s1 + $0x8] sm:$0xf]
  %v37 = vld [vmem:[%s1 + $0xc] sm:$0xf]
  %v38 = vld [vmem:[%s1 + $0x10] sm:$0xf]
  %v39 = vld [vmem:[%s1 + $0x14] sm:$0xf]
  %v40 = vld [vmem:[%s1 + $0x18] sm:$0xf]
  %v41 = vld [vmem:[%s1 + $0x1c] sm:$0xf]
  %v42 = vpack.c.bf16 %v34, %v34
  %v43 = vpack.c.bf16 %v35, %v35
  %v44 = vpack.c.bf16 %v36, %v36
  %v45 = vpack.c.bf16 %v37, %v37
  %v46 = vpack.c.bf16 %v38, %v38
  %v47 = vpack.c.bf16 %v39, %v39
  %v48 = vpack.c.bf16 %v40, %v40
  %v49 = vpack.c.bf16 %v41, %v41
  %v50 = vld [vmem:[%s2] sm:$0xf]
  %v51 = vld [vmem:[%s2 + $0x4] sm:$0xf]
  %v52 = vld [vmem:[%s2 + $0x8] sm:$0xf]
  %v53 = vld [vmem:[%s2 + $0xc] sm:$0xf]
  %v54 = vld [vmem:[%s2 + $0x10] sm:$0xf]
  %v55 = vld [vmem:[%s2 + $0x14] sm:$0xf]
  %v56 = vld [vmem:[%s2 + $0x18] sm:$0xf]
  %v57 = vld [vmem:[%s2 + $0x1c] sm:$0xf]
  %v58 = vpack.c.bf16 %v50, %v50
  %v59 = vpack.c.bf16 %v51, %v51
  %v60 = vpack.c.bf16 %v52, %v52
  %v61 = vpack.c.bf16 %v53, %v53
  %v62 = vpack.c.bf16 %v54, %v54
  %v63 = vpack.c.bf16 %v55, %v55
  %v64 = vpack.c.bf16 %v56, %v56
  %v65 = vpack.c.bf16 %v57, %v57
  %vm66 = vcmask 130048
  %v68 = vsel %vm66, %v26, 0
  %v71 = vsel %vm66, %v42, 0
  %73 = vmatprep.subr.bf16.mxu0 0
  %74 = vmatpush1.bf16.xpose.msra.mxu0 0
  %75 = vmatprep.subr.bf16.mxu0 0
  %76 = vmatpush1.bf16.xpose.msra.mxu0 0
  %77 = vmatprep.subr.bf16.mxu0 0
  %78 = vmatpush1.bf16.xpose.msra.mxu0 0
  %79 = vmatprep.subr.bf16.mxu0 0
  %80 = vmatpush1.bf16.xpose.msra.mxu0 0
  %81 = vmatprep.subr.bf16.mxu0 0
  %82 = vmatpush1.bf16.xpose.msra.mxu0 0
  %83 = vmatprep.subr.bf16.mxu0 0
  %84 = vmatpush1.bf16.xpose.msra.mxu0 0
  %85 = vmatprep.subr.bf16.mxu0 0
  %86 = vmatpush1.bf16.xpose.msra.mxu0 0
  %87 = vmatprep.subr.bf16.mxu0 0
  %88 = vmatpush1.bf16.xpose.msra.mxu0 %v71
  %89 = vmatprep.subr.bf16.mxu0 0
  %90 = vmatpush2.bf16.xpose.msra.mxu0 0
  %91 = vmatprep.subr.bf16.mxu0 0
  %92 = vmatpush2.bf16.xpose.msra.mxu0 0
  %93 = vmatprep.subr.bf16.mxu0 0
  %94 = vmatpush2.bf16.xpose.msra.mxu0 0
  %95 = vmatprep.subr.bf16.mxu0 0
  %96 = vmatpush2.bf16.xpose.msra.mxu0 0
  %97 = vmatprep.subr.bf16.mxu0 0
  %98 = vmatpush2.bf16.xpose.msra.mxu0 0
  %99 = vmatprep.subr.bf16.mxu0 0
  %100 = vmatpush2.bf16.xpose.msra.mxu0 0
  %101 = vmatprep.subr.bf16.mxu0 0
  %102 = vmatpush2.bf16.xpose.msra.mxu0 0
  %103 = vmatprep.subr.bf16.mxu0 0
  %104 = vmatpush2.bf16.xpose.msra.mxu0 0
  %105 = vmatprep.mubr.bf16.mxu0 0
  %106 = vmatmul.mubr.bf16.gmra.mxu0 %v68
  %v107 = vpop.f32.mrf.mxu0
  %v108 = vadd.f32 0.0, %v107
  %v109 = vpop.f32.mrf.mxu0
  %v110 = vpop.f32.mrf.mxu0
  %v111 = vpop.f32.mrf.mxu0
  %112 = vdwg.mxu0
  %v114 = vsel %vm66, %v27, 0
  %v117 = vsel %vm66, %v43, 0
  %119 = vmatprep.subr.bf16.mxu0 0
  %120 = vmatpush1.bf16.xpose.msra.mxu0 0
  %121 = vmatprep.subr.bf16.mxu0 0
  %122 = vmatpush1.bf16.xpose.msra.mxu0 0
  %123 = vmatprep.subr.bf16.mxu0 0
  %124 = vmatpush1.bf16.xpose.msra.mxu0 0
  %125 = vmatprep.subr.bf16.mxu0 0
  %126 = vmatpush1.bf16.xpose.msra.mxu0 0
  %127 = vmatprep.subr.bf16.mxu0 0
  %128 = vmatpush1.bf16.xpose.msra.mxu0 0
  %129 = vmatprep.subr.bf16.mxu0 0
  %130 = vmatpush1.bf16.xpose.msra.mxu0 0
  %131 = vmatprep.subr.bf16.mxu0 0
  %132 = vmatpush1.bf16.xpose.msra.mxu0 0
  %133 = vmatprep.subr.bf16.mxu0 0
  %134 = vmatpush1.bf16.xpose.msra.mxu0 %v117
  %135 = vmatprep.subr.bf16.mxu0 0
  %136 = vmatpush2.bf16.xpose.msra.mxu0 0
  %137 = vmatprep.subr.bf16.mxu0 0
  %138 = vmatpush2.bf16.xpose.msra.mxu0 0
  %139 = vmatprep.subr.bf16.mxu0 0
  %140 = vmatpush2.bf16.xpose.msra.mxu0 0
  %141 = vmatprep.subr.bf16.mxu0 0
  %142 = vmatpush2.bf16.xpose.msra.mxu0 0
  %143 = vmatprep.subr.bf16.mxu0 0
  %144 = vmatpush2.bf16.xpose.msra.mxu0 0
  %145 = vmatprep.subr.bf16.mxu0 0
  %146 = vmatpush2.bf16.xpose.msra.mxu0 0
  %147 = vmatprep.subr.bf16.mxu0 0
  %148 = vmatpush2.bf16.xpose.msra.mxu0 0
  %149 = vmatprep.subr.bf16.mxu0 0
  %150 = vmatpush2.bf16.xpose.msra.mxu0 0
  %151 = vmatprep.mubr.bf16.mxu0 0
  %152 = vmatmul.mubr.bf16.gmra.mxu0 %v114
  %v153 = vpop.f32.mrf.mxu0
  %v154 = vadd.f32 0.0, %v153
  %v155 = vpop.f32.mrf.mxu0
  %v156 = vpop.f32.mrf.mxu0
  %v157 = vpop.f32.mrf.mxu0
  %158 = vdwg.mxu0
  %v160 = vsel %vm66, %v28, 0
  %v163 = vsel %vm66, %v44, 0
  %165 = vmatprep.subr.bf16.mxu0 0
  %166 = vmatpush1.bf16.xpose.msra.mxu0 0
  %167 = vmatprep.subr.bf16.mxu0 0
  %168 = vmatpush1.bf16.xpose.msra.mxu0 0
  %169 = vmatprep.subr.bf16.mxu0 0
  %170 = vmatpush1.bf16.xpose.msra.mxu0 0
  %171 = vmatprep.subr.bf16.mxu0 0
  %172 = vmatpush1.bf16.xpose.msra.mxu0 0
  %173 = vmatprep.subr.bf16.mxu0 0
  %174 = vmatpush1.bf16.xpose.msra.mxu0 0
  %175 = vmatprep.subr.bf16.mxu0 0
  %176 = vmatpush1.bf16.xpose.msra.mxu0 0
  %177 = vmatprep.subr.bf16.mxu0 0
  %178 = vmatpush1.bf16.xpose.msra.mxu0 0
  %179 = vmatprep.subr.bf16.mxu0 0
  %180 = vmatpush1.bf16.xpose.msra.mxu0 %v163
  %181 = vmatprep.subr.bf16.mxu0 0
  %182 = vmatpush2.bf16.xpose.msra.mxu0 0
  %183 = vmatprep.subr.bf16.mxu0 0
  %184 = vmatpush2.bf16.xpose.msra.mxu0 0
  %185 = vmatprep.subr.bf16.mxu0 0
  %186 = vmatpush2.bf16.xpose.msra.mxu0 0
  %187 = vmatprep.subr.bf16.mxu0 0
  %188 = vmatpush2.bf16.xpose.msra.mxu0 0
  %189 = vmatprep.subr.bf16.mxu0 0
  %190 = vmatpush2.bf16.xpose.msra.mxu0 0
  %191 = vmatprep.subr.bf16.mxu0 0
  %192 = vmatpush2.bf16.xpose.msra.mxu0 0
  %193 = vmatprep.subr.bf16.mxu0 0
  %194 = vmatpush2.bf16.xpose.msra.mxu0 0
  %195 = vmatprep.subr.bf16.mxu0 0
  %196 = vmatpush2.bf16.xpose.msra.mxu0 0
  %197 = vmatprep.mubr.bf16.mxu0 0
  %198 = vmatmul.mubr.bf16.gmra.mxu0 %v160
  %v199 = vpop.f32.mrf.mxu0
  %v200 = vadd.f32 0.0, %v199
  %v201 = vpop.f32.mrf.mxu0
  %v202 = vpop.f32.mrf.mxu0
  %v203 = vpop.f32.mrf.mxu0
  %204 = vdwg.mxu0
  %v206 = vsel %vm66, %v29, 0
  %v209 = vsel %vm66, %v45, 0
  %211 = vmatprep.subr.bf16.mxu0 0
  %212 = vmatpush1.bf16.xpose.msra.mxu0 0
  %213 = vmatprep.subr.bf16.mxu0 0
  %214 = vmatpush1.bf16.xpose.msra.mxu0 0
  %215 = vmatprep.subr.bf16.mxu0 0
  %216 = vmatpush1.bf16.xpose.msra.mxu0 0
  %217 = vmatprep.subr.bf16.mxu0 0
  %218 = vmatpush1.bf16.xpose.msra.mxu0 0
  %219 = vmatprep.subr.bf16.mxu0 0
  %220 = vmatpush1.bf16.xpose.msra.mxu0 0
  %221 = vmatprep.subr.bf16.mxu0 0
  %222 = vmatpush1.bf16.xpose.msra.mxu0 0
  %223 = vmatprep.subr.bf16.mxu0 0
  %224 = vmatpush1.bf16.xpose.msra.mxu0 0
  %225 = vmatprep.subr.bf16.mxu0 0
  %226 = vmatpush1.bf16.xpose.msra.mxu0 %v209
  %227 = vmatprep.subr.bf16.mxu0 0
  %228 = vmatpush2.bf16.xpose.msra.mxu0 0
  %229 = vmatprep.subr.bf16.mxu0 0
  %230 = vmatpush2.bf16.xpose.msra.mxu0 0
  %231 = vmatprep.subr.bf16.mxu0 0
  %232 = vmatpush2.bf16.xpose.msra.mxu0 0
  %233 = vmatprep.subr.bf16.mxu0 0
  %234 = vmatpush2.bf16.xpose.msra.mxu0 0
  %235 = vmatprep.subr.bf16.mxu0 0
  %236 = vmatpush2.bf16.xpose.msra.mxu0 0
  %237 = vmatprep.subr.bf16.mxu0 0
  %238 = vmatpush2.bf16.xpose.msra.mxu0 0
  %239 = vmatprep.subr.bf16.mxu0 0
  %240 = vmatpush2.bf16.xpose.msra.mxu0 0
  %241 = vmatprep.subr.bf16.mxu0 0
  %242 = vmatpush2.bf16.xpose.msra.mxu0 0
  %243 = vmatprep.mubr.bf16.mxu0 0
  %244 = vmatmul.mubr.bf16.gmra.mxu0 %v206
  %v245 = vpop.f32.mrf.mxu0
  %v246 = vadd.f32 0.0, %v245
  %v247 = vpop.f32.mrf.mxu0
  %v248 = vpop.f32.mrf.mxu0
  %v249 = vpop.f32.mrf.mxu0
  %250 = vdwg.mxu0
  %v252 = vsel %vm66, %v30, 0
  %v255 = vsel %vm66, %v46, 0
  %257 = vmatprep.subr.bf16.mxu0 0
  %258 = vmatpush1.bf16.xpose.msra.mxu0 0
  %259 = vmatprep.subr.bf16.mxu0 0
  %260 = vmatpush1.bf16.xpose.msra.mxu0 0
  %261 = vmatprep.subr.bf16.mxu0 0
  %262 = vmatpush1.bf16.xpose.msra.mxu0 0
  %263 = vmatprep.subr.bf16.mxu0 0
  %264 = vmatpush1.bf16.xpose.msra.mxu0 0
  %265 = vmatprep.subr.bf16.mxu0 0
  %266 = vmatpush1.bf16.xpose.msra.mxu0 0
  %267 = vmatprep.subr.bf16.mxu0 0
  %268 = vmatpush1.bf16.xpose.msra.mxu0 0
  %269 = vmatprep.subr.bf16.mxu0 0
  %270 = vmatpush1.bf16.xpose.msra.mxu0 0
  %271 = vmatprep.subr.bf16.mxu0 0
  %272 = vmatpush1.bf16.xpose.msra.mxu0 %v255
  %273 = vmatprep.subr.bf16.mxu0 0
  %274 = vmatpush2.bf16.xpose.msra.mxu0 0
  %275 = vmatprep.subr.bf16.mxu0 0
  %276 = vmatpush2.bf16.xpose.msra.mxu0 0
  %277 = vmatprep.subr.bf16.mxu0 0
  %278 = vmatpush2.bf16.xpose.msra.mxu0 0
  %279 = vmatprep.subr.bf16.mxu0 0
  %280 = vmatpush2.bf16.xpose.msra.mxu0 0
  %281 = vmatprep.subr.bf16.mxu0 0
  %282 = vmatpush2.bf16.xpose.msra.mxu0 0
  %283 = vmatprep.subr.bf16.mxu0 0
  %284 = vmatpush2.bf16.xpose.msra.mxu0 0
  %285 = vmatprep.subr.bf16.mxu0 0
  %286 = vmatpush2.bf16.xpose.msra.mxu0 0
  %287 = vmatprep.subr.bf16.mxu0 0
  %288 = vmatpush2.bf16.xpose.msra.mxu0 0
  %289 = vmatprep.mubr.bf16.mxu0 0
  %290 = vmatmul.mubr.bf16.gmra.mxu0 %v252
  %v291 = vpop.f32.mrf.mxu0
  %v292 = vadd.f32 0.0, %v291
  %v293 = vpop.f32.mrf.mxu0
  %v294 = vpop.f32.mrf.mxu0
  %v295 = vpop.f32.mrf.mxu0
  %296 = vdwg.mxu0
  %v298 = vsel %vm66, %v31, 0
  %v301 = vsel %vm66, %v47, 0
  %303 = vmatprep.subr.bf16.mxu0 0
  %304 = vmatpush1.bf16.xpose.msra.mxu0 0
  %305 = vmatprep.subr.bf16.mxu0 0
  %306 = vmatpush1.bf16.xpose.msra.mxu0 0
  %307 = vmatprep.subr.bf16.mxu0 0
  %308 = vmatpush1.bf16.xpose.msra.mxu0 0
  %309 = vmatprep.subr.bf16.mxu0 0
  %310 = vmatpush1.bf16.xpose.msra.mxu0 0
  %311 = vmatprep.subr.bf16.mxu0 0
  %312 = vmatpush1.bf16.xpose.msra.mxu0 0
  %313 = vmatprep.subr.bf16.mxu0 0
  %314 = vmatpush1.bf16.xpose.msra.mxu0 0
  %315 = vmatprep.subr.bf16.mxu0 0
  %316 = vmatpush1.bf16.xpose.msra.mxu0 0
  %317 = vmatprep.subr.bf16.mxu0 0
  %318 = vmatpush1.bf16.xpose.msra.mxu0 %v301
  %319 = vmatprep.subr.bf16.mxu0 0
  %320 = vmatpush2.bf16.xpose.msra.mxu0 0
  %321 = vmatprep.subr.bf16.mxu0 0
  %322 = vmatpush2.bf16.xpose.msra.mxu0 0
  %323 = vmatprep.subr.bf16.mxu0 0
  %324 = vmatpush2.bf16.xpose.msra.mxu0 0
  %325 = vmatprep.subr.bf16.mxu0 0
  %326 = vmatpush2.bf16.xpose.msra.mxu0 0
  %327 = vmatprep.subr.bf16.mxu0 0
  %328 = vmatpush2.bf16.xpose.msra.mxu0 0
  %329 = vmatprep.subr.bf16.mxu0 0
  %330 = vmatpush2.bf16.xpose.msra.mxu0 0
  %331 = vmatprep.subr.bf16.mxu0 0
  %332 = vmatpush2.bf16.xpose.msra.mxu0 0
  %333 = vmatprep.subr.bf16.mxu0 0
  %334 = vmatpush2.bf16.xpose.msra.mxu0 0
  %335 = vmatprep.mubr.bf16.mxu0 0
  %336 = vmatmul.mubr.bf16.gmra.mxu0 %v298
  %v337 = vpop.f32.mrf.mxu0
  %v338 = vadd.f32 0.0, %v337
  %v339 = vpop.f32.mrf.mxu0
  %v340 = vpop.f32.mrf.mxu0
  %v341 = vpop.f32.mrf.mxu0
  %342 = vdwg.mxu0
  %v344 = vsel %vm66, %v32, 0
  %v347 = vsel %vm66, %v48, 0
  %349 = vmatprep.subr.bf16.mxu0 0
  %350 = vmatpush1.bf16.xpose.msra.mxu0 0
  %351 = vmatprep.subr.bf16.mxu0 0
  %352 = vmatpush1.bf16.xpose.msra.mxu0 0
  %353 = vmatprep.subr.bf16.mxu0 0
  %354 = vmatpush1.bf16.xpose.msra.mxu0 0
  %355 = vmatprep.subr.bf16.mxu0 0
  %356 = vmatpush1.bf16.xpose.msra.mxu0 0
  %357 = vmatprep.subr.bf16.mxu0 0
  %358 = vmatpush1.bf16.xpose.msra.mxu0 0
  %359 = vmatprep.subr.bf16.mxu0 0
  %360 = vmatpush1.bf16.xpose.msra.mxu0 0
  %361 = vmatprep.subr.bf16.mxu0 0
  %362 = vmatpush1.bf16.xpose.msra.mxu0 0
  %363 = vmatprep.subr.bf16.mxu0 0
  %364 = vmatpush1.bf16.xpose.msra.mxu0 %v347
  %365 = vmatprep.subr.bf16.mxu0 0
  %366 = vmatpush2.bf16.xpose.msra.mxu0 0
  %367 = vmatprep.subr.bf16.mxu0 0
  %368 = vmatpush2.bf16.xpose.msra.mxu0 0
  %369 = vmatprep.subr.bf16.mxu0 0
  %370 = vmatpush2.bf16.xpose.msra.mxu0 0
  %371 = vmatprep.subr.bf16.mxu0 0
  %372 = vmatpush2.bf16.xpose.msra.mxu0 0
  %373 = vmatprep.subr.bf16.mxu0 0
  %374 = vmatpush2.bf16.xpose.msra.mxu0 0
  %375 = vmatprep.subr.bf16.mxu0 0
  %376 = vmatpush2.bf16.xpose.msra.mxu0 0
  %377 = vmatprep.subr.bf16.mxu0 0
  %378 = vmatpush2.bf16.xpose.msra.mxu0 0
  %379 = vmatprep.subr.bf16.mxu0 0
  %380 = vmatpush2.bf16.xpose.msra.mxu0 0
  %381 = vmatprep.mubr.bf16.mxu0 0
  %382 = vmatmul.mubr.bf16.gmra.mxu0 %v344
  %v383 = vpop.f32.mrf.mxu0
  %v384 = vadd.f32 0.0, %v383
  %v385 = vpop.f32.mrf.mxu0
  %v386 = vpop.f32.mrf.mxu0
  %v387 = vpop.f32.mrf.mxu0
  %388 = vdwg.mxu0
  %v390 = vsel %vm66, %v33, 0
  %v393 = vsel %vm66, %v49, 0
  %395 = vmatprep.subr.bf16.mxu0 0
  %396 = vmatpush1.bf16.xpose.msra.mxu0 0
  %397 = vmatprep.subr.bf16.mxu0 0
  %398 = vmatpush1.bf16.xpose.msra.mxu0 0
  %399 = vmatprep.subr.bf16.mxu0 0
  %400 = vmatpush1.bf16.xpose.msra.mxu0 0
  %401 = vmatprep.subr.bf16.mxu0 0
  %402 = vmatpush1.bf16.xpose.msra.mxu0 0
  %403 = vmatprep.subr.bf16.mxu0 0
  %404 = vmatpush1.bf16.xpose.msra.mxu0 0
  %405 = vmatprep.subr.bf16.mxu0 0
  %406 = vmatpush1.bf16.xpose.msra.mxu0 0
  %407 = vmatprep.subr.bf16.mxu0 0
  %408 = vmatpush1.bf16.xpose.msra.mxu0 0
  %409 = vmatprep.subr.bf16.mxu0 0
  %410 = vmatpush1.bf16.xpose.msra.mxu0 %v393
  %411 = vmatprep.subr.bf16.mxu0 0
  %412 = vmatpush2.bf16.xpose.msra.mxu0 0
  %413 = vmatprep.subr.bf16.mxu0 0
  %414 = vmatpush2.bf16.xpose.msra.mxu0 0
  %415 = vmatprep.subr.bf16.mxu0 0
  %416 = vmatpush2.bf16.xpose.msra.mxu0 0
  %417 = vmatprep.subr.bf16.mxu0 0
  %418 = vmatpush2.bf16.xpose.msra.mxu0 0
  %419 = vmatprep.subr.bf16.mxu0 0
  %420 = vmatpush2.bf16.xpose.msra.mxu0 0
  %421 = vmatprep.subr.bf16.mxu0 0
  %422 = vmatpush2.bf16.xpose.msra.mxu0 0
  %423 = vmatprep.subr.bf16.mxu0 0
  %424 = vmatpush2.bf16.xpose.msra.mxu0 0
  %425 = vmatprep.subr.bf16.mxu0 0
  %426 = vmatpush2.bf16.xpose.msra.mxu0 0
  %427 = vmatprep.mubr.bf16.mxu0 0
  %428 = vmatmul.mubr.bf16.gmra.mxu0 %v390
  %v429 = vpop.f32.mrf.mxu0
  %v430 = vadd.f32 0.0, %v429
  %v431 = vpop.f32.mrf.mxu0
  %v432 = vpop.f32.mrf.mxu0
  %v433 = vpop.f32.mrf.mxu0
  %434 = vdwg.mxu0
  %v435 = vmul.f32 %v108, 0.25
  %v436 = vmul.f32 %v154, 0.25
  %v437 = vmul.f32 %v200, 0.25
  %v438 = vmul.f32 %v246, 0.25
  %v439 = vmul.f32 %v292, 0.25
  %v440 = vmul.f32 %v338, 0.25
  %v441 = vmul.f32 %v384, 0.25
  %v442 = vmul.f32 %v430, 0.25
  %v443 = vld [vmem:[%s3] sm:$0xf]
  %v444 = vld [vmem:[%s3 + $0x4] sm:$0xf]
  %v445 = vld [vmem:[%s3 + $0x8] sm:$0xf]
  %v446 = vld [vmem:[%s3 + $0xc] sm:$0xf]
  %v447 = vadd.f32 %v435, %v443
  %v448 = vadd.f32 %v436, %v444
  %v449 = vadd.f32 %v437, %v445
  %v450 = vadd.f32 %v438, %v446
  %v451 = vadd.f32 %v439, %v443
  %v452 = vadd.f32 %v440, %v444
  %v453 = vadd.f32 %v441, %v445
  %v454 = vadd.f32 %v442, %v446
  %vm455 = vcmask 27648
  %v456 = vsel %vm455, %v447, -inf
  %457 = vmax.xlane.f32.xlu0 %v456
  %v458 = vpop.xlane.xlu0 %457
  %v459 = vsel %vm455, %v448, -inf
  %460 = vmax.xlane.f32.xlu0 %v459
  %v461 = vpop.xlane.xlu0 %460
  %v462 = vsel %vm455, %v449, -inf
  %463 = vmax.xlane.f32.xlu0 %v462
  %v464 = vpop.xlane.xlu0 %463
  %v465 = vsel %vm455, %v450, -inf
  %466 = vmax.xlane.f32.xlu0 %v465
  %v467 = vpop.xlane.xlu0 %466
  %v468 = vsel %vm455, %v451, -inf
  %469 = vmax.xlane.f32.xlu0 %v468
  %v470 = vpop.xlane.xlu0 %469
  %v471 = vsel %vm455, %v452, -inf
  %472 = vmax.xlane.f32.xlu0 %v471
  %v473 = vpop.xlane.xlu0 %472
  %v474 = vsel %vm455, %v453, -inf
  %475 = vmax.xlane.f32.xlu0 %v474
  %v476 = vpop.xlane.xlu0 %475
  %v477 = vsel %vm455, %v454, -inf
  %478 = vmax.xlane.f32.xlu0 %v477
  %v479 = vpop.xlane.xlu0 %478
  %v480 = vsub.f32 %v447, %v458
  %v481 = vsub.f32 %v448, %v461
  %v482 = vsub.f32 %v449, %v464
  %v483 = vsub.f32 %v450, %v467
  %v484 = vsub.f32 %v451, %v470
  %v485 = vsub.f32 %v452, %v473
  %v486 = vsub.f32 %v453, %v476
  %v487 = vsub.f32 %v454, %v479
  %v488 = vmul.f32 %v480, 1.442695
  %v489 = vpow.pop %v488
  %v490 = vmul.f32 %v481, 1.442695
  %v491 = vpow.pop %v490
  %v492 = vmul.f32 %v482, 1.442695
  %v493 = vpow.pop %v492
  %v494 = vmul.f32 %v483, 1.442695
  %v495 = vpow.pop %v494
  %v496 = vmul.f32 %v484, 1.442695
  %v497 = vpow.pop %v496
  %v498 = vmul.f32 %v485, 1.442695
  %v499 = vpow.pop %v498
  %v500 = vmul.f32 %v486, 1.442695
  %v501 = vpow.pop %v500
  %v502 = vmul.f32 %v487, 1.442695
  %v503 = vpow.pop %v502
  %v504 = vsel %vm455, %v489, 0.0
  %505 = vadd.xlane.f32.xlu0 %v504
  %v506 = vpop.xlane.xlu0 %505
  %v507 = vsel %vm455, %v491, 0.0
  %508 = vadd.xlane.f32.xlu0 %v507
  %v509 = vpop.xlane.xlu0 %508
  %v510 = vsel %vm455, %v493, 0.0
  %511 = vadd.xlane.f32.xlu0 %v510
  %v512 = vpop.xlane.xlu0 %511
  %v513 = vsel %vm455, %v495, 0.0
  %514 = vadd.xlane.f32.xlu0 %v513
  %v515 = vpop.xlane.xlu0 %514
  %v516 = vsel %vm455, %v497, 0.0
  %517 = vadd.xlane.f32.xlu0 %v516
  %v518 = vpop.xlane.xlu0 %517
  %v519 = vsel %vm455, %v499, 0.0
  %520 = vadd.xlane.f32.xlu0 %v519
  %v521 = vpop.xlane.xlu0 %520
  %v522 = vsel %vm455, %v501, 0.0
  %523 = vadd.xlane.f32.xlu0 %v522
  %v524 = vpop.xlane.xlu0 %523
  %v525 = vsel %vm455, %v503, 0.0
  %526 = vadd.xlane.f32.xlu0 %v525
  %v527 = vpop.xlane.xlu0 %526
  %v528 = vrcp.pop %v506
  %v529 = vrcp.pop %v509
  %v530 = vrcp.pop %v512
  %v531 = vrcp.pop %v515
  %v532 = vrcp.pop %v518
  %v533 = vrcp.pop %v521
  %v534 = vrcp.pop %v524
  %v535 = vrcp.pop %v527
  %v536 = vmul.f32 %v489, %v528
  %v537 = vmul.f32 %v491, %v529
  %v538 = vmul.f32 %v493, %v530
  %v539 = vmul.f32 %v495, %v531
  %v540 = vmul.f32 %v497, %v532
  %v541 = vmul.f32 %v499, %v533
  %v542 = vmul.f32 %v501, %v534
  %v543 = vmul.f32 %v503, %v535
  %v544 = vpack.c.bf16 %v536, %v536
  %v545 = vpack.c.bf16 %v537, %v537
  %v546 = vpack.c.bf16 %v538, %v538
  %v547 = vpack.c.bf16 %v539, %v539
  %v548 = vpack.c.bf16 %v540, %v540
  %v549 = vpack.c.bf16 %v541, %v541
  %v550 = vpack.c.bf16 %v542, %v542
  %v551 = vpack.c.bf16 %v543, %v543
  %vm552 = vcmask 31744
  %v554 = vsel %vm552, %v544, 0
  %vm556 = vcmask 1041408
  %v558 = vsel %vm556, %v58, 0
  %560 = vmatprep.subr.bf16.mxu0 0
  %561 = vmatpush1.bf16.msra.mxu0 0
  %562 = vmatprep.subr.bf16.mxu0 0
  %563 = vmatpush1.bf16.msra.mxu0 0
  %564 = vmatprep.subr.bf16.mxu0 0
  %565 = vmatpush1.bf16.msra.mxu0 0
  %566 = vmatprep.subr.bf16.mxu0 0
  %567 = vmatpush1.bf16.msra.mxu0 0
  %568 = vmatprep.subr.bf16.mxu0 0
  %569 = vmatpush1.bf16.msra.mxu0 0
  %570 = vmatprep.subr.bf16.mxu0 0
  %571 = vmatpush1.bf16.msra.mxu0 0
  %572 = vmatprep.subr.bf16.mxu0 0
  %573 = vmatpush1.bf16.msra.mxu0 0
  %574 = vmatprep.subr.bf16.mxu0 0
  %575 = vmatpush1.bf16.msra.mxu0 %v558
  %576 = vmatprep.subr.bf16.mxu0 0
  %577 = vmatpush2.bf16.msra.mxu0 0
  %578 = vmatprep.subr.bf16.mxu0 0
  %579 = vmatpush2.bf16.msra.mxu0 0
  %580 = vmatprep.subr.bf16.mxu0 0
  %581 = vmatpush2.bf16.msra.mxu0 0
  %582 = vmatprep.subr.bf16.mxu0 0
  %583 = vmatpush2.bf16.msra.mxu0 0
  %584 = vmatprep.subr.bf16.mxu0 0
  %585 = vmatpush2.bf16.msra.mxu0 0
  %586 = vmatprep.subr.bf16.mxu0 0
  %587 = vmatpush2.bf16.msra.mxu0 0
  %588 = vmatprep.subr.bf16.mxu0 0
  %589 = vmatpush2.bf16.msra.mxu0 0
  %590 = vmatprep.subr.bf16.mxu0 0
  %591 = vmatpush2.bf16.msra.mxu0 0
  %592 = vmatprep.mubr.bf16.mxu0 0
  %593 = vmatmul.mubr.bf16.gmra.mxu0 %v554
  %v594 = vpop.f32.mrf.mxu0
  %v595 = vadd.f32 0.0, %v594
  %v596 = vpop.f32.mrf.mxu0
  %v597 = vpop.f32.mrf.mxu0
  %v598 = vpop.f32.mrf.mxu0
  %599 = vdwg.mxu0
  %v601 = vsel %vm552, %v545, 0
  %v604 = vsel %vm556, %v59, 0
  %606 = vmatprep.subr.bf16.mxu0 0
  %607 = vmatpush1.bf16.msra.mxu0 0
  %608 = vmatprep.subr.bf16.mxu0 0
  %609 = vmatpush1.bf16.msra.mxu0 0
  %610 = vmatprep.subr.bf16.mxu0 0
  %611 = vmatpush1.bf16.msra.mxu0 0
  %612 = vmatprep.subr.bf16.mxu0 0
  %613 = vmatpush1.bf16.msra.mxu0 0
  %614 = vmatprep.subr.bf16.mxu0 0
  %615 = vmatpush1.bf16.msra.mxu0 0
  %616 = vmatprep.subr.bf16.mxu0 0
  %617 = vmatpush1.bf16.msra.mxu0 0
  %618 = vmatprep.subr.bf16.mxu0 0
  %619 = vmatpush1.bf16.msra.mxu0 0
  %620 = vmatprep.subr.bf16.mxu0 0
  %621 = vmatpush1.bf16.msra.mxu0 %v604
  %622 = vmatprep.subr.bf16.mxu0 0
  %623 = vmatpush2.bf16.msra.mxu0 0
  %624 = vmatprep.subr.bf16.mxu0 0
  %625 = vmatpush2.bf16.msra.mxu0 0
  %626 = vmatprep.subr.bf16.mxu0 0
  %627 = vmatpush2.bf16.msra.mxu0 0
  %628 = vmatprep.subr.bf16.mxu0 0
  %629 = vmatpush2.bf16.msra.mxu0 0
  %630 = vmatprep.subr.bf16.mxu0 0
  %631 = vmatpush2.bf16.msra.mxu0 0
  %632 = vmatprep.subr.bf16.mxu0 0
  %633 = vmatpush2.bf16.msra.mxu0 0
  %634 = vmatprep.subr.bf16.mxu0 0
  %635 = vmatpush2.bf16.msra.mxu0 0
  %636 = vmatprep.subr.bf16.mxu0 0
  %637 = vmatpush2.bf16.msra.mxu0 0
  %638 = vmatprep.mubr.bf16.mxu0 0
  %639 = vmatmul.mubr.bf16.gmra.mxu0 %v601
  %v640 = vpop.f32.mrf.mxu0
  %v641 = vadd.f32 0.0, %v640
  %v642 = vpop.f32.mrf.mxu0
  %v643 = vpop.f32.mrf.mxu0
  %v644 = vpop.f32.mrf.mxu0
  %645 = vdwg.mxu0
  %v647 = vsel %vm552, %v546, 0
  %v650 = vsel %vm556, %v60, 0
  %652 = vmatprep.subr.bf16.mxu0 0
  %653 = vmatpush1.bf16.msra.mxu0 0
  %654 = vmatprep.subr.bf16.mxu0 0
  %655 = vmatpush1.bf16.msra.mxu0 0
  %656 = vmatprep.subr.bf16.mxu0 0
  %657 = vmatpush1.bf16.msra.mxu0 0
  %658 = vmatprep.subr.bf16.mxu0 0
  %659 = vmatpush1.bf16.msra.mxu0 0
  %660 = vmatprep.subr.bf16.mxu0 0
  %661 = vmatpush1.bf16.msra.mxu0 0
  %662 = vmatprep.subr.bf16.mxu0 0
  %663 = vmatpush1.bf16.msra.mxu0 0
  %664 = vmatprep.subr.bf16.mxu0 0
  %665 = vmatpush1.bf16.msra.mxu0 0
  %666 = vmatprep.subr.bf16.mxu0 0
  %667 = vmatpush1.bf16.msra.mxu0 %v650
  %668 = vmatprep.subr.bf16.mxu0 0
  %669 = vmatpush2.bf16.msra.mxu0 0
  %670 = vmatprep.subr.bf16.mxu0 0
  %671 = vmatpush2.bf16.msra.mxu0 0
  %672 = vmatprep.subr.bf16.mxu0 0
  %673 = vmatpush2.bf16.msra.mxu0 0
  %674 = vmatprep.subr.bf16.mxu0 0
  %675 = vmatpush2.bf16.msra.mxu0 0
  %676 = vmatprep.subr.bf16.mxu0 0
  %677 = vmatpush2.bf16.msra.mxu0 0
  %678 = vmatprep.subr.bf16.mxu0 0
  %679 = vmatpush2.bf16.msra.mxu0 0
  %680 = vmatprep.subr.bf16.mxu0 0
  %681 = vmatpush2.bf16.msra.mxu0 0
  %682 = vmatprep.subr.bf16.mxu0 0
  %683 = vmatpush2.bf16.msra.mxu0 0
  %684 = vmatprep.mubr.bf16.mxu0 0
  %685 = vmatmul.mubr.bf16.gmra.mxu0 %v647
  %v686 = vpop.f32.mrf.mxu0
  %v687 = vadd.f32 0.0, %v686
  %v688 = vpop.f32.mrf.mxu0
  %v689 = vpop.f32.mrf.mxu0
  %v690 = vpop.f32.mrf.mxu0
  %691 = vdwg.mxu0
  %v693 = vsel %vm552, %v547, 0
  %v696 = vsel %vm556, %v61, 0
  %698 = vmatprep.subr.bf16.mxu0 0
  %699 = vmatpush1.bf16.msra.mxu0 0
  %700 = vmatprep.subr.bf16.mxu0 0
  %701 = vmatpush1.bf16.msra.mxu0 0
  %702 = vmatprep.subr.bf16.mxu0 0
  %703 = vmatpush1.bf16.msra.mxu0 0
  %704 = vmatprep.subr.bf16.mxu0 0
  %705 = vmatpush1.bf16.msra.mxu0 0
  %706 = vmatprep.subr.bf16.mxu0 0
  %707 = vmatpush1.bf16.msra.mxu0 0
  %708 = vmatprep.subr.bf16.mxu0 0
  %709 = vmatpush1.bf16.msra.mxu0 0
  %710 = vmatprep.subr.bf16.mxu0 0
  %711 = vmatpush1.bf16.msra.mxu0 0
  %712 = vmatprep.subr.bf16.mxu0 0
  %713 = vmatpush1.bf16.msra.mxu0 %v696
  %714 = vmatprep.subr.bf16.mxu0 0
  %715 = vmatpush2.bf16.msra.mxu0 0
  %716 = vmatprep.subr.bf16.mxu0 0
  %717 = vmatpush2.bf16.msra.mxu0 0
  %718 = vmatprep.subr.bf16.mxu0 0
  %719 = vmatpush2.bf16.msra.mxu0 0
  %720 = vmatprep.subr.bf16.mxu0 0
  %721 = vmatpush2.bf16.msra.mxu0 0
  %722 = vmatprep.subr.bf16.mxu0 0
  %723 = vmatpush2.bf16.msra.mxu0 0
  %724 = vmatprep.subr.bf16.mxu0 0
  %725 = vmatpush2.bf16.msra.mxu0 0
  %726 = vmatprep.subr.bf16.mxu0 0
  %727 = vmatpush2.bf16.msra.mxu0 0
  %728 = vmatprep.subr.bf16.mxu0 0
  %729 = vmatpush2.bf16.msra.mxu0 0
  %730 = vmatprep.mubr.bf16.mxu0 0
  %731 = vmatmul.mubr.bf16.gmra.mxu0 %v693
  %v732 = vpop.f32.mrf.mxu0
  %v733 = vadd.f32 0.0, %v732
  %v734 = vpop.f32.mrf.mxu0
  %v735 = vpop.f32.mrf.mxu0
  %v736 = vpop.f32.mrf.mxu0
  %737 = vdwg.mxu0
  %v739 = vsel %vm552, %v548, 0
  %v742 = vsel %vm556, %v62, 0
  %744 = vmatprep.subr.bf16.mxu0 0
  %745 = vmatpush1.bf16.msra.mxu0 0
  %746 = vmatprep.subr.bf16.mxu0 0
  %747 = vmatpush1.bf16.msra.mxu0 0
  %748 = vmatprep.subr.bf16.mxu0 0
  %749 = vmatpush1.bf16.msra.mxu0 0
  %750 = vmatprep.subr.bf16.mxu0 0
  %751 = vmatpush1.bf16.msra.mxu0 0
  %752 = vmatprep.subr.bf16.mxu0 0
  %753 = vmatpush1.bf16.msra.mxu0 0
  %754 = vmatprep.subr.bf16.mxu0 0
  %755 = vmatpush1.bf16.msra.mxu0 0
  %756 = vmatprep.subr.bf16.mxu0 0
  %757 = vmatpush1.bf16.msra.mxu0 0
  %758 = vmatprep.subr.bf16.mxu0 0
  %759 = vmatpush1.bf16.msra.mxu0 %v742
  %760 = vmatprep.subr.bf16.mxu0 0
  %761 = vmatpush2.bf16.msra.mxu0 0
  %762 = vmatprep.subr.bf16.mxu0 0
  %763 = vmatpush2.bf16.msra.mxu0 0
  %764 = vmatprep.subr.bf16.mxu0 0
  %765 = vmatpush2.bf16.msra.mxu0 0
  %766 = vmatprep.subr.bf16.mxu0 0
  %767 = vmatpush2.bf16.msra.mxu0 0
  %768 = vmatprep.subr.bf16.mxu0 0
  %769 = vmatpush2.bf16.msra.mxu0 0
  %770 = vmatprep.subr.bf16.mxu0 0
  %771 = vmatpush2.bf16.msra.mxu0 0
  %772 = vmatprep.subr.bf16.mxu0 0
  %773 = vmatpush2.bf16.msra.mxu0 0
  %774 = vmatprep.subr.bf16.mxu0 0
  %775 = vmatpush2.bf16.msra.mxu0 0
  %776 = vmatprep.mubr.bf16.mxu0 0
  %777 = vmatmul.mubr.bf16.gmra.mxu0 %v739
  %v778 = vpop.f32.mrf.mxu0
  %v779 = vadd.f32 0.0, %v778
  %v780 = vpop.f32.mrf.mxu0
  %v781 = vpop.f32.mrf.mxu0
  %v782 = vpop.f32.mrf.mxu0
  %783 = vdwg.mxu0
  %v785 = vsel %vm552, %v549, 0
  %v788 = vsel %vm556, %v63, 0
  %790 = vmatprep.subr.bf16.mxu0 0
  %791 = vmatpush1.bf16.msra.mxu0 0
  %792 = vmatprep.subr.bf16.mxu0 0
  %793 = vmatpush1.bf16.msra.mxu0 0
  %794 = vmatprep.subr.bf16.mxu0 0
  %795 = vmatpush1.bf16.msra.mxu0 0
  %796 = vmatprep.subr.bf16.mxu0 0
  %797 = vmatpush1.bf16.msra.mxu0 0
  %798 = vmatprep.subr.bf16.mxu0 0
  %799 = vmatpush1.bf16.msra.mxu0 0
  %800 = vmatprep.subr.bf16.mxu0 0
  %801 = vmatpush1.bf16.msra.mxu0 0
  %802 = vmatprep.subr.bf16.mxu0 0
  %803 = vmatpush1.bf16.msra.mxu0 0
  %804 = vmatprep.subr.bf16.mxu0 0
  %805 = vmatpush1.bf16.msra.mxu0 %v788
  %806 = vmatprep.subr.bf16.mxu0 0
  %807 = vmatpush2.bf16.msra.mxu0 0
  %808 = vmatprep.subr.bf16.mxu0 0
  %809 = vmatpush2.bf16.msra.mxu0 0
  %810 = vmatprep.subr.bf16.mxu0 0
  %811 = vmatpush2.bf16.msra.mxu0 0
  %812 = vmatprep.subr.bf16.mxu0 0
  %813 = vmatpush2.bf16.msra.mxu0 0
  %814 = vmatprep.subr.bf16.mxu0 0
  %815 = vmatpush2.bf16.msra.mxu0 0
  %816 = vmatprep.subr.bf16.mxu0 0
  %817 = vmatpush2.bf16.msra.mxu0 0
  %818 = vmatprep.subr.bf16.mxu0 0
  %819 = vmatpush2.bf16.msra.mxu0 0
  %820 = vmatprep.subr.bf16.mxu0 0
  %821 = vmatpush2.bf16.msra.mxu0 0
  %822 = vmatprep.mubr.bf16.mxu0 0
  %823 = vmatmul.mubr.bf16.gmra.mxu0 %v785
  %v824 = vpop.f32.mrf.mxu0
  %v825 = vadd.f32 0.0, %v824
  %v826 = vpop.f32.mrf.mxu0
  %v827 = vpop.f32.mrf.mxu0
  %v828 = vpop.f32.mrf.mxu0
  %829 = vdwg.mxu0
  %v831 = vsel %vm552, %v550, 0
  %v834 = vsel %vm556, %v64, 0
  %836 = vmatprep.subr.bf16.mxu0 0
  %837 = vmatpush1.bf16.msra.mxu0 0
  %838 = vmatprep.subr.bf16.mxu0 0
  %839 = vmatpush1.bf16.msra.mxu0 0
  %840 = vmatprep.subr.bf16.mxu0 0
  %841 = vmatpush1.bf16.msra.mxu0 0
  %842 = vmatprep.subr.bf16.mxu0 0
  %843 = vmatpush1.bf16.msra.mxu0 0
  %844 = vmatprep.subr.bf16.mxu0 0
  %845 = vmatpush1.bf16.msra.mxu0 0
  %846 = vmatprep.subr.bf16.mxu0 0
  %847 = vmatpush1.bf16.msra.mxu0 0
  %848 = vmatprep.subr.bf16.mxu0 0
  %849 = vmatpush1.bf16.msra.mxu0 0
  %850 = vmatprep.subr.bf16.mxu0 0
  %851 = vmatpush1.bf16.msra.mxu0 %v834
  %852 = vmatprep.subr.bf16.mxu0 0
  %853 = vmatpush2.bf16.msra.mxu0 0
  %854 = vmatprep.subr.bf16.mxu0 0
  %855 = vmatpush2.bf16.msra.mxu0 0
  %856 = vmatprep.subr.bf16.mxu0 0
  %857 = vmatpush2.bf16.msra.mxu0 0
  %858 = vmatprep.subr.bf16.mxu0 0
  %859 = vmatpush2.bf16.msra.mxu0 0
  %860 = vmatprep.subr.bf16.mxu0 0
  %861 = vmatpush2.bf16.msra.mxu0 0
  %862 = vmatprep.subr.bf16.mxu0 0
  %863 = vmatpush2.bf16.msra.mxu0 0
  %864 = vmatprep.subr.bf16.mxu0 0
  %865 = vmatpush2.bf16.msra.mxu0 0
  %866 = vmatprep.subr.bf16.mxu0 0
  %867 = vmatpush2.bf16.msra.mxu0 0
  %868 = vmatprep.mubr.bf16.mxu0 0
  %869 = vmatmul.mubr.bf16.gmra.mxu0 %v831
  %v870 = vpop.f32.mrf.mxu0
  %v871 = vadd.f32 0.0, %v870
  %v872 = vpop.f32.mrf.mxu0
  %v873 = vpop.f32.mrf.mxu0
  %v874 = vpop.f32.mrf.mxu0
  %875 = vdwg.mxu0
  %v877 = vsel %vm552, %v551, 0
  %v880 = vsel %vm556, %v65, 0
  %882 = vmatprep.subr.bf16.mxu0 0
  %883 = vmatpush1.bf16.msra.mxu0 0
  %884 = vmatprep.subr.bf16.mxu0 0
  %885 = vmatpush1.bf16.msra.mxu0 0
  %886 = vmatprep.subr.bf16.mxu0 0
  %887 = vmatpush1.bf16.msra.mxu0 0
  %888 = vmatprep.subr.bf16.mxu0 0
  %889 = vmatpush1.bf16.msra.mxu0 0
  %890 = vmatprep.subr.bf16.mxu0 0
  %891 = vmatpush1.bf16.msra.mxu0 0
  %892 = vmatprep.subr.bf16.mxu0 0
  %893 = vmatpush1.bf16.msra.mxu0 0
  %894 = vmatprep.subr.bf16.mxu0 0
  %895 = vmatpush1.bf16.msra.mxu0 0
  %896 = vmatprep.subr.bf16.mxu0 0
  %897 = vmatpush1.bf16.msra.mxu0 %v880
  %898 = vmatprep.subr.bf16.mxu0 0
  %899 = vmatpush2.bf16.msra.mxu0 0
  %900 = vmatprep.subr.bf16.mxu0 0
  %901 = vmatpush2.bf16.msra.mxu0 0
  %902 = vmatprep.subr.bf16.mxu0 0
  %903 = vmatpush2.bf16.msra.mxu0 0
  %904 = vmatprep.subr.bf16.mxu0 0
  %905 = vmatpush2.bf16.msra.mxu0 0
  %906 = vmatprep.subr.bf16.mxu0 0
  %907 = vmatpush2.bf16.msra.mxu0 0
  %908 = vmatprep.subr.bf16.mxu0 0
  %909 = vmatpush2.bf16.msra.mxu0 0
  %910 = vmatprep.subr.bf16.mxu0 0
  %911 = vmatpush2.bf16.msra.mxu0 0
  %912 = vmatprep.subr.bf16.mxu0 0
  %913 = vmatpush2.bf16.msra.mxu0 0
  %914 = vmatprep.mubr.bf16.mxu0 0
  %915 = vmatmul.mubr.bf16.gmra.mxu0 %v877
  %v916 = vpop.f32.mrf.mxu0
  %v917 = vadd.f32 0.0, %v916
  %v918 = vpop.f32.mrf.mxu0
  %v919 = vpop.f32.mrf.mxu0
  %v920 = vpop.f32.mrf.mxu0
  %921 = vdwg.mxu0
  %vm922 = vcmask 125952
  %923 = vst.msk [vmem:[%s4] sm:$0xf] %vm922, %v595
  %924 = vst.msk [vmem:[%s4 + $0x4] sm:$0xf] %vm922, %v641
  %925 = vst.msk [vmem:[%s4 + $0x8] sm:$0xf] %vm922, %v687
  %926 = vst.msk [vmem:[%s4 + $0xc] sm:$0xf] %vm922, %v733
  %927 = vst.msk [vmem:[%s4 + $0x10] sm:$0xf] %vm922, %v779
  %928 = vst.msk [vmem:[%s4 + $0x14] sm:$0xf] %vm922, %v825
  %929 = vst.msk [vmem:[%s4 + $0x18] sm:$0xf] %vm922, %v871
  %930 = vst.msk [vmem:[%s4 + $0x1c] sm:$0xf] %vm922, %v917
  // Predicated region
  $region18: #{forward.24} parent=0 // pred_check
    _
  $region19: #{forward.24} parent=0 // pred_check_branch
    %932 = sbr.rel (0) target = $region21
  $region20: #{forward.24} parent=0 // pred_region
    _
  $region21: #{forward.24} parent=0 // pred_fallthru
    _
  // Predicated region
  $region22: #{forward.24} parent=0 // pred_check
    _
  $region23: #{forward.24} parent=0 // pred_check_branch
    %934 = sbr.rel (0) target = $region25
  $region24: #{forward.24} parent=0 // pred_region
    _
  $region25: #{forward.24} parent=0 // pred_fallthru
    _

// kernel: forward.26
$region0: #{forward.26}
  #allocation0 [shape = 'u32[]', space=smem, size = 0x4, offset = 0x4, fixed_abs, tag = 'smem constant byte address 0x4 - core index']
  #allocation1 [shape = 'u32[144,128]{1,0:T(1,128)}', space=vmem, size = 0x12000, scoped, tag = 'internal scratch']
  %s0 = inlined_call_operand.vmem [shape: f32[8,64], index: 0, kind: input, shape index: {}]
  %s1 = inlined_call_operand.hbm [shape: f32[1,64], index: 1, kind: input, shape index: {}]
  %s2 = inlined_call_operand.hbm [shape: f32[1,64], index: 2, kind: input, shape index: {}]
  %s3 = inlined_call_operand.vmem [shape: bf16[64,192], index: 3, kind: input, shape index: {}]
  %s4 = inlined_call_operand.vmem [shape: f32[1,192], index: 4, kind: input, shape index: {}]
  %s5 = inlined_call_operand.vmem [shape: f32[8,192], index: 5, kind: output, shape index: {}]
  %s6 = sld [smem:[#allocation0]]
  $region38: #{forward.26} parent=0
    _
  %s8 = ssub.s32 1, %s6
  %s9 = scalar_select 0, %s8, %s6
  $region1: #{forward.26} parent=0
    #allocation2 [shape = 'u8[512]{0}', space=vmem, size = 0x400, scoped, tag = 'input window, operand 1, single buffered']
    #allocation3 [shape = 's32[1]{0}', space=sflag, size = 0x4, scoped, tag = 'scoped memory for forward.26']
    #allocation4 [shape = 'u8[512]{0}', space=vmem, size = 0x400, scoped, tag = 'input window, operand 2, single buffered']
    #allocation5 [shape = 's32[1]{0}', space=sflag, size = 0x4, scoped, tag = 'scoped memory for forward.26']
    %10 = vsyncpa [#allocation3], 0
    %11 = vsyncpa [#allocation5], 0
    // Predicated region
    $region2: #{forward.26} parent=1 // pred_check
      _
    $region3: #{forward.26} parent=1 // pred_check_branch
      %13 = sbr.rel (0) target = $region5
    $region4: #{forward.26} parent=1 // pred_region
      _
    $region5: #{forward.26} parent=1 // pred_fallthru
      _
    // Predicated region
    $region6: #{forward.26} parent=1 // pred_check
      _
    $region7: #{forward.26} parent=1 // pred_check_branch
      %15 = sbr.rel (0) target = $region9
    $region8: #{forward.26} parent=1 // pred_region
      %s17 = ssub.s32 16, 16
      %18 = vsyncadd [#allocation3], %s17
      %s20 = sshll.u32 [#allocation2], 4
      %s21 = int_to_ptr.vmem [resolvable:$true] %s20
      %23 = dma.hbm_to_vmem [thread:$0]  %s1, 16, %s21, [#allocation3]
    $region9: #{forward.26} parent=1 // pred_fallthru
      _
    // Predicated region
    $region10: #{forward.26} parent=1 // pred_check
      _
    $region11: #{forward.26} parent=1 // pred_check_branch
      %25 = sbr.rel (0) target = $region13
    $region12: #{forward.26} parent=1 // pred_region
      %s27 = ssub.s32 16, 16
      %28 = vsyncadd [#allocation5], %s27
      %s30 = sshll.u32 [#allocation4], 4
      %s31 = int_to_ptr.vmem [resolvable:$true] %s30
      %33 = dma.hbm_to_vmem [thread:$0]  %s2, 16, %s31, [#allocation5]
    $region13: #{forward.26} parent=1 // pred_fallthru
      _
    // Predicated region
    $region14: #{forward.26} parent=1 // pred_check
      _
    $region15: #{forward.26} parent=1 // pred_check_branch
      %35 = sbr.rel (0) target = $region17
    $region16: #{forward.26} parent=1 // pred_region
      _
    $region17: #{forward.26} parent=1 // pred_fallthru
      _
    // Predicated region
    $region18: #{forward.26} parent=1 // pred_check
      _
    $region19: #{forward.26} parent=1 // pred_check_branch
      %37 = sbr.rel (0) target = $region21
    $region20: #{forward.26} parent=1 // pred_region
      _
    $region21: #{forward.26} parent=1 // pred_fallthru
      _
    // Predicated region
    $region22: #{forward.26} parent=1 // pred_check
      _
    $region23: #{forward.26} parent=1 // pred_check_branch
      %39 = sbr.rel (0) target = $region25
    $region24: #{forward.26} parent=1 // pred_region
      %40 = dma.done [#allocation3], 16
    $region25: #{forward.26} parent=1 // pred_fallthru
      _
    // Predicated region
    $region26: #{forward.26} parent=1 // pred_check
      _
    $region27: #{forward.26} parent=1 // pred_check_branch
      %42 = sbr.rel (0) target = $region29
    $region28: #{forward.26} parent=1 // pred_region
      %43 = dma.done [#allocation5], 16
    $region29: #{forward.26} parent=1 // pred_fallthru
      _
    %v45 = vld [vmem:[%s0] sm:$0xff]
    %v46 = vld [vmem:[#allocation2] sm:$0x1]
    %v47 = vld [vmem:[#allocation4] sm:$0x1]
    %vm48 = vcmask 523264
    %v49 = vsel %vm48, %v45, 0.0
    %50 = vadd.xlane.f32.xlu0 %v49
    %v51 = vpop.xlane.xlu0 %50
    %v52 = vrcp.pop 64.0
    %v53 = vmul.f32 %v51, %v52
    %v54 = vsub.f32 %v45, %v53
    %v55 = vmul.f32 %v54, %v54
    %v56 = vsel %vm48, %v55, 0.0
    %57 = vadd.xlane.f32.xlu0 %v56
    %v58 = vpop.xlane.xlu0 %57
    %v59 = vmul.f32 %v58, %v52
    %v60 = vadd.f32 %v59, 1e-05
    %v61 = vrsqrt.pop %v60
    %v62 = vmul.f32 %v54, %v61
    %v64 = vlaneseq
    %v65 = vshrl.u32 %v64, 7
    %v66 = vsub.s32 0, %v65
    %v67 = vrot.slane %v46, %v66
    %v69 = vmul.f32 %v62, %v67
    %v71 = vlaneseq
    %v72 = vshrl.u32 %v71, 7
    %v73 = vsub.s32 0, %v72
    %v74 = vrot.slane %v47, %v73
    %v76 = vadd.f32 %v69, %v74
    %v77 = vld [vmem:[%s3] sm:$0xff]
    %v78 = vld [vmem:[%s3 + $0x8] sm:$0xff]
    %v79 = vld [vmem:[%s3 + $0x10] sm:$0xff]
    %v80 = vld [vmem:[%s3 + $0x18] sm:$0xff]
    %v81 = vld [vmem:[%s3 + $0x20] sm:$0xff]
    %v82 = vld [vmem:[%s3 + $0x28] sm:$0xff]
    %v83 = vld [vmem:[%s3 + $0x30] sm:$0xff]
    %v84 = vld [vmem:[%s3 + $0x38] sm:$0xff]
    %v85 = vpack.c.bf16 %v76, %v76
    %v86 = vld [vmem:[%s4] sm:$0x3]
    %v88 = vlaneseq
    %v89 = vshrl.u32 %v88, 7
    %v90 = vsub.s32 0, %v89
    %v91 = vrot.slane %v86, %v90
    %v92 = vlaneseq
    %v93 = vshrl.u32 %v92, 7
    %v94 = vsub.s32 1, %v93
    %v95 = vrot.slane %v86, %v94
    %v106 = vunpack.c.l.b16 %v77
    %v107 = vunpack.c.h.b16 %v77
    %v108 = vunpack.c.l.b16 %v78
    %v109 = vunpack.c.h.b16 %v78
    %v110 = vunpack.c.l.b16 %v79
    %v111 = vunpack.c.h.b16 %v79
    %v112 = vunpack.c.l.b16 %v80
    %v113 = vunpack.c.h.b16 %v80
    %v114 = vunpack.c.l.b16 %v81
    %v115 = vunpack.c.h.b16 %v81
    %v116 = vunpack.c.l.b16 %v82
    %v117 = vunpack.c.h.b16 %v82
    %v118 = vunpack.c.l.b16 %v83
    %v119 = vunpack.c.h.b16 %v83
    %v120 = vunpack.c.l.b16 %v84
    %v121 = vunpack.c.h.b16 %v84
    %v122 = vpack.c.b16 %v108, %v106
    %v123 = vpack.c.b16 %v109, %v107
    %v124 = vpack.c.b16 %v112, %v110
    %v125 = vpack.c.b16 %v113, %v111
    %v126 = vpack.c.b16 %v116, %v114
    %v127 = vpack.c.b16 %v117, %v115
    %v128 = vpack.c.b16 %v120, %v118
    %v129 = vpack.c.b16 %v121, %v119
    %v139 = vsel %vm48, %v85, 0
    %141 = vmatprep.subr.bf16.mxu0 0
    %142 = vmatpush1.bf16.msra.mxu0 0
    %143 = vmatprep.subr.bf16.mxu0 0
    %144 = vmatpush1.bf16.msra.mxu0 0
    %145 = vmatprep.subr.bf16.mxu0 0
    %146 = vmatpush1.bf16.msra.mxu0 0
    %147 = vmatprep.subr.bf16.mxu0 0
    %148 = vmatpush1.bf16.msra.mxu0 0
    %149 = vmatprep.subr.bf16.mxu0 %v129
    %150 = vmatpush1.bf16.msra.mxu0 %v128
    %151 = vmatprep.subr.bf16.mxu0 %v127
    %152 = vmatpush1.bf16.msra.mxu0 %v126
    %153 = vmatprep.subr.bf16.mxu0 %v125
    %154 = vmatpush1.bf16.msra.mxu0 %v124
    %155 = vmatprep.subr.bf16.mxu0 %v123
    %156 = vmatpush1.bf16.msra.mxu0 %v122
    %157 = vmatprep.subr.bf16.mxu0 0
    %158 = vmatpush2.bf16.msra.mxu0 0
    %159 = vmatprep.subr.bf16.mxu0 0
    %160 = vmatpush2.bf16.msra.mxu0 0
    %161 = vmatprep.subr.bf16.mxu0 0
    %162 = vmatpush2.bf16.msra.mxu0 0
    %163 = vmatprep.subr.bf16.mxu0 0
    %164 = vmatpush2.bf16.msra.mxu0 0
    %165 = vmatprep.subr.bf16.mxu0 0
    %166 = vmatpush2.bf16.msra.mxu0 0
    %167 = vmatprep.subr.bf16.mxu0 0
    %168 = vmatpush2.bf16.msra.mxu0 0
    %169 = vmatprep.subr.bf16.mxu0 0
    %170 = vmatpush2.bf16.msra.mxu0 0
    %171 = vmatprep.subr.bf16.mxu0 0
    %172 = vmatpush2.bf16.msra.mxu0 0
    %173 = vmatprep.mubr.bf16.mxu0 0
    %174 = vmatmul.mubr.bf16.gmra.mxu0 %v139
    %v175 = vpop.f32.mrf.mxu0
    %v176 = vadd.f32 %v91, %v175
    %v177 = vpop.f32.mrf.mxu0
    %v178 = vadd.f32 %v95, %v177
    %v179 = vpop.f32.mrf.mxu0
    %v180 = vpop.f32.mrf.mxu0
    %181 = vdwg.mxu0
    %182 = vst [vmem:[%s5] sm:$0xff] %v176
    %183 = vst.msk [vmem:[%s5 + $0x8] sm:$0xff] %vm48, %v178
    // Predicated region
    $region30: #{forward.26} parent=1 // pred_check
      _
    $region31: #{forward.26} parent=1 // pred_check_branch
      %185 = sbr.rel (0) target = $region33
    $region32: #{forward.26} parent=1 // pred_region
      _
    $region33: #{forward.26} parent=1 // pred_fallthru
      _
    // Predicated region
    $region34: #{forward.26} parent=1 // pred_check
      _
    $region35: #{forward.26} parent=1 // pred_check_branch
      %187 = sbr.rel (0) target = $region37
    $region36: #{forward.26} parent=1 // pred_region
      _
    $region37: #{forward.26} parent=1 // pred_fallthru
      _
    %188 = vsyncpa [#allocation3], 1
    %189 = vsyncpa [#allocation5], 1

// kernel: forward.25
$region0: #{forward.25}
  #allocation0 [shape = 'u32[]', space=smem, size = 0x4, offset = 0x4, fixed_abs, tag = 'smem constant byte address 0x4 - core index']
  #allocation1 [shape = 'u32[144,128]{1,0:T(1,128)}', space=vmem, size = 0x12000, scoped, tag = 'internal scratch']
  %s0 = inlined_call_operand.vmem [shape: f32[8,64], index: 0, kind: input, shape index: {}]
  %s1 = inlined_call_operand.vmem [shape: f32[8,64], index: 1, kind: input, shape index: {}]
  %s2 = inlined_call_operand.vmem [shape: bf16[64,64], index: 2, kind: input, shape index: {}]
  %s3 = inlined_call_operand.vmem [shape: f32[1,64], index: 3, kind: input, shape index: {}]
  %s4 = inlined_call_operand.vmem [shape: f32[1,64], index: 4, kind: input, shape index: {}]
  %s5 = inlined_call_operand.vmem [shape: f32[1,64], index: 5, kind: input, shape index: {}]
  %s6 = inlined_call_operand.vmem [shape: bf16[64,256], index: 6, kind: input, shape index: {}]
  %s7 = inlined_call_operand.vmem [shape: f32[1,256], index: 7, kind: input, shape index: {}]
  %s8 = inlined_call_operand.vmem [shape: bf16[256,64], index: 8, kind: input, shape index: {}]
  %s9 = inlined_call_operand.vmem [shape: f32[1,64], index: 9, kind: input, shape index: {}]
  %s10 = inlined_call_operand.vmem [shape: f32[8,64], index: 10, kind: output, shape index: {}]
  %s11 = sld [smem:[#allocation0]]
  $region50: #{forward.25} parent=0
    _
  %s13 = ssub.s32 1, %s11
  %s14 = scalar_select 0, %s13, %s11
  // Predicated region
  $region2: #{forward.25} parent=0 // pred_check
    _
  $region3: #{forward.25} parent=0 // pred_check_branch
    %16 = sbr.rel (0) target = $region5
  $region4: #{forward.25} parent=0 // pred_region
    _
  $region5: #{forward.25} parent=0 // pred_fallthru
    _
  // Predicated region
  $region6: #{forward.25} parent=0 // pred_check
    _
  $region7: #{forward.25} parent=0 // pred_check_branch
    %18 = sbr.rel (0) target = $region9
  $region8: #{forward.25} parent=0 // pred_region
    _
  $region9: #{forward.25} parent=0 // pred_fallthru
    _
  // Predicated region
  $region10: #{forward.25} parent=0 // pred_check
    _
  $region11: #{forward.25} parent=0 // pred_check_branch
    %20 = sbr.rel (0) target = $region13
  $region12: #{forward.25} parent=0 // pred_region
    _
  $region13: #{forward.25} parent=0 // pred_fallthru
    _
  // Predicated region
  $region14: #{forward.25} parent=0 // pred_check
    _
  $region15: #{forward.25} parent=0 // pred_check_branch
    %22 = sbr.rel (0) target = $region17
  $region16: #{forward.25} parent=0 // pred_region
    _
  $region17: #{forward.25} parent=0 // pred_fallthru
    _
  // Predicated region
  $region18: #{forward.25} parent=0 // pred_check
    _
  $region19: #{forward.25} parent=0 // pred_check_branch
    %24 = sbr.rel (0) target = $region21
  $region20: #{forward.25} parent=0 // pred_region
    _
  $region21: #{forward.25} parent=0 // pred_fallthru
    _
  // Predicated region
  $region22: #{forward.25} parent=0 // pred_check
    _
  $region23: #{forward.25} parent=0 // pred_check_branch
    %26 = sbr.rel (0) target = $region25
  $region24: #{forward.25} parent=0 // pred_region
    _
  $region25: #{forward.25} parent=0 // pred_fallthru
    _
  // Predicated region
  $region26: #{forward.25} parent=0 // pred_check
    _
  $region27: #{forward.25} parent=0 // pred_check_branch
    %28 = sbr.rel (0) target = $region29
  $region28: #{forward.25} parent=0 // pred_region
    _
  $region29: #{forward.25} parent=0 // pred_fallthru
    _
  // Predicated region
  $region30: #{forward.25} parent=0 // pred_check
    _
  $region31: #{forward.25} parent=0 // pred_check_branch
    %30 = sbr.rel (0) target = $region33
  $region32: #{forward.25} parent=0 // pred_region
    _
  $region33: #{forward.25} parent=0 // pred_fallthru
    _
  // Predicated region
  $region34: #{forward.25} parent=0 // pred_check
    _
  $region35: #{forward.25} parent=0 // pred_check_branch
    %32 = sbr.rel (0) target = $region37
  $region36: #{forward.25} parent=0 // pred_region
    _
  $region37: #{forward.25} parent=0 // pred_fallthru
    _
  // Predicated region
  $region38: #{forward.25} parent=0 // pred_check
    _
  $region39: #{forward.25} parent=0 // pred_check_branch
    %34 = sbr.rel (0) target = $region41
  $region40: #{forward.25} parent=0 // pred_region
    _
  $region41: #{forward.25} parent=0 // pred_fallthru
    _
  %v36 = vld [vmem:[%s0] sm:$0xff]
  %v37 = vld [vmem:[%s1] sm:$0xff]
  %v38 = vld [vmem:[%s2] sm:$0xf]
  %v39 = vld [vmem:[%s2 + $0x4] sm:$0xf]
  %v40 = vld [vmem:[%s2 + $0x8] sm:$0xf]
  %v41 = vld [vmem:[%s2 + $0xc] sm:$0xf]
  %v42 = vld [vmem:[%s2 + $0x10] sm:$0xf]
  %v43 = vld [vmem:[%s2 + $0x14] sm:$0xf]
  %v44 = vld [vmem:[%s2 + $0x18] sm:$0xf]
  %v45 = vld [vmem:[%s2 + $0x1c] sm:$0xf]
  %v46 = vpack.c.bf16 %v37, %v37
  %v55 = vunpack.c.l.b16 %v38
  %v56 = vunpack.c.l.b16 %v39
  %v57 = vunpack.c.l.b16 %v40
  %v58 = vunpack.c.l.b16 %v41
  %v59 = vunpack.c.l.b16 %v42
  %v60 = vunpack.c.l.b16 %v43
  %v61 = vunpack.c.l.b16 %v44
  %v62 = vunpack.c.l.b16 %v45
  %v63 = vpack.c.b16 %v56, %v55
  %v64 = vpack.c.b16 %v58, %v57
  %v65 = vpack.c.b16 %v60, %v59
  %v66 = vpack.c.b16 %v62, %v61
  %vm71 = vcmask 523264
  %v73 = vsel %vm71, %v46, 0
  %75 = vmatprep.subr.bf16.mxu0 0
  %76 = vmatpush1.bf16.msra.mxu0 0
  %77 = vmatprep.subr.bf16.mxu0 0
  %78 = vmatpush1.bf16.msra.mxu0 0
  %79 = vmatprep.subr.bf16.mxu0 0
  %80 = vmatpush1.bf16.msra.mxu0 0
  %81 = vmatprep.subr.bf16.mxu0 0
  %82 = vmatpush1.bf16.msra.mxu0 0
  %83 = vmatprep.subr.bf16.mxu0 0
  %84 = vmatpush1.bf16.msra.mxu0 %v66
  %85 = vmatprep.subr.bf16.mxu0 0
  %86 = vmatpush1.bf16.msra.mxu0 %v65
  %87 = vmatprep.subr.bf16.mxu0 0
  %88 = vmatpush1.bf16.msra.mxu0 %v64
  %89 = vmatprep.subr.bf16.mxu0 0
  %90 = vmatpush1.bf16.msra.mxu0 %v63
  %91 = vmatprep.subr.bf16.mxu0 0
  %92 = vmatpush2.bf16.msra.mxu0 0
  %93 = vmatprep.subr.bf16.mxu0 0
  %94 = vmatpush2.bf16.msra.mxu0 0
  %95 = vmatprep.subr.bf16.mxu0 0
  %96 = vmatpush2.bf16.msra.mxu0 0
  %97 = vmatprep.subr.bf16.mxu0 0
  %98 = vmatpush2.bf16.msra.mxu0 0
  %99 = vmatprep.subr.bf16.mxu0 0
  %100 = vmatpush2.bf16.msra.mxu0 0
  %101 = vmatprep.subr.bf16.mxu0 0
  %102 = vmatpush2.bf16.msra.mxu0 0
  %103 = vmatprep.subr.bf16.mxu0 0
  %104 = vmatpush2.bf16.msra.mxu0 0
  %105 = vmatprep.subr.bf16.mxu0 0
  %106 = vmatpush2.bf16.msra.mxu0 0
  %107 = vmatprep.mubr.bf16.mxu0 0
  %108 = vmatmul.mubr.bf16.gmra.mxu0 %v73
  %v109 = vpop.f32.mrf.mxu0
  %v110 = vadd.f32 0.0, %v109
  %v111 = vpop.f32.mrf.mxu0
  %v112 = vpop.f32.mrf.mxu0
  %v113 = vpop.f32.mrf.mxu0
  %114 = vdwg.mxu0
  %v115 = vadd.f32 %v36, %v110
  %v116 = vld [vmem:[%s3] sm:$0x1]
  %v118 = vlaneseq
  %v119 = vshrl.u32 %v118, 7
  %v120 = vsub.s32 0, %v119
  %v121 = vrot.slane %v116, %v120
  %v123 = vadd.f32 %v115, %v121
  %v124 = vld [vmem:[%s4] sm:$0x1]
  %v125 = vld [vmem:[%s5] sm:$0x1]
  %v126 = vsel %vm71, %v123, 0.0
  %127 = vadd.xlane.f32.xlu0 %v126
  %v128 = vpop.xlane.xlu0 %127
  %v129 = vrcp.pop 64.0
  %v130 = vmul.f32 %v128, %v129
  %v131 = vsub.f32 %v123, %v130
  %v132 = vmul.f32 %v131, %v131
  %v133 = vsel %vm71, %v132, 0.0
  %134 = vadd.xlane.f32.xlu0 %v133
  %v135 = vpop.xlane.xlu0 %134
  %v136 = vmul.f32 %v135, %v129
  %v137 = vadd.f32 %v136, 1e-05
  %v138 = vrsqrt.pop %v137
  %v139 = vmul.f32 %v131, %v138
  %v141 = vlaneseq
  %v142 = vshrl.u32 %v141, 7
  %v143 = vsub.s32 0, %v142
  %v144 = vrot.slane %v124, %v143
  %v146 = vmul.f32 %v139, %v144
  %v148 = vlaneseq
  %v149 = vshrl.u32 %v148, 7
  %v150 = vsub.s32 0, %v149
  %v151 = vrot.slane %v125, %v150
  %v153 = vadd.f32 %v146, %v151
  %v154 = vld [vmem:[%s6] sm:$0xff]
  %v155 = vld [vmem:[%s6 + $0x8] sm:$0xff]
  %v156 = vld [vmem:[%s6 + $0x10] sm:$0xff]
  %v157 = vld [vmem:[%s6 + $0x18] sm:$0xff]
  %v158 = vld [vmem:[%s6 + $0x20] sm:$0xff]
  %v159 = vld [vmem:[%s6 + $0x28] sm:$0xff]
  %v160 = vld [vmem:[%s6 + $0x30] sm:$0xff]
  %v161 = vld [vmem:[%s6 + $0x38] sm:$0xff]
  %v162 = vpack.c.bf16 %v153, %v153
  %v163 = vld [vmem:[%s7] sm:$0x3]
  %v165 = vlaneseq
  %v166 = vshrl.u32 %v165, 7
  %v167 = vsub.s32 0, %v166
  %v168 = vrot.slane %v163, %v167
  %v169 = vlaneseq
  %v170 = vshrl.u32 %v169, 7
  %v171 = vsub.s32 1, %v170
  %v172 = vrot.slane %v163, %v171
  %v183 = vunpack.c.l.b16 %v154
  %v184 = vunpack.c.h.b16 %v154
  %v185 = vunpack.c.l.b16 %v155
  %v186 = vunpack.c.h.b16 %v155
  %v187 = vunpack.c.l.b16 %v156
  %v188 = vunpack.c.h.b16 %v156
  %v189 = vunpack.c.l.b16 %v157
  %v190 = vunpack.c.h.b16 %v157
  %v191 = vunpack.c.l.b16 %v158
  %v192 = vunpack.c.h.b16 %v158
  %v193 = vunpack.c.l.b16 %v159
  %v194 = vunpack.c.h.b16 %v159
  %v195 = vunpack.c.l.b16 %v160
  %v196 = vunpack.c.h.b16 %v160
  %v197 = vunpack.c.l.b16 %v161
  %v198 = vunpack.c.h.b16 %v161
  %v199 = vpack.c.b16 %v185, %v183
  %v200 = vpack.c.b16 %v186, %v184
  %v201 = vpack.c.b16 %v189, %v187
  %v202 = vpack.c.b16 %v190, %v188
  %v203 = vpack.c.b16 %v193, %v191
  %v204 = vpack.c.b16 %v194, %v192
  %v205 = vpack.c.b16 %v197, %v195
  %v206 = vpack.c.b16 %v198, %v196
  %v216 = vsel %vm71, %v162, 0
  %218 = vmatprep.subr.bf16.mxu0 0
  %219 = vmatpush1.bf16.msra.mxu0 0
  %220 = vmatprep.subr.bf16.mxu0 0
  %221 = vmatpush1.bf16.msra.mxu0 0
  %222 = vmatprep.subr.bf16.mxu0 0
  %223 = vmatpush1.bf16.msra.mxu0 0
  %224 = vmatprep.subr.bf16.mxu0 0
  %225 = vmatpush1.bf16.msra.mxu0 0
  %226 = vmatprep.subr.bf16.mxu0 %v206
  %227 = vmatpush1.bf16.msra.mxu0 %v205
  %228 = vmatprep.subr.bf16.mxu0 %v204
  %229 = vmatpush1.bf16.msra.mxu0 %v203
  %230 = vmatprep.subr.bf16.mxu0 %v202
  %231 = vmatpush1.bf16.msra.mxu0 %v201
  %232 = vmatprep.subr.bf16.mxu0 %v200
  %233 = vmatpush1.bf16.msra.mxu0 %v199
  %234 = vmatprep.subr.bf16.mxu0 0
  %235 = vmatpush2.bf16.msra.mxu0 0
  %236 = vmatprep.subr.bf16.mxu0 0
  %237 = vmatpush2.bf16.msra.mxu0 0
  %238 = vmatprep.subr.bf16.mxu0 0
  %239 = vmatpush2.bf16.msra.mxu0 0
  %240 = vmatprep.subr.bf16.mxu0 0
  %241 = vmatpush2.bf16.msra.mxu0 0
  %242 = vmatprep.subr.bf16.mxu0 0
  %243 = vmatpush2.bf16.msra.mxu0 0
  %244 = vmatprep.subr.bf16.mxu0 0
  %245 = vmatpush2.bf16.msra.mxu0 0
  %246 = vmatprep.subr.bf16.mxu0 0
  %247 = vmatpush2.bf16.msra.mxu0 0
  %248 = vmatprep.subr.bf16.mxu0 0
  %249 = vmatpush2.bf16.msra.mxu0 0
  %250 = vmatprep.mubr.bf16.mxu0 0
  %251 = vmatmul.mubr.bf16.gmra.mxu0 %v216
  %v252 = vpop.f32.mrf.mxu0
  %v253 = vadd.f32 %v168, %v252
  %v254 = vpop.f32.mrf.mxu0
  %v255 = vadd.f32 %v172, %v254
  %v256 = vpop.f32.mrf.mxu0
  %v257 = vpop.f32.mrf.mxu0
  %258 = vdwg.mxu0
  %v259 = vmul.f32 %v253, %v253
  %v260 = vmul.f32 %v255, %v255
  %v261 = vmul.f32 %v253, %v259
  %v262 = vmul.f32 %v255, %v260
  %v263 = vmul.f32 %v261, 0.044715
  %v264 = vmul.f32 %v262, 0.044715
  %v265 = vadd.f32 %v253, %v263
  %v266 = vadd.f32 %v255, %v264
  %v267 = vmul.f32 %v265, 0.7978846
  %v268 = vmul.f32 %v266, 0.7978846
  %v269 = vtanh.pop %v267
  %v270 = vtanh.pop %v268
  %v271 = vadd.f32 %v269, 1.0
  %v272 = vadd.f32 %v270, 1.0
  %v273 = vmul.f32 %v271, 0.5
  %v274 = vmul.f32 %v272, 0.5
  %v275 = vmul.f32 %v253, %v273
  %v276 = vmul.f32 %v255, %v274
  %v277 = vld [vmem:[%s8] sm:$0xf]
  %v278 = vld [vmem:[%s8 + $0x4] sm:$0xf]
  %v279 = vld [vmem:[%s8 + $0x8] sm:$0xf]
  %v280 = vld [vmem:[%s8 + $0xc] sm:$0xf]
  %v281 = vld [vmem:[%s8 + $0x10] sm:$0xf]
  %v282 = vld [vmem:[%s8 + $0x14] sm:$0xf]
  %v283 = vld [vmem:[%s8 + $0x18] sm:$0xf]
  %v284 = vld [vmem:[%s8 + $0x1c] sm:$0xf]
  %v285 = vld [vmem:[%s8 + $0x20] sm:$0xf]
  %v286 = vld [vmem:[%s8 + $0x24] sm:$0xf]
  %v287 = vld [vmem:[%s8 + $0x28] sm:$0xf]
  %v288 = vld [vmem:[%s8 + $0x2c] sm:$0xf]
  %v289 = vld [vmem:[%s8 + $0x30] sm:$0xf]
  %v290 = vld [vmem:[%s8 + $0x34] sm:$0xf]
  %v291 = vld [vmem:[%s8 + $0x38] sm:$0xf]
  %v292 = vld [vmem:[%s8 + $0x3c] sm:$0xf]
  %v293 = vld [vmem:[%s8 + $0x40] sm:$0xf]
  %v294 = vld [vmem:[%s8 + $0x44] sm:$0xf]
  %v295 = vld [vmem:[%s8 + $0x48] sm:$0xf]
  %v296 = vld [vmem:[%s8 + $0x4c] sm:$0xf]
  %v297 = vld [vmem:[%s8 + $0x50] sm:$0xf]
  %v298 = vld [vmem:[%s8 + $0x54] sm:$0xf]
  %v299 = vld [vmem:[%s8 + $0x58] sm:$0xf]
  %v300 = vld [vmem:[%s8 + $0x5c] sm:$0xf]
  %v301 = vld [vmem:[%s8 + $0x60] sm:$0xf]
  %v302 = vld [vmem:[%s8 + $0x64] sm:$0xf]
  %v303 = vld [vmem:[%s8 + $0x68] sm:$0xf]
  %v304 = vld [vmem:[%s8 + $0x6c] sm:$0xf]
  %v305 = vld [vmem:[%s8 + $0x70] sm:$0xf]
  %v306 = vld [vmem:[%s8 + $0x74] sm:$0xf]
  %v307 = vld [vmem:[%s8 + $0x78] sm:$0xf]
  %v308 = vld [vmem:[%s8 + $0x7c] sm:$0xf]
  %v309 = vpack.c.bf16 %v275, %v275
  %v310 = vpack.c.bf16 %v276, %v276
  %v343 = vunpack.c.l.b16 %v277
  %v344 = vunpack.c.l.b16 %v278
  %v345 = vunpack.c.l.b16 %v279
  %v346 = vunpack.c.l.b16 %v280
  %v347 = vunpack.c.l.b16 %v281
  %v348 = vunpack.c.l.b16 %v282
  %v349 = vunpack.c.l.b16 %v283
  %v350 = vunpack.c.l.b16 %v284
  %v351 = vunpack.c.l.b16 %v285
  %v352 = vunpack.c.l.b16 %v286
  %v353 = vunpack.c.l.b16 %v287
  %v354 = vunpack.c.l.b16 %v288
  %v355 = vunpack.c.l.b16 %v289
  %v356 = vunpack.c.l.b16 %v290
  %v357 = vunpack.c.l.b16 %v291
  %v358 = vunpack.c.l.b16 %v292
  %v359 = vunpack.c.l.b16 %v293
  %v360 = vunpack.c.l.b16 %v294
  %v361 = vunpack.c.l.b16 %v295
  %v362 = vunpack.c.l.b16 %v296
  %v363 = vunpack.c.l.b16 %v297
  %v364 = vunpack.c.l.b16 %v298
  %v365 = vunpack.c.l.b16 %v299
  %v366 = vunpack.c.l.b16 %v300
  %v367 = vunpack.c.l.b16 %v301
  %v368 = vunpack.c.l.b16 %v302
  %v369 = vunpack.c.l.b16 %v303
  %v370 = vunpack.c.l.b16 %v304
  %v371 = vunpack.c.l.b16 %v305
  %v372 = vunpack.c.l.b16 %v306
  %v373 = vunpack.c.l.b16 %v307
  %v374 = vunpack.c.l.b16 %v308
  %v375 = vpack.c.b16 %v344, %v343
  %v376 = vpack.c.b16 %v346, %v345
  %v377 = vpack.c.b16 %v348, %v347
  %v378 = vpack.c.b16 %v350, %v349
  %v379 = vpack.c.b16 %v352, %v351
  %v380 = vpack.c.b16 %v354, %v353
  %v381 = vpack.c.b16 %v356, %v355
  %v382 = vpack.c.b16 %v358, %v357
  %v383 = vpack.c.b16 %v360, %v359
  %v384 = vpack.c.b16 %v362, %v361
  %v385 = vpack.c.b16 %v364, %v363
  %v386 = vpack.c.b16 %v366, %v365
  %v387 = vpack.c.b16 %v368, %v367
  %v388 = vpack.c.b16 %v370, %v369
  %v389 = vpack.c.b16 %v372, %v371
  %v390 = vpack.c.b16 %v374, %v373
  %407 = vmatprep.subr.bf16.mxu0 0
  %408 = vmatpush1.bf16.msra.mxu0 %v382
  %409 = vmatprep.subr.bf16.mxu0 0
  %410 = vmatpush1.bf16.msra.mxu0 %v381
  %411 = vmatprep.subr.bf16.mxu0 0
  %412 = vmatpush1.bf16.msra.mxu0 %v380
  %413 = vmatprep.subr.bf16.mxu0 0
  %414 = vmatpush1.bf16.msra.mxu0 %v379
  %415 = vmatprep.subr.bf16.mxu0 0
  %416 = vmatpush1.bf16.msra.mxu0 %v378
  %417 = vmatprep.subr.bf16.mxu0 0
  %418 = vmatpush1.bf16.msra.mxu0 %v377
  %419 = vmatprep.subr.bf16.mxu0 0
  %420 = vmatpush1.bf16.msra.mxu0 %v376
  %421 = vmatprep.subr.bf16.mxu0 0
  %422 = vmatpush1.bf16.msra.mxu0 %v375
  %423 = vmatprep.subr.bf16.mxu0 0
  %424 = vmatpush2.bf16.msra.mxu0 %v390
  %425 = vmatprep.subr.bf16.mxu0 0
  %426 = vmatpush2.bf16.msra.mxu0 %v389
  %427 = vmatprep.subr.bf16.mxu0 0
  %428 = vmatpush2.bf16.msra.mxu0 %v388
  %429 = vmatprep.subr.bf16.mxu0 0
  %430 = vmatpush2.bf16.msra.mxu0 %v387
  %431 = vmatprep.subr.bf16.mxu0 0
  %432 = vmatpush2.bf16.msra.mxu0 %v386
  %433 = vmatprep.subr.bf16.mxu0 0
  %434 = vmatpush2.bf16.msra.mxu0 %v385
  %435 = vmatprep.subr.bf16.mxu0 0
  %436 = vmatpush2.bf16.msra.mxu0 %v384
  %437 = vmatprep.subr.bf16.mxu0 0
  %438 = vmatpush2.bf16.msra.mxu0 %v383
  %439 = vmatprep.mubr.bf16.mxu0 %v310
  %440 = vmatmul.mubr.bf16.gmra.mxu0 %v309
  %v441 = vpop.f32.mrf.mxu0
  %v442 = vadd.f32 0.0, %v441
  %v443 = vpop.f32.mrf.mxu0
  %v444 = vpop.f32.mrf.mxu0
  %v445 = vpop.f32.mrf.mxu0
  %446 = vdwg.mxu0
  %v447 = vadd.f32 %v123, %v442
  %v448 = vld [vmem:[%s9] sm:$0x1]
  %v450 = vlaneseq
  %v451 = vshrl.u32 %v450, 7
  %v452 = vsub.s32 0, %v451
  %v453 = vrot.slane %v448, %v452
  %v455 = vadd.f32 %v447, %v453
  %456 = vst.msk [vmem:[%s10] sm:$0xff] %vm71, %v455
  // Predicated region
  $region42: #{forward.25} parent=0 // pred_check
    _
  $region43: #{forward.25} parent=0 // pred_check_branch
    %458 = sbr.rel (0) target = $region45
  $region44: #{forward.25} parent=0 // pred_region
    _
  $region45: #{forward.25} parent=0 // pred_fallthru
    _
  // Predicated region
  $region46: #{forward.25} parent=0 // pred_check
    _
  $region47: #{forward.25} parent=0 // pred_check_branch
    %460 = sbr.rel (0) target = $region49
  $region48: #{forward.25} parent=0 // pred_region
    _
  $region49: #{forward.25} parent=0 // pred_fallthru
    _

// kernel: forward.28
$region0: #{forward.28}
  #allocation0 [shape = 'u32[]', space=smem, size = 0x4, offset = 0x4, fixed_abs, tag = 'smem constant byte address 0x4 - core index']
  #allocation1 [shape = 'u32[144,128]{1,0:T(1,128)}', space=vmem, size = 0x12000, scoped, tag = 'internal scratch']
  %s0 = inlined_call_operand.vmem [shape: f32[8,64], index: 0, kind: input, shape index: {}]
  %s1 = inlined_call_operand.vmem [shape: f32[8,64], index: 1, kind: input, shape index: {}]
  %s2 = inlined_call_operand.vmem [shape: bf16[64,64], index: 2, kind: input, shape index: {}]
  %s3 = inlined_call_operand.hbm [shape: f32[1,64], index: 3, kind: input, shape index: {}]
  %s4 = inlined_call_operand.hbm [shape: f32[1,64], index: 4, kind: input, shape index: {}]
  %s5 = inlined_call_operand.hbm [shape: f32[1,64], index: 5, kind: input, shape index: {}]
  %s6 = inlined_call_operand.vmem [shape: bf16[64,256], index: 6, kind: input, shape index: {}]
  %s7 = inlined_call_operand.vmem [shape: f32[1,256], index: 7, kind: input, shape index: {}]
  %s8 = inlined_call_operand.vmem [shape: bf16[256,64], index: 8, kind: input, shape index: {}]
  %s9 = inlined_call_operand.hbm [shape: f32[1,64], index: 9, kind: input, shape index: {}]
  %s10 = inlined_call_operand.vmem [shape: f32[8,64], index: 10, kind: output, shape index: {}]
  %s11 = sld [smem:[#allocation0]]
  $region66: #{forward.28} parent=0
    _
  %s13 = ssub.s32 1, %s11
  %s14 = scalar_select 0, %s13, %s11
  $region1: #{forward.28} parent=0
    #allocation2 [shape = 'u8[512]{0}', space=vmem, size = 0x400, scoped, tag = 'input window, operand 3, single buffered']
    #allocation3 [shape = 's32[1]{0}', space=sflag, size = 0x4, scoped, tag = 'scoped memory for forward.28']
    #allocation4 [shape = 'u8[512]{0}', space=vmem, size = 0x400, scoped, tag = 'input window, operand 4, single buffered']
    #allocation5 [shape = 's32[1]{0}', space=sflag, size = 0x4, scoped, tag = 'scoped memory for forward.28']
    #allocation6 [shape = 'u8[512]{0}', space=vmem, size = 0x400, scoped, tag = 'input window, operand 5, single buffered']
    #allocation7 [shape = 'u8[512]{0}', space=vmem, size = 0x400, scoped, tag = 'input window, operand 9, single buffered']
    #allocation8 [shape = 's32[1]{0}', space=sflag, size = 0x4, scoped, tag = 'scoped memory for forward.28']
    %15 = vsyncpa [#allocation3], 0
    %16 = vsyncpa [#allocation5], 0
    %17 = vsyncpa [#allocation8], 0
    // Predicated region
    $region2: #{forward.28} parent=1 // pred_check
      _
    $region3: #{forward.28} parent=1 // pred_check_branch
      %19 = sbr.rel (0) target = $region5
    $region4: #{forward.28} parent=1 // pred_region
      _
    $region5: #{forward.28} parent=1 // pred_fallthru
      _
    // Predicated region
    $region6: #{forward.28} parent=1 // pred_check
      _
    $region7: #{forward.28} parent=1 // pred_check_branch
      %21 = sbr.rel (0) target = $region9
    $region8: #{forward.28} parent=1 // pred_region
      _
    $region9: #{forward.28} parent=1 // pred_fallthru
      _
    // Predicated region
    $region10: #{forward.28} parent=1 // pred_check
      _
    $region11: #{forward.28} parent=1 // pred_check_branch
      %23 = sbr.rel (0) target = $region13
    $region12: #{forward.28} parent=1 // pred_region
      _
    $region13: #{forward.28} parent=1 // pred_fallthru
      _
    // Predicated region
    $region14: #{forward.28} parent=1 // pred_check
      _
    $region15: #{forward.28} parent=1 // pred_check_branch
      %25 = sbr.rel (0) target = $region17
    $region16: #{forward.28} parent=1 // pred_region
      %s27 = ssub.s32 16, 16
      %28 = vsyncadd [#allocation3], %s27
      %s30 = sshll.u32 [#allocation2], 4
      %s31 = int_to_ptr.vmem [resolvable:$true] %s30
      %33 = dma.hbm_to_vmem [thread:$0]  %s3, 16, %s31, [#allocation3]
    $region17: #{forward.28} parent=1 // pred_fallthru
      _
    // Predicated region
    $region18: #{forward.28} parent=1 // pred_check
      _
    $region19: #{forward.28} parent=1 // pred_check_branch
      %35 = sbr.rel (0) target = $region21
    $region20: #{forward.28} parent=1 // pred_region
      %s37 = ssub.s32 16, 16
      %38 = vsyncadd [#allocation5], %s37
      %s40 = sshll.u32 [#allocation4], 4
      %s41 = int_to_ptr.vmem [resolvable:$true] %s40
      %43 = dma.hbm_to_vmem [thread:$0]  %s4, 16, %s41, [#allocation5]
    $region21: #{forward.28} parent=1 // pred_fallthru
      _
    // Predicated region
    $region22: #{forward.28} parent=1 // pred_check
      _
    $region23: #{forward.28} parent=1 // pred_check_branch
      %45 = sbr.rel (0) target = $region25
    $region24: #{forward.28} parent=1 // pred_region
      %s47 = ssub.s32 16, 16
      %48 = vsyncadd [#allocation5], %s47
      %s50 = sshll.u32 [#allocation6], 4
      %s51 = int_to_ptr.vmem [resolvable:$true] %s50
      %53 = dma.hbm_to_vmem [thread:$0]  %s5, 16, %s51, [#allocation5]
    $region25: #{forward.28} parent=1 // pred_fallthru
      _
    // Predicated region
    $region26: #{forward.28} parent=1 // pred_check
      _
    $region27: #{forward.28} parent=1 // pred_check_branch
      %55 = sbr.rel (0) target = $region29
    $region28: #{forward.28} parent=1 // pred_region
      _
    $region29: #{forward.28} parent=1 // pred_fallthru
      _
    // Predicated region
    $region30: #{forward.28} parent=1 // pred_check
      _
    $region31: #{forward.28} parent=1 // pred_check_branch
      %57 = sbr.rel (0) target = $region33
    $region32: #{forward.28} parent=1 // pred_region
      _
    $region33: #{forward.28} parent=1 // pred_fallthru
      _
    // Predicated region
    $region34: #{forward.28} parent=1 // pred_check
      _
    $region35: #{forward.28} parent=1 // pred_check_branch
      %59 = sbr.rel (0) target = $region37
    $region36: #{forward.28} parent=1 // pred_region
      _
    $region37: #{forward.28} parent=1 // pred_fallthru
      _
    // Predicated region
    $region38: #{forward.28} parent=1 // pred_check
      _
    $region39: #{forward.28} parent=1 // pred_check_branch
      %61 = sbr.rel (0) target = $region41
    $region40: #{forward.28} parent=1 // pred_region
      %s63 = ssub.s32 16, 16
      %64 = vsyncadd [#allocation8], %s63
      %s66 = sshll.u32 [#allocation7], 4
      %s67 = int_to_ptr.vmem [resolvable:$true] %s66
      %69 = dma.hbm_to_vmem [thread:$0]  %s9, 16, %s67, [#allocation8]
    $region41: #{forward.28} parent=1 // pred_fallthru
      _
    // Predicated region
    $region42: #{forward.28} parent=1 // pred_check
      _
    $region43: #{forward.28} parent=1 // pred_check_branch
      %71 = sbr.rel (0) target = $region45
    $region44: #{forward.28} parent=1 // pred_region
      %72 = dma.done [#allocation3], 16
    $region45: #{forward.28} parent=1 // pred_fallthru
      _
    // Predicated region
    $region46: #{forward.28} parent=1 // pred_check
      _
    $region47: #{forward.28} parent=1 // pred_check_branch
      %74 = sbr.rel (0) target = $region49
    $region48: #{forward.28} parent=1 // pred_region
      %75 = dma.done [#allocation5], 16
    $region49: #{forward.28} parent=1 // pred_fallthru
      _
    // Predicated region
    $region50: #{forward.28} parent=1 // pred_check
      _
    $region51: #{forward.28} parent=1 // pred_check_branch
      %77 = sbr.rel (0) target = $region53
    $region52: #{forward.28} parent=1 // pred_region
      %78 = dma.done [#allocation5], 16
    $region53: #{forward.28} parent=1 // pred_fallthru
      _
    // Predicated region
    $region54: #{forward.28} parent=1 // pred_check
      _
    $region55: #{forward.28} parent=1 // pred_check_branch
      %80 = sbr.rel (0) target = $region57
    $region56: #{forward.28} parent=1 // pred_region
      %81 = dma.done [#allocation8], 16
    $region57: #{forward.28} parent=1 // pred_fallthru
      _
    %v83 = vld [vmem:[%s0] sm:$0xff]
    %v84 = vld [vmem:[%s1] sm:$0xff]
    %v85 = vld [vmem:[%s2] sm:$0xf]
    %v86 = vld [vmem:[%s2 + $0x4] sm:$0xf]
    %v87 = vld [vmem:[%s2 + $0x8] sm:$0xf]
    %v88 = vld [vmem:[%s2 + $0xc] sm:$0xf]
    %v89 = vld [vmem:[%s2 + $0x10] sm:$0xf]
    %v90 = vld [vmem:[%s2 + $0x14] sm:$0xf]
    %v91 = vld [vmem:[%s2 + $0x18] sm:$0xf]
    %v92 = vld [vmem:[%s2 + $0x1c] sm:$0xf]
    %v93 = vpack.c.bf16 %v84, %v84
    %v102 = vunpack.c.l.b16 %v85
    %v103 = vunpack.c.l.b16 %v86
    %v104 = vunpack.c.l.b16 %v87
    %v105 = vunpack.c.l.b16 %v88
    %v106 = vunpack.c.l.b16 %v89
    %v107 = vunpack.c.l.b16 %v90
    %v108 = vunpack.c.l.b16 %v91
    %v109 = vunpack.c.l.b16 %v92
    %v110 = vpack.c.b16 %v103, %v102
    %v111 = vpack.c.b16 %v105, %v104
    %v112 = vpack.c.b16 %v107, %v106
    %v113 = vpack.c.b16 %v109, %v108
    %vm118 = vcmask 523264
    %v120 = vsel %vm118, %v93, 0
    %122 = vmatprep.subr.bf16.mxu0 0
    %123 = vmatpush1.bf16.msra.mxu0 0
    %124 = vmatprep.subr.bf16.mxu0 0
    %125 = vmatpush1.bf16.msra.mxu0 0
    %126 = vmatprep.subr.bf16.mxu0 0
    %127 = vmatpush1.bf16.msra.mxu0 0
    %128 = vmatprep.subr.bf16.mxu0 0
    %129 = vmatpush1.bf16.msra.mxu0 0
    %130 = vmatprep.subr.bf16.mxu0 0
    %131 = vmatpush1.bf16.msra.mxu0 %v113
    %132 = vmatprep.subr.bf16.mxu0 0
    %133 = vmatpush1.bf16.msra.mxu0 %v112
    %134 = vmatprep.subr.bf16.mxu0 0
    %135 = vmatpush1.bf16.msra.mxu0 %v111
    %136 = vmatprep.subr.bf16.mxu0 0
    %137 = vmatpush1.bf16.msra.mxu0 %v110
    %138 = vmatprep.subr.bf16.mxu0 0
    %139 = vmatpush2.bf16.msra.mxu0 0
    %140 = vmatprep.subr.bf16.mxu0 0
    %141 = vmatpush2.bf16.msra.mxu0 0
    %142 = vmatprep.subr.bf16.mxu0 0
    %143 = vmatpush2.bf16.msra.mxu0 0
    %144 = vmatprep.subr.bf16.mxu0 0
    %145 = vmatpush2.bf16.msra.mxu0 0
    %146 = vmatprep.subr.bf16.mxu0 0
    %147 = vmatpush2.bf16.msra.mxu0 0
    %148 = vmatprep.subr.bf16.mxu0 0
    %149 = vmatpush2.bf16.msra.mxu0 0
    %150 = vmatprep.subr.bf16.mxu0 0
    %151 = vmatpush2.bf16.msra.mxu0 0
    %152 = vmatprep.subr.bf16.mxu0 0
    %153 = vmatpush2.bf16.msra.mxu0 0
    %154 = vmatprep.mubr.bf16.mxu0 0
    %155 = vmatmul.mubr.bf16.gmra.mxu0 %v120
    %v156 = vpop.f32.mrf.mxu0
    %v157 = vadd.f32 0.0, %v156
    %v158 = vpop.f32.mrf.mxu0
    %v159 = vpop.f32.mrf.mxu0
    %v160 = vpop.f32.mrf.mxu0
    %161 = vdwg.mxu0
    %v162 = vadd.f32 %v83, %v157
    %v163 = vld [vmem:[#allocation2] sm:$0x1]
    %v165 = vlaneseq
    %v166 = vshrl.u32 %v165, 7
    %v167 = vsub.s32 0, %v166
    %v168 = vrot.slane %v163, %v167
    %v170 = vadd.f32 %v162, %v168
    %v171 = vld [vmem:[#allocation4] sm:$0x1]
    %v172 = vld [vmem:[#allocation6] sm:$0x1]
    %v173 = vsel %vm118, %v170, 0.0
    %174 = vadd.xlane.f32.xlu0 %v173
    %v175 = vpop.xlane.xlu0 %174
    %v176 = vrcp.pop 64.0
    %v177 = vmul.f32 %v175, %v176
    %v178 = vsub.f32 %v170, %v177
    %v179 = vmul.f32 %v178, %v178
    %v180 = vsel %vm118, %v179, 0.0
    %181 = vadd.xlane.f32.xlu0 %v180
    %v182 = vpop.xlane.xlu0 %181
    %v183 = vmul.f32 %v182, %v176
    %v184 = vadd.f32 %v183, 1e-05
    %v185 = vrsqrt.pop %v184
    %v186 = vmul.f32 %v178, %v185
    %v188 = vlaneseq
    %v189 = vshrl.u32 %v188, 7
    %v190 = vsub.s32 0, %v189
    %v191 = vrot.slane %v171, %v190
    %v193 = vmul.f32 %v186, %v191
    %v195 = vlaneseq
    %v196 = vshrl.u32 %v195, 7
    %v197 = vsub.s32 0, %v196
    %v198 = vrot.slane %v172, %v197
    %v200 = vadd.f32 %v193, %v198
    %v201 = vld [vmem:[%s6] sm:$0xff]
    %v202 = vld [vmem:[%s6 + $0x8] sm:$0xff]
    %v203 = vld [vmem:[%s6 + $0x10] sm:$0xff]
    %v204 = vld [vmem:[%s6 + $0x18] sm:$0xff]
    %v205 = vld [vmem:[%s6 + $0x20] sm:$0xff]
    %v206 = vld [vmem:[%s6 + $0x28] sm:$0xff]
    %v207 = vld [vmem:[%s6 + $0x30] sm:$0xff]
    %v208 = vld [vmem:[%s6 + $0x38] sm:$0xff]
    %v209 = vpack.c.bf16 %v200, %v200
    %v210 = vld [vmem:[%s7] sm:$0x3]
    %v212 = vlaneseq
    %v213 = vshrl.u32 %v212, 7
    %v214 = vsub.s32 0, %v213
    %v215 = vrot.slane %v210, %v214
    %v216 = vlaneseq
    %v217 = vshrl.u32 %v216, 7
    %v218 = vsub.s32 1, %v217
    %v219 = vrot.slane %v210, %v218
    %v230 = vunpack.c.l.b16 %v201
    %v231 = vunpack.c.h.b16 %v201
    %v232 = vunpack.c.l.b16 %v202
    %v233 = vunpack.c.h.b16 %v202
    %v234 = vunpack.c.l.b16 %v203
    %v235 = vunpack.c.h.b16 %v203
    %v236 = vunpack.c.l.b16 %v204
    %v237 = vunpack.c.h.b16 %v204
    %v238 = vunpack.c.l.b16 %v205
    %v239 = vunpack.c.h.b16 %v205
    %v240 = vunpack.c.l.b16 %v206
    %v241 = vunpack.c.h.b16 %v206
    %v242 = vunpack.c.l.b16 %v207
    %v243 = vunpack.c.h.b16 %v207
    %v244 = vunpack.c.l.b16 %v208
    %v245 = vunpack.c.h.b16 %v208
    %v246 = vpack.c.b16 %v232, %v230
    %v247 = vpack.c.b16 %v233, %v231
    %v248 = vpack.c.b16 %v236, %v234
    %v249 = vpack.c.b16 %v237, %v235
    %v250 = vpack.c.b16 %v240, %v238
    %v251 = vpack.c.b16 %v241, %v239
    %v252 = vpack.c.b16 %v244, %v242
    %v253 = vpack.c.b16 %v245, %v243
    %v263 = vsel %vm118, %v209, 0
    %265 = vmatprep.subr.bf16.mxu0 0
    %266 = vmatpush1.bf16.msra.mxu0 0
    %267 = vmatprep.subr.bf16.mxu0 0
    %268 = vmatpush1.bf16.msra.mxu0 0
    %269 = vmatprep.subr.bf16.mxu0 0
    %270 = vmatpush1.bf16.msra.mxu0 0
    %271 = vmatprep.subr.bf16.mxu0 0
    %272 = vmatpush1.bf16.msra.mxu0 0
    %273 = vmatprep.subr.bf16.mxu0 %v253
    %274 = vmatpush1.bf16.msra.mxu0 %v252
    %275 = vmatprep.subr.bf16.mxu0 %v251
    %276 = vmatpush1.bf16.msra.mxu0 %v250
    %277 = vmatprep.subr.bf16.mxu0 %v249
    %278 = vmatpush1.bf16.msra.mxu0 %v248
    %279 = vmatprep.subr.bf16.mxu0 %v247
    %280 = vmatpush1.bf16.msra.mxu0 %v246
    %281 = vmatprep.subr.bf16.mxu0 0
    %282 = vmatpush2.bf16.msra.mxu0 0
    %283 = vmatprep.subr.bf16.mxu0 0
    %284 = vmatpush2.bf16.msra.mxu0 0
    %285 = vmatprep.subr.bf16.mxu0 0
    %286 = vmatpush2.bf16.msra.mxu0 0
    %287 = vmatprep.subr.bf16.mxu0 0
    %288 = vmatpush2.bf16.msra.mxu0 0
    %289 = vmatprep.subr.bf16.mxu0 0
    %290 = vmatpush2.bf16.msra.mxu0 0
    %291 = vmatprep.subr.bf16.mxu0 0
    %292 = vmatpush2.bf16.msra.mxu0 0
    %293 = vmatprep.subr.bf16.mxu0 0
    %294 = vmatpush2.bf16.msra.mxu0 0
    %295 = vmatprep.subr.bf16.mxu0 0
    %296 = vmatpush2.bf16.msra.mxu0 0
    %297 = vmatprep.mubr.bf16.mxu0 0
    %298 = vmatmul.mubr.bf16.gmra.mxu0 %v263
    %v299 = vpop.f32.mrf.mxu0
    %v300 = vadd.f32 %v215, %v299
    %v301 = vpop.f32.mrf.mxu0
    %v302 = vadd.f32 %v219, %v301
    %v303 = vpop.f32.mrf.mxu0
    %v304 = vpop.f32.mrf.mxu0
    %305 = vdwg.mxu0
    %v306 = vmul.f32 %v300, %v300
    %v307 = vmul.f32 %v302, %v302
    %v308 = vmul.f32 %v300, %v306
    %v309 = vmul.f32 %v302, %v307
    %v310 = vmul.f32 %v308, 0.044715
    %v311 = vmul.f32 %v309, 0.044715
    %v312 = vadd.f32 %v300, %v310
    %v313 = vadd.f32 %v302, %v311
    %v314 = vmul.f32 %v312, 0.7978846
    %v315 = vmul.f32 %v313, 0.7978846
    %v316 = vtanh.pop %v314
    %v317 = vtanh.pop %v315
    %v318 = vadd.f32 %v316, 1.0
    %v319 = vadd.f32 %v317, 1.0
    %v320 = vmul.f32 %v318, 0.5
    %v321 = vmul.f32 %v319, 0.5
    %v322 = vmul.f32 %v300, %v320
    %v323 = vmul.f32 %v302, %v321
    %v324 = vld [vmem:[%s8] sm:$0xf]
    %v325 = vld [vmem:[%s8 + $0x4] sm:$0xf]
    %v326 = vld [vmem:[%s8 + $0x8] sm:$0xf]
    %v327 = vld [vmem:[%s8 + $0xc] sm:$0xf]
    %v328 = vld [vmem:[%s8 + $0x10] sm:$0xf]
    %v329 = vld [vmem:[%s8 + $0x14] sm:$0xf]
    %v330 = vld [vmem:[%s8 + $0x18] sm:$0xf]
    %v331 = vld [vmem:[%s8 + $0x1c] sm:$0xf]
    %v332 = vld [vmem:[%s8 + $0x20] sm:$0xf]
    %v333 = vld [vmem:[%s8 + $0x24] sm:$0xf]
    %v334 = vld [vmem:[%s8 + $0x28] sm:$0xf]
    %v335 = vld [vmem:[%s8 + $0x2c] sm:$0xf]
    %v336 = vld [vmem:[%s8 + $0x30] sm:$0xf]
    %v337 = vld [vmem:[%s8 + $0x34] sm:$0xf]
    %v338 = vld [vmem:[%s8 + $0x38] sm:$0xf]
    %v339 = vld [vmem:[%s8 + $0x3c] sm:$0xf]
    %v340 = vld [vmem:[%s8 + $0x40] sm:$0xf]
    %v341 = vld [vmem:[%s8 + $0x44] sm:$0xf]
    %v342 = vld [vmem:[%s8 + $0x48] sm:$0xf]
    %v343 = vld [vmem:[%s8 + $0x4c] sm:$0xf]
    %v344 = vld [vmem:[%s8 + $0x50] sm:$0xf]
    %v345 = vld [vmem:[%s8 + $0x54] sm:$0xf]
    %v346 = vld [vmem:[%s8 + $0x58] sm:$0xf]
    %v347 = vld [vmem:[%s8 + $0x5c] sm:$0xf]
    %v348 = vld [vmem:[%s8 + $0x60] sm:$0xf]
    %v349 = vld [vmem:[%s8 + $0x64] sm:$0xf]
    %v350 = vld [vmem:[%s8 + $0x68] sm:$0xf]
    %v351 = vld [vmem:[%s8 + $0x6c] sm:$0xf]
    %v352 = vld [vmem:[%s8 + $0x70] sm:$0xf]
    %v353 = vld [vmem:[%s8 + $0x74] sm:$0xf]
    %v354 = vld [vmem:[%s8 + $0x78] sm:$0xf]
    %v355 = vld [vmem:[%s8 + $0x7c] sm:$0xf]
    %v356 = vpack.c.bf16 %v322, %v322
    %v357 = vpack.c.bf16 %v323, %v323
    %v390 = vunpack.c.l.b16 %v324
    %v391 = vunpack.c.l.b16 %v325
    %v392 = vunpack.c.l.b16 %v326
    %v393 = vunpack.c.l.b16 %v327
    %v394 = vunpack.c.l.b16 %v328
    %v395 = vunpack.c.l.b16 %v329
    %v396 = vunpack.c.l.b16 %v330
    %v397 = vunpack.c.l.b16 %v331
    %v398 = vunpack.c.l.b16 %v332
    %v399 = vunpack.c.l.b16 %v333
    %v400 = vunpack.c.l.b16 %v334
    %v401 = vunpack.c.l.b16 %v335
    %v402 = vunpack.c.l.b16 %v336
    %v403 = vunpack.c.l.b16 %v337
    %v404 = vunpack.c.l.b16 %v338
    %v405 = vunpack.c.l.b16 %v339
    %v406 = vunpack.c.l.b16 %v340
    %v407 = vunpack.c.l.b16 %v341
    %v408 = vunpack.c.l.b16 %v342
    %v409 = vunpack.c.l.b16 %v343
    %v410 = vunpack.c.l.b16 %v344
    %v411 = vunpack.c.l.b16 %v345
    %v412 = vunpack.c.l.b16 %v346
    %v413 = vunpack.c.l.b16 %v347
    %v414 = vunpack.c.l.b16 %v348
    %v415 = vunpack.c.l.b16 %v349
    %v416 = vunpack.c.l.b16 %v350
    %v417 = vunpack.c.l.b16 %v351
    %v418 = vunpack.c.l.b16 %v352
    %v419 = vunpack.c.l.b16 %v353
    %v420 = vunpack.c.l.b16 %v354
    %v421 = vunpack.c.l.b16 %v355
    %v422 = vpack.c.b16 %v391, %v390
    %v423 = vpack.c.b16 %v393, %v392
    %v424 = vpack.c.b16 %v395, %v394
    %v425 = vpack.c.b16 %v397, %v396
    %v426 = vpack.c.b16 %v399, %v398
    %v427 = vpack.c.b16 %v401, %v400
    %v428 = vpack.c.b16 %v403, %v402
    %v429 = vpack.c.b16 %v405, %v404
    %v430 = vpack.c.b16 %v407, %v406
    %v431 = vpack.c.b16 %v409, %v408
    %v432 = vpack.c.b16 %v411, %v410
    %v433 = vpack.c.b16 %v413, %v412
    %v434 = vpack.c.b16 %v415, %v414
    %v435 = vpack.c.b16 %v417, %v416
    %v436 = vpack.c.b16 %v419, %v418
    %v437 = vpack.c.b16 %v421, %v420
    %454 = vmatprep.subr.bf16.mxu0 0
    %455 = vmatpush1.bf16.msra.mxu0 %v429
    %456 = vmatprep.subr.bf16.mxu0 0
    %457 = vmatpush1.bf16.msra.mxu0 %v428
    %458 = vmatprep.subr.bf16.mxu0 0
    %459 = vmatpush1.bf16.msra.mxu0 %v427
    %460 = vmatprep.subr.bf16.mxu0 0
    %461 = vmatpush1.bf16.msra.mxu0 %v426
    %462 = vmatprep.subr.bf16.mxu0 0
    %463 = vmatpush1.bf16.msra.mxu0 %v425
    %464 = vmatprep.subr.bf16.mxu0 0
    %465 = vmatpush1.bf16.msra.mxu0 %v424
    %466 = vmatprep.subr.bf16.mxu0 0
    %467 = vmatpush1.bf16.msra.mxu0 %v423
    %468 = vmatprep.subr.bf16.mxu0 0
    %469 = vmatpush1.bf16.msra.mxu0 %v422
    %470 = vmatprep.subr.bf16.mxu0 0
    %471 = vmatpush2.bf16.msra.mxu0 %v437
    %472 = vmatprep.subr.bf16.mxu0 0
    %473 = vmatpush2.bf16.msra.mxu0 %v436
    %474 = vmatprep.subr.bf16.mxu0 0
    %475 = vmatpush2.bf16.msra.mxu0 %v435
    %476 = vmatprep.subr.bf16.mxu0 0
    %477 = vmatpush2.bf16.msra.mxu0 %v434
    %478 = vmatprep.subr.bf16.mxu0 0
    %479 = vmatpush2.bf16.msra.mxu0 %v433
    %480 = vmatprep.subr.bf16.mxu0 0
    %481 = vmatpush2.bf16.msra.mxu0 %v432
    %482 = vmatprep.subr.bf16.mxu0 0
    %483 = vmatpush2.bf16.msra.mxu0 %v431
    %484 = vmatprep.subr.bf16.mxu0 0
    %485 = vmatpush2.bf16.msra.mxu0 %v430
    %486 = vmatprep.mubr.bf16.mxu0 %v357
    %487 = vmatmul.mubr.bf16.gmra.mxu0 %v356
    %v488 = vpop.f32.mrf.mxu0
    %v489 = vadd.f32 0.0, %v488
    %v490 = vpop.f32.mrf.mxu0
    %v491 = vpop.f32.mrf.mxu0
    %v492 = vpop.f32.mrf.mxu0
    %493 = vdwg.mxu0
    %v494 = vadd.f32 %v170, %v489
    %v495 = vld [vmem:[#allocation7] sm:$0x1]
    %v497 = vlaneseq
    %v498 = vshrl.u32 %v497, 7
    %v499 = vsub.s32 0, %v498
    %v500 = vrot.slane %v495, %v499
    %v502 = vadd.f32 %v494, %v500
    %503 = vst.msk [vmem:[%s10] sm:$0xff] %vm118, %v502
    // Predicated region
    $region58: #{forward.28} parent=1 // pred_check
      _
    $region59: #{forward.28} parent=1 // pred_check_branch
      %505 = sbr.rel (0) target = $region61
    $region60: #{forward.28} parent=1 // pred_region
      _
    $region61: #{forward.28} parent=1 // pred_fallthru
      _
    // Predicated region
    $region62: #{forward.28} parent=1 // pred_check
      _
    $region63: #{forward.28} parent=1 // pred_check_branch
      %507 = sbr.rel (0) target = $region65
    $region64: #{forward.28} parent=1 // pred_region
      _
    $region65: #{forward.28} parent=1 // pred_fallthru
      _
    %508 = vsyncpa [#allocation3], 1
    %509 = vsyncpa [#allocation5], 1
    %510 = vsyncpa [#allocation8], 1

// kernel: forward.29
$region0: #{forward.29}
  #allocation0 [shape = 'u32[]', space=smem, size = 0x4, offset = 0x4, fixed_abs, tag = 'smem constant byte address 0x4 - core index']
  #allocation1 [shape = 'u32[144,128]{1,0:T(1,128)}', space=vmem, size = 0x12000, scoped, tag = 'internal scratch']
  %s0 = inlined_call_operand.vmem [shape: f32[2,4,64], index: 0, kind: input, shape index: {}]
  %s1 = inlined_call_operand.vmem [shape: f32[1,64], index: 1, kind: input, shape index: {}]
  %s2 = inlined_call_operand.vmem [shape: f32[1,64], index: 2, kind: input, shape index: {}]
  %s3 = inlined_call_operand.vmem [shape: bf16[64,1024], index: 3, kind: input, shape index: {}]
  %s4 = inlined_call_operand.vmem [shape: f32[1,1024], index: 4, kind: input, shape index: {}]
  %s5 = inlined_call_operand.vmem [shape: bf16[1024,1024], index: 5, kind: input, shape index: {}]
  %s6 = inlined_call_operand.vmem [shape: f32[1,1024], index: 6, kind: input, shape index: {}]
  %s7 = inlined_call_operand.vmem [shape: bf16[1024,128], index: 7, kind: input, shape index: {}]
  %s8 = inlined_call_operand.vmem [shape: f32[1,128], index: 8, kind: input, shape index: {}]
  %s9 = inlined_call_operand.hbm [shape: f32[2,128], index: 9, kind: output, shape index: {}]
  %s10 = sld [smem:[#allocation0]]
  $region46: #{forward.29} parent=0
    _
  %s12 = ssub.s32 1, %s10
  %s13 = scalar_select 0, %s12, %s10
  $region1: #{forward.29} parent=0
    #allocation2 [shape = 'u8[1024]{0}', space=vmem, size = 0x400, scoped, tag = 'output window, operand 0, single buffered']
    #allocation3 [shape = 's32[1]{0}', space=sflag, size = 0x4, scoped, tag = 'scoped memory for forward.29']
    %14 = vsyncpa [#allocation3], 0
    // Predicated region
    $region2: #{forward.29} parent=1 // pred_check
      _
    $region3: #{forward.29} parent=1 // pred_check_branch
      %16 = sbr.rel (0) target = $region5
    $region4: #{forward.29} parent=1 // pred_region
      _
    $region5: #{forward.29} parent=1 // pred_fallthru
      _
    // Predicated region
    $region6: #{forward.29} parent=1 // pred_check
      _
    $region7: #{forward.29} parent=1 // pred_check_branch
      %18 = sbr.rel (0) target = $region9
    $region8: #{forward.29} parent=1 // pred_region
      _
    $region9: #{forward.29} parent=1 // pred_fallthru
      _
    // Predicated region
    $region10: #{forward.29} parent=1 // pred_check
      _
    $region11: #{forward.29} parent=1 // pred_check_branch
      %20 = sbr.rel (0) target = $region13
    $region12: #{forward.29} parent=1 // pred_region
      _
    $region13: #{forward.29} parent=1 // pred_fallthru
      _
    // Predicated region
    $region14: #{forward.29} parent=1 // pred_check
      _
    $region15: #{forward.29} parent=1 // pred_check_branch
      %22 = sbr.rel (0) target = $region17
    $region16: #{forward.29} parent=1 // pred_region
      _
    $region17: #{forward.29} parent=1 // pred_fallthru
      _
    // Predicated region
    $region18: #{forward.29} parent=1 // pred_check
      _
    $region19: #{forward.29} parent=1 // pred_check_branch
      %24 = sbr.rel (0) target = $region21
    $region20: #{forward.29} parent=1 // pred_region
      _
    $region21: #{forward.29} parent=1 // pred_fallthru
      _
    // Predicated region
    $region22: #{forward.29} parent=1 // pred_check
      _
    $region23: #{forward.29} parent=1 // pred_check_branch
      %26 = sbr.rel (0) target = $region25
    $region24: #{forward.29} parent=1 // pred_region
      _
    $region25: #{forward.29} parent=1 // pred_fallthru
      _
    // Predicated region
    $region26: #{forward.29} parent=1 // pred_check
      _
    $region27: #{forward.29} parent=1 // pred_check_branch
      %28 = sbr.rel (0) target = $region29
    $region28: #{forward.29} parent=1 // pred_region
      _
    $region29: #{forward.29} parent=1 // pred_fallthru
      _
    // Predicated region
    $region30: #{forward.29} parent=1 // pred_check
      _
    $region31: #{forward.29} parent=1 // pred_check_branch
      %30 = sbr.rel (0) target = $region33
    $region32: #{forward.29} parent=1 // pred_region
      _
    $region33: #{forward.29} parent=1 // pred_fallthru
      _
    // Predicated region
    $region34: #{forward.29} parent=1 // pred_check
      _
    $region35: #{forward.29} parent=1 // pred_check_branch
      %32 = sbr.rel (0) target = $region37
    $region36: #{forward.29} parent=1 // pred_region
      _
    $region37: #{forward.29} parent=1 // pred_fallthru
      _
    %v34 = vld [vmem:[%s0] sm:$0xf]
    %v35 = vld [vmem:[%s0 + $0x4] sm:$0xf]
    %v36 = vld [vmem:[%s1] sm:$0x1]
    %v37 = vld [vmem:[%s2] sm:$0x1]
    %vm38 = vcmask 519168
    %v39 = vsel %vm38, %v34, 0.0
    %40 = vadd.xlane.f32.xlu0 %v39
    %v41 = vpop.xlane.xlu0 %40
    %v42 = vsel %vm38, %v35, 0.0
    %43 = vadd.xlane.f32.xlu0 %v42
    %v44 = vpop.xlane.xlu0 %43
    %v45 = vrcp.pop 64.0
    %v46 = vmul.f32 %v41, %v45
    %v47 = vmul.f32 %v44, %v45
    %v48 = vsub.f32 %v34, %v46
    %v49 = vsub.f32 %v35, %v47
    %v50 = vmul.f32 %v48, %v48
    %v51 = vmul.f32 %v49, %v49
    %v52 = vsel %vm38, %v50, 0.0
    %53 = vadd.xlane.f32.xlu0 %v52
    %v54 = vpop.xlane.xlu0 %53
    %v55 = vsel %vm38, %v51, 0.0
    %56 = vadd.xlane.f32.xlu0 %v55
    %v57 = vpop.xlane.xlu0 %56
    %v58 = vmul.f32 %v54, %v45
    %v59 = vmul.f32 %v57, %v45
    %v60 = vadd.f32 %v58, 1e-05
    %v61 = vadd.f32 %v59, 1e-05
    %v62 = vrsqrt.pop %v60
    %v63 = vrsqrt.pop %v61
    %v64 = vmul.f32 %v48, %v62
    %v65 = vmul.f32 %v49, %v63
    %v67 = vlaneseq
    %v68 = vshrl.u32 %v67, 7
    %v69 = vsub.s32 0, %v68
    %v70 = vrot.slane %v36, %v69
    %v72 = vmul.f32 %v64, %v70
    %v73 = vmul.f32 %v65, %v70
    %v75 = vlaneseq
    %v76 = vshrl.u32 %v75, 7
    %v77 = vsub.s32 0, %v76
    %v78 = vrot.slane %v37, %v77
    %v80 = vadd.f32 %v72, %v78
    %v81 = vadd.f32 %v73, %v78
    %v82 = vsel %vm38, %v80, 0.0
    %v83 = vrot.slane %v82, 4
    %v84 = vadd.f32 %v82, %v83
    %v85 = vrot.slane %v84, 2
    %v86 = vadd.f32 %v84, %v85
    %v87 = vrot.slane %v86, 1
    %v88 = vadd.f32 %v86, %v87
    %v89 = vsel %vm38, %v81, 0.0
    %v90 = vrot.slane %v89, 4
    %v91 = vadd.f32 %v89, %v90
    %v92 = vrot.slane %v91, 2
    %v93 = vadd.f32 %v91, %v92
    %v94 = vrot.slane %v93, 1
    %v95 = vadd.f32 %v93, %v94
    %v96 = vrcp.pop 4.0
    %v97 = vmul.f32 %v88, %v96
    %v98 = vmul.f32 %v95, %v96
    %v99 = vld [vmem:[%s3] sm:$0xff]
    %v100 = vld [vmem:[%s3 + $0x8] sm:$0xff]
    %v101 = vld [vmem:[%s3 + $0x10] sm:$0xff]
    %v102 = vld [vmem:[%s3 + $0x18] sm:$0xff]
    %v103 = vld [vmem:[%s3 + $0x20] sm:$0xff]
    %v104 = vld [vmem:[%s3 + $0x28] sm:$0xff]
    %v105 = vld [vmem:[%s3 + $0x30] sm:$0xff]
    %v106 = vld [vmem:[%s3 + $0x38] sm:$0xff]
    %v107 = vld [vmem:[%s3 + $0x40] sm:$0xff]
    %v108 = vld [vmem:[%s3 + $0x48] sm:$0xff]
    %v109 = vld [vmem:[%s3 + $0x50] sm:$0xff]
    %v110 = vld [vmem:[%s3 + $0x58] sm:$0xff]
    %v111 = vld [vmem:[%s3 + $0x60] sm:$0xff]
    %v112 = vld [vmem:[%s3 + $0x68] sm:$0xff]
    %v113 = vld [vmem:[%s3 + $0x70] sm:$0xff]
    %v114 = vld [vmem:[%s3 + $0x78] sm:$0xff]
    %v115 = vld [vmem:[%s3 + $0x80] sm:$0xff]
    %v116 = vld [vmem:[%s3 + $0x88] sm:$0xff]
    %v117 = vld [vmem:[%s3 + $0x90] sm:$0xff]
    %v118 = vld [vmem:[%s3 + $0x98] sm:$0xff]
    %v119 = vld [vmem:[%s3 + $0xa0] sm:$0xff]
    %v120 = vld [vmem:[%s3 + $0xa8] sm:$0xff]
    %v121 = vld [vmem:[%s3 + $0xb0] sm:$0xff]
    %v122 = vld [vmem:[%s3 + $0xb8] sm:$0xff]
    %v123 = vld [vmem:[%s3 + $0xc0] sm:$0xff]
    %v124 = vld [vmem:[%s3 + $0xc8] sm:$0xff]
    %v125 = vld [vmem:[%s3 + $0xd0] sm:$0xff]
    %v126 = vld [vmem:[%s3 + $0xd8] sm:$0xff]
    %v127 = vld [vmem:[%s3 + $0xe0] sm:$0xff]
    %v128 = vld [vmem:[%s3 + $0xe8] sm:$0xff]
    %v129 = vld [vmem:[%s3 + $0xf0] sm:$0xff]
    %v130 = vld [vmem:[%s3 + $0xf8] sm:$0xff]
    %v131 = vpack.c.bf16 %v97, %v97
    %v132 = vpack.c.bf16 %v98, %v98
    %v133 = vld [vmem:[%s4] sm:$0xff]
    %v135 = vlaneseq
    %v136 = vshrl.u32 %v135, 7
    %v137 = vsub.s32 0, %v136
    %v138 = vrot.slane %v133, %v137
    %v139 = vlaneseq
    %v140 = vshrl.u32 %v139, 7
    %v141 = vsub.s32 1, %v140
    %v142 = vrot.slane %v133, %v141
    %v143 = vlaneseq
    %v144 = vshrl.u32 %v143, 7
    %v145 = vsub.s32 2, %v144
    %v146 = vrot.slane %v133, %v145
    %v147 = vlaneseq
    %v148 = vshrl.u32 %v147, 7
    %v149 = vsub.s32 3, %v148
    %v150 = vrot.slane %v133, %v149
    %v151 = vlaneseq
    %v152 = vshrl.u32 %v151, 7
    %v153 = vsub.s32 4, %v152
    %v154 = vrot.slane %v133, %v153
    %v155 = vlaneseq
    %v156 = vshrl.u32 %v155, 7
    %v157 = vsub.s32 5, %v156
    %v158 = vrot.slane %v133, %v157
    %v159 = vlaneseq
    %v160 = vshrl.u32 %v159, 7
    %v161 = vsub.s32 6, %v160
    %v162 = vrot.slane %v133, %v161
    %v163 = vlaneseq
    %v164 = vshrl.u32 %v163, 7
    %v165 = vsub.s32 7, %v164
    %v166 = vrot.slane %v133, %v165
    %v177 = vunpack.c.l.b16 %v131
    %v178 = vunpack.c.l.b16 %v132
    %vm179 = vcmask 1041409
    %v180 = vsel %vm179, %v178, %v177
    %v181 = vpack.c.b16 %v180, %v180
    %v214 = vunpack.c.l.b16 %v99
    %v215 = vunpack.c.h.b16 %v99
    %v216 = vunpack.c.l.b16 %v100
    %v217 = vunpack.c.h.b16 %v100
    %v218 = vunpack.c.l.b16 %v101
    %v219 = vunpack.c.h.b16 %v101
    %v220 = vunpack.c.l.b16 %v102
    %v221 = vunpack.c.h.b16 %v102
    %v222 = vunpack.c.l.b16 %v103
    %v223 = vunpack.c.h.b16 %v103
    %v224 = vunpack.c.l.b16 %v104
    %v225 = vunpack.c.h.b16 %v104
    %v226 = vunpack.c.l.b16 %v105
    %v227 = vunpack.c.h.b16 %v105
    %v228 = vunpack.c.l.b16 %v106
    %v229 = vunpack.c.h.b16 %v106
    %v230 = vunpack.c.l.b16 %v107
    %v231 = vunpack.c.h.b16 %v107
    %v232 = vunpack.c.l.b16 %v108
    %v233 = vunpack.c.h.b16 %v108
    %v234 = vunpack.c.l.b16 %v109
    %v235 = vunpack.c.h.b16 %v109
    %v236 = vunpack.c.l.b16 %v110
    %v237 = vunpack.c.h.b16 %v110
    %v238 = vunpack.c.l.b16 %v111
    %v239 = vunpack.c.h.b16 %v111
    %v240 = vunpack.c.l.b16 %v112
    %v241 = vunpack.c.h.b16 %v112
    %v242 = vunpack.c.l.b16 %v113
    %v243 = vunpack.c.h.b16 %v113
    %v244 = vunpack.c.l.b16 %v114
    %v245 = vunpack.c.h.b16 %v114
    %v246 = vunpack.c.l.b16 %v115
    %v247 = vunpack.c.h.b16 %v115
    %v248 = vunpack.c.l.b16 %v116
    %v249 = vunpack.c.h.b16 %v116
    %v250 = vunpack.c.l.b16 %v117
    %v251 = vunpack.c.h.b16 %v117
    %v252 = vunpack.c.l.b16 %v118
    %v253 = vunpack.c.h.b16 %v118
    %v254 = vunpack.c.l.b16 %v119
    %v255 = vunpack.c.h.b16 %v119
    %v256 = vunpack.c.l.b16 %v120
    %v257 = vunpack.c.h.b16 %v120
    %v258 = vunpack.c.l.b16 %v121
    %v259 = vunpack.c.h.b16 %v121
    %v260 = vunpack.c.l.b16 %v122
    %v261 = vunpack.c.h.b16 %v122
    %v262 = vunpack.c.l.b16 %v123
    %v263 = vunpack.c.h.b16 %v123
    %v264 = vunpack.c.l.b16 %v124
    %v265 = vunpack.c.h.b16 %v124
    %v266 = vunpack.c.l.b16 %v125
    %v267 = vunpack.c.h.b16 %v125
    %v268 = vunpack.c.l.b16 %v126
    %v269 = vunpack.c.h.b16 %v126
    %v270 = vunpack.c.l.b16 %v127
    %v271 = vunpack.c.h.b16 %v127
    %v272 = vunpack.c.l.b16 %v128
    %v273 = vunpack.c.h.b16 %v128
    %v274 = vunpack.c.l.b16 %v129
    %v275 = vunpack.c.h.b16 %v129
    %v276 = vunpack.c.l.b16 %v130
    %v277 = vunpack.c.h.b16 %v130
    %v278 = vpack.c.b16 %v222, %v214
    %v279 = vpack.c.b16 %v223, %v215
    %v280 = vpack.c.b16 %v224, %v216
    %v281 = vpack.c.b16 %v225, %v217
    %v282 = vpack.c.b16 %v226, %v218
    %v283 = vpack.c.b16 %v227, %v219
    %v284 = vpack.c.b16 %v228, %v220
    %v285 = vpack.c.b16 %v229, %v221
    %v286 = vpack.c.b16 %v238, %v230
    %v287 = vpack.c.b16 %v239, %v231
    %v288 = vpack.c.b16 %v240, %v232
    %v289 = vpack.c.b16 %v241, %v233
    %v290 = vpack.c.b16 %v242, %v234
    %v291 = vpack.c.b16 %v243, %v235
    %v292 = vpack.c.b16 %v244, %v236
    %v293 = vpack.c.b16 %v245, %v237
    %v294 = vpack.c.b16 %v254, %v246
    %v295 = vpack.c.b16 %v255, %v247
    %v296 = vpack.c.b16 %v256, %v248
    %v297 = vpack.c.b16 %v257, %v249
    %v298 = vpack.c.b16 %v258, %v250
    %v299 = vpack.c.b16 %v259, %v251
    %v300 = vpack.c.b16 %v260, %v252
    %v301 = vpack.c.b16 %v261, %v253
    %v302 = vpack.c.b16 %v270, %v262
    %v303 = vpack.c.b16 %v271, %v263
    %v304 = vpack.c.b16 %v272, %v264
    %v305 = vpack.c.b16 %v273, %v265
    %v306 = vpack.c.b16 %v274, %v266
    %v307 = vpack.c.b16 %v275, %v267
    %v308 = vpack.c.b16 %v276, %v268
    %v309 = vpack.c.b16 %v277, %v269
    %vm342 = vcmask 523264
    %v344 = vsel %vm342, %v181, 0
    %346 = vmatprep.subr.bf16.mxu0 0
    %347 = vmatpush1.bf16.msra.mxu0 0
    %348 = vmatprep.subr.bf16.mxu0 0
    %349 = vmatpush1.bf16.msra.mxu0 0
    %350 = vmatprep.subr.bf16.mxu0 0
    %351 = vmatpush1.bf16.msra.mxu0 0
    %352 = vmatprep.subr.bf16.mxu0 0
    %353 = vmatpush1.bf16.msra.mxu0 0
    %354 = vmatprep.subr.bf16.mxu0 %v303
    %355 = vmatpush1.bf16.msra.mxu0 %v302
    %356 = vmatprep.subr.bf16.mxu0 %v295
    %357 = vmatpush1.bf16.msra.mxu0 %v294
    %358 = vmatprep.subr.bf16.mxu0 %v287
    %359 = vmatpush1.bf16.msra.mxu0 %v286
    %360 = vmatprep.subr.bf16.mxu0 %v279
    %361 = vmatpush1.bf16.msra.mxu0 %v278
    %362 = vmatprep.subr.bf16.mxu0 0
    %363 = vmatpush2.bf16.msra.mxu0 0
    %364 = vmatprep.subr.bf16.mxu0 0
    %365 = vmatpush2.bf16.msra.mxu0 0
    %366 = vmatprep.subr.bf16.mxu0 0
    %367 = vmatpush2.bf16.msra.mxu0 0
    %368 = vmatprep.subr.bf16.mxu0 0
    %369 = vmatpush2.bf16.msra.mxu0 0
    %370 = vmatprep.subr.bf16.mxu0 0
    %371 = vmatpush2.bf16.msra.mxu0 0
    %372 = vmatprep.subr.bf16.mxu0 0
    %373 = vmatpush2.bf16.msra.mxu0 0
    %374 = vmatprep.subr.bf16.mxu0 0
    %375 = vmatpush2.bf16.msra.mxu0 0
    %376 = vmatprep.subr.bf16.mxu0 0
    %377 = vmatpush2.bf16.msra.mxu0 0
    %378 = vmatprep.mubr.bf16.mxu0 0
    %379 = vmatmul.mubr.bf16.gmra.mxu0 %v344
    %v380 = vpop.f32.mrf.mxu0
    %v381 = vadd.f32 %v138, %v380
    %v382 = vpop.f32.mrf.mxu0
    %v383 = vadd.f32 %v142, %v382
    %v384 = vpop.f32.mrf.mxu0
    %v385 = vpop.f32.mrf.mxu0
    %386 = vdwg.mxu0
    %387 = vmatprep.subr.bf16.mxu0 0
    %388 = vmatpush1.bf16.msra.mxu0 0
    %389 = vmatprep.subr.bf16.mxu0 0
    %390 = vmatpush1.bf16.msra.mxu0 0
    %391 = vmatprep.subr.bf16.mxu0 0
    %392 = vmatpush1.bf16.msra.mxu0 0
    %393 = vmatprep.subr.bf16.mxu0 0
    %394 = vmatpush1.bf16.msra.mxu0 0
    %395 = vmatprep.subr.bf16.mxu0 %v305
    %396 = vmatpush1.bf16.msra.mxu0 %v304
    %397 = vmatprep.subr.bf16.mxu0 %v297
    %398 = vmatpush1.bf16.msra.mxu0 %v296
    %399 = vmatprep.subr.bf16.mxu0 %v289
    %400 = vmatpush1.bf16.msra.mxu0 %v288
    %401 = vmatprep.subr.bf16.mxu0 %v281
    %402 = vmatpush1.bf16.msra.mxu0 %v280
    %403 = vmatprep.subr.bf16.mxu0 0
    %404 = vmatpush2.bf16.msra.mxu0 0
    %405 = vmatprep.subr.bf16.mxu0 0
    %406 = vmatpush2.bf16.msra.mxu0 0
    %407 = vmatprep.subr.bf16.mxu0 0
    %408 = vmatpush2.bf16.msra.mxu0 0
    %409 = vmatprep.subr.bf16.mxu0 0
    %410 = vmatpush2.bf16.msra.mxu0 0
    %411 = vmatprep.subr.bf16.mxu0 0
    %412 = vmatpush2.bf16.msra.mxu0 0
    %413 = vmatprep.subr.bf16.mxu0 0
    %414 = vmatpush2.bf16.msra.mxu0 0
    %415 = vmatprep.subr.bf16.mxu0 0
    %416 = vmatpush2.bf16.msra.mxu0 0
    %417 = vmatprep.subr.bf16.mxu0 0
    %418 = vmatpush2.bf16.msra.mxu0 0
    %419 = vmatprep.mubr.bf16.mxu0 0
    %420 = vmatmul.mubr.bf16.gmra.mxu0 %v344
    %v421 = vpop.f32.mrf.mxu0
    %v422 = vadd.f32 %v146, %v421
    %v423 = vpop.f32.mrf.mxu0
    %v424 = vadd.f32 %v150, %v423
    %v425 = vpop.f32.mrf.mxu0
    %v426 = vpop.f32.mrf.mxu0
    %427 = vdwg.mxu0
    %428 = vmatprep.subr.bf16.mxu0 0
    %429 = vmatpush1.bf16.msra.mxu0 0
    %430 = vmatprep.subr.bf16.mxu0 0
    %431 = vmatpush1.bf16.msra.mxu0 0
    %432 = vmatprep.subr.bf16.mxu0 0
    %433 = vmatpush1.bf16.msra.mxu0 0
    %434 = vmatprep.subr.bf16.mxu0 0
    %435 = vmatpush1.bf16.msra.mxu0 0
    %436 = vmatprep.subr.bf16.mxu0 %v307
    %437 = vmatpush1.bf16.msra.mxu0 %v306
    %438 = vmatprep.subr.bf16.mxu0 %v299
    %439 = vmatpush1.bf16.msra.mxu0 %v298
    %440 = vmatprep.subr.bf16.mxu0 %v291
    %441 = vmatpush1.bf16.msra.mxu0 %v290
    %442 = vmatprep.subr.bf16.mxu0 %v283
    %443 = vmatpush1.bf16.msra.mxu0 %v282
    %444 = vmatprep.subr.bf16.mxu0 0
    %445 = vmatpush2.bf16.msra.mxu0 0
    %446 = vmatprep.subr.bf16.mxu0 0
    %447 = vmatpush2.bf16.msra.mxu0 0
    %448 = vmatprep.subr.bf16.mxu0 0
    %449 = vmatpush2.bf16.msra.mxu0 0
    %450 = vmatprep.subr.bf16.mxu0 0
    %451 = vmatpush2.bf16.msra.mxu0 0
    %452 = vmatprep.subr.bf16.mxu0 0
    %453 = vmatpush2.bf16.msra.mxu0 0
    %454 = vmatprep.subr.bf16.mxu0 0
    %455 = vmatpush2.bf16.msra.mxu0 0
    %456 = vmatprep.subr.bf16.mxu0 0
    %457 = vmatpush2.bf16.msra.mxu0 0
    %458 = vmatprep.subr.bf16.mxu0 0
    %459 = vmatpush2.bf16.msra.mxu0 0
    %460 = vmatprep.mubr.bf16.mxu0 0
    %461 = vmatmul.mubr.bf16.gmra.mxu0 %v344
    %v462 = vpop.f32.mrf.mxu0
    %v463 = vadd.f32 %v154, %v462
    %v464 = vpop.f32.mrf.mxu0
    %v465 = vadd.f32 %v158, %v464
    %v466 = vpop.f32.mrf.mxu0
    %v467 = vpop.f32.mrf.mxu0
    %468 = vdwg.mxu0
    %469 = vmatprep.subr.bf16.mxu0 0
    %470 = vmatpush1.bf16.msra.mxu0 0
    %471 = vmatprep.subr.bf16.mxu0 0
    %472 = vmatpush1.bf16.msra.mxu0 0
    %473 = vmatprep.subr.bf16.mxu0 0
    %474 = vmatpush1.bf16.msra.mxu0 0
    %475 = vmatprep.subr.bf16.mxu0 0
    %476 = vmatpush1.bf16.msra.mxu0 0
    %477 = vmatprep.subr.bf16.mxu0 %v309
    %478 = vmatpush1.bf16.msra.mxu0 %v308
    %479 = vmatprep.subr.bf16.mxu0 %v301
    %480 = vmatpush1.bf16.msra.mxu0 %v300
    %481 = vmatprep.subr.bf16.mxu0 %v293
    %482 = vmatpush1.bf16.msra.mxu0 %v292
    %483 = vmatprep.subr.bf16.mxu0 %v285
    %484 = vmatpush1.bf16.msra.mxu0 %v284
    %485 = vmatprep.subr.bf16.mxu0 0
    %486 = vmatpush2.bf16.msra.mxu0 0
    %487 = vmatprep.subr.bf16.mxu0 0
    %488 = vmatpush2.bf16.msra.mxu0 0
    %489 = vmatprep.subr.bf16.mxu0 0
    %490 = vmatpush2.bf16.msra.mxu0 0
    %491 = vmatprep.subr.bf16.mxu0 0
    %492 = vmatpush2.bf16.msra.mxu0 0
    %493 = vmatprep.subr.bf16.mxu0 0
    %494 = vmatpush2.bf16.msra.mxu0 0
    %495 = vmatprep.subr.bf16.mxu0 0
    %496 = vmatpush2.bf16.msra.mxu0 0
    %497 = vmatprep.subr.bf16.mxu0 0
    %498 = vmatpush2.bf16.msra.mxu0 0
    %499 = vmatprep.subr.bf16.mxu0 0
    %500 = vmatpush2.bf16.msra.mxu0 0
    %501 = vmatprep.mubr.bf16.mxu0 0
    %502 = vmatmul.mubr.bf16.gmra.mxu0 %v344
    %v503 = vpop.f32.mrf.mxu0
    %v504 = vadd.f32 %v162, %v503
    %v505 = vpop.f32.mrf.mxu0
    %v506 = vadd.f32 %v166, %v505
    %v507 = vpop.f32.mrf.mxu0
    %v508 = vpop.f32.mrf.mxu0
    %509 = vdwg.mxu0
    %v510 = vld [vmem:[%s5] sm:$0xff]
    %v511 = vld [vmem:[%s5 + $0x8] sm:$0xff]
    %v512 = vld [vmem:[%s5 + $0x10] sm:$0xff]
    %v513 = vld [vmem:[%s5 + $0x18] sm:$0xff]
    %v514 = vld [vmem:[%s5 + $0x20] sm:$0xff]
    %v515 = vld [vmem:[%s5 + $0x28] sm:$0xff]
    %v516 = vld [vmem:[%s5 + $0x30] sm:$0xff]
    %v517 = vld [vmem:[%s5 + $0x38] sm:$0xff]
    %v518 = vld [vmem:[%s5 + $0x40] sm:$0xff]
    %v519 = vld [vmem:[%s5 + $0x48] sm:$0xff]
    %v520 = vld [vmem:[%s5 + $0x50] sm:$0xff]
    %v521 = vld [vmem:[%s5 + $0x58] sm:$0xff]
    %v522 = vld [vmem:[%s5 + $0x60] sm:$0xff]
    %v523 = vld [vmem:[%s5 + $0x68] sm:$0xff]
    %v524 = vld [vmem:[%s5 + $0x70] sm:$0xff]
    %v525 = vld [vmem:[%s5 + $0x78] sm:$0xff]
    %v526 = vld [vmem:[%s5 + $0x80] sm:$0xff]
    %v527 = vld [vmem:[%s5 + $0x88] sm:$0xff]
    %v528 = vld [vmem:[%s5 + $0x90] sm:$0xff]
    %v529 = vld [vmem:[%s5 + $0x98] sm:$0xff]
    %v530 = vld [vmem:[%s5 + $0xa0] sm:$0xff]
    %v531 = vld [vmem:[%s5 + $0xa8] sm:$0xff]
    %v532 = vld [vmem:[%s5 + $0xb0] sm:$0xff]
    %v533 = vld [vmem:[%s5 + $0xb8] sm:$0xff]
    %v534 = vld [vmem:[%s5 + $0xc0] sm:$0xff]
    %v535 = vld [vmem:[%s5 + $0xc8] sm:$0xff]
    %v536 = vld [vmem:[%s5 + $0xd0] sm:$0xff]
    %v537 = vld [vmem:[%s5 + $0xd8] sm:$0xff]
    %v538 = vld [vmem:[%s5 + $0xe0] sm:$0xff]
    %v539 = vld [vmem:[%s5 + $0xe8] sm:$0xff]
    %v540 = vld [vmem:[%s5 + $0xf0] sm:$0xff]
    %v541 = vld [vmem:[%s5 + $0xf8] sm:$0xff]
    %v542 = vld [vmem:[%s5 + $0x100] sm:$0xff]
    %v543 = vld [vmem:[%s5 + $0x108] sm:$0xff]
    %v544 = vld [vmem:[%s5 + $0x110] sm:$0xff]
    %v545 = vld [vmem:[%s5 + $0x118] sm:$0xff]
    %v546 = vld [vmem:[%s5 + $0x120] sm:$0xff]
    %v547 = vld [vmem:[%s5 + $0x128] sm:$0xff]
    %v548 = vld [vmem:[%s5 + $0x130] sm:$0xff]
    %v549 = vld [vmem:[%s5 + $0x138] sm:$0xff]
    %v550 = vld [vmem:[%s5 + $0x140] sm:$0xff]
    %v551 = vld [vmem:[%s5 + $0x148] sm:$0xff]
    %v552 = vld [vmem:[%s5 + $0x150] sm:$0xff]
    %v553 = vld [vmem:[%s5 + $0x158] sm:$0xff]
    %v554 = vld [vmem:[%s5 + $0x160] sm:$0xff]
    %v555 = vld [vmem:[%s5 + $0x168] sm:$0xff]
    %v556 = vld [vmem:[%s5 + $0x170] sm:$0xff]
    %v557 = vld [vmem:[%s5 + $0x178] sm:$0xff]
    %v558 = vld [vmem:[%s5 + $0x180] sm:$0xff]
    %v559 = vld [vmem:[%s5 + $0x188] sm:$0xff]
    %v560 = vld [vmem:[%s5 + $0x190] sm:$0xff]
    %v561 = vld [vmem:[%s5 + $0x198] sm:$0xff]
    %v562 = vld [vmem:[%s5 + $0x1a0] sm:$0xff]
    %v563 = vld [vmem:[%s5 + $0x1a8] sm:$0xff]
    %v564 = vld [vmem:[%s5 + $0x1b0] sm:$0xff]
    %v565 = vld [vmem:[%s5 + $0x1b8] sm:$0xff]
    %v566 = vld [vmem:[%s5 + $0x1c0] sm:$0xff]
    %v567 = vld [vmem:[%s5 + $0x1c8] sm:$0xff]
    %v568 = vld [vmem:[%s5 + $0x1d0] sm:$0xff]
    %v569 = vld [vmem:[%s5 + $0x1d8] sm:$0xff]
    %v570 = vld [vmem:[%s5 + $0x1e0] sm:$0xff]
    %v571 = vld [vmem:[%s5 + $0x1e8] sm:$0xff]
    %v572 = vld [vmem:[%s5 + $0x1f0] sm:$0xff]
    %v573 = vld [vmem:[%s5 + $0x1f8] sm:$0xff]
    %v574 = vld [vmem:[%s5 + $0x200] sm:$0xff]
    %v575 = vld [vmem:[%s5 + $0x208] sm:$0xff]
    %v576 = vld [vmem:[%s5 + $0x210] sm:$0xff]
    %v577 = vld [vmem:[%s5 + $0x218] sm:$0xff]
    %v578 = vld [vmem:[%s5 + $0x220] sm:$0xff]
    %v579 = vld [vmem:[%s5 + $0x228] sm:$0xff]
    %v580 = vld [vmem:[%s5 + $0x230] sm:$0xff]
    %v581 = vld [vmem:[%s5 + $0x238] sm:$0xff]
    %v582 = vld [vmem:[%s5 + $0x240] sm:$0xff]
    %v583 = vld [vmem:[%s5 + $0x248] sm:$0xff]
    %v584 = vld [vmem:[%s5 + $0x250] sm:$0xff]
    %v585 = vld [vmem:[%s5 + $0x258] sm:$0xff]
    %v586 = vld [vmem:[%s5 + $0x260] sm:$0xff]
    %v587 = vld [vmem:[%s5 + $0x268] sm:$0xff]
    %v588 = vld [vmem:[%s5 + $0x270] sm:$0xff]
    %v589 = vld [vmem:[%s5 + $0x278] sm:$0xff]
    %v590 = vld [vmem:[%s5 + $0x280] sm:$0xff]
    %v591 = vld [vmem:[%s5 + $0x288] sm:$0xff]
    %v592 = vld [vmem:[%s5 + $0x290] sm:$0xff]
    %v593 = vld [vmem:[%s5 + $0x298] sm:$0xff]
    %v594 = vld [vmem:[%s5 + $0x2a0] sm:$0xff]
    %v595 = vld [vmem:[%s5 + $0x2a8] sm:$0xff]
    %v596 = vld [vmem:[%s5 + $0x2b0] sm:$0xff]
    %v597 = vld [vmem:[%s5 + $0x2b8] sm:$0xff]
    %v598 = vld [vmem:[%s5 + $0x2c0] sm:$0xff]
    %v599 = vld [vmem:[%s5 + $0x2c8] sm:$0xff]
    %v600 = vld [vmem:[%s5 + $0x2d0] sm:$0xff]
    %v601 = vld [vmem:[%s5 + $0x2d8] sm:$0xff]
    %v602 = vld [vmem:[%s5 + $0x2e0] sm:$0xff]
    %v603 = vld [vmem:[%s5 + $0x2e8] sm:$0xff]
    %v604 = vld [vmem:[%s5 + $0x2f0] sm:$0xff]
    %v605 = vld [vmem:[%s5 + $0x2f8] sm:$0xff]
    %v606 = vld [vmem:[%s5 + $0x300] sm:$0xff]
    %v607 = vld [vmem:[%s5 + $0x308] sm:$0xff]
    %v608 = vld [vmem:[%s5 + $0x310] sm:$0xff]
    %v609 = vld [vmem:[%s5 + $0x318] sm:$0xff]
    %v610 = vld [vmem:[%s5 + $0x320] sm:$0xff]
    %v611 = vld [vmem:[%s5 + $0x328] sm:$0xff]
    %v612 = vld [vmem:[%s5 + $0x330] sm:$0xff]
    %v613 = vld [vmem:[%s5 + $0x338] sm:$0xff]
    %v614 = vld [vmem:[%s5 + $0x340] sm:$0xff]
    %v615 = vld [vmem:[%s5 + $0x348] sm:$0xff]
    %v616 = vld [vmem:[%s5 + $0x350] sm:$0xff]
    %v617 = vld [vmem:[%s5 + $0x358] sm:$0xff]
    %v618 = vld [vmem:[%s5 + $0x360] sm:$0xff]
    %v619 = vld [vmem:[%s5 + $0x368] sm:$0xff]
    %v620 = vld [vmem:[%s5 + $0x370] sm:$0xff]
    %v621 = vld [vmem:[%s5 + $0x378] sm:$0xff]
    %v622 = vld [vmem:[%s5 + $0x380] sm:$0xff]
    %v623 = vld [vmem:[%s5 + $0x388] sm:$0xff]
    %v624 = vld [vmem:[%s5 + $0x390] sm:$0xff]
    %v625 = vld [vmem:[%s5 + $0x398] sm:$0xff]
    %v626 = vld [vmem:[%s5 + $0x3a0] sm:$0xff]
    %v627 = vld [vmem:[%s5 + $0x3a8] sm:$0xff]
    %v628 = vld [vmem:[%s5 + $0x3b0] sm:$0xff]
    %v629 = vld [vmem:[%s5 + $0x3b8] sm:$0xff]
    %v630 = vld [vmem:[%s5 + $0x3c0] sm:$0xff]
    %v631 = vld [vmem:[%s5 + $0x3c8] sm:$0xff]
    %v632 = vld [vmem:[%s5 + $0x3d0] sm:$0xff]
    %v633 = vld [vmem:[%s5 + $0x3d8] sm:$0xff]
    %v634 = vld [vmem:[%s5 + $0x3e0] sm:$0xff]
    %v635 = vld [vmem:[%s5 + $0x3e8] sm:$0xff]
    %v636 = vld [vmem:[%s5 + $0x3f0] sm:$0xff]
    %v637 = vld [vmem:[%s5 + $0x3f8] sm:$0xff]
    %v638 = vld [vmem:[%s5 + $0x400] sm:$0xff]
    %v639 = vld [vmem:[%s5 + $0x408] sm:$0xff]
    %v640 = vld [vmem:[%s5 + $0x410] sm:$0xff]
    %v641 = vld [vmem:[%s5 + $0x418] sm:$0xff]
    %v642 = vld [vmem:[%s5 + $0x420] sm:$0xff]
    %v643 = vld [vmem:[%s5 + $0x428] sm:$0xff]
    %v644 = vld [vmem:[%s5 + $0x430] sm:$0xff]
    %v645 = vld [vmem:[%s5 + $0x438] sm:$0xff]
    %v646 = vld [vmem:[%s5 + $0x440] sm:$0xff]
    %v647 = vld [vmem:[%s5 + $0x448] sm:$0xff]
    %v648 = vld [vmem:[%s5 + $0x450] sm:$0xff]
    %v649 = vld [vmem:[%s5 + $0x458] sm:$0xff]
    %v650 = vld [vmem:[%s5 + $0x460] sm:$0xff]
    %v651 = vld [vmem:[%s5 + $0x468] sm:$0xff]
    %v652 = vld [vmem:[%s5 + $0x470] sm:$0xff]
    %v653 = vld [vmem:[%s5 + $0x478] sm:$0xff]
    %v654 = vld [vmem:[%s5 + $0x480] sm:$0xff]
    %v655 = vld [vmem:[%s5 + $0x488] sm:$0xff]
    %v656 = vld [vmem:[%s5 + $0x490] sm:$0xff]
    %v657 = vld [vmem:[%s5 + $0x498] sm:$0xff]
    %v658 = vld [vmem:[%s5 + $0x4a0] sm:$0xff]
    %v659 = vld [vmem:[%s5 + $0x4a8] sm:$0xff]
    %v660 = vld [vmem:[%s5 + $0x4b0] sm:$0xff]
    %v661 = vld [vmem:[%s5 + $0x4b8] sm:$0xff]
    %v662 = vld [vmem:[%s5 + $0x4c0] sm:$0xff]
    %v663 = vld [vmem:[%s5 + $0x4c8] sm:$0xff]
    %v664 = vld [vmem:[%s5 + $0x4d0] sm:$0xff]
    %v665 = vld [vmem:[%s5 + $0x4d8] sm:$0xff]
    %v666 = vld [vmem:[%s5 + $0x4e0] sm:$0xff]
    %v667 = vld [vmem:[%s5 + $0x4e8] sm:$0xff]
    %v668 = vld [vmem:[%s5 + $0x4f0] sm:$0xff]
    %v669 = vld [vmem:[%s5 + $0x4f8] sm:$0xff]
    %v670 = vld [vmem:[%s5 + $0x500] sm:$0xff]
    %v671 = vld [vmem:[%s5 + $0x508] sm:$0xff]
    %v672 = vld [vmem:[%s5 + $0x510] sm:$0xff]
    %v673 = vld [vmem:[%s5 + $0x518] sm:$0xff]
    %v674 = vld [vmem:[%s5 + $0x520] sm:$0xff]
    %v675 = vld [vmem:[%s5 + $0x528] sm:$0xff]
    %v676 = vld [vmem:[%s5 + $0x530] sm:$0xff]
    %v677 = vld [vmem:[%s5 + $0x538] sm:$0xff]
    %v678 = vld [vmem:[%s5 + $0x540] sm:$0xff]
    %v679 = vld [vmem:[%s5 + $0x548] sm:$0xff]
    %v680 = vld [vmem:[%s5 + $0x550] sm:$0xff]
    %v681 = vld [vmem:[%s5 + $0x558] sm:$0xff]
    %v682 = vld [vmem:[%s5 + $0x560] sm:$0xff]
    %v683 = vld [vmem:[%s5 + $0x568] sm:$0xff]
    %v684 = vld [vmem:[%s5 + $0x570] sm:$0xff]
    %v685 = vld [vmem:[%s5 + $0x578] sm:$0xff]
    %v686 = vld [vmem:[%s5 + $0x580] sm:$0xff]
    %v687 = vld [vmem:[%s5 + $0x588] sm:$0xff]
    %v688 = vld [vmem:[%s5 + $0x590] sm:$0xff]
    %v689 = vld [vmem:[%s5 + $0x598] sm:$0xff]
    %v690 = vld [vmem:[%s5 + $0x5a0] sm:$0xff]
    %v691 = vld [vmem:[%s5 + $0x5a8] sm:$0xff]
    %v692 = vld [vmem:[%s5 + $0x5b0] sm:$0xff]
    %v693 = vld [vmem:[%s5 + $0x5b8] sm:$0xff]
    %v694 = vld [vmem:[%s5 + $0x5c0] sm:$0xff]
    %v695 = vld [vmem:[%s5 + $0x5c8] sm:$0xff]
    %v696 = vld [vmem:[%s5 + $0x5d0] sm:$0xff]
    %v697 = vld [vmem:[%s5 + $0x5d8] sm:$0xff]
    %v698 = vld [vmem:[%s5 + $0x5e0] sm:$0xff]
    %v699 = vld [vmem:[%s5 + $0x5e8] sm:$0xff]
    %v700 = vld [vmem:[%s5 + $0x5f0] sm:$0xff]
    %v701 = vld [vmem:[%s5 + $0x5f8] sm:$0xff]
    %v702 = vld [vmem:[%s5 + $0x600] sm:$0xff]
    %v703 = vld [vmem:[%s5 + $0x608] sm:$0xff]
    %v704 = vld [vmem:[%s5 + $0x610] sm:$0xff]
    %v705 = vld [vmem:[%s5 + $0x618] sm:$0xff]
    %v706 = vld [vmem:[%s5 + $0x620] sm:$0xff]
    %v707 = vld [vmem:[%s5 + $0x628] sm:$0xff]
    %v708 = vld [vmem:[%s5 + $0x630] sm:$0xff]
    %v709 = vld [vmem:[%s5 + $0x638] sm:$0xff]
    %v710 = vld [vmem:[%s5 + $0x640] sm:$0xff]
    %v711 = vld [vmem:[%s5 + $0x648] sm:$0xff]
    %v712 = vld [vmem:[%s5 + $0x650] sm:$0xff]
    %v713 = vld [vmem:[%s5 + $0x658] sm:$0xff]
    %v714 = vld [vmem:[%s5 + $0x660] sm:$0xff]
    %v715 = vld [vmem:[%s5 + $0x668] sm:$0xff]
    %v716 = vld [vmem:[%s5 + $0x670] sm:$0xff]
    %v717 = vld [vmem:[%s5 + $0x678] sm:$0xff]
    %v718 = vld [vmem:[%s5 + $0x680] sm:$0xff]
    %v719 = vld [vmem:[%s5 + $0x688] sm:$0xff]
    %v720 = vld [vmem:[%s5 + $0x690] sm:$0xff]
    %v721 = vld [vmem:[%s5 + $0x698] sm:$0xff]
    %v722 = vld [vmem:[%s5 + $0x6a0] sm:$0xff]
    %v723 = vld [vmem:[%s5 + $0x6a8] sm:$0xff]
    %v724 = vld [vmem:[%s5 + $0x6b0] sm:$0xff]
    %v725 = vld [vmem:[%s5 + $0x6b8] sm:$0xff]
    %v726 = vld [vmem:[%s5 + $0x6c0] sm:$0xff]
    %v727 = vld [vmem:[%s5 + $0x6c8] sm:$0xff]
    %v728 = vld [vmem:[%s5 + $0x6d0] sm:$0xff]
    %v729 = vld [vmem:[%s5 + $0x6d8] sm:$0xff]
    %v730 = vld [vmem:[%s5 + $0x6e0] sm:$0xff]
    %v731 = vld [vmem:[%s5 + $0x6e8] sm:$0xff]
    %v732 = vld [vmem:[%s5 + $0x6f0] sm:$0xff]
    %v733 = vld [vmem:[%s5 + $0x6f8] sm:$0xff]
    %v734 = vld [vmem:[%s5 + $0x700] sm:$0xff]
    %v735 = vld [vmem:[%s5 + $0x708] sm:$0xff]
    %v736 = vld [vmem:[%s5 + $0x710] sm:$0xff]
    %v737 = vld [vmem:[%s5 + $0x718] sm:$0xff]
    %v738 = vld [vmem:[%s5 + $0x720] sm:$0xff]
    %v739 = vld [vmem:[%s5 + $0x728] sm:$0xff]
    %v740 = vld [vmem:[%s5 + $0x730] sm:$0xff]
    %v741 = vld [vmem:[%s5 + $0x738] sm:$0xff]
    %v742 = vld [vmem:[%s5 + $0x740] sm:$0xff]
    %v743 = vld [vmem:[%s5 + $0x748] sm:$0xff]
    %v744 = vld [vmem:[%s5 + $0x750] sm:$0xff]
    %v745 = vld [vmem:[%s5 + $0x758] sm:$0xff]
    %v746 = vld [vmem:[%s5 + $0x760] sm:$0xff]
    %v747 = vld [vmem:[%s5 + $0x768] sm:$0xff]
    %v748 = vld [vmem:[%s5 + $0x770] sm:$0xff]
    %v749 = vld [vmem:[%s5 + $0x778] sm:$0xff]
    %v750 = vld [vmem:[%s5 + $0x780] sm:$0xff]
    %v751 = vld [vmem:[%s5 + $0x788] sm:$0xff]
    %v752 = vld [vmem:[%s5 + $0x790] sm:$0xff]
    %v753 = vld [vmem:[%s5 + $0x798] sm:$0xff]
    %v754 = vld [vmem:[%s5 + $0x7a0] sm:$0xff]
    %v755 = vld [vmem:[%s5 + $0x7a8] sm:$0xff]
    %v756 = vld [vmem:[%s5 + $0x7b0] sm:$0xff]
    %v757 = vld [vmem:[%s5 + $0x7b8] sm:$0xff]
    %v758 = vld [vmem:[%s5 + $0x7c0] sm:$0xff]
    %v759 = vld [vmem:[%s5 + $0x7c8] sm:$0xff]
    %v760 = vld [vmem:[%s5 + $0x7d0] sm:$0xff]
    %v761 = vld [vmem:[%s5 + $0x7d8] sm:$0xff]
    %v762 = vld [vmem:[%s5 + $0x7e0] sm:$0xff]
    %v763 = vld [vmem:[%s5 + $0x7e8] sm:$0xff]
    %v764 = vld [vmem:[%s5 + $0x7f0] sm:$0xff]
    %v765 = vld [vmem:[%s5 + $0x7f8] sm:$0xff]
    %v766 = vld [vmem:[%s5 + $0x800] sm:$0xff]
    %v767 = vld [vmem:[%s5 + $0x808] sm:$0xff]
    %v768 = vld [vmem:[%s5 + $0x810] sm:$0xff]
    %v769 = vld [vmem:[%s5 + $0x818] sm:$0xff]
    %v770 = vld [vmem:[%s5 + $0x820] sm:$0xff]
    %v771 = vld [vmem:[%s5 + $0x828] sm:$0xff]
    %v772 = vld [vmem:[%s5 + $0x830] sm:$0xff]
    %v773 = vld [vmem:[%s5 + $0x838] sm:$0xff]
    %v774 = vld [vmem:[%s5 + $0x840] sm:$0xff]
    %v775 = vld [vmem:[%s5 + $0x848] sm:$0xff]
    %v776 = vld [vmem:[%s5 + $0x850] sm:$0xff]
    %v777 = vld [vmem:[%s5 + $0x858] sm:$0xff]
    %v778 = vld [vmem:[%s5 + $0x860] sm:$0xff]
    %v779 = vld [vmem:[%s5 + $0x868] sm:$0xff]
    %v780 = vld [vmem:[%s5 + $0x870] sm:$0xff]
    %v781 = vld [vmem:[%s5 + $0x878] sm:$0xff]
    %v782 = vld [vmem:[%s5 + $0x880] sm:$0xff]
    %v783 = vld [vmem:[%s5 + $0x888] sm:$0xff]
    %v784 = vld [vmem:[%s5 + $0x890] sm:$0xff]
    %v785 = vld [vmem:[%s5 + $0x898] sm:$0xff]
    %v786 = vld [vmem:[%s5 + $0x8a0] sm:$0xff]
    %v787 = vld [vmem:[%s5 + $0x8a8] sm:$0xff]
    %v788 = vld [vmem:[%s5 + $0x8b0] sm:$0xff]
    %v789 = vld [vmem:[%s5 + $0x8b8] sm:$0xff]
    %v790 = vld [vmem:[%s5 + $0x8c0] sm:$0xff]
    %v791 = vld [vmem:[%s5 + $0x8c8] sm:$0xff]
    %v792 = vld [vmem:[%s5 + $0x8d0] sm:$0xff]
    %v793 = vld [vmem:[%s5 + $0x8d8] sm:$0xff]
    %v794 = vld [vmem:[%s5 + $0x8e0] sm:$0xff]
    %v795 = vld [vmem:[%s5 + $0x8e8] sm:$0xff]
    %v796 = vld [vmem:[%s5 + $0x8f0] sm:$0xff]
    %v797 = vld [vmem:[%s5 + $0x8f8] sm:$0xff]
    %v798 = vld [vmem:[%s5 + $0x900] sm:$0xff]
    %v799 = vld [vmem:[%s5 + $0x908] sm:$0xff]
    %v800 = vld [vmem:[%s5 + $0x910] sm:$0xff]
    %v801 = vld [vmem:[%s5 + $0x918] sm:$0xff]
    %v802 = vld [vmem:[%s5 + $0x920] sm:$0xff]
    %v803 = vld [vmem:[%s5 + $0x928] sm:$0xff]
    %v804 = vld [vmem:[%s5 + $0x930] sm:$0xff]
    %v805 = vld [vmem:[%s5 + $0x938] sm:$0xff]
    %v806 = vld [vmem:[%s5 + $0x940] sm:$0xff]
    %v807 = vld [vmem:[%s5 + $0x948] sm:$0xff]
    %v808 = vld [vmem:[%s5 + $0x950] sm:$0xff]
    %v809 = vld [vmem:[%s5 + $0x958] sm:$0xff]
    %v810 = vld [vmem:[%s5 + $0x960] sm:$0xff]
    %v811 = vld [vmem:[%s5 + $0x968] sm:$0xff]
    %v812 = vld [vmem:[%s5 + $0x970] sm:$0xff]
    %v813 = vld [vmem:[%s5 + $0x978] sm:$0xff]
    %v814 = vld [vmem:[%s5 + $0x980] sm:$0xff]
    %v815 = vld [vmem:[%s5 + $0x988] sm:$0xff]
    %v816 = vld [vmem:[%s5 + $0x990] sm:$0xff]
    %v817 = vld [vmem:[%s5 + $0x998] sm:$0xff]
    %v818 = vld [vmem:[%s5 + $0x9a0] sm:$0xff]
    %v819 = vld [vmem:[%s5 + $0x9a8] sm:$0xff]
    %v820 = vld [vmem:[%s5 + $0x9b0] sm:$0xff]
    %v821 = vld [vmem:[%s5 + $0x9b8] sm:$0xff]
    %v822 = vld [vmem:[%s5 + $0x9c0] sm:$0xff]
    %v823 = vld [vmem:[%s5 + $0x9c8] sm:$0xff]
    %v824 = vld [vmem:[%s5 + $0x9d0] sm:$0xff]
    %v825 = vld [vmem:[%s5 + $0x9d8] sm:$0xff]
    %v826 = vld [vmem:[%s5 + $0x9e0] sm:$0xff]
    %v827 = vld [vmem:[%s5 + $0x9e8] sm:$0xff]
    %v828 = vld [vmem:[%s5 + $0x9f0] sm:$0xff]
    %v829 = vld [vmem:[%s5 + $0x9f8] sm:$0xff]
    %v830 = vld [vmem:[%s5 + $0xa00] sm:$0xff]
    %v831 = vld [vmem:[%s5 + $0xa08] sm:$0xff]
    %v832 = vld [vmem:[%s5 + $0xa10] sm:$0xff]
    %v833 = vld [vmem:[%s5 + $0xa18] sm:$0xff]
    %v834 = vld [vmem:[%s5 + $0xa20] sm:$0xff]
    %v835 = vld [vmem:[%s5 + $0xa28] sm:$0xff]
    %v836 = vld [vmem:[%s5 + $0xa30] sm:$0xff]
    %v837 = vld [vmem:[%s5 + $0xa38] sm:$0xff]
    %v838 = vld [vmem:[%s5 + $0xa40] sm:$0xff]
    %v839 = vld [vmem:[%s5 + $0xa48] sm:$0xff]
    %v840 = vld [vmem:[%s5 + $0xa50] sm:$0xff]
    %v841 = vld [vmem:[%s5 + $0xa58] sm:$0xff]
    %v842 = vld [vmem:[%s5 + $0xa60] sm:$0xff]
    %v843 = vld [vmem:[%s5 + $0xa68] sm:$0xff]
    %v844 = vld [vmem:[%s5 + $0xa70] sm:$0xff]
    %v845 = vld [vmem:[%s5 + $0xa78] sm:$0xff]
    %v846 = vld [vmem:[%s5 + $0xa80] sm:$0xff]
    %v847 = vld [vmem:[%s5 + $0xa88] sm:$0xff]
    %v848 = vld [vmem:[%s5 + $0xa90] sm:$0xff]
    %v849 = vld [vmem:[%s5 + $0xa98] sm:$0xff]
    %v850 = vld [vmem:[%s5 + $0xaa0] sm:$0xff]
    %v851 = vld [vmem:[%s5 + $0xaa8] sm:$0xff]
    %v852 = vld [vmem:[%s5 + $0xab0] sm:$0xff]
    %v853 = vld [vmem:[%s5 + $0xab8] sm:$0xff]
    %v854 = vld [vmem:[%s5 + $0xac0] sm:$0xff]
    %v855 = vld [vmem:[%s5 + $0xac8] sm:$0xff]
    %v856 = vld [vmem:[%s5 + $0xad0] sm:$0xff]
    %v857 = vld [vmem:[%s5 + $0xad8] sm:$0xff]
    %v858 = vld [vmem:[%s5 + $0xae0] sm:$0xff]
    %v859 = vld [vmem:[%s5 + $0xae8] sm:$0xff]
    %v860 = vld [vmem:[%s5 + $0xaf0] sm:$0xff]
    %v861 = vld [vmem:[%s5 + $0xaf8] sm:$0xff]
    %v862 = vld [vmem:[%s5 + $0xb00] sm:$0xff]
    %v863 = vld [vmem:[%s5 + $0xb08] sm:$0xff]
    %v864 = vld [vmem:[%s5 + $0xb10] sm:$0xff]
    %v865 = vld [vmem:[%s5 + $0xb18] sm:$0xff]
    %v866 = vld [vmem:[%s5 + $0xb20] sm:$0xff]
    %v867 = vld [vmem:[%s5 + $0xb28] sm:$0xff]
    %v868 = vld [vmem:[%s5 + $0xb30] sm:$0xff]
    %v869 = vld [vmem:[%s5 + $0xb38] sm:$0xff]
    %v870 = vld [vmem:[%s5 + $0xb40] sm:$0xff]
    %v871 = vld [vmem:[%s5 + $0xb48] sm:$0xff]
    %v872 = vld [vmem:[%s5 + $0xb50] sm:$0xff]
    %v873 = vld [vmem:[%s5 + $0xb58] sm:$0xff]
    %v874 = vld [vmem:[%s5 + $0xb60] sm:$0xff]
    %v875 = vld [vmem:[%s5 + $0xb68] sm:$0xff]
    %v876 = vld [vmem:[%s5 + $0xb70] sm:$0xff]
    %v877 = vld [vmem:[%s5 + $0xb78] sm:$0xff]
    %v878 = vld [vmem:[%s5 + $0xb80] sm:$0xff]
    %v879 = vld [vmem:[%s5 + $0xb88] sm:$0xff]
    %v880 = vld [vmem:[%s5 + $0xb90] sm:$0xff]
    %v881 = vld [vmem:[%s5 + $0xb98] sm:$0xff]
    %v882 = vld [vmem:[%s5 + $0xba0] sm:$0xff]
    %v883 = vld [vmem:[%s5 + $0xba8] sm:$0xff]
    %v884 = vld [vmem:[%s5 + $0xbb0] sm:$0xff]
    %v885 = vld [vmem:[%s5 + $0xbb8] sm:$0xff]
    %v886 = vld [vmem:[%s5 + $0xbc0] sm:$0xff]
    %v887 = vld [vmem:[%s5 + $0xbc8] sm:$0xff]
    %v888 = vld [vmem:[%s5 + $0xbd0] sm:$0xff]
    %v889 = vld [vmem:[%s5 + $0xbd8] sm:$0xff]
    %v890 = vld [vmem:[%s5 + $0xbe0] sm:$0xff]
    %v891 = vld [vmem:[%s5 + $0xbe8] sm:$0xff]
    %v892 = vld [vmem:[%s5 + $0xbf0] sm:$0xff]
    %v893 = vld [vmem:[%s5 + $0xbf8] sm:$0xff]
    %v894 = vld [vmem:[%s5 + $0xc00] sm:$0xff]
    %v895 = vld [vmem:[%s5 + $0xc08] sm:$0xff]
    %v896 = vld [vmem:[%s5 + $0xc10] sm:$0xff]
    %v897 = vld [vmem:[%s5 + $0xc18] sm:$0xff]
    %v898 = vld [vmem:[%s5 + $0xc20] sm:$0xff]
    %v899 = vld [vmem:[%s5 + $0xc28] sm:$0xff]
    %v900 = vld [vmem:[%s5 + $0xc30] sm:$0xff]
    %v901 = vld [vmem:[%s5 + $0xc38] sm:$0xff]
    %v902 = vld [vmem:[%s5 + $0xc40] sm:$0xff]
    %v903 = vld [vmem:[%s5 + $0xc48] sm:$0xff]
    %v904 = vld [vmem:[%s5 + $0xc50] sm:$0xff]
    %v905 = vld [vmem:[%s5 + $0xc58] sm:$0xff]
    %v906 = vld [vmem:[%s5 + $0xc60] sm:$0xff]
    %v907 = vld [vmem:[%s5 + $0xc68] sm:$0xff]
    %v908 = vld [vmem:[%s5 + $0xc70] sm:$0xff]
    %v909 = vld [vmem:[%s5 + $0xc78] sm:$0xff]
    %v910 = vld [vmem:[%s5 + $0xc80] sm:$0xff]
    %v911 = vld [vmem:[%s5 + $0xc88] sm:$0xff]
    %v912 = vld [vmem:[%s5 + $0xc90] sm:$0xff]
    %v913 = vld [vmem:[%s5 + $0xc98] sm:$0xff]
    %v914 = vld [vmem:[%s5 + $0xca0] sm:$0xff]
    %v915 = vld [vmem:[%s5 + $0xca8] sm:$0xff]
    %v916 = vld [vmem:[%s5 + $0xcb0] sm:$0xff]
    %v917 = vld [vmem:[%s5 + $0xcb8] sm:$0xff]
    %v918 = vld [vmem:[%s5 + $0xcc0] sm:$0xff]
    %v919 = vld [vmem:[%s5 + $0xcc8] sm:$0xff]
    %v920 = vld [vmem:[%s5 + $0xcd0] sm:$0xff]
    %v921 = vld [vmem:[%s5 + $0xcd8] sm:$0xff]
    %v922 = vld [vmem:[%s5 + $0xce0] sm:$0xff]
    %v923 = vld [vmem:[%s5 + $0xce8] sm:$0xff]
    %v924 = vld [vmem:[%s5 + $0xcf0] sm:$0xff]
    %v925 = vld [vmem:[%s5 + $0xcf8] sm:$0xff]
    %v926 = vld [vmem:[%s5 + $0xd00] sm:$0xff]
    %v927 = vld [vmem:[%s5 + $0xd08] sm:$0xff]
    %v928 = vld [vmem:[%s5 + $0xd10] sm:$0xff]
    %v929 = vld [vmem:[%s5 + $0xd18] sm:$0xff]
    %v930 = vld [vmem:[%s5 + $0xd20] sm:$0xff]
    %v931 = vld [vmem:[%s5 + $0xd28] sm:$0xff]
    %v932 = vld [vmem:[%s5 + $0xd30] sm:$0xff]
    %v933 = vld [vmem:[%s5 + $0xd38] sm:$0xff]
    %v934 = vld [vmem:[%s5 + $0xd40] sm:$0xff]
    %v935 = vld [vmem:[%s5 + $0xd48] sm:$0xff]
    %v936 = vld [vmem:[%s5 + $0xd50] sm:$0xff]
    %v937 = vld [vmem:[%s5 + $0xd58] sm:$0xff]
    %v938 = vld [vmem:[%s5 + $0xd60] sm:$0xff]
    %v939 = vld [vmem:[%s5 + $0xd68] sm:$0xff]
    %v940 = vld [vmem:[%s5 + $0xd70] sm:$0xff]
    %v941 = vld [vmem:[%s5 + $0xd78] sm:$0xff]
    %v942 = vld [vmem:[%s5 + $0xd80] sm:$0xff]
    %v943 = vld [vmem:[%s5 + $0xd88] sm:$0xff]
    %v944 = vld [vmem:[%s5 + $0xd90] sm:$0xff]
    %v945 = vld [vmem:[%s5 + $0xd98] sm:$0xff]
    %v946 = vld [vmem:[%s5 + $0xda0] sm:$0xff]
    %v947 = vld [vmem:[%s5 + $0xda8] sm:$0xff]
    %v948 = vld [vmem:[%s5 + $0xdb0] sm:$0xff]
    %v949 = vld [vmem:[%s5 + $0xdb8] sm:$0xff]
    %v950 = vld [vmem:[%s5 + $0xdc0] sm:$0xff]
    %v951 = vld [vmem:[%s5 + $0xdc8] sm:$0xff]
    %v952 = vld [vmem:[%s5 + $0xdd0] sm:$0xff]
    %v953 = vld [vmem:[%s5 + $0xdd8] sm:$0xff]
    %v954 = vld [vmem:[%s5 + $0xde0] sm:$0xff]
    %v955 = vld [vmem:[%s5 + $0xde8] sm:$0xff]
    %v956 = vld [vmem:[%s5 + $0xdf0] sm:$0xff]
    %v957 = vld [vmem:[%s5 + $0xdf8] sm:$0xff]
    %v958 = vld [vmem:[%s5 + $0xe00] sm:$0xff]
    %v959 = vld [vmem:[%s5 + $0xe08] sm:$0xff]
    %v960 = vld [vmem:[%s5 + $0xe10] sm:$0xff]
    %v961 = vld [vmem:[%s5 + $0xe18] sm:$0xff]
    %v962 = vld [vmem:[%s5 + $0xe20] sm:$0xff]
    %v963 = vld [vmem:[%s5 + $0xe28] sm:$0xff]
    %v964 = vld [vmem:[%s5 + $0xe30] sm:$0xff]
    %v965 = vld [vmem:[%s5 + $0xe38] sm:$0xff]
    %v966 = vld [vmem:[%s5 + $0xe40] sm:$0xff]
    %v967 = vld [vmem:[%s5 + $0xe48] sm:$0xff]
    %v968 = vld [vmem:[%s5 + $0xe50] sm:$0xff]
    %v969 = vld [vmem:[%s5 + $0xe58] sm:$0xff]
    %v970 = vld [vmem:[%s5 + $0xe60] sm:$0xff]
    %v971 = vld [vmem:[%s5 + $0xe68] sm:$0xff]
    %v972 = vld [vmem:[%s5 + $0xe70] sm:$0xff]
    %v973 = vld [vmem:[%s5 + $0xe78] sm:$0xff]
    %v974 = vld [vmem:[%s5 + $0xe80] sm:$0xff]
    %v975 = vld [vmem:[%s5 + $0xe88] sm:$0xff]
    %v976 = vld [vmem:[%s5 + $0xe90] sm:$0xff]
    %v977 = vld [vmem:[%s5 + $0xe98] sm:$0xff]
    %v978 = vld [vmem:[%s5 + $0xea0] sm:$0xff]
    %v979 = vld [vmem:[%s5 + $0xea8] sm:$0xff]
    %v980 = vld [vmem:[%s5 + $0xeb0] sm:$0xff]
    %v981 = vld [vmem:[%s5 + $0xeb8] sm:$0xff]
    %v982 = vld [vmem:[%s5 + $0xec0] sm:$0xff]
    %v983 = vld [vmem:[%s5 + $0xec8] sm:$0xff]
    %v984 = vld [vmem:[%s5 + $0xed0] sm:$0xff]
    %v985 = vld [vmem:[%s5 + $0xed8] sm:$0xff]
    %v986 = vld [vmem:[%s5 + $0xee0] sm:$0xff]
    %v987 = vld [vmem:[%s5 + $0xee8] sm:$0xff]
    %v988 = vld [vmem:[%s5 + $0xef0] sm:$0xff]
    %v989 = vld [vmem:[%s5 + $0xef8] sm:$0xff]
    %v990 = vld [vmem:[%s5 + $0xf00] sm:$0xff]
    %v991 = vld [vmem:[%s5 + $0xf08] sm:$0xff]
    %v992 = vld [vmem:[%s5 + $0xf10] sm:$0xff]
    %v993 = vld [vmem:[%s5 + $0xf18] sm:$0xff]
    %v994 = vld [vmem:[%s5 + $0xf20] sm:$0xff]
    %v995 = vld [vmem:[%s5 + $0xf28] sm:$0xff]
    %v996 = vld [vmem:[%s5 + $0xf30] sm:$0xff]
    %v997 = vld [vmem:[%s5 + $0xf38] sm:$0xff]
    %v998 = vld [vmem:[%s5 + $0xf40] sm:$0xff]
    %v999 = vld [vmem:[%s5 + $0xf48] sm:$0xff]
    %v1000 = vld [vmem:[%s5 + $0xf50] sm:$0xff]
    %v1001 = vld [vmem:[%s5 + $0xf58] sm:$0xff]
    %v1002 = vld [vmem:[%s5 + $0xf60] sm:$0xff]
    %v1003 = vld [vmem:[%s5 + $0xf68] sm:$0xff]
    %v1004 = vld [vmem:[%s5 + $0xf70] sm:$0xff]
    %v1005 = vld [vmem:[%s5 + $0xf78] sm:$0xff]
    %v1006 = vld [vmem:[%s5 + $0xf80] sm:$0xff]
    %v1007 = vld [vmem:[%s5 + $0xf88] sm:$0xff]
    %v1008 = vld [vmem:[%s5 + $0xf90] sm:$0xff]
    %v1009 = vld [vmem:[%s5 + $0xf98] sm:$0xff]
    %v1010 = vld [vmem:[%s5 + $0xfa0] sm:$0xff]
    %v1011 = vld [vmem:[%s5 + $0xfa8] sm:$0xff]
    %v1012 = vld [vmem:[%s5 + $0xfb0] sm:$0xff]
    %v1013 = vld [vmem:[%s5 + $0xfb8] sm:$0xff]
    %v1014 = vld [vmem:[%s5 + $0xfc0] sm:$0xff]
    %v1015 = vld [vmem:[%s5 + $0xfc8] sm:$0xff]
    %v1016 = vld [vmem:[%s5 + $0xfd0] sm:$0xff]
    %v1017 = vld [vmem:[%s5 + $0xfd8] sm:$0xff]
    %v1018 = vld [vmem:[%s5 + $0xfe0] sm:$0xff]
    %v1019 = vld [vmem:[%s5 + $0xfe8] sm:$0xff]
    %v1020 = vld [vmem:[%s5 + $0xff0] sm:$0xff]
    %v1021 = vld [vmem:[%s5 + $0xff8] sm:$0xff]
    %v1022 = vpack.c.bf16 %v381, %v381
    %v1023 = vpack.c.bf16 %v383, %v383
    %v1024 = vpack.c.bf16 %v422, %v422
    %v1025 = vpack.c.bf16 %v424, %v424
    %v1026 = vpack.c.bf16 %v463, %v463
    %v1027 = vpack.c.bf16 %v465, %v465
    %v1028 = vpack.c.bf16 %v504, %v504
    %v1029 = vpack.c.bf16 %v506, %v506
    %v1030 = vld [vmem:[%s6] sm:$0xff]
    %v1032 = vlaneseq
    %v1033 = vshrl.u32 %v1032, 7
    %v1034 = vsub.s32 0, %v1033
    %v1035 = vrot.slane %v1030, %v1034
    %v1036 = vlaneseq
    %v1037 = vshrl.u32 %v1036, 7
    %v1038 = vsub.s32 1, %v1037
    %v1039 = vrot.slane %v1030, %v1038
    %v1040 = vlaneseq
    %v1041 = vshrl.u32 %v1040, 7
    %v1042 = vsub.s32 2, %v1041
    %v1043 = vrot.slane %v1030, %v1042
    %v1044 = vlaneseq
    %v1045 = vshrl.u32 %v1044, 7
    %v1046 = vsub.s32 3, %v1045
    %v1047 = vrot.slane %v1030, %v1046
    %v1048 = vlaneseq
    %v1049 = vshrl.u32 %v1048, 7
    %v1050 = vsub.s32 4, %v1049
    %v1051 = vrot.slane %v1030, %v1050
    %v1052 = vlaneseq
    %v1053 = vshrl.u32 %v1052, 7
    %v1054 = vsub.s32 5, %v1053
    %v1055 = vrot.slane %v1030, %v1054
    %v1056 = vlaneseq
    %v1057 = vshrl.u32 %v1056, 7
    %v1058 = vsub.s32 6, %v1057
    %v1059 = vrot.slane %v1030, %v1058
    %v1060 = vlaneseq
    %v1061 = vshrl.u32 %v1060, 7
    %v1062 = vsub.s32 7, %v1061
    %v1063 = vrot.slane %v1030, %v1062
    %v1584 = vunpack.c.l.b16 %v510
    %v1585 = vunpack.c.h.b16 %v510
    %v1586 = vunpack.c.l.b16 %v511
    %v1587 = vunpack.c.h.b16 %v511
    %v1588 = vunpack.c.l.b16 %v512
    %v1589 = vunpack.c.h.b16 %v512
    %v1590 = vunpack.c.l.b16 %v513
    %v1591 = vunpack.c.h.b16 %v513
    %v1592 = vunpack.c.l.b16 %v514
    %v1593 = vunpack.c.h.b16 %v514
    %v1594 = vunpack.c.l.b16 %v515
    %v1595 = vunpack.c.h.b16 %v515
    %v1596 = vunpack.c.l.b16 %v516
    %v1597 = vunpack.c.h.b16 %v516
    %v1598 = vunpack.c.l.b16 %v517
    %v1599 = vunpack.c.h.b16 %v517
    %v1600 = vunpack.c.l.b16 %v518
    %v1601 = vunpack.c.h.b16 %v518
    %v1602 = vunpack.c.l.b16 %v519
    %v1603 = vunpack.c.h.b16 %v519
    %v1604 = vunpack.c.l.b16 %v520
    %v1605 = vunpack.c.h.b16 %v520
    %v1606 = vunpack.c.l.b16 %v521
    %v1607 = vunpack.c.h.b16 %v521
    %v1608 = vunpack.c.l.b16 %v522
    %v1609 = vunpack.c.h.b16 %v522
    %v1610 = vunpack.c.l.b16 %v523
    %v1611 = vunpack.c.h.b16 %v523
    %v1612 = vunpack.c.l.b16 %v524
    %v1613 = vunpack.c.h.b16 %v524
    %v1614 = vunpack.c.l.b16 %v525
    %v1615 = vunpack.c.h.b16 %v525
    %v1616 = vunpack.c.l.b16 %v526
    %v1617 = vunpack.c.h.b16 %v526
    %v1618 = vunpack.c.l.b16 %v527
    %v1619 = vunpack.c.h.b16 %v527
    %v1620 = vunpack.c.l.b16 %v528
    %v1621 = vunpack.c.h.b16 %v528
    %v1622 = vunpack.c.l.b16 %v529
    %v1623 = vunpack.c.h.b16 %v529
    %v1624 = vunpack.c.l.b16 %v530
    %v1625 = vunpack.c.h.b16 %v530
    %v1626 = vunpack.c.l.b16 %v531
    %v1627 = vunpack.c.h.b16 %v531
    %v1628 = vunpack.c.l.b16 %v532
    %v1629 = vunpack.c.h.b16 %v532
    %v1630 = vunpack.c.l.b16 %v533
    %v1631 = vunpack.c.h.b16 %v533
    %v1632 = vunpack.c.l.b16 %v534
    %v1633 = vunpack.c.h.b16 %v534
    %v1634 = vunpack.c.l.b16 %v535
    %v1635 = vunpack.c.h.b16 %v535
    %v1636 = vunpack.c.l.b16 %v536
    %v1637 = vunpack.c.h.b16 %v536
    %v1638 = vunpack.c.l.b16 %v537
    %v1639 = vunpack.c.h.b16 %v537
    %v1640 = vunpack.c.l.b16 %v538
    %v1641 = vunpack.c.h.b16 %v538
    %v1642 = vunpack.c.l.b16 %v539
    %v1643 = vunpack.c.h.b16 %v539
    %v1644 = vunpack.c.l.b16 %v540
    %v1645 = vunpack.c.h.b16 %v540
    %v1646 = vunpack.c.l.b16 %v541
    %v1647 = vunpack.c.h.b16 %v541
    %v1648 = vunpack.c.l.b16 %v542
    %v1649 = vunpack.c.h.b16 %v542
    %v1650 = vunpack.c.l.b16 %v543
    %v1651 = vunpack.c.h.b16 %v543
    %v1652 = vunpack.c.l.b16 %v544
    %v1653 = vunpack.c.h.b16 %v544
    %v1654 = vunpack.c.l.b16 %v545
    %v1655 = vunpack.c.h.b16 %v545
    %v1656 = vunpack.c.l.b16 %v546
    %v1657 = vunpack.c.h.b16 %v546
    %v1658 = vunpack.c.l.b16 %v547
    %v1659 = vunpack.c.h.b16 %v547
    %v1660 = vunpack.c.l.b16 %v548
    %v1661 = vunpack.c.h.b16 %v548
    %v1662 = vunpack.c.l.b16 %v549
    %v1663 = vunpack.c.h.b16 %v549
    %v1664 = vunpack.c.l.b16 %v550
    %v1665 = vunpack.c.h.b16 %v550
    %v1666 = vunpack.c.l.b16 %v551
    %v1667 = vunpack.c.h.b16 %v551
    %v1668 = vunpack.c.l.b16 %v552
    %v1669 = vunpack.c.h.b16 %v552
    %v1670 = vunpack.c.l.b16 %v553
    %v1671 = vunpack.c.h.b16 %v553
    %v1672 = vunpack.c.l.b16 %v554
    %v1673 = vunpack.c.h.b16 %v554
    %v1674 = vunpack.c.l.b16 %v555
    %v1675 = vunpack.c.h.b16 %v555
    %v1676 = vunpack.c.l.b16 %v556
    %v1677 = vunpack.c.h.b16 %v556
    %v1678 = vunpack.c.l.b16 %v557
    %v1679 = vunpack.c.h.b16 %v557
    %v1680 = vunpack.c.l.b16 %v558
    %v1681 = vunpack.c.h.b16 %v558
    %v1682 = vunpack.c.l.b16 %v559
    %v1683 = vunpack.c.h.b16 %v559
    %v1684 = vunpack.c.l.b16 %v560
    %v1685 = vunpack.c.h.b16 %v560
    %v1686 = vunpack.c.l.b16 %v561
    %v1687 = vunpack.c.h.b16 %v561
    %v1688 = vunpack.c.l.b16 %v562
    %v1689 = vunpack.c.h.b16 %v562
    %v1690 = vunpack.c.l.b16 %v563
    %v1691 = vunpack.c.h.b16 %v563
    %v1692 = vunpack.c.l.b16 %v564
    %v1693 = vunpack.c.h.b16 %v564
    %v1694 = vunpack.c.l.b16 %v565
    %v1695 = vunpack.c.h.b16 %v565
    %v1696 = vunpack.c.l.b16 %v566
    %v1697 = vunpack.c.h.b16 %v566
    %v1698 = vunpack.c.l.b16 %v567
    %v1699 = vunpack.c.h.b16 %v567
    %v1700 = vunpack.c.l.b16 %v568
    %v1701 = vunpack.c.h.b16 %v568
    %v1702 = vunpack.c.l.b16 %v569
    %v1703 = vunpack.c.h.b16 %v569
    %v1704 = vunpack.c.l.b16 %v570
    %v1705 = vunpack.c.h.b16 %v570
    %v1706 = vunpack.c.l.b16 %v571
    %v1707 = vunpack.c.h.b16 %v571
    %v1708 = vunpack.c.l.b16 %v572
    %v1709 = vunpack.c.h.b16 %v572
    %v1710 = vunpack.c.l.b16 %v573
    %v1711 = vunpack.c.h.b16 %v573
    %v1712 = vunpack.c.l.b16 %v574
    %v1713 = vunpack.c.h.b16 %v574
    %v1714 = vunpack.c.l.b16 %v575
    %v1715 = vunpack.c.h.b16 %v575
    %v1716 = vunpack.c.l.b16 %v576
    %v1717 = vunpack.c.h.b16 %v576
    %v1718 = vunpack.c.l.b16 %v577
    %v1719 = vunpack.c.h.b16 %v577
    %v1720 = vunpack.c.l.b16 %v578
    %v1721 = vunpack.c.h.b16 %v578
    %v1722 = vunpack.c.l.b16 %v579
    %v1723 = vunpack.c.h.b16 %v579
    %v1724 = vunpack.c.l.b16 %v580
    %v1725 = vunpack.c.h.b16 %v580
    %v1726 = vunpack.c.l.b16 %v581
    %v1727 = vunpack.c.h.b16 %v581
    %v1728 = vunpack.c.l.b16 %v582
    %v1729 = vunpack.c.h.b16 %v582
    %v1730 = vunpack.c.l.b16 %v583
    %v1731 = vunpack.c.h.b16 %v583
    %v1732 = vunpack.c.l.b16 %v584
    %v1733 = vunpack.c.h.b16 %v584
    %v1734 = vunpack.c.l.b16 %v585
    %v1735 = vunpack.c.h.b16 %v585
    %v1736 = vunpack.c.l.b16 %v586
    %v1737 = vunpack.c.h.b16 %v586
    %v1738 = vunpack.c.l.b16 %v587
    %v1739 = vunpack.c.h.b16 %v587
    %v1740 = vunpack.c.l.b16 %v588
    %v1741 = vunpack.c.h.b16 %v588
    %v1742 = vunpack.c.l.b16 %v589
    %v1743 = vunpack.c.h.b16 %v589
    %v1744 = vunpack.c.l.b16 %v590
    %v1745 = vunpack.c.h.b16 %v590
    %v1746 = vunpack.c.l.b16 %v591
    %v1747 = vunpack.c.h.b16 %v591
    %v1748 = vunpack.c.l.b16 %v592
    %v1749 = vunpack.c.h.b16 %v592
    %v1750 = vunpack.c.l.b16 %v593
    %v1751 = vunpack.c.h.b16 %v593
    %v1752 = vunpack.c.l.b16 %v594
    %v1753 = vunpack.c.h.b16 %v594
    %v1754 = vunpack.c.l.b16 %v595
    %v1755 = vunpack.c.h.b16 %v595
    %v1756 = vunpack.c.l.b16 %v596
    %v1757 = vunpack.c.h.b16 %v596
    %v1758 = vunpack.c.l.b16 %v597
    %v1759 = vunpack.c.h.b16 %v597
    %v1760 = vunpack.c.l.b16 %v598
    %v1761 = vunpack.c.h.b16 %v598
    %v1762 = vunpack.c.l.b16 %v599
    %v1763 = vunpack.c.h.b16 %v599
    %v1764 = vunpack.c.l.b16 %v600
    %v1765 = vunpack.c.h.b16 %v600
    %v1766 = vunpack.c.l.b16 %v601
    %v1767 = vunpack.c.h.b16 %v601
    %v1768 = vunpack.c.l.b16 %v602
    %v1769 = vunpack.c.h.b16 %v602
    %v1770 = vunpack.c.l.b16 %v603
    %v1771 = vunpack.c.h.b16 %v603
    %v1772 = vunpack.c.l.b16 %v604
    %v1773 = vunpack.c.h.b16 %v604
    %v1774 = vunpack.c.l.b16 %v605
    %v1775 = vunpack.c.h.b16 %v605
    %v1776 = vunpack.c.l.b16 %v606
    %v1777 = vunpack.c.h.b16 %v606
    %v1778 = vunpack.c.l.b16 %v607
    %v1779 = vunpack.c.h.b16 %v607
    %v1780 = vunpack.c.l.b16 %v608
    %v1781 = vunpack.c.h.b16 %v608
    %v1782 = vunpack.c.l.b16 %v609
    %v1783 = vunpack.c.h.b16 %v609
    %v1784 = vunpack.c.l.b16 %v610
    %v1785 = vunpack.c.h.b16 %v610
    %v1786 = vunpack.c.l.b16 %v611
    %v1787 = vunpack.c.h.b16 %v611
    %v1788 = vunpack.c.l.b16 %v612
    %v1789 = vunpack.c.h.b16 %v612
    %v1790 = vunpack.c.l.b16 %v613
    %v1791 = vunpack.c.h.b16 %v613
    %v1792 = vunpack.c.l.b16 %v614
    %v1793 = vunpack.c.h.b16 %v614
    %v1794 = vunpack.c.l.b16 %v615
    %v1795 = vunpack.c.h.b16 %v615
    %v1796 = vunpack.c.l.b16 %v616
    %v1797 = vunpack.c.h.b16 %v616
    %v1798 = vunpack.c.l.b16 %v617
    %v1799 = vunpack.c.h.b16 %v617
    %v1800 = vunpack.c.l.b16 %v618
    %v1801 = vunpack.c.h.b16 %v618
    %v1802 = vunpack.c.l.b16 %v619
    %v1803 = vunpack.c.h.b16 %v619
    %v1804 = vunpack.c.l.b16 %v620
    %v1805 = vunpack.c.h.b16 %v620
    %v1806 = vunpack.c.l.b16 %v621
    %v1807 = vunpack.c.h.b16 %v621
    %v1808 = vunpack.c.l.b16 %v622
    %v1809 = vunpack.c.h.b16 %v622
    %v1810 = vunpack.c.l.b16 %v623
    %v1811 = vunpack.c.h.b16 %v623
    %v1812 = vunpack.c.l.b16 %v624
    %v1813 = vunpack.c.h.b16 %v624
    %v1814 = vunpack.c.l.b16 %v625
    %v1815 = vunpack.c.h.b16 %v625
    %v1816 = vunpack.c.l.b16 %v626
    %v1817 = vunpack.c.h.b16 %v626
    %v1818 = vunpack.c.l.b16 %v627
    %v1819 = vunpack.c.h.b16 %v627
    %v1820 = vunpack.c.l.b16 %v628
    %v1821 = vunpack.c.h.b16 %v628
    %v1822 = vunpack.c.l.b16 %v629
    %v1823 = vunpack.c.h.b16 %v629
    %v1824 = vunpack.c.l.b16 %v630
    %v1825 = vunpack.c.h.b16 %v630
    %v1826 = vunpack.c.l.b16 %v631
    %v1827 = vunpack.c.h.b16 %v631
    %v1828 = vunpack.c.l.b16 %v632
    %v1829 = vunpack.c.h.b16 %v632
    %v1830 = vunpack.c.l.b16 %v633
    %v1831 = vunpack.c.h.b16 %v633
    %v1832 = vunpack.c.l.b16 %v634
    %v1833 = vunpack.c.h.b16 %v634
    %v1834 = vunpack.c.l.b16 %v635
    %v1835 = vunpack.c.h.b16 %v635
    %v1836 = vunpack.c.l.b16 %v636
    %v1837 = vunpack.c.h.b16 %v636
    %v1838 = vunpack.c.l.b16 %v637
    %v1839 = vunpack.c.h.b16 %v637
    %v1840 = vunpack.c.l.b16 %v638
    %v1841 = vunpack.c.h.b16 %v638
    %v1842 = vunpack.c.l.b16 %v639
    %v1843 = vunpack.c.h.b16 %v639
    %v1844 = vunpack.c.l.b16 %v640
    %v1845 = vunpack.c.h.b16 %v640
    %v1846 = vunpack.c.l.b16 %v641
    %v1847 = vunpack.c.h.b16 %v641
    %v1848 = vunpack.c.l.b16 %v642
    %v1849 = vunpack.c.h.b16 %v642
    %v1850 = vunpack.c.l.b16 %v643
    %v1851 = vunpack.c.h.b16 %v643
    %v1852 = vunpack.c.l.b16 %v644
    %v1853 = vunpack.c.h.b16 %v644
    %v1854 = vunpack.c.l.b16 %v645
    %v1855 = vunpack.c.h.b16 %v645
    %v1856 = vunpack.c.l.b16 %v646
    %v1857 = vunpack.c.h.b16 %v646
    %v1858 = vunpack.c.l.b16 %v647
    %v1859 = vunpack.c.h.b16 %v647
    %v1860 = vunpack.c.l.b16 %v648
    %v1861 = vunpack.c.h.b16 %v648
    %v1862 = vunpack.c.l.b16 %v649
    %v1863 = vunpack.c.h.b16 %v649
    %v1864 = vunpack.c.l.b16 %v650
    %v1865 = vunpack.c.h.b16 %v650
    %v1866 = vunpack.c.l.b16 %v651
    %v1867 = vunpack.c.h.b16 %v651
    %v1868 = vunpack.c.l.b16 %v652
    %v1869 = vunpack.c.h.b16 %v652
    %v1870 = vunpack.c.l.b16 %v653
    %v1871 = vunpack.c.h.b16 %v653
    %v1872 = vunpack.c.l.b16 %v654
    %v1873 = vunpack.c.h.b16 %v654
    %v1874 = vunpack.c.l.b16 %v655
    %v1875 = vunpack.c.h.b16 %v655
    %v1876 = vunpack.c.l.b16 %v656
    %v1877 = vunpack.c.h.b16 %v656
    %v1878 = vunpack.c.l.b16 %v657
    %v1879 = vunpack.c.h.b16 %v657
    %v1880 = vunpack.c.l.b16 %v658
    %v1881 = vunpack.c.h.b16 %v658
    %v1882 = vunpack.c.l.b16 %v659
    %v1883 = vunpack.c.h.b16 %v659
    %v1884 = vunpack.c.l.b16 %v660
    %v1885 = vunpack.c.h.b16 %v660
    %v1886 = vunpack.c.l.b16 %v661
    %v1887 = vunpack.c.h.b16 %v661
    %v1888 = vunpack.c.l.b16 %v662
    %v1889 = vunpack.c.h.b16 %v662
    %v1890 = vunpack.c.l.b16 %v663
    %v1891 = vunpack.c.h.b16 %v663
    %v1892 = vunpack.c.l.b16 %v664
    %v1893 = vunpack.c.h.b16 %v664
    %v1894 = vunpack.c.l.b16 %v665
    %v1895 = vunpack.c.h.b16 %v665
    %v1896 = vunpack.c.l.b16 %v666
    %v1897 = vunpack.c.h.b16 %v666
    %v1898 = vunpack.c.l.b16 %v667
    %v1899 = vunpack.c.h.b16 %v667
    %v1900 = vunpack.c.l.b16 %v668
    %v1901 = vunpack.c.h.b16 %v668
    %v1902 = vunpack.c.l.b16 %v669
    %v1903 = vunpack.c.h.b16 %v669
    %v1904 = vunpack.c.l.b16 %v670
    %v1905 = vunpack.c.h.b16 %v670
    %v1906 = vunpack.c.l.b16 %v671
    %v1907 = vunpack.c.h.b16 %v671
    %v1908 = vunpack.c.l.b16 %v672
    %v1909 = vunpack.c.h.b16 %v672
    %v1910 = vunpack.c.l.b16 %v673
    %v1911 = vunpack.c.h.b16 %v673
    %v1912 = vunpack.c.l.b16 %v674
    %v1913 = vunpack.c.h.b16 %v674
    %v1914 = vunpack.c.l.b16 %v675
    %v1915 = vunpack.c.h.b16 %v675
    %v1916 = vunpack.c.l.b16 %v676
    %v1917 = vunpack.c.h.b16 %v676
    %v1918 = vunpack.c.l.b16 %v677
    %v1919 = vunpack.c.h.b16 %v677
    %v1920 = vunpack.c.l.b16 %v678
    %v1921 = vunpack.c.h.b16 %v678
    %v1922 = vunpack.c.l.b16 %v679
    %v1923 = vunpack.c.h.b16 %v679
    %v1924 = vunpack.c.l.b16 %v680
    %v1925 = vunpack.c.h.b16 %v680
    %v1926 = vunpack.c.l.b16 %v681
    %v1927 = vunpack.c.h.b16 %v681
    %v1928 = vunpack.c.l.b16 %v682
    %v1929 = vunpack.c.h.b16 %v682
    %v1930 = vunpack.c.l.b16 %v683
    %v1931 = vunpack.c.h.b16 %v683
    %v1932 = vunpack.c.l.b16 %v684
    %v1933 = vunpack.c.h.b16 %v684
    %v1934 = vunpack.c.l.b16 %v685
    %v1935 = vunpack.c.h.b16 %v685
    %v1936 = vunpack.c.l.b16 %v686
    %v1937 = vunpack.c.h.b16 %v686
    %v1938 = vunpack.c.l.b16 %v687
    %v1939 = vunpack.c.h.b16 %v687
    %v1940 = vunpack.c.l.b16 %v688
    %v1941 = vunpack.c.h.b16 %v688
    %v1942 = vunpack.c.l.b16 %v689
    %v1943 = vunpack.c.h.b16 %v689
    %v1944 = vunpack.c.l.b16 %v690
    %v1945 = vunpack.c.h.b16 %v690
    %v1946 = vunpack.c.l.b16 %v691
    %v1947 = vunpack.c.h.b16 %v691
    %v1948 = vunpack.c.l.b16 %v692
    %v1949 = vunpack.c.h.b16 %v692
    %v1950 = vunpack.c.l.b16 %v693
    %v1951 = vunpack.c.h.b16 %v693
    %v1952 = vunpack.c.l.b16 %v694
    %v1953 = vunpack.c.h.b16 %v694
    %v1954 = vunpack.c.l.b16 %v695
    %v1955 = vunpack.c.h.b16 %v695
    %v1956 = vunpack.c.l.b16 %v696
    %v1957 = vunpack.c.h.b16 %v696
    %v1958 = vunpack.c.l.b16 %v697
    %v1959 = vunpack.c.h.b16 %v697
    %v1960 = vunpack.c.l.b16 %v698
    %v1961 = vunpack.c.h.b16 %v698
    %v1962 = vunpack.c.l.b16 %v699
    %v1963 = vunpack.c.h.b16 %v699
    %v1964 = vunpack.c.l.b16 %v700
    %v1965 = vunpack.c.h.b16 %v700
    %v1966 = vunpack.c.l.b16 %v701
    %v1967 = vunpack.c.h.b16 %v701
    %v1968 = vunpack.c.l.b16 %v702
    %v1969 = vunpack.c.h.b16 %v702
    %v1970 = vunpack.c.l.b16 %v703
    %v1971 = vunpack.c.h.b16 %v703
    %v1972 = vunpack.c.l.b16 %v704
    %v1973 = vunpack.c.h.b16 %v704
    %v1974 = vunpack.c.l.b16 %v705
    %v1975 = vunpack.c.h.b16 %v705
    %v1976 = vunpack.c.l.b16 %v706
    %v1977 = vunpack.c.h.b16 %v706
    %v1978 = vunpack.c.l.b16 %v707
    %v1979 = vunpack.c.h.b16 %v707
    %v1980 = vunpack.c.l.b16 %v708
    %v1981 = vunpack.c.h.b16 %v708
    %v1982 = vunpack.c.l.b16 %v709
    %v1983 = vunpack.c.h.b16 %v709
    %v1984 = vunpack.c.l.b16 %v710
    %v1985 = vunpack.c.h.b16 %v710
    %v1986 = vunpack.c.l.b16 %v711
    %v1987 = vunpack.c.h.b16 %v711
    %v1988 = vunpack.c.l.b16 %v712
    %v1989 = vunpack.c.h.b16 %v712
    %v1990 = vunpack.c.l.b16 %v713
    %v1991 = vunpack.c.h.b16 %v713
    %v1992 = vunpack.c.l.b16 %v714
    %v1993 = vunpack.c.h.b16 %v714
    %v1994 = vunpack.c.l.b16 %v715
    %v1995 = vunpack.c.h.b16 %v715
    %v1996 = vunpack.c.l.b16 %v716
    %v1997 = vunpack.c.h.b16 %v716
    %v1998 = vunpack.c.l.b16 %v717
    %v1999 = vunpack.c.h.b16 %v717
    %v2000 = vunpack.c.l.b16 %v718
    %v2001 = vunpack.c.h.b16 %v718
    %v2002 = vunpack.c.l.b16 %v719
    %v2003 = vunpack.c.h.b16 %v719
    %v2004 = vunpack.c.l.b16 %v720
    %v2005 = vunpack.c.h.b16 %v720
    %v2006 = vunpack.c.l.b16 %v721
    %v2007 = vunpack.c.h.b16 %v721
    %v2008 = vunpack.c.l.b16 %v722
    %v2009 = vunpack.c.h.b16 %v722
    %v2010 = vunpack.c.l.b16 %v723
    %v2011 = vunpack.c.h.b16 %v723
    %v2012 = vunpack.c.l.b16 %v724
    %v2013 = vunpack.c.h.b16 %v724
    %v2014 = vunpack.c.l.b16 %v725
    %v2015 = vunpack.c.h.b16 %v725
    %v2016 = vunpack.c.l.b16 %v726
    %v2017 = vunpack.c.h.b16 %v726
    %v2018 = vunpack.c.l.b16 %v727
    %v2019 = vunpack.c.h.b16 %v727
    %v2020 = vunpack.c.l.b16 %v728
    %v2021 = vunpack.c.h.b16 %v728
    %v2022 = vunpack.c.l.b16 %v729
    %v2023 = vunpack.c.h.b16 %v729
    %v2024 = vunpack.c.l.b16 %v730
    %v2025 = vunpack.c.h.b16 %v730
    %v2026 = vunpack.c.l.b16 %v731
    %v2027 = vunpack.c.h.b16 %v731
    %v2028 = vunpack.c.l.b16 %v732
    %v2029 = vunpack.c.h.b16 %v732
    %v2030 = vunpack.c.l.b16 %v733
    %v2031 = vunpack.c.h.b16 %v733
    %v2032 = vunpack.c.l.b16 %v734
    %v2033 = vunpack.c.h.b16 %v734
    %v2034 = vunpack.c.l.b16 %v735
    %v2035 = vunpack.c.h.b16 %v735
    %v2036 = vunpack.c.l.b16 %v736
    %v2037 = vunpack.c.h.b16 %v736
    %v2038 = vunpack.c.l.b16 %v737
    %v2039 = vunpack.c.h.b16 %v737
    %v2040 = vunpack.c.l.b16 %v738
    %v2041 = vunpack.c.h.b16 %v738
    %v2042 = vunpack.c.l.b16 %v739
    %v2043 = vunpack.c.h.b16 %v739
    %v2044 = vunpack.c.l.b16 %v740
    %v2045 = vunpack.c.h.b16 %v740
    %v2046 = vunpack.c.l.b16 %v741
    %v2047 = vunpack.c.h.b16 %v741
    %v2048 = vunpack.c.l.b16 %v742
    %v2049 = vunpack.c.h.b16 %v742
    %v2050 = vunpack.c.l.b16 %v743
    %v2051 = vunpack.c.h.b16 %v743
    %v2052 = vunpack.c.l.b16 %v744
    %v2053 = vunpack.c.h.b16 %v744
    %v2054 = vunpack.c.l.b16 %v745
    %v2055 = vunpack.c.h.b16 %v745
    %v2056 = vunpack.c.l.b16 %v746
    %v2057 = vunpack.c.h.b16 %v746
    %v2058 = vunpack.c.l.b16 %v747
    %v2059 = vunpack.c.h.b16 %v747
    %v2060 = vunpack.c.l.b16 %v748
    %v2061 = vunpack.c.h.b16 %v748
    %v2062 = vunpack.c.l.b16 %v749
    %v2063 = vunpack.c.h.b16 %v749
    %v2064 = vunpack.c.l.b16 %v750
    %v2065 = vunpack.c.h.b16 %v750
    %v2066 = vunpack.c.l.b16 %v751
    %v2067 = vunpack.c.h.b16 %v751
    %v2068 = vunpack.c.l.b16 %v752
    %v2069 = vunpack.c.h.b16 %v752
    %v2070 = vunpack.c.l.b16 %v753
    %v2071 = vunpack.c.h.b16 %v753
    %v2072 = vunpack.c.l.b16 %v754
    %v2073 = vunpack.c.h.b16 %v754
    %v2074 = vunpack.c.l.b16 %v755
    %v2075 = vunpack.c.h.b16 %v755
    %v2076 = vunpack.c.l.b16 %v756
    %v2077 = vunpack.c.h.b16 %v756
    %v2078 = vunpack.c.l.b16 %v757
    %v2079 = vunpack.c.h.b16 %v757
    %v2080 = vunpack.c.l.b16 %v758
    %v2081 = vunpack.c.h.b16 %v758
    %v2082 = vunpack.c.l.b16 %v759
    %v2083 = vunpack.c.h.b16 %v759
    %v2084 = vunpack.c.l.b16 %v760
    %v2085 = vunpack.c.h.b16 %v760
    %v2086 = vunpack.c.l.b16 %v761
    %v2087 = vunpack.c.h.b16 %v761
    %v2088 = vunpack.c.l.b16 %v762
    %v2089 = vunpack.c.h.b16 %v762
    %v2090 = vunpack.c.l.b16 %v763
    %v2091 = vunpack.c.h.b16 %v763
    %v2092 = vunpack.c.l.b16 %v764
    %v2093 = vunpack.c.h.b16 %v764
    %v2094 = vunpack.c.l.b16 %v765
    %v2095 = vunpack.c.h.b16 %v765
    %v2096 = vunpack.c.l.b16 %v766
    %v2097 = vunpack.c.h.b16 %v766
    %v2098 = vunpack.c.l.b16 %v767
    %v2099 = vunpack.c.h.b16 %v767
    %v2100 = vunpack.c.l.b16 %v768
    %v2101 = vunpack.c.h.b16 %v768
    %v2102 = vunpack.c.l.b16 %v769
    %v2103 = vunpack.c.h.b16 %v769
    %v2104 = vunpack.c.l.b16 %v770
    %v2105 = vunpack.c.h.b16 %v770
    %v2106 = vunpack.c.l.b16 %v771
    %v2107 = vunpack.c.h.b16 %v771
    %v2108 = vunpack.c.l.b16 %v772
    %v2109 = vunpack.c.h.b16 %v772
    %v2110 = vunpack.c.l.b16 %v773
    %v2111 = vunpack.c.h.b16 %v773
    %v2112 = vunpack.c.l.b16 %v774
    %v2113 = vunpack.c.h.b16 %v774
    %v2114 = vunpack.c.l.b16 %v775
    %v2115 = vunpack.c.h.b16 %v775
    %v2116 = vunpack.c.l.b16 %v776
    %v2117 = vunpack.c.h.b16 %v776
    %v2118 = vunpack.c.l.b16 %v777
    %v2119 = vunpack.c.h.b16 %v777
    %v2120 = vunpack.c.l.b16 %v778
    %v2121 = vunpack.c.h.b16 %v778
    %v2122 = vunpack.c.l.b16 %v779
    %v2123 = vunpack.c.h.b16 %v779
    %v2124 = vunpack.c.l.b16 %v780
    %v2125 = vunpack.c.h.b16 %v780
    %v2126 = vunpack.c.l.b16 %v781
    %v2127 = vunpack.c.h.b16 %v781
    %v2128 = vunpack.c.l.b16 %v782
    %v2129 = vunpack.c.h.b16 %v782
    %v2130 = vunpack.c.l.b16 %v783
    %v2131 = vunpack.c.h.b16 %v783
    %v2132 = vunpack.c.l.b16 %v784
    %v2133 = vunpack.c.h.b16 %v784
    %v2134 = vunpack.c.l.b16 %v785
    %v2135 = vunpack.c.h.b16 %v785
    %v2136 = vunpack.c.l.b16 %v786
    %v2137 = vunpack.c.h.b16 %v786
    %v2138 = vunpack.c.l.b16 %v787
    %v2139 = vunpack.c.h.b16 %v787
    %v2140 = vunpack.c.l.b16 %v788
    %v2141 = vunpack.c.h.b16 %v788
    %v2142 = vunpack.c.l.b16 %v789
    %v2143 = vunpack.c.h.b16 %v789
    %v2144 = vunpack.c.l.b16 %v790
    %v2145 = vunpack.c.h.b16 %v790
    %v2146 = vunpack.c.l.b16 %v791
    %v2147 = vunpack.c.h.b16 %v791
    %v2148 = vunpack.c.l.b16 %v792
    %v2149 = vunpack.c.h.b16 %v792
    %v2150 = vunpack.c.l.b16 %v793
    %v2151 = vunpack.c.h.b16 %v793
    %v2152 = vunpack.c.l.b16 %v794
    %v2153 = vunpack.c.h.b16 %v794
    %v2154 = vunpack.c.l.b16 %v795
    %v2155 = vunpack.c.h.b16 %v795
    %v2156 = vunpack.c.l.b16 %v796
    %v2157 = vunpack.c.h.b16 %v796
    %v2158 = vunpack.c.l.b16 %v797
    %v2159 = vunpack.c.h.b16 %v797
    %v2160 = vunpack.c.l.b16 %v798
    %v2161 = vunpack.c.h.b16 %v798
    %v2162 = vunpack.c.l.b16 %v799
    %v2163 = vunpack.c.h.b16 %v799
    %v2164 = vunpack.c.l.b16 %v800
    %v2165 = vunpack.c.h.b16 %v800
    %v2166 = vunpack.c.l.b16 %v801
    %v2167 = vunpack.c.h.b16 %v801
    %v2168 = vunpack.c.l.b16 %v802
    %v2169 = vunpack.c.h.b16 %v802
    %v2170 = vunpack.c.l.b16 %v803
    %v2171 = vunpack.c.h.b16 %v803
    %v2172 = vunpack.c.l.b16 %v804
    %v2173 = vunpack.c.h.b16 %v804
    %v2174 = vunpack.c.l.b16 %v805
    %v2175 = vunpack.c.h.b16 %v805
    %v2176 = vunpack.c.l.b16 %v806
    %v2177 = vunpack.c.h.b16 %v806
    %v2178 = vunpack.c.l.b16 %v807
    %v2179 = vunpack.c.h.b16 %v807
    %v2180 = vunpack.c.l.b16 %v808
    %v2181 = vunpack.c.h.b16 %v808
    %v2182 = vunpack.c.l.b16 %v809
    %v2183 = vunpack.c.h.b16 %v809
    %v2184 = vunpack.c.l.b16 %v810
    %v2185 = vunpack.c.h.b16 %v810
    %v2186 = vunpack.c.l.b16 %v811
    %v2187 = vunpack.c.h.b16 %v811
    %v2188 = vunpack.c.l.b16 %v812
    %v2189 = vunpack.c.h.b16 %v812
    %v2190 = vunpack.c.l.b16 %v813
    %v2191 = vunpack.c.h.b16 %v813
    %v2192 = vunpack.c.l.b16 %v814
    %v2193 = vunpack.c.h.b16 %v814
    %v2194 = vunpack.c.l.b16 %v815
    %v2195 = vunpack.c.h.b16 %v815
    %v2196 = vunpack.c.l.b16 %v816
    %v2197 = vunpack.c.h.b16 %v816
    %v2198 = vunpack.c.l.b16 %v817
    %v2199 = vunpack.c.h.b16 %v817
    %v2200 = vunpack.c.l.b16 %v818
    %v2201 = vunpack.c.h.b16 %v818
    %v2202 = vunpack.c.l.b16 %v819
    %v2203 = vunpack.c.h.b16 %v819
    %v2204 = vunpack.c.l.b16 %v820
    %v2205 = vunpack.c.h.b16 %v820
    %v2206 = vunpack.c.l.b16 %v821
    %v2207 = vunpack.c.h.b16 %v821
    %v2208 = vunpack.c.l.b16 %v822
    %v2209 = vunpack.c.h.b16 %v822
    %v2210 = vunpack.c.l.b16 %v823
    %v2211 = vunpack.c.h.b16 %v823
    %v2212 = vunpack.c.l.b16 %v824
    %v2213 = vunpack.c.h.b16 %v824
    %v2214 = vunpack.c.l.b16 %v825
    %v2215 = vunpack.c.h.b16 %v825
    %v2216 = vunpack.c.l.b16 %v826
    %v2217 = vunpack.c.h.b16 %v826
    %v2218 = vunpack.c.l.b16 %v827
    %v2219 = vunpack.c.h.b16 %v827
    %v2220 = vunpack.c.l.b16 %v828
    %v2221 = vunpack.c.h.b16 %v828
    %v2222 = vunpack.c.l.b16 %v829
    %v2223 = vunpack.c.h.b16 %v829
    %v2224 = vunpack.c.l.b16 %v830
    %v2225 = vunpack.c.h.b16 %v830
    %v2226 = vunpack.c.l.b16 %v831
    %v2227 = vunpack.c.h.b16 %v831
    %v2228 = vunpack.c.l.b16 %v832
    %v2229 = vunpack.c.h.b16 %v832
    %v2230 = vunpack.c.l.b16 %v833
    %v2231 = vunpack.c.h.b16 %v833
    %v2232 = vunpack.c.l.b16 %v834
    %v2233 = vunpack.c.h.b16 %v834
    %v2234 = vunpack.c.l.b16 %v835
    %v2235 = vunpack.c.h.b16 %v835
    %v2236 = vunpack.c.l.b16 %v836
    %v2237 = vunpack.c.h.b16 %v836
    %v2238 = vunpack.c.l.b16 %v837
    %v2239 = vunpack.c.h.b16 %v837
    %v2240 = vunpack.c.l.b16 %v838
    %v2241 = vunpack.c.h.b16 %v838
    %v2242 = vunpack.c.l.b16 %v839
    %v2243 = vunpack.c.h.b16 %v839
    %v2244 = vunpack.c.l.b16 %v840
    %v2245 = vunpack.c.h.b16 %v840
    %v2246 = vunpack.c.l.b16 %v841
    %v2247 = vunpack.c.h.b16 %v841
    %v2248 = vunpack.c.l.b16 %v842
    %v2249 = vunpack.c.h.b16 %v842
    %v2250 = vunpack.c.l.b16 %v843
    %v2251 = vunpack.c.h.b16 %v843
    %v2252 = vunpack.c.l.b16 %v844
    %v2253 = vunpack.c.h.b16 %v844
    %v2254 = vunpack.c.l.b16 %v845
    %v2255 = vunpack.c.h.b16 %v845
    %v2256 = vunpack.c.l.b16 %v846
    %v2257 = vunpack.c.h.b16 %v846
    %v2258 = vunpack.c.l.b16 %v847
    %v2259 = vunpack.c.h.b16 %v847
    %v2260 = vunpack.c.l.b16 %v848
    %v2261 = vunpack.c.h.b16 %v848
    %v2262 = vunpack.c.l.b16 %v849
    %v2263 = vunpack.c.h.b16 %v849
    %v2264 = vunpack.c.l.b16 %v850
    %v2265 = vunpack.c.h.b16 %v850
    %v2266 = vunpack.c.l.b16 %v851
    %v2267 = vunpack.c.h.b16 %v851
    %v2268 = vunpack.c.l.b16 %v852
    %v2269 = vunpack.c.h.b16 %v852
    %v2270 = vunpack.c.l.b16 %v853
    %v2271 = vunpack.c.h.b16 %v853
    %v2272 = vunpack.c.l.b16 %v854
    %v2273 = vunpack.c.h.b16 %v854
    %v2274 = vunpack.c.l.b16 %v855
    %v2275 = vunpack.c.h.b16 %v855
    %v2276 = vunpack.c.l.b16 %v856
    %v2277 = vunpack.c.h.b16 %v856
    %v2278 = vunpack.c.l.b16 %v857
    %v2279 = vunpack.c.h.b16 %v857
    %v2280 = vunpack.c.l.b16 %v858
    %v2281 = vunpack.c.h.b16 %v858
    %v2282 = vunpack.c.l.b16 %v859
    %v2283 = vunpack.c.h.b16 %v859
    %v2284 = vunpack.c.l.b16 %v860
    %v2285 = vunpack.c.h.b16 %v860
    %v2286 = vunpack.c.l.b16 %v861
    %v2287 = vunpack.c.h.b16 %v861
    %v2288 = vunpack.c.l.b16 %v862
    %v2289 = vunpack.c.h.b16 %v862
    %v2290 = vunpack.c.l.b16 %v863
    %v2291 = vunpack.c.h.b16 %v863
    %v2292 = vunpack.c.l.b16 %v864
    %v2293 = vunpack.c.h.b16 %v864
    %v2294 = vunpack.c.l.b16 %v865
    %v2295 = vunpack.c.h.b16 %v865
    %v2296 = vunpack.c.l.b16 %v866
    %v2297 = vunpack.c.h.b16 %v866
    %v2298 = vunpack.c.l.b16 %v867
    %v2299 = vunpack.c.h.b16 %v867
    %v2300 = vunpack.c.l.b16 %v868
    %v2301 = vunpack.c.h.b16 %v868
    %v2302 = vunpack.c.l.b16 %v869
    %v2303 = vunpack.c.h.b16 %v869
    %v2304 = vunpack.c.l.b16 %v870
    %v2305 = vunpack.c.h.b16 %v870
    %v2306 = vunpack.c.l.b16 %v871
    %v2307 = vunpack.c.h.b16 %v871
    %v2308 = vunpack.c.l.b16 %v872
    %v2309 = vunpack.c.h.b16 %v872
    %v2310 = vunpack.c.l.b16 %v873
    %v2311 = vunpack.c.h.b16 %v873
    %v2312 = vunpack.c.l.b16 %v874
    %v2313 = vunpack.c.h.b16 %v874
    %v2314 = vunpack.c.l.b16 %v875
    %v2315 = vunpack.c.h.b16 %v875
    %v2316 = vunpack.c.l.b16 %v876
    %v2317 = vunpack.c.h.b16 %v876
    %v2318 = vunpack.c.l.b16 %v877
    %v2319 = vunpack.c.h.b16 %v877
    %v2320 = vunpack.c.l.b16 %v878
    %v2321 = vunpack.c.h.b16 %v878
    %v2322 = vunpack.c.l.b16 %v879
    %v2323 = vunpack.c.h.b16 %v879
    %v2324 = vunpack.c.l.b16 %v880
    %v2325 = vunpack.c.h.b16 %v880
    %v2326 = vunpack.c.l.b16 %v881
    %v2327 = vunpack.c.h.b16 %v881
    %v2328 = vunpack.c.l.b16 %v882
    %v2329 = vunpack.c.h.b16 %v882
    %v2330 = vunpack.c.l.b16 %v883
    %v2331 = vunpack.c.h.b16 %v883
    %v2332 = vunpack.c.l.b16 %v884
    %v2333 = vunpack.c.h.b16 %v884
    %v2334 = vunpack.c.l.b16 %v885
    %v2335 = vunpack.c.h.b16 %v885
    %v2336 = vunpack.c.l.b16 %v886
    %v2337 = vunpack.c.h.b16 %v886
    %v2338 = vunpack.c.l.b16 %v887
    %v2339 = vunpack.c.h.b16 %v887
    %v2340 = vunpack.c.l.b16 %v888
    %v2341 = vunpack.c.h.b16 %v888
    %v2342 = vunpack.c.l.b16 %v889
    %v2343 = vunpack.c.h.b16 %v889
    %v2344 = vunpack.c.l.b16 %v890
    %v2345 = vunpack.c.h.b16 %v890
    %v2346 = vunpack.c.l.b16 %v891
    %v2347 = vunpack.c.h.b16 %v891
    %v2348 = vunpack.c.l.b16 %v892
    %v2349 = vunpack.c.h.b16 %v892
    %v2350 = vunpack.c.l.b16 %v893
    %v2351 = vunpack.c.h.b16 %v893
    %v2352 = vunpack.c.l.b16 %v894
    %v2353 = vunpack.c.h.b16 %v894
    %v2354 = vunpack.c.l.b16 %v895
    %v2355 = vunpack.c.h.b16 %v895
    %v2356 = vunpack.c.l.b16 %v896
    %v2357 = vunpack.c.h.b16 %v896
    %v2358 = vunpack.c.l.b16 %v897
    %v2359 = vunpack.c.h.b16 %v897
    %v2360 = vunpack.c.l.b16 %v898
    %v2361 = vunpack.c.h.b16 %v898
    %v2362 = vunpack.c.l.b16 %v899
    %v2363 = vunpack.c.h.b16 %v899
    %v2364 = vunpack.c.l.b16 %v900
    %v2365 = vunpack.c.h.b16 %v900
    %v2366 = vunpack.c.l.b16 %v901
    %v2367 = vunpack.c.h.b16 %v901
    %v2368 = vunpack.c.l.b16 %v902
    %v2369 = vunpack.c.h.b16 %v902
    %v2370 = vunpack.c.l.b16 %v903
    %v2371 = vunpack.c.h.b16 %v903
    %v2372 = vunpack.c.l.b16 %v904
    %v2373 = vunpack.c.h.b16 %v904
    %v2374 = vunpack.c.l.b16 %v905
    %v2375 = vunpack.c.h.b16 %v905
    %v2376 = vunpack.c.l.b16 %v906
    %v2377 = vunpack.c.h.b16 %v906
    %v2378 = vunpack.c.l.b16 %v907
    %v2379 = vunpack.c.h.b16 %v907
    %v2380 = vunpack.c.l.b16 %v908
    %v2381 = vunpack.c.h.b16 %v908
    %v2382 = vunpack.c.l.b16 %v909
    %v2383 = vunpack.c.h.b16 %v909
    %v2384 = vunpack.c.l.b16 %v910
    %v2385 = vunpack.c.h.b16 %v910
    %v2386 = vunpack.c.l.b16 %v911
    %v2387 = vunpack.c.h.b16 %v911
    %v2388 = vunpack.c.l.b16 %v912
    %v2389 = vunpack.c.h.b16 %v912
    %v2390 = vunpack.c.l.b16 %v913
    %v2391 = vunpack.c.h.b16 %v913
    %v2392 = vunpack.c.l.b16 %v914
    %v2393 = vunpack.c.h.b16 %v914
    %v2394 = vunpack.c.l.b16 %v915
    %v2395 = vunpack.c.h.b16 %v915
    %v2396 = vunpack.c.l.b16 %v916
    %v2397 = vunpack.c.h.b16 %v916
    %v2398 = vunpack.c.l.b16 %v917
    %v2399 = vunpack.c.h.b16 %v917
    %v2400 = vunpack.c.l.b16 %v918
    %v2401 = vunpack.c.h.b16 %v918
    %v2402 = vunpack.c.l.b16 %v919
    %v2403 = vunpack.c.h.b16 %v919
    %v2404 = vunpack.c.l.b16 %v920
    %v2405 = vunpack.c.h.b16 %v920
    %v2406 = vunpack.c.l.b16 %v921
    %v2407 = vunpack.c.h.b16 %v921
    %v2408 = vunpack.c.l.b16 %v922
    %v2409 = vunpack.c.h.b16 %v922
    %v2410 = vunpack.c.l.b16 %v923
    %v2411 = vunpack.c.h.b16 %v923
    %v2412 = vunpack.c.l.b16 %v924
    %v2413 = vunpack.c.h.b16 %v924
    %v2414 = vunpack.c.l.b16 %v925
    %v2415 = vunpack.c.h.b16 %v925
    %v2416 = vunpack.c.l.b16 %v926
    %v2417 = vunpack.c.h.b16 %v926
    %v2418 = vunpack.c.l.b16 %v927
    %v2419 = vunpack.c.h.b16 %v927
    %v2420 = vunpack.c.l.b16 %v928
    %v2421 = vunpack.c.h.b16 %v928
    %v2422 = vunpack.c.l.b16 %v929
    %v2423 = vunpack.c.h.b16 %v929
    %v2424 = vunpack.c.l.b16 %v930
    %v2425 = vunpack.c.h.b16 %v930
    %v2426 = vunpack.c.l.b16 %v931
    %v2427 = vunpack.c.h.b16 %v931
    %v2428 = vunpack.c.l.b16 %v932
    %v2429 = vunpack.c.h.b16 %v932
    %v2430 = vunpack.c.l.b16 %v933
    %v2431 = vunpack.c.h.b16 %v933
    %v2432 = vunpack.c.l.b16 %v934
    %v2433 = vunpack.c.h.b16 %v934
    %v2434 = vunpack.c.l.b16 %v935
    %v2435 = vunpack.c.h.b16 %v935
    %v2436 = vunpack.c.l.b16 %v936
    %v2437 = vunpack.c.h.b16 %v936
    %v2438 = vunpack.c.l.b16 %v937
    %v2439 = vunpack.c.h.b16 %v937
    %v2440 = vunpack.c.l.b16 %v938
    %v2441 = vunpack.c.h.b16 %v938
    %v2442 = vunpack.c.l.b16 %v939
    %v2443 = vunpack.c.h.b16 %v939
    %v2444 = vunpack.c.l.b16 %v940
    %v2445 = vunpack.c.h.b16 %v940
    %v2446 = vunpack.c.l.b16 %v941
    %v2447 = vunpack.c.h.b16 %v941
    %v2448 = vunpack.c.l.b16 %v942
    %v2449 = vunpack.c.h.b16 %v942
    %v2450 = vunpack.c.l.b16 %v943
    %v2451 = vunpack.c.h.b16 %v943
    %v2452 = vunpack.c.l.b16 %v944
    %v2453 = vunpack.c.h.b16 %v944
    %v2454 = vunpack.c.l.b16 %v945
    %v2455 = vunpack.c.h.b16 %v945
    %v2456 = vunpack.c.l.b16 %v946
    %v2457 = vunpack.c.h.b16 %v946
    %v2458 = vunpack.c.l.b16 %v947
    %v2459 = vunpack.c.h.b16 %v947
    %v2460 = vunpack.c.l.b16 %v948
    %v2461 = vunpack.c.h.b16 %v948
    %v2462 = vunpack.c.l.b16 %v949
    %v2463 = vunpack.c.h.b16 %v949
    %v2464 = vunpack.c.l.b16 %v950
    %v2465 = vunpack.c.h.b16 %v950
    %v2466 = vunpack.c.l.b16 %v951
    %v2467 = vunpack.c.h.b16 %v951
    %v2468 = vunpack.c.l.b16 %v952
    %v2469 = vunpack.c.h.b16 %v952
    %v2470 = vunpack.c.l.b16 %v953
    %v2471 = vunpack.c.h.b16 %v953
    %v2472 = vunpack.c.l.b16 %v954
    %v2473 = vunpack.c.h.b16 %v954
    %v2474 = vunpack.c.l.b16 %v955
    %v2475 = vunpack.c.h.b16 %v955
    %v2476 = vunpack.c.l.b16 %v956
    %v2477 = vunpack.c.h.b16 %v956
    %v2478 = vunpack.c.l.b16 %v957
    %v2479 = vunpack.c.h.b16 %v957
    %v2480 = vunpack.c.l.b16 %v958
    %v2481 = vunpack.c.h.b16 %v958
    %v2482 = vunpack.c.l.b16 %v959
    %v2483 = vunpack.c.h.b16 %v959
    %v2484 = vunpack.c.l.b16 %v960
    %v2485 = vunpack.c.h.b16 %v960
    %v2486 = vunpack.c.l.b16 %v961
    %v2487 = vunpack.c.h.b16 %v961
    %v2488 = vunpack.c.l.b16 %v962
    %v2489 = vunpack.c.h.b16 %v962
    %v2490 = vunpack.c.l.b16 %v963
    %v2491 = vunpack.c.h.b16 %v963
    %v2492 = vunpack.c.l.b16 %v964
    %v2493 = vunpack.c.h.b16 %v964
    %v2494 = vunpack.c.l.b16 %v965
    %v2495 = vunpack.c.h.b16 %v965
    %v2496 = vunpack.c.l.b16 %v966
    %v2497 = vunpack.c.h.b16 %v966
    %v2498 = vunpack.c.l.b16 %v967
    %v2499 = vunpack.c.h.b16 %v967
    %v2500 = vunpack.c.l.b16 %v968
    %v2501 = vunpack.c.h.b16 %v968
    %v2502 = vunpack.c.l.b16 %v969
    %v2503 = vunpack.c.h.b16 %v969
    %v2504 = vunpack.c.l.b16 %v970
    %v2505 = vunpack.c.h.b16 %v970
    %v2506 = vunpack.c.l.b16 %v971
    %v2507 = vunpack.c.h.b16 %v971
    %v2508 = vunpack.c.l.b16 %v972
    %v2509 = vunpack.c.h.b16 %v972
    %v2510 = vunpack.c.l.b16 %v973
    %v2511 = vunpack.c.h.b16 %v973
    %v2512 = vunpack.c.l.b16 %v974
    %v2513 = vunpack.c.h.b16 %v974
    %v2514 = vunpack.c.l.b16 %v975
    %v2515 = vunpack.c.h.b16 %v975
    %v2516 = vunpack.c.l.b16 %v976
    %v2517 = vunpack.c.h.b16 %v976
    %v2518 = vunpack.c.l.b16 %v977
    %v2519 = vunpack.c.h.b16 %v977
    %v2520 = vunpack.c.l.b16 %v978
    %v2521 = vunpack.c.h.b16 %v978
    %v2522 = vunpack.c.l.b16 %v979
    %v2523 = vunpack.c.h.b16 %v979
    %v2524 = vunpack.c.l.b16 %v980
    %v2525 = vunpack.c.h.b16 %v980
    %v2526 = vunpack.c.l.b16 %v981
    %v2527 = vunpack.c.h.b16 %v981
    %v2528 = vunpack.c.l.b16 %v982
    %v2529 = vunpack.c.h.b16 %v982
    %v2530 = vunpack.c.l.b16 %v983
    %v2531 = vunpack.c.h.b16 %v983
    %v2532 = vunpack.c.l.b16 %v984
    %v2533 = vunpack.c.h.b16 %v984
    %v2534 = vunpack.c.l.b16 %v985
    %v2535 = vunpack.c.h.b16 %v985
    %v2536 = vunpack.c.l.b16 %v986
    %v2537 = vunpack.c.h.b16 %v986
    %v2538 = vunpack.c.l.b16 %v987
    %v2539 = vunpack.c.h.b16 %v987
    %v2540 = vunpack.c.l.b16 %v988
    %v2541 = vunpack.c.h.b16 %v988
    %v2542 = vunpack.c.l.b16 %v989
    %v2543 = vunpack.c.h.b16 %v989
    %v2544 = vunpack.c.l.b16 %v990
    %v2545 = vunpack.c.h.b16 %v990
    %v2546 = vunpack.c.l.b16 %v991
    %v2547 = vunpack.c.h.b16 %v991
    %v2548 = vunpack.c.l.b16 %v992
    %v2549 = vunpack.c.h.b16 %v992
    %v2550 = vunpack.c.l.b16 %v993
    %v2551 = vunpack.c.h.b16 %v993
    %v2552 = vunpack.c.l.b16 %v994
    %v2553 = vunpack.c.h.b16 %v994
    %v2554 = vunpack.c.l.b16 %v995
    %v2555 = vunpack.c.h.b16 %v995
    %v2556 = vunpack.c.l.b16 %v996
    %v2557 = vunpack.c.h.b16 %v996
    %v2558 = vunpack.c.l.b16 %v997
    %v2559 = vunpack.c.h.b16 %v997
    %v2560 = vunpack.c.l.b16 %v998
    %v2561 = vunpack.c.h.b16 %v998
    %v2562 = vunpack.c.l.b16 %v999
    %v2563 = vunpack.c.h.b16 %v999
    %v2564 = vunpack.c.l.b16 %v1000
    %v2565 = vunpack.c.h.b16 %v1000
    %v2566 = vunpack.c.l.b16 %v1001
    %v2567 = vunpack.c.h.b16 %v1001
    %v2568 = vunpack.c.l.b16 %v1002
    %v2569 = vunpack.c.h.b16 %v1002
    %v2570 = vunpack.c.l.b16 %v1003
    %v2571 = vunpack.c.h.b16 %v1003
    %v2572 = vunpack.c.l.b16 %v1004
    %v2573 = vunpack.c.h.b16 %v1004
    %v2574 = vunpack.c.l.b16 %v1005
    %v2575 = vunpack.c.h.b16 %v1005
    %v2576 = vunpack.c.l.b16 %v1006
    %v2577 = vunpack.c.h.b16 %v1006
    %v2578 = vunpack.c.l.b16 %v1007
    %v2579 = vunpack.c.h.b16 %v1007
    %v2580 = vunpack.c.l.b16 %v1008
    %v2581 = vunpack.c.h.b16 %v1008
    %v2582 = vunpack.c.l.b16 %v1009
    %v2583 = vunpack.c.h.b16 %v1009
    %v2584 = vunpack.c.l.b16 %v1010
    %v2585 = vunpack.c.h.b16 %v1010
    %v2586 = vunpack.c.l.b16 %v1011
    %v2587 = vunpack.c.h.b16 %v1011
    %v2588 = vunpack.c.l.b16 %v1012
    %v2589 = vunpack.c.h.b16 %v1012
    %v2590 = vunpack.c.l.b16 %v1013
    %v2591 = vunpack.c.h.b16 %v1013
    %v2592 = vunpack.c.l.b16 %v1014
    %v2593 = vunpack.c.h.b16 %v1014
    %v2594 = vunpack.c.l.b16 %v1015
    %v2595 = vunpack.c.h.b16 %v1015
    %v2596 = vunpack.c.l.b16 %v1016
    %v2597 = vunpack.c.h.b16 %v1016
    %v2598 = vunpack.c.l.b16 %v1017
    %v2599 = vunpack.c.h.b16 %v1017
    %v2600 = vunpack.c.l.b16 %v1018
    %v2601 = vunpack.c.h.b16 %v1018
    %v2602 = vunpack.c.l.b16 %v1019
    %v2603 = vunpack.c.h.b16 %v1019
    %v2604 = vunpack.c.l.b16 %v1020
    %v2605 = vunpack.c.h.b16 %v1020
    %v2606 = vunpack.c.l.b16 %v1021
    %v2607 = vunpack.c.h.b16 %v1021
    %v2608 = vpack.c.b16 %v1592, %v1584
    %v2609 = vpack.c.b16 %v1593, %v1585
    %v2610 = vpack.c.b16 %v1594, %v1586
    %v2611 = vpack.c.b16 %v1595, %v1587
    %v2612 = vpack.c.b16 %v1596, %v1588
    %v2613 = vpack.c.b16 %v1597, %v1589
    %v2614 = vpack.c.b16 %v1598, %v1590
    %v2615 = vpack.c.b16 %v1599, %v1591
    %v2616 = vpack.c.b16 %v1608, %v1600
    %v2617 = vpack.c.b16 %v1609, %v1601
    %v2618 = vpack.c.b16 %v1610, %v1602
    %v2619 = vpack.c.b16 %v1611, %v1603
    %v2620 = vpack.c.b16 %v1612, %v1604
    %v2621 = vpack.c.b16 %v1613, %v1605
    %v2622 = vpack.c.b16 %v1614, %v1606
    %v2623 = vpack.c.b16 %v1615, %v1607
    %v2624 = vpack.c.b16 %v1624, %v1616
    %v2625 = vpack.c.b16 %v1625, %v1617
    %v2626 = vpack.c.b16 %v1626, %v1618
    %v2627 = vpack.c.b16 %v1627, %v1619
    %v2628 = vpack.c.b16 %v1628, %v1620
    %v2629 = vpack.c.b16 %v1629, %v1621
    %v2630 = vpack.c.b16 %v1630, %v1622
    %v2631 = vpack.c.b16 %v1631, %v1623
    %v2632 = vpack.c.b16 %v1640, %v1632
    %v2633 = vpack.c.b16 %v1641, %v1633
    %v2634 = vpack.c.b16 %v1642, %v1634
    %v2635 = vpack.c.b16 %v1643, %v1635
    %v2636 = vpack.c.b16 %v1644, %v1636
    %v2637 = vpack.c.b16 %v1645, %v1637
    %v2638 = vpack.c.b16 %v1646, %v1638
    %v2639 = vpack.c.b16 %v1647, %v1639
    %v2640 = vpack.c.b16 %v1656, %v1648
    %v2641 = vpack.c.b16 %v1657, %v1649
    %v2642 = vpack.c.b16 %v1658, %v1650
    %v2643 = vpack.c.b16 %v1659, %v1651
    %v2644 = vpack.c.b16 %v1660, %v1652
    %v2645 = vpack.c.b16 %v1661, %v1653
    %v2646 = vpack.c.b16 %v1662, %v1654
    %v2647 = vpack.c.b16 %v1663, %v1655
    %v2648 = vpack.c.b16 %v1672, %v1664
    %v2649 = vpack.c.b16 %v1673, %v1665
    %v2650 = vpack.c.b16 %v1674, %v1666
    %v2651 = vpack.c.b16 %v1675, %v1667
    %v2652 = vpack.c.b16 %v1676, %v1668
    %v2653 = vpack.c.b16 %v1677, %v1669
    %v2654 = vpack.c.b16 %v1678, %v1670
    %v2655 = vpack.c.b16 %v1679, %v1671
    %v2656 = vpack.c.b16 %v1688, %v1680
    %v2657 = vpack.c.b16 %v1689, %v1681
    %v2658 = vpack.c.b16 %v1690, %v1682
    %v2659 = vpack.c.b16 %v1691, %v1683
    %v2660 = vpack.c.b16 %v1692, %v1684
    %v2661 = vpack.c.b16 %v1693, %v1685
    %v2662 = vpack.c.b16 %v1694, %v1686
    %v2663 = vpack.c.b16 %v1695, %v1687
    %v2664 = vpack.c.b16 %v1704, %v1696
    %v2665 = vpack.c.b16 %v1705, %v1697
    %v2666 = vpack.c.b16 %v1706, %v1698
    %v2667 = vpack.c.b16 %v1707, %v1699
    %v2668 = vpack.c.b16 %v1708, %v1700
    %v2669 = vpack.c.b16 %v1709, %v1701
    %v2670 = vpack.c.b16 %v1710, %v1702
    %v2671 = vpack.c.b16 %v1711, %v1703
    %v2672 = vpack.c.b16 %v1720, %v1712
    %v2673 = vpack.c.b16 %v1721, %v1713
    %v2674 = vpack.c.b16 %v1722, %v1714
    %v2675 = vpack.c.b16 %v1723, %v1715
    %v2676 = vpack.c.b16 %v1724, %v1716
    %v2677 = vpack.c.b16 %v1725, %v1717
    %v2678 = vpack.c.b16 %v1726, %v1718
    %v2679 = vpack.c.b16 %v1727, %v1719
    %v2680 = vpack.c.b16 %v1736, %v1728
    %v2681 = vpack.c.b16 %v1737, %v1729
    %v2682 = vpack.c.b16 %v1738, %v1730
    %v2683 = vpack.c.b16 %v1739, %v1731
    %v2684 = vpack.c.b16 %v1740, %v1732
    %v2685 = vpack.c.b16 %v1741, %v1733
    %v2686 = vpack.c.b16 %v1742, %v1734
    %v2687 = vpack.c.b16 %v1743, %v1735
    %v2688 = vpack.c.b16 %v1752, %v1744
    %v2689 = vpack.c.b16 %v1753, %v1745
    %v2690 = vpack.c.b16 %v1754, %v1746
    %v2691 = vpack.c.b16 %v1755, %v1747
    %v2692 = vpack.c.b16 %v1756, %v1748
    %v2693 = vpack.c.b16 %v1757, %v1749
    %v2694 = vpack.c.b16 %v1758, %v1750
    %v2695 = vpack.c.b16 %v1759, %v1751
    %v2696 = vpack.c.b16 %v1768, %v1760
    %v2697 = vpack.c.b16 %v1769, %v1761
    %v2698 = vpack.c.b16 %v1770, %v1762
    %v2699 = vpack.c.b16 %v1771, %v1763
    %v2700 = vpack.c.b16 %v1772, %v1764
    %v2701 = vpack.c.b16 %v1773, %v1765
    %v2702 = vpack.c.b16 %v1774, %v1766
    %v2703 = vpack.c.b16 %v1775, %v1767
    %v2704 = vpack.c.b16 %v1784, %v1776
    %v2705 = vpack.c.b16 %v1785, %v1777
    %v2706 = vpack.c.b16 %v1786, %v1778
    %v2707 = vpack.c.b16 %v1787, %v1779
    %v2708 = vpack.c.b16 %v1788, %v1780
    %v2709 = vpack.c.b16 %v1789, %v1781
    %v2710 = vpack.c.b16 %v1790, %v1782
    %v2711 = vpack.c.b16 %v1791, %v1783
    %v2712 = vpack.c.b16 %v1800, %v1792
    %v2713 = vpack.c.b16 %v1801, %v1793
    %v2714 = vpack.c.b16 %v1802, %v1794
    %v2715 = vpack.c.b16 %v1803, %v1795
    %v2716 = vpack.c.b16 %v1804, %v1796
    %v2717 = vpack.c.b16 %v1805, %v1797
    %v2718 = vpack.c.b16 %v1806, %v1798
    %v2719 = vpack.c.b16 %v1807, %v1799
    %v2720 = vpack.c.b16 %v1816, %v1808
    %v2721 = vpack.c.b16 %v1817, %v1809
    %v2722 = vpack.c.b16 %v1818, %v1810
    %v2723 = vpack.c.b16 %v1819, %v1811
    %v2724 = vpack.c.b16 %v1820, %v1812
    %v2725 = vpack.c.b16 %v1821, %v1813
    %v2726 = vpack.c.b16 %v1822, %v1814
    %v2727 = vpack.c.b16 %v1823, %v1815
    %v2728 = vpack.c.b16 %v1832, %v1824
    %v2729 = vpack.c.b16 %v1833, %v1825
    %v2730 = vpack.c.b16 %v1834, %v1826
    %v2731 = vpack.c.b16 %v1835, %v1827
    %v2732 = vpack.c.b16 %v1836, %v1828
    %v2733 = vpack.c.b16 %v1837, %v1829
    %v2734 = vpack.c.b16 %v1838, %v1830
    %v2735 = vpack.c.b16 %v1839, %v1831
    %v2736 = vpack.c.b16 %v1848, %v1840
    %v2737 = vpack.c.b16 %v1849, %v1841
    %v2738 = vpack.c.b16 %v1850, %v1842
    %v2739 = vpack.c.b16 %v1851, %v1843
    %v2740 = vpack.c.b16 %v1852, %v1844
    %v2741 = vpack.c.b16 %v1853, %v1845
    %v2742 = vpack.c.b16 %v1854, %v1846
    %v2743 = vpack.c.b16 %v1855, %v1847
    %v2744 = vpack.c.b16 %v1864, %v1856
    %v2745 = vpack.c.b16 %v1865, %v1857
    %v2746 = vpack.c.b16 %v1866, %v1858
    %v2747 = vpack.c.b16 %v1867, %v1859
    %v2748 = vpack.c.b16 %v1868, %v1860
    %v2749 = vpack.c.b16 %v1869, %v1861
    %v2750 = vpack.c.b16 %v1870, %v1862
    %v2751 = vpack.c.b16 %v1871, %v1863
    %v2752 = vpack.c.b16 %v1880, %v1872
    %v2753 = vpack.c.b16 %v1881, %v1873
    %v2754 = vpack.c.b16 %v1882, %v1874
    %v2755 = vpack.c.b16 %v1883, %v1875
    %v2756 = vpack.c.b16 %v1884, %v1876
    %v2757 = vpack.c.b16 %v1885, %v1877
    %v2758 = vpack.c.b16 %v1886, %v1878
    %v2759 = vpack.c.b16 %v1887, %v1879
    %v2760 = vpack.c.b16 %v1896, %v1888
    %v2761 = vpack.c.b16 %v1897, %v1889
    %v2762 = vpack.c.b16 %v1898, %v1890
    %v2763 = vpack.c.b16 %v1899, %v1891
    %v2764 = vpack.c.b16 %v1900, %v1892
    %v2765 = vpack.c.b16 %v1901, %v1893
    %v2766 = vpack.c.b16 %v1902, %v1894
    %v2767 = vpack.c.b16 %v1903, %v1895
    %v2768 = vpack.c.b16 %v1912, %v1904
    %v2769 = vpack.c.b16 %v1913, %v1905
    %v2770 = vpack.c.b16 %v1914, %v1906
    %v2771 = vpack.c.b16 %v1915, %v1907
    %v2772 = vpack.c.b16 %v1916, %v1908
    %v2773 = vpack.c.b16 %v1917, %v1909
    %v2774 = vpack.c.b16 %v1918, %v1910
    %v2775 = vpack.c.b16 %v1919, %v1911
    %v2776 = vpack.c.b16 %v1928, %v1920
    %v2777 = vpack.c.b16 %v1929, %v1921
    %v2778 = vpack.c.b16 %v1930, %v1922
    %v2779 = vpack.c.b16 %v1931, %v1923
    %v2780 = vpack.c.b16 %v1932, %v1924
    %v2781 = vpack.c.b16 %v1933, %v1925
    %v2782 = vpack.c.b16 %v1934, %v1926
    %v2783 = vpack.c.b16 %v1935, %v1927
    %v2784 = vpack.c.b16 %v1944, %v1936
    %v2785 = vpack.c.b16 %v1945, %v1937
    %v2786 = vpack.c.b16 %v1946, %v1938
    %v2787 = vpack.c.b16 %v1947, %v1939
    %v2788 = vpack.c.b16 %v1948, %v1940
    %v2789 = vpack.c.b16 %v1949, %v1941
    %v2790 = vpack.c.b16 %v1950, %v1942
    %v2791 = vpack.c.b16 %v1951, %v1943
    %v2792 = vpack.c.b16 %v1960, %v1952
    %v2793 = vpack.c.b16 %v1961, %v1953
    %v2794 = vpack.c.b16 %v1962, %v1954
    %v2795 = vpack.c.b16 %v1963, %v1955
    %v2796 = vpack.c.b16 %v1964, %v1956
    %v2797 = vpack.c.b16 %v1965, %v1957
    %v2798 = vpack.c.b16 %v1966, %v1958
    %v2799 = vpack.c.b16 %v1967, %v1959
    %v2800 = vpack.c.b16 %v1976, %v1968
    %v2801 = vpack.c.b16 %v1977, %v1969
    %v2802 = vpack.c.b16 %v1978, %v1970
    %v2803 = vpack.c.b16 %v1979, %v1971
    %v2804 = vpack.c.b16 %v1980, %v1972
    %v2805 = vpack.c.b16 %v1981, %v1973
    %v2806 = vpack.c.b16 %v1982, %v1974
    %v2807 = vpack.c.b16 %v1983, %v1975
    %v2808 = vpack.c.b16 %v1992, %v1984
    %v2809 = vpack.c.b16 %v1993, %v1985
    %v2810 = vpack.c.b16 %v1994, %v1986
    %v2811 = vpack.c.b16 %v1995, %v1987
    %v2812 = vpack.c.b16 %v1996, %v1988
    %v2813 = vpack.c.b16 %v1997, %v1989
    %v2814 = vpack.c.b16 %v1998, %v1990
    %v2815 = vpack.c.b16 %v1999, %v1991
    %v2816 = vpack.c.b16 %v2008, %v2000
    %v2817 = vpack.c.b16 %v2009, %v2001
    %v2818 = vpack.c.b16 %v2010, %v2002
    %v2819 = vpack.c.b16 %v2011, %v2003
    %v2820 = vpack.c.b16 %v2012, %v2004
    %v2821 = vpack.c.b16 %v2013, %v2005
    %v2822 = vpack.c.b16 %v2014, %v2006
    %v2823 = vpack.c.b16 %v2015, %v2007
    %v2824 = vpack.c.b16 %v2024, %v2016
    %v2825 = vpack.c.b16 %v2025, %v2017
    %v2826 = vpack.c.b16 %v2026, %v2018
    %v2827 = vpack.c.b16 %v2027, %v2019
    %v2828 = vpack.c.b16 %v2028, %v2020
    %v2829 = vpack.c.b16 %v2029, %v2021
    %v2830 = vpack.c.b16 %v2030, %v2022
    %v2831 = vpack.c.b16 %v2031, %v2023
    %v2832 = vpack.c.b16 %v2040, %v2032
    %v2833 = vpack.c.b16 %v2041, %v2033
    %v2834 = vpack.c.b16 %v2042, %v2034
    %v2835 = vpack.c.b16 %v2043, %v2035
    %v2836 = vpack.c.b16 %v2044, %v2036
    %v2837 = vpack.c.b16 %v2045, %v2037
    %v2838 = vpack.c.b16 %v2046, %v2038
    %v2839 = vpack.c.b16 %v2047, %v2039
    %v2840 = vpack.c.b16 %v2056, %v2048
    %v2841 = vpack.c.b16 %v2057, %v2049
    %v2842 = vpack.c.b16 %v2058, %v2050
    %v2843 = vpack.c.b16 %v2059, %v2051
    %v2844 = vpack.c.b16 %v2060, %v2052
    %v2845 = vpack.c.b16 %v2061, %v2053
    %v2846 = vpack.c.b16 %v2062, %v2054
    %v2847 = vpack.c.b16 %v2063, %v2055
    %v2848 = vpack.c.b16 %v2072, %v2064
    %v2849 = vpack.c.b16 %v2073, %v2065
    %v2850 = vpack.c.b16 %v2074, %v2066
    %v2851 = vpack.c.b16 %v2075, %v2067
    %v2852 = vpack.c.b16 %v2076, %v2068
    %v2853 = vpack.c.b16 %v2077, %v2069
    %v2854 = vpack.c.b16 %v2078, %v2070
    %v2855 = vpack.c.b16 %v2079, %v2071
    %v2856 = vpack.c.b16 %v2088, %v2080
    %v2857 = vpack.c.b16 %v2089, %v2081
    %v2858 = vpack.c.b16 %v2090, %v2082
    %v2859 = vpack.c.b16 %v2091, %v2083
    %v2860 = vpack.c.b16 %v2092, %v2084
    %v2861 = vpack.c.b16 %v2093, %v2085
    %v2862 = vpack.c.b16 %v2094, %v2086
    %v2863 = vpack.c.b16 %v2095, %v2087
    %v2864 = vpack.c.b16 %v2104, %v2096
    %v2865 = vpack.c.b16 %v2105, %v2097
    %v2866 = vpack.c.b16 %v2106, %v2098
    %v2867 = vpack.c.b16 %v2107, %v2099
    %v2868 = vpack.c.b16 %v2108, %v2100
    %v2869 = vpack.c.b16 %v2109, %v2101
    %v2870 = vpack.c.b16 %v2110, %v2102
    %v2871 = vpack.c.b16 %v2111, %v2103
    %v2872 = vpack.c.b16 %v2120, %v2112
    %v2873 = vpack.c.b16 %v2121, %v2113
    %v2874 = vpack.c.b16 %v2122, %v2114
    %v2875 = vpack.c.b16 %v2123, %v2115
    %v2876 = vpack.c.b16 %v2124, %v2116
    %v2877 = vpack.c.b16 %v2125, %v2117
    %v2878 = vpack.c.b16 %v2126, %v2118
    %v2879 = vpack.c.b16 %v2127, %v2119
    %v2880 = vpack.c.b16 %v2136, %v2128
    %v2881 = vpack.c.b16 %v2137, %v2129
    %v2882 = vpack.c.b16 %v2138, %v2130
    %v2883 = vpack.c.b16 %v2139, %v2131
    %v2884 = vpack.c.b16 %v2140, %v2132
    %v2885 = vpack.c.b16 %v2141, %v2133
    %v2886 = vpack.c.b16 %v2142, %v2134
    %v2887 = vpack.c.b16 %v2143, %v2135
    %v2888 = vpack.c.b16 %v2152, %v2144
    %v2889 = vpack.c.b16 %v2153, %v2145
    %v2890 = vpack.c.b16 %v2154, %v2146
    %v2891 = vpack.c.b16 %v2155, %v2147
    %v2892 = vpack.c.b16 %v2156, %v2148
    %v2893 = vpack.c.b16 %v2157, %v2149
    %v2894 = vpack.c.b16 %v2158, %v2150
    %v2895 = vpack.c.b16 %v2159, %v2151
    %v2896 = vpack.c.b16 %v2168, %v2160
    %v2897 = vpack.c.b16 %v2169, %v2161
    %v2898 = vpack.c.b16 %v2170, %v2162
    %v2899 = vpack.c.b16 %v2171, %v2163
    %v2900 = vpack.c.b16 %v2172, %v2164
    %v2901 = vpack.c.b16 %v2173, %v2165
    %v2902 = vpack.c.b16 %v2174, %v2166
    %v2903 = vpack.c.b16 %v2175, %v2167
    %v2904 = vpack.c.b16 %v2184, %v2176
    %v2905 = vpack.c.b16 %v2185, %v2177
    %v2906 = vpack.c.b16 %v2186, %v2178
    %v2907 = vpack.c.b16 %v2187, %v2179
    %v2908 = vpack.c.b16 %v2188, %v2180
    %v2909 = vpack.c.b16 %v2189, %v2181
    %v2910 = vpack.c.b16 %v2190, %v2182
    %v2911 = vpack.c.b16 %v2191, %v2183
    %v2912 = vpack.c.b16 %v2200, %v2192
    %v2913 = vpack.c.b16 %v2201, %v2193
    %v2914 = vpack.c.b16 %v2202, %v2194
    %v2915 = vpack.c.b16 %v2203, %v2195
    %v2916 = vpack.c.b16 %v2204, %v2196
    %v2917 = vpack.c.b16 %v2205, %v2197
    %v2918 = vpack.c.b16 %v2206, %v2198
    %v2919 = vpack.c.b16 %v2207, %v2199
    %v2920 = vpack.c.b16 %v2216, %v2208
    %v2921 = vpack.c.b16 %v2217, %v2209
    %v2922 = vpack.c.b16 %v2218, %v2210
    %v2923 = vpack.c.b16 %v2219, %v2211
    %v2924 = vpack.c.b16 %v2220, %v2212
    %v2925 = vpack.c.b16 %v2221, %v2213
    %v2926 = vpack.c.b16 %v2222, %v2214
    %v2927 = vpack.c.b16 %v2223, %v2215
    %v2928 = vpack.c.b16 %v2232, %v2224
    %v2929 = vpack.c.b16 %v2233, %v2225
    %v2930 = vpack.c.b16 %v2234, %v2226
    %v2931 = vpack.c.b16 %v2235, %v2227
    %v2932 = vpack.c.b16 %v2236, %v2228
    %v2933 = vpack.c.b16 %v2237, %v2229
    %v2934 = vpack.c.b16 %v2238, %v2230
    %v2935 = vpack.c.b16 %v2239, %v2231
    %v2936 = vpack.c.b16 %v2248, %v2240
    %v2937 = vpack.c.b16 %v2249, %v2241
    %v2938 = vpack.c.b16 %v2250, %v2242
    %v2939 = vpack.c.b16 %v2251, %v2243
    %v2940 = vpack.c.b16 %v2252, %v2244
    %v2941 = vpack.c.b16 %v2253, %v2245
    %v2942 = vpack.c.b16 %v2254, %v2246
    %v2943 = vpack.c.b16 %v2255, %v2247
    %v2944 = vpack.c.b16 %v2264, %v2256
    %v2945 = vpack.c.b16 %v2265, %v2257
    %v2946 = vpack.c.b16 %v2266, %v2258
    %v2947 = vpack.c.b16 %v2267, %v2259
    %v2948 = vpack.c.b16 %v2268, %v2260
    %v2949 = vpack.c.b16 %v2269, %v2261
    %v2950 = vpack.c.b16 %v2270, %v2262
    %v2951 = vpack.c.b16 %v2271, %v2263
    %v2952 = vpack.c.b16 %v2280, %v2272
    %v2953 = vpack.c.b16 %v2281, %v2273
    %v2954 = vpack.c.b16 %v2282, %v2274
    %v2955 = vpack.c.b16 %v2283, %v2275
    %v2956 = vpack.c.b16 %v2284, %v2276
    %v2957 = vpack.c.b16 %v2285, %v2277
    %v2958 = vpack.c.b16 %v2286, %v2278
    %v2959 = vpack.c.b16 %v2287, %v2279
    %v2960 = vpack.c.b16 %v2296, %v2288
    %v2961 = vpack.c.b16 %v2297, %v2289
    %v2962 = vpack.c.b16 %v2298, %v2290
    %v2963 = vpack.c.b16 %v2299, %v2291
    %v2964 = vpack.c.b16 %v2300, %v2292
    %v2965 = vpack.c.b16 %v2301, %v2293
    %v2966 = vpack.c.b16 %v2302, %v2294
    %v2967 = vpack.c.b16 %v2303, %v2295
    %v2968 = vpack.c.b16 %v2312, %v2304
    %v2969 = vpack.c.b16 %v2313, %v2305
    %v2970 = vpack.c.b16 %v2314, %v2306
    %v2971 = vpack.c.b16 %v2315, %v2307
    %v2972 = vpack.c.b16 %v2316, %v2308
    %v2973 = vpack.c.b16 %v2317, %v2309
    %v2974 = vpack.c.b16 %v2318, %v2310
    %v2975 = vpack.c.b16 %v2319, %v2311
    %v2976 = vpack.c.b16 %v2328, %v2320
    %v2977 = vpack.c.b16 %v2329, %v2321
    %v2978 = vpack.c.b16 %v2330, %v2322
    %v2979 = vpack.c.b16 %v2331, %v2323
    %v2980 = vpack.c.b16 %v2332, %v2324
    %v2981 = vpack.c.b16 %v2333, %v2325
    %v2982 = vpack.c.b16 %v2334, %v2326
    %v2983 = vpack.c.b16 %v2335, %v2327
    %v2984 = vpack.c.b16 %v2344, %v2336
    %v2985 = vpack.c.b16 %v2345, %v2337
    %v2986 = vpack.c.b16 %v2346, %v2338
    %v2987 = vpack.c.b16 %v2347, %v2339
    %v2988 = vpack.c.b16 %v2348, %v2340
    %v2989 = vpack.c.b16 %v2349, %v2341
    %v2990 = vpack.c.b16 %v2350, %v2342
    %v2991 = vpack.c.b16 %v2351, %v2343
    %v2992 = vpack.c.b16 %v2360, %v2352
    %v2993 = vpack.c.b16 %v2361, %v2353
    %v2994 = vpack.c.b16 %v2362, %v2354
    %v2995 = vpack.c.b16 %v2363, %v2355
    %v2996 = vpack.c.b16 %v2364, %v2356
    %v2997 = vpack.c.b16 %v2365, %v2357
    %v2998 = vpack.c.b16 %v2366, %v2358
    %v2999 = vpack.c.b16 %v2367, %v2359
    %v3000 = vpack.c.b16 %v2376, %v2368
    %v3001 = vpack.c.b16 %v2377, %v2369
    %v3002 = vpack.c.b16 %v2378, %v2370
    %v3003 = vpack.c.b16 %v2379, %v2371
    %v3004 = vpack.c.b16 %v2380, %v2372
    %v3005 = vpack.c.b16 %v2381, %v2373
    %v3006 = vpack.c.b16 %v2382, %v2374
    %v3007 = vpack.c.b16 %v2383, %v2375
    %v3008 = vpack.c.b16 %v2392, %v2384
    %v3009 = vpack.c.b16 %v2393, %v2385
    %v3010 = vpack.c.b16 %v2394, %v2386
    %v3011 = vpack.c.b16 %v2395, %v2387
    %v3012 = vpack.c.b16 %v2396, %v2388
    %v3013 = vpack.c.b16 %v2397, %v2389
    %v3014 = vpack.c.b16 %v2398, %v2390
    %v3015 = vpack.c.b16 %v2399, %v2391
    %v3016 = vpack.c.b16 %v2408, %v2400
    %v3017 = vpack.c.b16 %v2409, %v2401
    %v3018 = vpack.c.b16 %v2410, %v2402
    %v3019 = vpack.c.b16 %v2411, %v2403
    %v3020 = vpack.c.b16 %v2412, %v2404
    %v3021 = vpack.c.b16 %v2413, %v2405
    %v3022 = vpack.c.b16 %v2414, %v2406
    %v3023 = vpack.c.b16 %v2415, %v2407
    %v3024 = vpack.c.b16 %v2424, %v2416
    %v3025 = vpack.c.b16 %v2425, %v2417
    %v3026 = vpack.c.b16 %v2426, %v2418
    %v3027 = vpack.c.b16 %v2427, %v2419
    %v3028 = vpack.c.b16 %v2428, %v2420
    %v3029 = vpack.c.b16 %v2429, %v2421
    %v3030 = vpack.c.b16 %v2430, %v2422
    %v3031 = vpack.c.b16 %v2431, %v2423
    %v3032 = vpack.c.b16 %v2440, %v2432
    %v3033 = vpack.c.b16 %v2441, %v2433
    %v3034 = vpack.c.b16 %v2442, %v2434
    %v3035 = vpack.c.b16 %v2443, %v2435
    %v3036 = vpack.c.b16 %v2444, %v2436
    %v3037 = vpack.c.b16 %v2445, %v2437
    %v3038 = vpack.c.b16 %v2446, %v2438
    %v3039 = vpack.c.b16 %v2447, %v2439
    %v3040 = vpack.c.b16 %v2456, %v2448
    %v3041 = vpack.c.b16 %v2457, %v2449
    %v3042 = vpack.c.b16 %v2458, %v2450
    %v3043 = vpack.c.b16 %v2459, %v2451
    %v3044 = vpack.c.b16 %v2460, %v2452
    %v3045 = vpack.c.b16 %v2461, %v2453
    %v3046 = vpack.c.b16 %v2462, %v2454
    %v3047 = vpack.c.b16 %v2463, %v2455
    %v3048 = vpack.c.b16 %v2472, %v2464
    %v3049 = vpack.c.b16 %v2473, %v2465
    %v3050 = vpack.c.b16 %v2474, %v2466
    %v3051 = vpack.c.b16 %v2475, %v2467
    %v3052 = vpack.c.b16 %v2476, %v2468
    %v3053 = vpack.c.b16 %v2477, %v2469
    %v3054 = vpack.c.b16 %v2478, %v2470
    %v3055 = vpack.c.b16 %v2479, %v2471
    %v3056 = vpack.c.b16 %v2488, %v2480
    %v3057 = vpack.c.b16 %v2489, %v2481
    %v3058 = vpack.c.b16 %v2490, %v2482
    %v3059 = vpack.c.b16 %v2491, %v2483
    %v3060 = vpack.c.b16 %v2492, %v2484
    %v3061 = vpack.c.b16 %v2493, %v2485
    %v3062 = vpack.c.b16 %v2494, %v2486
    %v3063 = vpack.c.b16 %v2495, %v2487
    %v3064 = vpack.c.b16 %v2504, %v2496
    %v3065 = vpack.c.b16 %v2505, %v2497
    %v3066 = vpack.c.b16 %v2506, %v2498
    %v3067 = vpack.c.b16 %v2507, %v2499
    %v3068 = vpack.c.b16 %v2508, %v2500
    %v3069 = vpack.c.b16 %v2509, %v2501
    %v3070 = vpack.c.b16 %v2510, %v2502
    %v3071 = vpack.c.b16 %v2511, %v2503
    %v3072 = vpack.c.b16 %v2520, %v2512
    %v3073 = vpack.c.b16 %v2521, %v2513
    %v3074 = vpack.c.b16 %v2522, %v2514
    %v3075 = vpack.c.b16 %v2523, %v2515
    %v3076 = vpack.c.b16 %v2524, %v2516
    %v3077 = vpack.c.b16 %v2525, %v2517
    %v3078 = vpack.c.b16 %v2526, %v2518
    %v3079 = vpack.c.b16 %v2527, %v2519
    %v3080 = vpack.c.b16 %v2536, %v2528
    %v3081 = vpack.c.b16 %v2537, %v2529
    %v3082 = vpack.c.b16 %v2538, %v2530
    %v3083 = vpack.c.b16 %v2539, %v2531
    %v3084 = vpack.c.b16 %v2540, %v2532
    %v3085 = vpack.c.b16 %v2541, %v2533
    %v3086 = vpack.c.b16 %v2542, %v2534
    %v3087 = vpack.c.b16 %v2543, %v2535
    %v3088 = vpack.c.b16 %v2552, %v2544
    %v3089 = vpack.c.b16 %v2553, %v2545
    %v3090 = vpack.c.b16 %v2554, %v2546
    %v3091 = vpack.c.b16 %v2555, %v2547
    %v3092 = vpack.c.b16 %v2556, %v2548
    %v3093 = vpack.c.b16 %v2557, %v2549
    %v3094 = vpack.c.b16 %v2558, %v2550
    %v3095 = vpack.c.b16 %v2559, %v2551
    %v3096 = vpack.c.b16 %v2568, %v2560
    %v3097 = vpack.c.b16 %v2569, %v2561
    %v3098 = vpack.c.b16 %v2570, %v2562
    %v3099 = vpack.c.b16 %v2571, %v2563
    %v3100 = vpack.c.b16 %v2572, %v2564
    %v3101 = vpack.c.b16 %v2573, %v2565
    %v3102 = vpack.c.b16 %v2574, %v2566
    %v3103 = vpack.c.b16 %v2575, %v2567
    %v3104 = vpack.c.b16 %v2584, %v2576
    %v3105 = vpack.c.b16 %v2585, %v2577
    %v3106 = vpack.c.b16 %v2586, %v2578
    %v3107 = vpack.c.b16 %v2587, %v2579
    %v3108 = vpack.c.b16 %v2588, %v2580
    %v3109 = vpack.c.b16 %v2589, %v2581
    %v3110 = vpack.c.b16 %v2590, %v2582
    %v3111 = vpack.c.b16 %v2591, %v2583
    %v3112 = vpack.c.b16 %v2600, %v2592
    %v3113 = vpack.c.b16 %v2601, %v2593
    %v3114 = vpack.c.b16 %v2602, %v2594
    %v3115 = vpack.c.b16 %v2603, %v2595
    %v3116 = vpack.c.b16 %v2604, %v2596
    %v3117 = vpack.c.b16 %v2605, %v2597
    %v3118 = vpack.c.b16 %v2606, %v2598
    %v3119 = vpack.c.b16 %v2607, %v2599
    %3632 = vmatprep.subr.bf16.mxu0 %v2665
    %3633 = vmatpush1.bf16.msra.mxu0 %v2664
    %3634 = vmatprep.subr.bf16.mxu0 %v2657
    %3635 = vmatpush1.bf16.msra.mxu0 %v2656
    %3636 = vmatprep.subr.bf16.mxu0 %v2649
    %3637 = vmatpush1.bf16.msra.mxu0 %v2648
    %3638 = vmatprep.subr.bf16.mxu0 %v2641
    %3639 = vmatpush1.bf16.msra.mxu0 %v2640
    %3640 = vmatprep.subr.bf16.mxu0 %v2633
    %3641 = vmatpush1.bf16.msra.mxu0 %v2632
    %3642 = vmatprep.subr.bf16.mxu0 %v2625
    %3643 = vmatpush1.bf16.msra.mxu0 %v2624
    %3644 = vmatprep.subr.bf16.mxu0 %v2617
    %3645 = vmatpush1.bf16.msra.mxu0 %v2616
    %3646 = vmatprep.subr.bf16.mxu0 %v2609
    %3647 = vmatpush1.bf16.msra.mxu0 %v2608
    %3648 = vmatprep.subr.bf16.mxu0 %v2729
    %3649 = vmatpush2.bf16.msra.mxu0 %v2728
    %3650 = vmatprep.subr.bf16.mxu0 %v2721
    %3651 = vmatpush2.bf16.msra.mxu0 %v2720
    %3652 = vmatprep.subr.bf16.mxu0 %v2713
    %3653 = vmatpush2.bf16.msra.mxu0 %v2712
    %3654 = vmatprep.subr.bf16.mxu0 %v2705
    %3655 = vmatpush2.bf16.msra.mxu0 %v2704
    %3656 = vmatprep.subr.bf16.mxu0 %v2697
    %3657 = vmatpush2.bf16.msra.mxu0 %v2696
    %3658 = vmatprep.subr.bf16.mxu0 %v2689
    %3659 = vmatpush2.bf16.msra.mxu0 %v2688
    %3660 = vmatprep.subr.bf16.mxu0 %v2681
    %3661 = vmatpush2.bf16.msra.mxu0 %v2680
    %3662 = vmatprep.subr.bf16.mxu0 %v2673
    %3663 = vmatpush2.bf16.msra.mxu0 %v2672
    %3664 = vmatprep.mubr.bf16.mxu0 %v1023
    %3665 = vmatmul.mubr.bf16.gmra.mxu0 %v1022
    %v3666 = vpop.f32.mrf.mxu0
    %v3667 = vadd.f32 %v1035, %v3666
    %v3668 = vpop.f32.mrf.mxu0
    %v3669 = vadd.f32 %v1039, %v3668
    %v3670 = vpop.f32.mrf.mxu0
    %v3671 = vpop.f32.mrf.mxu0
    %3672 = vdwg.mxu0
    %3673 = vmatprep.subr.bf16.mxu0 %v2793
    %3674 = vmatpush1.bf16.msra.mxu0 %v2792
    %3675 = vmatprep.subr.bf16.mxu0 %v2785
    %3676 = vmatpush1.bf16.msra.mxu0 %v2784
    %3677 = vmatprep.subr.bf16.mxu0 %v2777
    %3678 = vmatpush1.bf16.msra.mxu0 %v2776
    %3679 = vmatprep.subr.bf16.mxu0 %v2769
    %3680 = vmatpush1.bf16.msra.mxu0 %v2768
    %3681 = vmatprep.subr.bf16.mxu0 %v2761
    %3682 = vmatpush1.bf16.msra.mxu0 %v2760
    %3683 = vmatprep.subr.bf16.mxu0 %v2753
    %3684 = vmatpush1.bf16.msra.mxu0 %v2752
    %3685 = vmatprep.subr.bf16.mxu0 %v2745
    %3686 = vmatpush1.bf16.msra.mxu0 %v2744
    %3687 = vmatprep.subr.bf16.mxu0 %v2737
    %3688 = vmatpush1.bf16.msra.mxu0 %v2736
    %3689 = vmatprep.subr.bf16.mxu0 %v2857
    %3690 = vmatpush2.bf16.msra.mxu0 %v2856
    %3691 = vmatprep.subr.bf16.mxu0 %v2849
    %3692 = vmatpush2.bf16.msra.mxu0 %v2848
    %3693 = vmatprep.subr.bf16.mxu0 %v2841
    %3694 = vmatpush2.bf16.msra.mxu0 %v2840
    %3695 = vmatprep.subr.bf16.mxu0 %v2833
    %3696 = vmatpush2.bf16.msra.mxu0 %v2832
    %3697 = vmatprep.subr.bf16.mxu0 %v2825
    %3698 = vmatpush2.bf16.msra.mxu0 %v2824
    %3699 = vmatprep.subr.bf16.mxu0 %v2817
    %3700 = vmatpush2.bf16.msra.mxu0 %v2816
    %3701 = vmatprep.subr.bf16.mxu0 %v2809
    %3702 = vmatpush2.bf16.msra.mxu0 %v2808
    %3703 = vmatprep.subr.bf16.mxu0 %v2801
    %3704 = vmatpush2.bf16.msra.mxu0 %v2800
    %3705 = vmatprep.mubr.bf16.mxu0 %v1025
    %3706 = vmatmul.mubr.bf16.gmra.mxu0 %v1024
    %v3707 = vpop.f32.mrf.mxu0
    %v3708 = vadd.f32 %v3667, %v3707
    %v3709 = vpop.f32.mrf.mxu0
    %v3710 = vadd.f32 %v3669, %v3709
    %v3711 = vpop.f32.mrf.mxu0
    %v3712 = vpop.f32.mrf.mxu0
    %3713 = vdwg.mxu0
    %3714 = vmatprep.subr.bf16.mxu0 %v2921
    %3715 = vmatpush1.bf16.msra.mxu0 %v2920
    %3716 = vmatprep.subr.bf16.mxu0 %v2913
    %3717 = vmatpush1.bf16.msra.mxu0 %v2912
    %3718 = vmatprep.subr.bf16.mxu0 %v2905
    %3719 = vmatpush1.bf16.msra.mxu0 %v2904
    %3720 = vmatprep.subr.bf16.mxu0 %v2897
    %3721 = vmatpush1.bf16.msra.mxu0 %v2896
    %3722 = vmatprep.subr.bf16.mxu0 %v2889
    %3723 = vmatpush1.bf16.msra.mxu0 %v2888
    %3724 = vmatprep.subr.bf16.mxu0 %v2881
    %3725 = vmatpush1.bf16.msra.mxu0 %v2880
    %3726 = vmatprep.subr.bf16.mxu0 %v2873
    %3727 = vmatpush1.bf16.msra.mxu0 %v2872
    %3728 = vmatprep.subr.bf16.mxu0 %v2865
    %3729 = vmatpush1.bf16.msra.mxu0 %v2864
    %3730 = vmatprep.subr.bf16.mxu0 %v2985
    %3731 = vmatpush2.bf16.msra.mxu0 %v2984
    %3732 = vmatprep.subr.bf16.mxu0 %v2977
    %3733 = vmatpush2.bf16.msra.mxu0 %v2976
    %3734 = vmatprep.subr.bf16.mxu0 %v2969
    %3735 = vmatpush2.bf16.msra.mxu0 %v2968
    %3736 = vmatprep.subr.bf16.mxu0 %v2961
    %3737 = vmatpush2.bf16.msra.mxu0 %v2960
    %3738 = vmatprep.subr.bf16.mxu0 %v2953
    %3739 = vmatpush2.bf16.msra.mxu0 %v2952
    %3740 = vmatprep.subr.bf16.mxu0 %v2945
    %3741 = vmatpush2.bf16.msra.mxu0 %v2944
    %3742 = vmatprep.subr.bf16.mxu0 %v2937
    %3743 = vmatpush2.bf16.msra.mxu0 %v2936
    %3744 = vmatprep.subr.bf16.mxu0 %v2929
    %3745 = vmatpush2.bf16.msra.mxu0 %v2928
    %3746 = vmatprep.mubr.bf16.mxu0 %v1027
    %3747 = vmatmul.mubr.bf16.gmra.mxu0 %v1026
    %v3748 = vpop.f32.mrf.mxu0
    %v3749 = vadd.f32 %v3708, %v3748
    %v3750 = vpop.f32.mrf.mxu0
    %v3751 = vadd.f32 %v3710, %v3750
    %v3752 = vpop.f32.mrf.mxu0
    %v3753 = vpop.f32.mrf.mxu0
    %3754 = vdwg.mxu0
    %3755 = vmatprep.subr.bf16.mxu0 %v3049
    %3756 = vmatpush1.bf16.msra.mxu0 %v3048
    %3757 = vmatprep.subr.bf16.mxu0 %v3041
    %3758 = vmatpush1.bf16.msra.mxu0 %v3040
    %3759 = vmatprep.subr.bf16.mxu0 %v3033
    %3760 = vmatpush1.bf16.msra.mxu0 %v3032
    %3761 = vmatprep.subr.bf16.mxu0 %v3025
    %3762 = vmatpush1.bf16.msra.mxu0 %v3024
    %3763 = vmatprep.subr.bf16.mxu0 %v3017
    %3764 = vmatpush1.bf16.msra.mxu0 %v3016
    %3765 = vmatprep.subr.bf16.mxu0 %v3009
    %3766 = vmatpush1.bf16.msra.mxu0 %v3008
    %3767 = vmatprep.subr.bf16.mxu0 %v3001
    %3768 = vmatpush1.bf16.msra.mxu0 %v3000
    %3769 = vmatprep.subr.bf16.mxu0 %v2993
    %3770 = vmatpush1.bf16.msra.mxu0 %v2992
    %3771 = vmatprep.subr.bf16.mxu0 %v3113
    %3772 = vmatpush2.bf16.msra.mxu0 %v3112
    %3773 = vmatprep.subr.bf16.mxu0 %v3105
    %3774 = vmatpush2.bf16.msra.mxu0 %v3104
    %3775 = vmatprep.subr.bf16.mxu0 %v3097
    %3776 = vmatpush2.bf16.msra.mxu0 %v3096
    %3777 = vmatprep.subr.bf16.mxu0 %v3089
    %3778 = vmatpush2.bf16.msra.mxu0 %v3088
    %3779 = vmatprep.subr.bf16.mxu0 %v3081
    %3780 = vmatpush2.bf16.msra.mxu0 %v3080
    %3781 = vmatprep.subr.bf16.mxu0 %v3073
    %3782 = vmatpush2.bf16.msra.mxu0 %v3072
    %3783 = vmatprep.subr.bf16.mxu0 %v3065
    %3784 = vmatpush2.bf16.msra.mxu0 %v3064
    %3785 = vmatprep.subr.bf16.mxu0 %v3057
    %3786 = vmatpush2.bf16.msra.mxu0 %v3056
    %3787 = vmatprep.mubr.bf16.mxu0 %v1029
    %3788 = vmatmul.mubr.bf16.gmra.mxu0 %v1028
    %v3789 = vpop.f32.mrf.mxu0
    %v3790 = vadd.f32 %v3749, %v3789
    %v3791 = vpop.f32.mrf.mxu0
    %v3792 = vadd.f32 %v3751, %v3791
    %v3793 = vpop.f32.mrf.mxu0
    %v3794 = vpop.f32.mrf.mxu0
    %3795 = vdwg.mxu0
    %3796 = vmatprep.subr.bf16.mxu0 %v2667
    %3797 = vmatpush1.bf16.msra.mxu0 %v2666
    %3798 = vmatprep.subr.bf16.mxu0 %v2659
    %3799 = vmatpush1.bf16.msra.mxu0 %v2658
    %3800 = vmatprep.subr.bf16.mxu0 %v2651
    %3801 = vmatpush1.bf16.msra.mxu0 %v2650
    %3802 = vmatprep.subr.bf16.mxu0 %v2643
    %3803 = vmatpush1.bf16.msra.mxu0 %v2642
    %3804 = vmatprep.subr.bf16.mxu0 %v2635
    %3805 = vmatpush1.bf16.msra.mxu0 %v2634
    %3806 = vmatprep.subr.bf16.mxu0 %v2627
    %3807 = vmatpush1.bf16.msra.mxu0 %v2626
    %3808 = vmatprep.subr.bf16.mxu0 %v2619
    %3809 = vmatpush1.bf16.msra.mxu0 %v2618
    %3810 = vmatprep.subr.bf16.mxu0 %v2611
    %3811 = vmatpush1.bf16.msra.mxu0 %v2610
    %3812 = vmatprep.subr.bf16.mxu0 %v2731
    %3813 = vmatpush2.bf16.msra.mxu0 %v2730
    %3814 = vmatprep.subr.bf16.mxu0 %v2723
    %3815 = vmatpush2.bf16.msra.mxu0 %v2722
    %3816 = vmatprep.subr.bf16.mxu0 %v2715
    %3817 = vmatpush2.bf16.msra.mxu0 %v2714
    %3818 = vmatprep.subr.bf16.mxu0 %v2707
    %3819 = vmatpush2.bf16.msra.mxu0 %v2706
    %3820 = vmatprep.subr.bf16.mxu0 %v2699
    %3821 = vmatpush2.bf16.msra.mxu0 %v2698
    %3822 = vmatprep.subr.bf16.mxu0 %v2691
    %3823 = vmatpush2.bf16.msra.mxu0 %v2690
    %3824 = vmatprep.subr.bf16.mxu0 %v2683
    %3825 = vmatpush2.bf16.msra.mxu0 %v2682
    %3826 = vmatprep.subr.bf16.mxu0 %v2675
    %3827 = vmatpush2.bf16.msra.mxu0 %v2674
    %3828 = vmatprep.mubr.bf16.mxu0 %v1023
    %3829 = vmatmul.mubr.bf16.gmra.mxu0 %v1022
    %v3830 = vpop.f32.mrf.mxu0
    %v3831 = vadd.f32 %v1043, %v3830
    %v3832 = vpop.f32.mrf.mxu0
    %v3833 = vadd.f32 %v1047, %v3832
    %v3834 = vpop.f32.mrf.mxu0
    %v3835 = vpop.f32.mrf.mxu0
    %3836 = vdwg.mxu0
    %3837 = vmatprep.subr.bf16.mxu0 %v2795
    %3838 = vmatpush1.bf16.msra.mxu0 %v2794
    %3839 = vmatprep.subr.bf16.mxu0 %v2787
    %3840 = vmatpush1.bf16.msra.mxu0 %v2786
    %3841 = vmatprep.subr.bf16.mxu0 %v2779
    %3842 = vmatpush1.bf16.msra.mxu0 %v2778
    %3843 = vmatprep.subr.bf16.mxu0 %v2771
    %3844 = vmatpush1.bf16.msra.mxu0 %v2770
    %3845 = vmatprep.subr.bf16.mxu0 %v2763
    %3846 = vmatpush1.bf16.msra.mxu0 %v2762
    %3847 = vmatprep.subr.bf16.mxu0 %v2755
    %3848 = vmatpush1.bf16.msra.mxu0 %v2754
    %3849 = vmatprep.subr.bf16.mxu0 %v2747
    %3850 = vmatpush1.bf16.msra.mxu0 %v2746
    %3851 = vmatprep.subr.bf16.mxu0 %v2739
    %3852 = vmatpush1.bf16.msra.mxu0 %v2738
    %3853 = vmatprep.subr.bf16.mxu0 %v2859
    %3854 = vmatpush2.bf16.msra.mxu0 %v2858
    %3855 = vmatprep.subr.bf16.mxu0 %v2851
    %3856 = vmatpush2.bf16.msra.mxu0 %v2850
    %3857 = vmatprep.subr.bf16.mxu0 %v2843
    %3858 = vmatpush2.bf16.msra.mxu0 %v2842
    %3859 = vmatprep.subr.bf16.mxu0 %v2835
    %3860 = vmatpush2.bf16.msra.mxu0 %v2834
    %3861 = vmatprep.subr.bf16.mxu0 %v2827
    %3862 = vmatpush2.bf16.msra.mxu0 %v2826
    %3863 = vmatprep.subr.bf16.mxu0 %v2819
    %3864 = vmatpush2.bf16.msra.mxu0 %v2818
    %3865 = vmatprep.subr.bf16.mxu0 %v2811
    %3866 = vmatpush2.bf16.msra.mxu0 %v2810
    %3867 = vmatprep.subr.bf16.mxu0 %v2803
    %3868 = vmatpush2.bf16.msra.mxu0 %v2802
    %3869 = vmatprep.mubr.bf16.mxu0 %v1025
    %3870 = vmatmul.mubr.bf16.gmra.mxu0 %v1024
    %v3871 = vpop.f32.mrf.mxu0
    %v3872 = vadd.f32 %v3831, %v3871
    %v3873 = vpop.f32.mrf.mxu0
    %v3874 = vadd.f32 %v3833, %v3873
    %v3875 = vpop.f32.mrf.mxu0
    %v3876 = vpop.f32.mrf.mxu0
    %3877 = vdwg.mxu0
    %3878 = vmatprep.subr.bf16.mxu0 %v2923
    %3879 = vmatpush1.bf16.msra.mxu0 %v2922
    %3880 = vmatprep.subr.bf16.mxu0 %v2915
    %3881 = vmatpush1.bf16.msra.mxu0 %v2914
    %3882 = vmatprep.subr.bf16.mxu0 %v2907
    %3883 = vmatpush1.bf16.msra.mxu0 %v2906
    %3884 = vmatprep.subr.bf16.mxu0 %v2899
    %3885 = vmatpush1.bf16.msra.mxu0 %v2898
    %3886 = vmatprep.subr.bf16.mxu0 %v2891
    %3887 = vmatpush1.bf16.msra.mxu0 %v2890
    %3888 = vmatprep.subr.bf16.mxu0 %v2883
    %3889 = vmatpush1.bf16.msra.mxu0 %v2882
    %3890 = vmatprep.subr.bf16.mxu0 %v2875
    %3891 = vmatpush1.bf16.msra.mxu0 %v2874
    %3892 = vmatprep.subr.bf16.mxu0 %v2867
    %3893 = vmatpush1.bf16.msra.mxu0 %v2866
    %3894 = vmatprep.subr.bf16.mxu0 %v2987
    %3895 = vmatpush2.bf16.msra.mxu0 %v2986
    %3896 = vmatprep.subr.bf16.mxu0 %v2979
    %3897 = vmatpush2.bf16.msra.mxu0 %v2978
    %3898 = vmatprep.subr.bf16.mxu0 %v2971
    %3899 = vmatpush2.bf16.msra.mxu0 %v2970
    %3900 = vmatprep.subr.bf16.mxu0 %v2963
    %3901 = vmatpush2.bf16.msra.mxu0 %v2962
    %3902 = vmatprep.subr.bf16.mxu0 %v2955
    %3903 = vmatpush2.bf16.msra.mxu0 %v2954
    %3904 = vmatprep.subr.bf16.mxu0 %v2947
    %3905 = vmatpush2.bf16.msra.mxu0 %v2946
    %3906 = vmatprep.subr.bf16.mxu0 %v2939
    %3907 = vmatpush2.bf16.msra.mxu0 %v2938
    %3908 = vmatprep.subr.bf16.mxu0 %v2931
    %3909 = vmatpush2.bf16.msra.mxu0 %v2930
    %3910 = vmatprep.mubr.bf16.mxu0 %v1027
    %3911 = vmatmul.mubr.bf16.gmra.mxu0 %v1026
    %v3912 = vpop.f32.mrf.mxu0
    %v3913 = vadd.f32 %v3872, %v3912
    %v3914 = vpop.f32.mrf.mxu0
    %v3915 = vadd.f32 %v3874, %v3914
    %v3916 = vpop.f32.mrf.mxu0
    %v3917 = vpop.f32.mrf.mxu0
    %3918 = vdwg.mxu0
    %3919 = vmatprep.subr.bf16.mxu0 %v3051
    %3920 = vmatpush1.bf16.msra.mxu0 %v3050
    %3921 = vmatprep.subr.bf16.mxu0 %v3043
    %3922 = vmatpush1.bf16.msra.mxu0 %v3042
    %3923 = vmatprep.subr.bf16.mxu0 %v3035
    %3924 = vmatpush1.bf16.msra.mxu0 %v3034
    %3925 = vmatprep.subr.bf16.mxu0 %v3027
    %3926 = vmatpush1.bf16.msra.mxu0 %v3026
    %3927 = vmatprep.subr.bf16.mxu0 %v3019
    %3928 = vmatpush1.bf16.msra.mxu0 %v3018
    %3929 = vmatprep.subr.bf16.mxu0 %v3011
    %3930 = vmatpush1.bf16.msra.mxu0 %v3010
    %3931 = vmatprep.subr.bf16.mxu0 %v3003
    %3932 = vmatpush1.bf16.msra.mxu0 %v3002
    %3933 = vmatprep.subr.bf16.mxu0 %v2995
    %3934 = vmatpush1.bf16.msra.mxu0 %v2994
    %3935 = vmatprep.subr.bf16.mxu0 %v3115
    %3936 = vmatpush2.bf16.msra.mxu0 %v3114
    %3937 = vmatprep.subr.bf16.mxu0 %v3107
    %3938 = vmatpush2.bf16.msra.mxu0 %v3106
    %3939 = vmatprep.subr.bf16.mxu0 %v3099
    %3940 = vmatpush2.bf16.msra.mxu0 %v3098
    %3941 = vmatprep.subr.bf16.mxu0 %v3091
    %3942 = vmatpush2.bf16.msra.mxu0 %v3090
    %3943 = vmatprep.subr.bf16.mxu0 %v3083
    %3944 = vmatpush2.bf16.msra.mxu0 %v3082
    %3945 = vmatprep.subr.bf16.mxu0 %v3075
    %3946 = vmatpush2.bf16.msra.mxu0 %v3074
    %3947 = vmatprep.subr.bf16.mxu0 %v3067
    %3948 = vmatpush2.bf16.msra.mxu0 %v3066
    %3949 = vmatprep.subr.bf16.mxu0 %v3059
    %3950 = vmatpush2.bf16.msra.mxu0 %v3058
    %3951 = vmatprep.mubr.bf16.mxu0 %v1029
    %3952 = vmatmul.mubr.bf16.gmra.mxu0 %v1028
    %v3953 = vpop.f32.mrf.mxu0
    %v3954 = vadd.f32 %v3913, %v3953
    %v3955 = vpop.f32.mrf.mxu0
    %v3956 = vadd.f32 %v3915, %v3955
    %v3957 = vpop.f32.mrf.mxu0
    %v3958 = vpop.f32.mrf.mxu0
    %3959 = vdwg.mxu0
    %3960 = vmatprep.subr.bf16.mxu0 %v2669
    %3961 = vmatpush1.bf16.msra.mxu0 %v2668
    %3962 = vmatprep.subr.bf16.mxu0 %v2661
    %3963 = vmatpush1.bf16.msra.mxu0 %v2660
    %3964 = vmatprep.subr.bf16.mxu0 %v2653
    %3965 = vmatpush1.bf16.msra.mxu0 %v2652
    %3966 = vmatprep.subr.bf16.mxu0 %v2645
    %3967 = vmatpush1.bf16.msra.mxu0 %v2644
    %3968 = vmatprep.subr.bf16.mxu0 %v2637
    %3969 = vmatpush1.bf16.msra.mxu0 %v2636
    %3970 = vmatprep.subr.bf16.mxu0 %v2629
    %3971 = vmatpush1.bf16.msra.mxu0 %v2628
    %3972 = vmatprep.subr.bf16.mxu0 %v2621
    %3973 = vmatpush1.bf16.msra.mxu0 %v2620
    %3974 = vmatprep.subr.bf16.mxu0 %v2613
    %3975 = vmatpush1.bf16.msra.mxu0 %v2612
    %3976 = vmatprep.subr.bf16.mxu0 %v2733
    %3977 = vmatpush2.bf16.msra.mxu0 %v2732
    %3978 = vmatprep.subr.bf16.mxu0 %v2725
    %3979 = vmatpush2.bf16.msra.mxu0 %v2724
    %3980 = vmatprep.subr.bf16.mxu0 %v2717
    %3981 = vmatpush2.bf16.msra.mxu0 %v2716
    %3982 = vmatprep.subr.bf16.mxu0 %v2709
    %3983 = vmatpush2.bf16.msra.mxu0 %v2708
    %3984 = vmatprep.subr.bf16.mxu0 %v2701
    %3985 = vmatpush2.bf16.msra.mxu0 %v2700
    %3986 = vmatprep.subr.bf16.mxu0 %v2693
    %3987 = vmatpush2.bf16.msra.mxu0 %v2692
    %3988 = vmatprep.subr.bf16.mxu0 %v2685
    %3989 = vmatpush2.bf16.msra.mxu0 %v2684
    %3990 = vmatprep.subr.bf16.mxu0 %v2677
    %3991 = vmatpush2.bf16.msra.mxu0 %v2676
    %3992 = vmatprep.mubr.bf16.mxu0 %v1023
    %3993 = vmatmul.mubr.bf16.gmra.mxu0 %v1022
    %v3994 = vpop.f32.mrf.mxu0
    %v3995 = vadd.f32 %v1051, %v3994
    %v3996 = vpop.f32.mrf.mxu0
    %v3997 = vadd.f32 %v1055, %v3996
    %v3998 = vpop.f32.mrf.mxu0
    %v3999 = vpop.f32.mrf.mxu0
    %4000 = vdwg.mxu0
    %4001 = vmatprep.subr.bf16.mxu0 %v2797
    %4002 = vmatpush1.bf16.msra.mxu0 %v2796
    %4003 = vmatprep.subr.bf16.mxu0 %v2789
    %4004 = vmatpush1.bf16.msra.mxu0 %v2788
    %4005 = vmatprep.subr.bf16.mxu0 %v2781
    %4006 = vmatpush1.bf16.msra.mxu0 %v2780
    %4007 = vmatprep.subr.bf16.mxu0 %v2773
    %4008 = vmatpush1.bf16.msra.mxu0 %v2772
    %4009 = vmatprep.subr.bf16.mxu0 %v2765
    %4010 = vmatpush1.bf16.msra.mxu0 %v2764
    %4011 = vmatprep.subr.bf16.mxu0 %v2757
    %4012 = vmatpush1.bf16.msra.mxu0 %v2756
    %4013 = vmatprep.subr.bf16.mxu0 %v2749
    %4014 = vmatpush1.bf16.msra.mxu0 %v2748
    %4015 = vmatprep.subr.bf16.mxu0 %v2741
    %4016 = vmatpush1.bf16.msra.mxu0 %v2740
    %4017 = vmatprep.subr.bf16.mxu0 %v2861
    %4018 = vmatpush2.bf16.msra.mxu0 %v2860
    %4019 = vmatprep.subr.bf16.mxu0 %v2853
    %4020 = vmatpush2.bf16.msra.mxu0 %v2852
    %4021 = vmatprep.subr.bf16.mxu0 %v2845
    %4022 = vmatpush2.bf16.msra.mxu0 %v2844
    %4023 = vmatprep.subr.bf16.mxu0 %v2837
    %4024 = vmatpush2.bf16.msra.mxu0 %v2836
    %4025 = vmatprep.subr.bf16.mxu0 %v2829
    %4026 = vmatpush2.bf16.msra.mxu0 %v2828
    %4027 = vmatprep.subr.bf16.mxu0 %v2821
    %4028 = vmatpush2.bf16.msra.mxu0 %v2820
    %4029 = vmatprep.subr.bf16.mxu0 %v2813
    %4030 = vmatpush2.bf16.msra.mxu0 %v2812
    %4031 = vmatprep.subr.bf16.mxu0 %v2805
    %4032 = vmatpush2.bf16.msra.mxu0 %v2804
    %4033 = vmatprep.mubr.bf16.mxu0 %v1025
    %4034 = vmatmul.mubr.bf16.gmra.mxu0 %v1024
    %v4035 = vpop.f32.mrf.mxu0
    %v4036 = vadd.f32 %v3995, %v4035
    %v4037 = vpop.f32.mrf.mxu0
    %v4038 = vadd.f32 %v3997, %v4037
    %v4039 = vpop.f32.mrf.mxu0
    %v4040 = vpop.f32.mrf.mxu0
    %4041 = vdwg.mxu0
    %4042 = vmatprep.subr.bf16.mxu0 %v2925
    %4043 = vmatpush1.bf16.msra.mxu0 %v2924
    %4044 = vmatprep.subr.bf16.mxu0 %v2917
    %4045 = vmatpush1.bf16.msra.mxu0 %v2916
    %4046 = vmatprep.subr.bf16.mxu0 %v2909
    %4047 = vmatpush1.bf16.msra.mxu0 %v2908
    %4048 = vmatprep.subr.bf16.mxu0 %v2901
    %4049 = vmatpush1.bf16.msra.mxu0 %v2900
    %4050 = vmatprep.subr.bf16.mxu0 %v2893
    %4051 = vmatpush1.bf16.msra.mxu0 %v2892
    %4052 = vmatprep.subr.bf16.mxu0 %v2885
    %4053 = vmatpush1.bf16.msra.mxu0 %v2884
    %4054 = vmatprep.subr.bf16.mxu0 %v2877
    %4055 = vmatpush1.bf16.msra.mxu0 %v2876
    %4056 = vmatprep.subr.bf16.mxu0 %v2869
    %4057 = vmatpush1.bf16.msra.mxu0 %v2868
    %4058 = vmatprep.subr.bf16.mxu0 %v2989
    %4059 = vmatpush2.bf16.msra.mxu0 %v2988
    %4060 = vmatprep.subr.bf16.mxu0 %v2981
    %4061 = vmatpush2.bf16.msra.mxu0 %v2980
    %4062 = vmatprep.subr.bf16.mxu0 %v2973
    %4063 = vmatpush2.bf16.msra.mxu0 %v2972
    %4064 = vmatprep.subr.bf16.mxu0 %v2965
    %4065 = vmatpush2.bf16.msra.mxu0 %v2964
    %4066 = vmatprep.subr.bf16.mxu0 %v2957
    %4067 = vmatpush2.bf16.msra.mxu0 %v2956
    %4068 = vmatprep.subr.bf16.mxu0 %v2949
    %4069 = vmatpush2.bf16.msra.mxu0 %v2948
    %4070 = vmatprep.subr.bf16.mxu0 %v2941
    %4071 = vmatpush2.bf16.msra.mxu0 %v2940
    %4072 = vmatprep.subr.bf16.mxu0 %v2933
    %4073 = vmatpush2.bf16.msra.mxu0 %v2932
    %4074 = vmatprep.mubr.bf16.mxu0 %v1027
    %4075 = vmatmul.mubr.bf16.gmra.mxu0 %v1026
    %v4076 = vpop.f32.mrf.mxu0
    %v4077 = vadd.f32 %v4036, %v4076
    %v4078 = vpop.f32.mrf.mxu0
    %v4079 = vadd.f32 %v4038, %v4078
    %v4080 = vpop.f32.mrf.mxu0
    %v4081 = vpop.f32.mrf.mxu0
    %4082 = vdwg.mxu0
    %4083 = vmatprep.subr.bf16.mxu0 %v3053
    %4084 = vmatpush1.bf16.msra.mxu0 %v3052
    %4085 = vmatprep.subr.bf16.mxu0 %v3045
    %4086 = vmatpush1.bf16.msra.mxu0 %v3044
    %4087 = vmatprep.subr.bf16.mxu0 %v3037
    %4088 = vmatpush1.bf16.msra.mxu0 %v3036
    %4089 = vmatprep.subr.bf16.mxu0 %v3029
    %4090 = vmatpush1.bf16.msra.mxu0 %v3028
    %4091 = vmatprep.subr.bf16.mxu0 %v3021
    %4092 = vmatpush1.bf16.msra.mxu0 %v3020
    %4093 = vmatprep.subr.bf16.mxu0 %v3013
    %4094 = vmatpush1.bf16.msra.mxu0 %v3012
    %4095 = vmatprep.subr.bf16.mxu0 %v3005
    %4096 = vmatpush1.bf16.msra.mxu0 %v3004
    %4097 = vmatprep.subr.bf16.mxu0 %v2997
    %4098 = vmatpush1.bf16.msra.mxu0 %v2996
    %4099 = vmatprep.subr.bf16.mxu0 %v3117
    %4100 = vmatpush2.bf16.msra.mxu0 %v3116
    %4101 = vmatprep.subr.bf16.mxu0 %v3109
    %4102 = vmatpush2.bf16.msra.mxu0 %v3108
    %4103 = vmatprep.subr.bf16.mxu0 %v3101
    %4104 = vmatpush2.bf16.msra.mxu0 %v3100
    %4105 = vmatprep.subr.bf16.mxu0 %v3093
    %4106 = vmatpush2.bf16.msra.mxu0 %v3092
    %4107 = vmatprep.subr.bf16.mxu0 %v3085
    %4108 = vmatpush2.bf16.msra.mxu0 %v3084
    %4109 = vmatprep.subr.bf16.mxu0 %v3077
    %4110 = vmatpush2.bf16.msra.mxu0 %v3076
    %4111 = vmatprep.subr.bf16.mxu0 %v3069
    %4112 = vmatpush2.bf16.msra.mxu0 %v3068
    %4113 = vmatprep.subr.bf16.mxu0 %v3061
    %4114 = vmatpush2.bf16.msra.mxu0 %v3060
    %4115 = vmatprep.mubr.bf16.mxu0 %v1029
    %4116 = vmatmul.mubr.bf16.gmra.mxu0 %v1028
    %v4117 = vpop.f32.mrf.mxu0
    %v4118 = vadd.f32 %v4077, %v4117
    %v4119 = vpop.f32.mrf.mxu0
    %v4120 = vadd.f32 %v4079, %v4119
    %v4121 = vpop.f32.mrf.mxu0
    %v4122 = vpop.f32.mrf.mxu0
    %4123 = vdwg.mxu0
    %4124 = vmatprep.subr.bf16.mxu0 %v2671
    %4125 = vmatpush1.bf16.msra.mxu0 %v2670
    %4126 = vmatprep.subr.bf16.mxu0 %v2663
    %4127 = vmatpush1.bf16.msra.mxu0 %v2662
    %4128 = vmatprep.subr.bf16.mxu0 %v2655
    %4129 = vmatpush1.bf16.msra.mxu0 %v2654
    %4130 = vmatprep.subr.bf16.mxu0 %v2647
    %4131 = vmatpush1.bf16.msra.mxu0 %v2646
    %4132 = vmatprep.subr.bf16.mxu0 %v2639
    %4133 = vmatpush1.bf16.msra.mxu0 %v2638
    %4134 = vmatprep.subr.bf16.mxu0 %v2631
    %4135 = vmatpush1.bf16.msra.mxu0 %v2630
    %4136 = vmatprep.subr.bf16.mxu0 %v2623
    %4137 = vmatpush1.bf16.msra.mxu0 %v2622
    %4138 = vmatprep.subr.bf16.mxu0 %v2615
    %4139 = vmatpush1.bf16.msra.mxu0 %v2614
    %4140 = vmatprep.subr.bf16.mxu0 %v2735
    %4141 = vmatpush2.bf16.msra.mxu0 %v2734
    %4142 = vmatprep.subr.bf16.mxu0 %v2727
    %4143 = vmatpush2.bf16.msra.mxu0 %v2726
    %4144 = vmatprep.subr.bf16.mxu0 %v2719
    %4145 = vmatpush2.bf16.msra.mxu0 %v2718
    %4146 = vmatprep.subr.bf16.mxu0 %v2711
    %4147 = vmatpush2.bf16.msra.mxu0 %v2710
    %4148 = vmatprep.subr.bf16.mxu0 %v2703
    %4149 = vmatpush2.bf16.msra.mxu0 %v2702
    %4150 = vmatprep.subr.bf16.mxu0 %v2695
    %4151 = vmatpush2.bf16.msra.mxu0 %v2694
    %4152 = vmatprep.subr.bf16.mxu0 %v2687
    %4153 = vmatpush2.bf16.msra.mxu0 %v2686
    %4154 = vmatprep.subr.bf16.mxu0 %v2679
    %4155 = vmatpush2.bf16.msra.mxu0 %v2678
    %4156 = vmatprep.mubr.bf16.mxu0 %v1023
    %4157 = vmatmul.mubr.bf16.gmra.mxu0 %v1022
    %v4158 = vpop.f32.mrf.mxu0
    %v4159 = vadd.f32 %v1059, %v4158
    %v4160 = vpop.f32.mrf.mxu0
    %v4161 = vadd.f32 %v1063, %v4160
    %v4162 = vpop.f32.mrf.mxu0
    %v4163 = vpop.f32.mrf.mxu0
    %4164 = vdwg.mxu0
    %4165 = vmatprep.subr.bf16.mxu0 %v2799
    %4166 = vmatpush1.bf16.msra.mxu0 %v2798
    %4167 = vmatprep.subr.bf16.mxu0 %v2791
    %4168 = vmatpush1.bf16.msra.mxu0 %v2790
    %4169 = vmatprep.subr.bf16.mxu0 %v2783
    %4170 = vmatpush1.bf16.msra.mxu0 %v2782
    %4171 = vmatprep.subr.bf16.mxu0 %v2775
    %4172 = vmatpush1.bf16.msra.mxu0 %v2774
    %4173 = vmatprep.subr.bf16.mxu0 %v2767
    %4174 = vmatpush1.bf16.msra.mxu0 %v2766
    %4175 = vmatprep.subr.bf16.mxu0 %v2759
    %4176 = vmatpush1.bf16.msra.mxu0 %v2758
    %4177 = vmatprep.subr.bf16.mxu0 %v2751
    %4178 = vmatpush1.bf16.msra.mxu0 %v2750
    %4179 = vmatprep.subr.bf16.mxu0 %v2743
    %4180 = vmatpush1.bf16.msra.mxu0 %v2742
    %4181 = vmatprep.subr.bf16.mxu0 %v2863
    %4182 = vmatpush2.bf16.msra.mxu0 %v2862
    %4183 = vmatprep.subr.bf16.mxu0 %v2855
    %4184 = vmatpush2.bf16.msra.mxu0 %v2854
    %4185 = vmatprep.subr.bf16.mxu0 %v2847
    %4186 = vmatpush2.bf16.msra.mxu0 %v2846
    %4187 = vmatprep.subr.bf16.mxu0 %v2839
    %4188 = vmatpush2.bf16.msra.mxu0 %v2838
    %4189 = vmatprep.subr.bf16.mxu0 %v2831
    %4190 = vmatpush2.bf16.msra.mxu0 %v2830
    %4191 = vmatprep.subr.bf16.mxu0 %v2823
    %4192 = vmatpush2.bf16.msra.mxu0 %v2822
    %4193 = vmatprep.subr.bf16.mxu0 %v2815
    %4194 = vmatpush2.bf16.msra.mxu0 %v2814
    %4195 = vmatprep.subr.bf16.mxu0 %v2807
    %4196 = vmatpush2.bf16.msra.mxu0 %v2806
    %4197 = vmatprep.mubr.bf16.mxu0 %v1025
    %4198 = vmatmul.mubr.bf16.gmra.mxu0 %v1024
    %v4199 = vpop.f32.mrf.mxu0
    %v4200 = vadd.f32 %v4159, %v4199
    %v4201 = vpop.f32.mrf.mxu0
    %v4202 = vadd.f32 %v4161, %v4201
    %v4203 = vpop.f32.mrf.mxu0
    %v4204 = vpop.f32.mrf.mxu0
    %4205 = vdwg.mxu0
    %4206 = vmatprep.subr.bf16.mxu0 %v2927
    %4207 = vmatpush1.bf16.msra.mxu0 %v2926
    %4208 = vmatprep.subr.bf16.mxu0 %v2919
    %4209 = vmatpush1.bf16.msra.mxu0 %v2918
    %4210 = vmatprep.subr.bf16.mxu0 %v2911
    %4211 = vmatpush1.bf16.msra.mxu0 %v2910
    %4212 = vmatprep.subr.bf16.mxu0 %v2903
    %4213 = vmatpush1.bf16.msra.mxu0 %v2902
    %4214 = vmatprep.subr.bf16.mxu0 %v2895
    %4215 = vmatpush1.bf16.msra.mxu0 %v2894
    %4216 = vmatprep.subr.bf16.mxu0 %v2887
    %4217 = vmatpush1.bf16.msra.mxu0 %v2886
    %4218 = vmatprep.subr.bf16.mxu0 %v2879
    %4219 = vmatpush1.bf16.msra.mxu0 %v2878
    %4220 = vmatprep.subr.bf16.mxu0 %v2871
    %4221 = vmatpush1.bf16.msra.mxu0 %v2870
    %4222 = vmatprep.subr.bf16.mxu0 %v2991
    %4223 = vmatpush2.bf16.msra.mxu0 %v2990
    %4224 = vmatprep.subr.bf16.mxu0 %v2983
    %4225 = vmatpush2.bf16.msra.mxu0 %v2982
    %4226 = vmatprep.subr.bf16.mxu0 %v2975
    %4227 = vmatpush2.bf16.msra.mxu0 %v2974
    %4228 = vmatprep.subr.bf16.mxu0 %v2967
    %4229 = vmatpush2.bf16.msra.mxu0 %v2966
    %4230 = vmatprep.subr.bf16.mxu0 %v2959
    %4231 = vmatpush2.bf16.msra.mxu0 %v2958
    %4232 = vmatprep.subr.bf16.mxu0 %v2951
    %4233 = vmatpush2.bf16.msra.mxu0 %v2950
    %4234 = vmatprep.subr.bf16.mxu0 %v2943
    %4235 = vmatpush2.bf16.msra.mxu0 %v2942
    %4236 = vmatprep.subr.bf16.mxu0 %v2935
    %4237 = vmatpush2.bf16.msra.mxu0 %v2934
    %4238 = vmatprep.mubr.bf16.mxu0 %v1027
    %4239 = vmatmul.mubr.bf16.gmra.mxu0 %v1026
    %v4240 = vpop.f32.mrf.mxu0
    %v4241 = vadd.f32 %v4200, %v4240
    %v4242 = vpop.f32.mrf.mxu0
    %v4243 = vadd.f32 %v4202, %v4242
    %v4244 = vpop.f32.mrf.mxu0
    %v4245 = vpop.f32.mrf.mxu0
    %4246 = vdwg.mxu0
    %4247 = vmatprep.subr.bf16.mxu0 %v3055
    %4248 = vmatpush1.bf16.msra.mxu0 %v3054
    %4249 = vmatprep.subr.bf16.mxu0 %v3047
    %4250 = vmatpush1.bf16.msra.mxu0 %v3046
    %4251 = vmatprep.subr.bf16.mxu0 %v3039
    %4252 = vmatpush1.bf16.msra.mxu0 %v3038
    %4253 = vmatprep.subr.bf16.mxu0 %v3031
    %4254 = vmatpush1.bf16.msra.mxu0 %v3030
    %4255 = vmatprep.subr.bf16.mxu0 %v3023
    %4256 = vmatpush1.bf16.msra.mxu0 %v3022
    %4257 = vmatprep.subr.bf16.mxu0 %v3015
    %4258 = vmatpush1.bf16.msra.mxu0 %v3014
    %4259 = vmatprep.subr.bf16.mxu0 %v3007
    %4260 = vmatpush1.bf16.msra.mxu0 %v3006
    %4261 = vmatprep.subr.bf16.mxu0 %v2999
    %4262 = vmatpush1.bf16.msra.mxu0 %v2998
    %4263 = vmatprep.subr.bf16.mxu0 %v3119
    %4264 = vmatpush2.bf16.msra.mxu0 %v3118
    %4265 = vmatprep.subr.bf16.mxu0 %v3111
    %4266 = vmatpush2.bf16.msra.mxu0 %v3110
    %4267 = vmatprep.subr.bf16.mxu0 %v3103
    %4268 = vmatpush2.bf16.msra.mxu0 %v3102
    %4269 = vmatprep.subr.bf16.mxu0 %v3095
    %4270 = vmatpush2.bf16.msra.mxu0 %v3094
    %4271 = vmatprep.subr.bf16.mxu0 %v3087
    %4272 = vmatpush2.bf16.msra.mxu0 %v3086
    %4273 = vmatprep.subr.bf16.mxu0 %v3079
    %4274 = vmatpush2.bf16.msra.mxu0 %v3078
    %4275 = vmatprep.subr.bf16.mxu0 %v3071
    %4276 = vmatpush2.bf16.msra.mxu0 %v3070
    %4277 = vmatprep.subr.bf16.mxu0 %v3063
    %4278 = vmatpush2.bf16.msra.mxu0 %v3062
    %4279 = vmatprep.mubr.bf16.mxu0 %v1029
    %4280 = vmatmul.mubr.bf16.gmra.mxu0 %v1028
    %v4281 = vpop.f32.mrf.mxu0
    %v4282 = vadd.f32 %v4241, %v4281
    %v4283 = vpop.f32.mrf.mxu0
    %v4284 = vadd.f32 %v4243, %v4283
    %v4285 = vpop.f32.mrf.mxu0
    %v4286 = vpop.f32.mrf.mxu0
    %4287 = vdwg.mxu0
    %vm4288 = vcmp.ge.f32.partialorder %v3790, 0.0
    %vm4289 = vcmp.ge.f32.partialorder %v3792, 0.0
    %vm4290 = vcmp.ge.f32.partialorder %v3954, 0.0
    %vm4291 = vcmp.ge.f32.partialorder %v3956, 0.0
    %vm4292 = vcmp.ge.f32.partialorder %v4118, 0.0
    %vm4293 = vcmp.ge.f32.partialorder %v4120, 0.0
    %vm4294 = vcmp.ge.f32.partialorder %v4282, 0.0
    %vm4295 = vcmp.ge.f32.partialorder %v4284, 0.0
    %v4296 = vmul.f32 %v3790, 0.01
    %v4297 = vmul.f32 %v3792, 0.01
    %v4298 = vmul.f32 %v3954, 0.01
    %v4299 = vmul.f32 %v3956, 0.01
    %v4300 = vmul.f32 %v4118, 0.01
    %v4301 = vmul.f32 %v4120, 0.01
    %v4302 = vmul.f32 %v4282, 0.01
    %v4303 = vmul.f32 %v4284, 0.01
    %v4304 = vsel %vm4288, %v3790, %v4296
    %v4305 = vsel %vm4289, %v3792, %v4297
    %v4306 = vsel %vm4290, %v3954, %v4298
    %v4307 = vsel %vm4291, %v3956, %v4299
    %v4308 = vsel %vm4292, %v4118, %v4300
    %v4309 = vsel %vm4293, %v4120, %v4301
    %v4310 = vsel %vm4294, %v4282, %v4302
    %v4311 = vsel %vm4295, %v4284, %v4303
    %v4312 = vld [vmem:[%s7] sm:$0xf]
    %v4313 = vld [vmem:[%s7 + $0x4] sm:$0xf]
    %v4314 = vld [vmem:[%s7 + $0x8] sm:$0xf]
    %v4315 = vld [vmem:[%s7 + $0xc] sm:$0xf]
    %v4316 = vld [vmem:[%s7 + $0x10] sm:$0xf]
    %v4317 = vld [vmem:[%s7 + $0x14] sm:$0xf]
    %v4318 = vld [vmem:[%s7 + $0x18] sm:$0xf]
    %v4319 = vld [vmem:[%s7 + $0x1c] sm:$0xf]
    %v4320 = vld [vmem:[%s7 + $0x20] sm:$0xf]
    %v4321 = vld [vmem:[%s7 + $0x24] sm:$0xf]
    %v4322 = vld [vmem:[%s7 + $0x28] sm:$0xf]
    %v4323 = vld [vmem:[%s7 + $0x2c] sm:$0xf]
    %v4324 = vld [vmem:[%s7 + $0x30] sm:$0xf]
    %v4325 = vld [vmem:[%s7 + $0x34] sm:$0xf]
    %v4326 = vld [vmem:[%s7 + $0x38] sm:$0xf]
    %v4327 = vld [vmem:[%s7 + $0x3c] sm:$0xf]
    %v4328 = vld [vmem:[%s7 + $0x40] sm:$0xf]
    %v4329 = vld [vmem:[%s7 + $0x44] sm:$0xf]
    %v4330 = vld [vmem:[%s7 + $0x48] sm:$0xf]
    %v4331 = vld [vmem:[%s7 + $0x4c] sm:$0xf]
    %v4332 = vld [vmem:[%s7 + $0x50] sm:$0xf]
    %v4333 = vld [vmem:[%s7 + $0x54] sm:$0xf]
    %v4334 = vld [vmem:[%s7 + $0x58] sm:$0xf]
    %v4335 = vld [vmem:[%s7 + $0x5c] sm:$0xf]
    %v4336 = vld [vmem:[%s7 + $0x60] sm:$0xf]
    %v4337 = vld [vmem:[%s7 + $0x64] sm:$0xf]
    %v4338 = vld [vmem:[%s7 + $0x68] sm:$0xf]
    %v4339 = vld [vmem:[%s7 + $0x6c] sm:$0xf]
    %v4340 = vld [vmem:[%s7 + $0x70] sm:$0xf]
    %v4341 = vld [vmem:[%s7 + $0x74] sm:$0xf]
    %v4342 = vld [vmem:[%s7 + $0x78] sm:$0xf]
    %v4343 = vld [vmem:[%s7 + $0x7c] sm:$0xf]
    %v4344 = vld [vmem:[%s7 + $0x80] sm:$0xf]
    %v4345 = vld [vmem:[%s7 + $0x84] sm:$0xf]
    %v4346 = vld [vmem:[%s7 + $0x88] sm:$0xf]
    %v4347 = vld [vmem:[%s7 + $0x8c] sm:$0xf]
    %v4348 = vld [vmem:[%s7 + $0x90] sm:$0xf]
    %v4349 = vld [vmem:[%s7 + $0x94] sm:$0xf]
    %v4350 = vld [vmem:[%s7 + $0x98] sm:$0xf]
    %v4351 = vld [vmem:[%s7 + $0x9c] sm:$0xf]
    %v4352 = vld [vmem:[%s7 + $0xa0] sm:$0xf]
    %v4353 = vld [vmem:[%s7 + $0xa4] sm:$0xf]
    %v4354 = vld [vmem:[%s7 + $0xa8] sm:$0xf]
    %v4355 = vld [vmem:[%s7 + $0xac] sm:$0xf]
    %v4356 = vld [vmem:[%s7 + $0xb0] sm:$0xf]
    %v4357 = vld [vmem:[%s7 + $0xb4] sm:$0xf]
    %v4358 = vld [vmem:[%s7 + $0xb8] sm:$0xf]
    %v4359 = vld [vmem:[%s7 + $0xbc] sm:$0xf]
    %v4360 = vld [vmem:[%s7 + $0xc0] sm:$0xf]
    %v4361 = vld [vmem:[%s7 + $0xc4] sm:$0xf]
    %v4362 = vld [vmem:[%s7 + $0xc8] sm:$0xf]
    %v4363 = vld [vmem:[%s7 + $0xcc] sm:$0xf]
    %v4364 = vld [vmem:[%s7 + $0xd0] sm:$0xf]
    %v4365 = vld [vmem:[%s7 + $0xd4] sm:$0xf]
    %v4366 = vld [vmem:[%s7 + $0xd8] sm:$0xf]
    %v4367 = vld [vmem:[%s7 + $0xdc] sm:$0xf]
    %v4368 = vld [vmem:[%s7 + $0xe0] sm:$0xf]
    %v4369 = vld [vmem:[%s7 + $0xe4] sm:$0xf]
    %v4370 = vld [vmem:[%s7 + $0xe8] sm:$0xf]
    %v4371 = vld [vmem:[%s7 + $0xec] sm:$0xf]
    %v4372 = vld [vmem:[%s7 + $0xf0] sm:$0xf]
    %v4373 = vld [vmem:[%s7 + $0xf4] sm:$0xf]
    %v4374 = vld [vmem:[%s7 + $0xf8] sm:$0xf]
    %v4375 = vld [vmem:[%s7 + $0xfc] sm:$0xf]
    %v4376 = vld [vmem:[%s7 + $0x100] sm:$0xf]
    %v4377 = vld [vmem:[%s7 + $0x104] sm:$0xf]
    %v4378 = vld [vmem:[%s7 + $0x108] sm:$0xf]
    %v4379 = vld [vmem:[%s7 + $0x10c] sm:$0xf]
    %v4380 = vld [vmem:[%s7 + $0x110] sm:$0xf]
    %v4381 = vld [vmem:[%s7 + $0x114] sm:$0xf]
    %v4382 = vld [vmem:[%s7 + $0x118] sm:$0xf]
    %v4383 = vld [vmem:[%s7 + $0x11c] sm:$0xf]
    %v4384 = vld [vmem:[%s7 + $0x120] sm:$0xf]
    %v4385 = vld [vmem:[%s7 + $0x124] sm:$0xf]
    %v4386 = vld [vmem:[%s7 + $0x128] sm:$0xf]
    %v4387 = vld [vmem:[%s7 + $0x12c] sm:$0xf]
    %v4388 = vld [vmem:[%s7 + $0x130] sm:$0xf]
    %v4389 = vld [vmem:[%s7 + $0x134] sm:$0xf]
    %v4390 = vld [vmem:[%s7 + $0x138] sm:$0xf]
    %v4391 = vld [vmem:[%s7 + $0x13c] sm:$0xf]
    %v4392 = vld [vmem:[%s7 + $0x140] sm:$0xf]
    %v4393 = vld [vmem:[%s7 + $0x144] sm:$0xf]
    %v4394 = vld [vmem:[%s7 + $0x148] sm:$0xf]
    %v4395 = vld [vmem:[%s7 + $0x14c] sm:$0xf]
    %v4396 = vld [vmem:[%s7 + $0x150] sm:$0xf]
    %v4397 = vld [vmem:[%s7 + $0x154] sm:$0xf]
    %v4398 = vld [vmem:[%s7 + $0x158] sm:$0xf]
    %v4399 = vld [vmem:[%s7 + $0x15c] sm:$0xf]
    %v4400 = vld [vmem:[%s7 + $0x160] sm:$0xf]
    %v4401 = vld [vmem:[%s7 + $0x164] sm:$0xf]
    %v4402 = vld [vmem:[%s7 + $0x168] sm:$0xf]
    %v4403 = vld [vmem:[%s7 + $0x16c] sm:$0xf]
    %v4404 = vld [vmem:[%s7 + $0x170] sm:$0xf]
    %v4405 = vld [vmem:[%s7 + $0x174] sm:$0xf]
    %v4406 = vld [vmem:[%s7 + $0x178] sm:$0xf]
    %v4407 = vld [vmem:[%s7 + $0x17c] sm:$0xf]
    %v4408 = vld [vmem:[%s7 + $0x180] sm:$0xf]
    %v4409 = vld [vmem:[%s7 + $0x184] sm:$0xf]
    %v4410 = vld [vmem:[%s7 + $0x188] sm:$0xf]
    %v4411 = vld [vmem:[%s7 + $0x18c] sm:$0xf]
    %v4412 = vld [vmem:[%s7 + $0x190] sm:$0xf]
    %v4413 = vld [vmem:[%s7 + $0x194] sm:$0xf]
    %v4414 = vld [vmem:[%s7 + $0x198] sm:$0xf]
    %v4415 = vld [vmem:[%s7 + $0x19c] sm:$0xf]
    %v4416 = vld [vmem:[%s7 + $0x1a0] sm:$0xf]
    %v4417 = vld [vmem:[%s7 + $0x1a4] sm:$0xf]
    %v4418 = vld [vmem:[%s7 + $0x1a8] sm:$0xf]
    %v4419 = vld [vmem:[%s7 + $0x1ac] sm:$0xf]
    %v4420 = vld [vmem:[%s7 + $0x1b0] sm:$0xf]
    %v4421 = vld [vmem:[%s7 + $0x1b4] sm:$0xf]
    %v4422 = vld [vmem:[%s7 + $0x1b8] sm:$0xf]
    %v4423 = vld [vmem:[%s7 + $0x1bc] sm:$0xf]
    %v4424 = vld [vmem:[%s7 + $0x1c0] sm:$0xf]
    %v4425 = vld [vmem:[%s7 + $0x1c4] sm:$0xf]
    %v4426 = vld [vmem:[%s7 + $0x1c8] sm:$0xf]
    %v4427 = vld [vmem:[%s7 + $0x1cc] sm:$0xf]
    %v4428 = vld [vmem:[%s7 + $0x1d0] sm:$0xf]
    %v4429 = vld [vmem:[%s7 + $0x1d4] sm:$0xf]
    %v4430 = vld [vmem:[%s7 + $0x1d8] sm:$0xf]
    %v4431 = vld [vmem:[%s7 + $0x1dc] sm:$0xf]
    %v4432 = vld [vmem:[%s7 + $0x1e0] sm:$0xf]
    %v4433 = vld [vmem:[%s7 + $0x1e4] sm:$0xf]
    %v4434 = vld [vmem:[%s7 + $0x1e8] sm:$0xf]
    %v4435 = vld [vmem:[%s7 + $0x1ec] sm:$0xf]
    %v4436 = vld [vmem:[%s7 + $0x1f0] sm:$0xf]
    %v4437 = vld [vmem:[%s7 + $0x1f4] sm:$0xf]
    %v4438 = vld [vmem:[%s7 + $0x1f8] sm:$0xf]
    %v4439 = vld [vmem:[%s7 + $0x1fc] sm:$0xf]
    %v4440 = vpack.c.bf16 %v4304, %v4304
    %v4441 = vpack.c.bf16 %v4305, %v4305
    %v4442 = vpack.c.bf16 %v4306, %v4306
    %v4443 = vpack.c.bf16 %v4307, %v4307
    %v4444 = vpack.c.bf16 %v4308, %v4308
    %v4445 = vpack.c.bf16 %v4309, %v4309
    %v4446 = vpack.c.bf16 %v4310, %v4310
    %v4447 = vpack.c.bf16 %v4311, %v4311
    %v4448 = vld [vmem:[%s8] sm:$0x1]
    %v4450 = vlaneseq
    %v4451 = vshrl.u32 %v4450, 7
    %v4452 = vsub.s32 0, %v4451
    %v4453 = vrot.slane %v4448, %v4452
    %v4583 = vunpack.c.l.b16 %v4312
    %v4584 = vunpack.c.l.b16 %v4313
    %v4585 = vunpack.c.l.b16 %v4314
    %v4586 = vunpack.c.l.b16 %v4315
    %v4587 = vunpack.c.l.b16 %v4316
    %v4588 = vunpack.c.l.b16 %v4317
    %v4589 = vunpack.c.l.b16 %v4318
    %v4590 = vunpack.c.l.b16 %v4319
    %v4591 = vunpack.c.l.b16 %v4320
    %v4592 = vunpack.c.l.b16 %v4321
    %v4593 = vunpack.c.l.b16 %v4322
    %v4594 = vunpack.c.l.b16 %v4323
    %v4595 = vunpack.c.l.b16 %v4324
    %v4596 = vunpack.c.l.b16 %v4325
    %v4597 = vunpack.c.l.b16 %v4326
    %v4598 = vunpack.c.l.b16 %v4327
    %v4599 = vunpack.c.l.b16 %v4328
    %v4600 = vunpack.c.l.b16 %v4329
    %v4601 = vunpack.c.l.b16 %v4330
    %v4602 = vunpack.c.l.b16 %v4331
    %v4603 = vunpack.c.l.b16 %v4332
    %v4604 = vunpack.c.l.b16 %v4333
    %v4605 = vunpack.c.l.b16 %v4334
    %v4606 = vunpack.c.l.b16 %v4335
    %v4607 = vunpack.c.l.b16 %v4336
    %v4608 = vunpack.c.l.b16 %v4337
    %v4609 = vunpack.c.l.b16 %v4338
    %v4610 = vunpack.c.l.b16 %v4339
    %v4611 = vunpack.c.l.b16 %v4340
    %v4612 = vunpack.c.l.b16 %v4341
    %v4613 = vunpack.c.l.b16 %v4342
    %v4614 = vunpack.c.l.b16 %v4343
    %v4615 = vunpack.c.l.b16 %v4344
    %v4616 = vunpack.c.l.b16 %v4345
    %v4617 = vunpack.c.l.b16 %v4346
    %v4618 = vunpack.c.l.b16 %v4347
    %v4619 = vunpack.c.l.b16 %v4348
    %v4620 = vunpack.c.l.b16 %v4349
    %v4621 = vunpack.c.l.b16 %v4350
    %v4622 = vunpack.c.l.b16 %v4351
    %v4623 = vunpack.c.l.b16 %v4352
    %v4624 = vunpack.c.l.b16 %v4353
    %v4625 = vunpack.c.l.b16 %v4354
    %v4626 = vunpack.c.l.b16 %v4355
    %v4627 = vunpack.c.l.b16 %v4356
    %v4628 = vunpack.c.l.b16 %v4357
    %v4629 = vunpack.c.l.b16 %v4358
    %v4630 = vunpack.c.l.b16 %v4359
    %v4631 = vunpack.c.l.b16 %v4360
    %v4632 = vunpack.c.l.b16 %v4361
    %v4633 = vunpack.c.l.b16 %v4362
    %v4634 = vunpack.c.l.b16 %v4363
    %v4635 = vunpack.c.l.b16 %v4364
    %v4636 = vunpack.c.l.b16 %v4365
    %v4637 = vunpack.c.l.b16 %v4366
    %v4638 = vunpack.c.l.b16 %v4367
    %v4639 = vunpack.c.l.b16 %v4368
    %v4640 = vunpack.c.l.b16 %v4369
    %v4641 = vunpack.c.l.b16 %v4370
    %v4642 = vunpack.c.l.b16 %v4371
    %v4643 = vunpack.c.l.b16 %v4372
    %v4644 = vunpack.c.l.b16 %v4373
    %v4645 = vunpack.c.l.b16 %v4374
    %v4646 = vunpack.c.l.b16 %v4375
    %v4647 = vunpack.c.l.b16 %v4376
    %v4648 = vunpack.c.l.b16 %v4377
    %v4649 = vunpack.c.l.b16 %v4378
    %v4650 = vunpack.c.l.b16 %v4379
    %v4651 = vunpack.c.l.b16 %v4380
    %v4652 = vunpack.c.l.b16 %v4381
    %v4653 = vunpack.c.l.b16 %v4382
    %v4654 = vunpack.c.l.b16 %v4383
    %v4655 = vunpack.c.l.b16 %v4384
    %v4656 = vunpack.c.l.b16 %v4385
    %v4657 = vunpack.c.l.b16 %v4386
    %v4658 = vunpack.c.l.b16 %v4387
    %v4659 = vunpack.c.l.b16 %v4388
    %v4660 = vunpack.c.l.b16 %v4389
    %v4661 = vunpack.c.l.b16 %v4390
    %v4662 = vunpack.c.l.b16 %v4391
    %v4663 = vunpack.c.l.b16 %v4392
    %v4664 = vunpack.c.l.b16 %v4393
    %v4665 = vunpack.c.l.b16 %v4394
    %v4666 = vunpack.c.l.b16 %v4395
    %v4667 = vunpack.c.l.b16 %v4396
    %v4668 = vunpack.c.l.b16 %v4397
    %v4669 = vunpack.c.l.b16 %v4398
    %v4670 = vunpack.c.l.b16 %v4399
    %v4671 = vunpack.c.l.b16 %v4400
    %v4672 = vunpack.c.l.b16 %v4401
    %v4673 = vunpack.c.l.b16 %v4402
    %v4674 = vunpack.c.l.b16 %v4403
    %v4675 = vunpack.c.l.b16 %v4404
    %v4676 = vunpack.c.l.b16 %v4405
    %v4677 = vunpack.c.l.b16 %v4406
    %v4678 = vunpack.c.l.b16 %v4407
    %v4679 = vunpack.c.l.b16 %v4408
    %v4680 = vunpack.c.l.b16 %v4409
    %v4681 = vunpack.c.l.b16 %v4410
    %v4682 = vunpack.c.l.b16 %v4411
    %v4683 = vunpack.c.l.b16 %v4412
    %v4684 = vunpack.c.l.b16 %v4413
    %v4685 = vunpack.c.l.b16 %v4414
    %v4686 = vunpack.c.l.b16 %v4415
    %v4687 = vunpack.c.l.b16 %v4416
    %v4688 = vunpack.c.l.b16 %v4417
    %v4689 = vunpack.c.l.b16 %v4418
    %v4690 = vunpack.c.l.b16 %v4419
    %v4691 = vunpack.c.l.b16 %v4420
    %v4692 = vunpack.c.l.b16 %v4421
    %v4693 = vunpack.c.l.b16 %v4422
    %v4694 = vunpack.c.l.b16 %v4423
    %v4695 = vunpack.c.l.b16 %v4424
    %v4696 = vunpack.c.l.b16 %v4425
    %v4697 = vunpack.c.l.b16 %v4426
    %v4698 = vunpack.c.l.b16 %v4427
    %v4699 = vunpack.c.l.b16 %v4428
    %v4700 = vunpack.c.l.b16 %v4429
    %v4701 = vunpack.c.l.b16 %v4430
    %v4702 = vunpack.c.l.b16 %v4431
    %v4703 = vunpack.c.l.b16 %v4432
    %v4704 = vunpack.c.l.b16 %v4433
    %v4705 = vunpack.c.l.b16 %v4434
    %v4706 = vunpack.c.l.b16 %v4435
    %v4707 = vunpack.c.l.b16 %v4436
    %v4708 = vunpack.c.l.b16 %v4437
    %v4709 = vunpack.c.l.b16 %v4438
    %v4710 = vunpack.c.l.b16 %v4439
    %v4711 = vpack.c.b16 %v4584, %v4583
    %v4712 = vpack.c.b16 %v4586, %v4585
    %v4713 = vpack.c.b16 %v4588, %v4587
    %v4714 = vpack.c.b16 %v4590, %v4589
    %v4715 = vpack.c.b16 %v4592, %v4591
    %v4716 = vpack.c.b16 %v4594, %v4593
    %v4717 = vpack.c.b16 %v4596, %v4595
    %v4718 = vpack.c.b16 %v4598, %v4597
    %v4719 = vpack.c.b16 %v4600, %v4599
    %v4720 = vpack.c.b16 %v4602, %v4601
    %v4721 = vpack.c.b16 %v4604, %v4603
    %v4722 = vpack.c.b16 %v4606, %v4605
    %v4723 = vpack.c.b16 %v4608, %v4607
    %v4724 = vpack.c.b16 %v4610, %v4609
    %v4725 = vpack.c.b16 %v4612, %v4611
    %v4726 = vpack.c.b16 %v4614, %v4613
    %v4727 = vpack.c.b16 %v4616, %v4615
    %v4728 = vpack.c.b16 %v4618, %v4617
    %v4729 = vpack.c.b16 %v4620, %v4619
    %v4730 = vpack.c.b16 %v4622, %v4621
    %v4731 = vpack.c.b16 %v4624, %v4623
    %v4732 = vpack.c.b16 %v4626, %v4625
    %v4733 = vpack.c.b16 %v4628, %v4627
    %v4734 = vpack.c.b16 %v4630, %v4629
    %v4735 = vpack.c.b16 %v4632, %v4631
    %v4736 = vpack.c.b16 %v4634, %v4633
    %v4737 = vpack.c.b16 %v4636, %v4635
    %v4738 = vpack.c.b16 %v4638, %v4637
    %v4739 = vpack.c.b16 %v4640, %v4639
    %v4740 = vpack.c.b16 %v4642, %v4641
    %v4741 = vpack.c.b16 %v4644, %v4643
    %v4742 = vpack.c.b16 %v4646, %v4645
    %v4743 = vpack.c.b16 %v4648, %v4647
    %v4744 = vpack.c.b16 %v4650, %v4649
    %v4745 = vpack.c.b16 %v4652, %v4651
    %v4746 = vpack.c.b16 %v4654, %v4653
    %v4747 = vpack.c.b16 %v4656, %v4655
    %v4748 = vpack.c.b16 %v4658, %v4657
    %v4749 = vpack.c.b16 %v4660, %v4659
    %v4750 = vpack.c.b16 %v4662, %v4661
    %v4751 = vpack.c.b16 %v4664, %v4663
    %v4752 = vpack.c.b16 %v4666, %v4665
    %v4753 = vpack.c.b16 %v4668, %v4667
    %v4754 = vpack.c.b16 %v4670, %v4669
    %v4755 = vpack.c.b16 %v4672, %v4671
    %v4756 = vpack.c.b16 %v4674, %v4673
    %v4757 = vpack.c.b16 %v4676, %v4675
    %v4758 = vpack.c.b16 %v4678, %v4677
    %v4759 = vpack.c.b16 %v4680, %v4679
    %v4760 = vpack.c.b16 %v4682, %v4681
    %v4761 = vpack.c.b16 %v4684, %v4683
    %v4762 = vpack.c.b16 %v4686, %v4685
    %v4763 = vpack.c.b16 %v4688, %v4687
    %v4764 = vpack.c.b16 %v4690, %v4689
    %v4765 = vpack.c.b16 %v4692, %v4691
    %v4766 = vpack.c.b16 %v4694, %v4693
    %v4767 = vpack.c.b16 %v4696, %v4695
    %v4768 = vpack.c.b16 %v4698, %v4697
    %v4769 = vpack.c.b16 %v4700, %v4699
    %v4770 = vpack.c.b16 %v4702, %v4701
    %v4771 = vpack.c.b16 %v4704, %v4703
    %v4772 = vpack.c.b16 %v4706, %v4705
    %v4773 = vpack.c.b16 %v4708, %v4707
    %v4774 = vpack.c.b16 %v4710, %v4709
    %4839 = vmatprep.subr.bf16.mxu0 0
    %4840 = vmatpush1.bf16.msra.mxu0 %v4718
    %4841 = vmatprep.subr.bf16.mxu0 0
    %4842 = vmatpush1.bf16.msra.mxu0 %v4717
    %4843 = vmatprep.subr.bf16.mxu0 0
    %4844 = vmatpush1.bf16.msra.mxu0 %v4716
    %4845 = vmatprep.subr.bf16.mxu0 0
    %4846 = vmatpush1.bf16.msra.mxu0 %v4715
    %4847 = vmatprep.subr.bf16.mxu0 0
    %4848 = vmatpush1.bf16.msra.mxu0 %v4714
    %4849 = vmatprep.subr.bf16.mxu0 0
    %4850 = vmatpush1.bf16.msra.mxu0 %v4713
    %4851 = vmatprep.subr.bf16.mxu0 0
    %4852 = vmatpush1.bf16.msra.mxu0 %v4712
    %4853 = vmatprep.subr.bf16.mxu0 0
    %4854 = vmatpush1.bf16.msra.mxu0 %v4711
    %4855 = vmatprep.subr.bf16.mxu0 0
    %4856 = vmatpush2.bf16.msra.mxu0 %v4726
    %4857 = vmatprep.subr.bf16.mxu0 0
    %4858 = vmatpush2.bf16.msra.mxu0 %v4725
    %4859 = vmatprep.subr.bf16.mxu0 0
    %4860 = vmatpush2.bf16.msra.mxu0 %v4724
    %4861 = vmatprep.subr.bf16.mxu0 0
    %4862 = vmatpush2.bf16.msra.mxu0 %v4723
    %4863 = vmatprep.subr.bf16.mxu0 0
    %4864 = vmatpush2.bf16.msra.mxu0 %v4722
    %4865 = vmatprep.subr.bf16.mxu0 0
    %4866 = vmatpush2.bf16.msra.mxu0 %v4721
    %4867 = vmatprep.subr.bf16.mxu0 0
    %4868 = vmatpush2.bf16.msra.mxu0 %v4720
    %4869 = vmatprep.subr.bf16.mxu0 0
    %4870 = vmatpush2.bf16.msra.mxu0 %v4719
    %4871 = vmatprep.mubr.bf16.mxu0 %v4441
    %4872 = vmatmul.mubr.bf16.gmra.mxu0 %v4440
    %v4873 = vpop.f32.mrf.mxu0
    %v4874 = vadd.f32 %v4453, %v4873
    %v4875 = vpop.f32.mrf.mxu0
    %v4876 = vpop.f32.mrf.mxu0
    %v4877 = vpop.f32.mrf.mxu0
    %4878 = vdwg.mxu0
    %4879 = vmatprep.subr.bf16.mxu0 0
    %4880 = vmatpush1.bf16.msra.mxu0 %v4734
    %4881 = vmatprep.subr.bf16.mxu0 0
    %4882 = vmatpush1.bf16.msra.mxu0 %v4733
    %4883 = vmatprep.subr.bf16.mxu0 0
    %4884 = vmatpush1.bf16.msra.mxu0 %v4732
    %4885 = vmatprep.subr.bf16.mxu0 0
    %4886 = vmatpush1.bf16.msra.mxu0 %v4731
    %4887 = vmatprep.subr.bf16.mxu0 0
    %4888 = vmatpush1.bf16.msra.mxu0 %v4730
    %4889 = vmatprep.subr.bf16.mxu0 0
    %4890 = vmatpush1.bf16.msra.mxu0 %v4729
    %4891 = vmatprep.subr.bf16.mxu0 0
    %4892 = vmatpush1.bf16.msra.mxu0 %v4728
    %4893 = vmatprep.subr.bf16.mxu0 0
    %4894 = vmatpush1.bf16.msra.mxu0 %v4727
    %4895 = vmatprep.subr.bf16.mxu0 0
    %4896 = vmatpush2.bf16.msra.mxu0 %v4742
    %4897 = vmatprep.subr.bf16.mxu0 0
    %4898 = vmatpush2.bf16.msra.mxu0 %v4741
    %4899 = vmatprep.subr.bf16.mxu0 0
    %4900 = vmatpush2.bf16.msra.mxu0 %v4740
    %4901 = vmatprep.subr.bf16.mxu0 0
    %4902 = vmatpush2.bf16.msra.mxu0 %v4739
    %4903 = vmatprep.subr.bf16.mxu0 0
    %4904 = vmatpush2.bf16.msra.mxu0 %v4738
    %4905 = vmatprep.subr.bf16.mxu0 0
    %4906 = vmatpush2.bf16.msra.mxu0 %v4737
    %4907 = vmatprep.subr.bf16.mxu0 0
    %4908 = vmatpush2.bf16.msra.mxu0 %v4736
    %4909 = vmatprep.subr.bf16.mxu0 0
    %4910 = vmatpush2.bf16.msra.mxu0 %v4735
    %4911 = vmatprep.mubr.bf16.mxu0 %v4443
    %4912 = vmatmul.mubr.bf16.gmra.mxu0 %v4442
    %v4913 = vpop.f32.mrf.mxu0
    %v4914 = vadd.f32 %v4874, %v4913
    %v4915 = vpop.f32.mrf.mxu0
    %v4916 = vpop.f32.mrf.mxu0
    %v4917 = vpop.f32.mrf.mxu0
    %4918 = vdwg.mxu0
    %4919 = vmatprep.subr.bf16.mxu0 0
    %4920 = vmatpush1.bf16.msra.mxu0 %v4750
    %4921 = vmatprep.subr.bf16.mxu0 0
    %4922 = vmatpush1.bf16.msra.mxu0 %v4749
    %4923 = vmatprep.subr.bf16.mxu0 0
    %4924 = vmatpush1.bf16.msra.mxu0 %v4748
    %4925 = vmatprep.subr.bf16.mxu0 0
    %4926 = vmatpush1.bf16.msra.mxu0 %v4747
    %4927 = vmatprep.subr.bf16.mxu0 0
    %4928 = vmatpush1.bf16.msra.mxu0 %v4746
    %4929 = vmatprep.subr.bf16.mxu0 0
    %4930 = vmatpush1.bf16.msra.mxu0 %v4745
    %4931 = vmatprep.subr.bf16.mxu0 0
    %4932 = vmatpush1.bf16.msra.mxu0 %v4744
    %4933 = vmatprep.subr.bf16.mxu0 0
    %4934 = vmatpush1.bf16.msra.mxu0 %v4743
    %4935 = vmatprep.subr.bf16.mxu0 0
    %4936 = vmatpush2.bf16.msra.mxu0 %v4758
    %4937 = vmatprep.subr.bf16.mxu0 0
    %4938 = vmatpush2.bf16.msra.mxu0 %v4757
    %4939 = vmatprep.subr.bf16.mxu0 0
    %4940 = vmatpush2.bf16.msra.mxu0 %v4756
    %4941 = vmatprep.subr.bf16.mxu0 0
    %4942 = vmatpush2.bf16.msra.mxu0 %v4755
    %4943 = vmatprep.subr.bf16.mxu0 0
    %4944 = vmatpush2.bf16.msra.mxu0 %v4754
    %4945 = vmatprep.subr.bf16.mxu0 0
    %4946 = vmatpush2.bf16.msra.mxu0 %v4753
    %4947 = vmatprep.subr.bf16.mxu0 0
    %4948 = vmatpush2.bf16.msra.mxu0 %v4752
    %4949 = vmatprep.subr.bf16.mxu0 0
    %4950 = vmatpush2.bf16.msra.mxu0 %v4751
    %4951 = vmatprep.mubr.bf16.mxu0 %v4445
    %4952 = vmatmul.mubr.bf16.gmra.mxu0 %v4444
    %v4953 = vpop.f32.mrf.mxu0
    %v4954 = vadd.f32 %v4914, %v4953
    %v4955 = vpop.f32.mrf.mxu0
    %v4956 = vpop.f32.mrf.mxu0
    %v4957 = vpop.f32.mrf.mxu0
    %4958 = vdwg.mxu0
    %4959 = vmatprep.subr.bf16.mxu0 0
    %4960 = vmatpush1.bf16.msra.mxu0 %v4766
    %4961 = vmatprep.subr.bf16.mxu0 0
    %4962 = vmatpush1.bf16.msra.mxu0 %v4765
    %4963 = vmatprep.subr.bf16.mxu0 0
    %4964 = vmatpush1.bf16.msra.mxu0 %v4764
    %4965 = vmatprep.subr.bf16.mxu0 0
    %4966 = vmatpush1.bf16.msra.mxu0 %v4763
    %4967 = vmatprep.subr.bf16.mxu0 0
    %4968 = vmatpush1.bf16.msra.mxu0 %v4762
    %4969 = vmatprep.subr.bf16.mxu0 0
    %4970 = vmatpush1.bf16.msra.mxu0 %v4761
    %4971 = vmatprep.subr.bf16.mxu0 0
    %4972 = vmatpush1.bf16.msra.mxu0 %v4760
    %4973 = vmatprep.subr.bf16.mxu0 0
    %4974 = vmatpush1.bf16.msra.mxu0 %v4759
    %4975 = vmatprep.subr.bf16.mxu0 0
    %4976 = vmatpush2.bf16.msra.mxu0 %v4774
    %4977 = vmatprep.subr.bf16.mxu0 0
    %4978 = vmatpush2.bf16.msra.mxu0 %v4773
    %4979 = vmatprep.subr.bf16.mxu0 0
    %4980 = vmatpush2.bf16.msra.mxu0 %v4772
    %4981 = vmatprep.subr.bf16.mxu0 0
    %4982 = vmatpush2.bf16.msra.mxu0 %v4771
    %4983 = vmatprep.subr.bf16.mxu0 0
    %4984 = vmatpush2.bf16.msra.mxu0 %v4770
    %4985 = vmatprep.subr.bf16.mxu0 0
    %4986 = vmatpush2.bf16.msra.mxu0 %v4769
    %4987 = vmatprep.subr.bf16.mxu0 0
    %4988 = vmatpush2.bf16.msra.mxu0 %v4768
    %4989 = vmatprep.subr.bf16.mxu0 0
    %4990 = vmatpush2.bf16.msra.mxu0 %v4767
    %4991 = vmatprep.mubr.bf16.mxu0 %v4447
    %4992 = vmatmul.mubr.bf16.gmra.mxu0 %v4446
    %v4993 = vpop.f32.mrf.mxu0
    %v4994 = vadd.f32 %v4954, %v4993
    %v4995 = vpop.f32.mrf.mxu0
    %v4996 = vpop.f32.mrf.mxu0
    %v4997 = vpop.f32.mrf.mxu0
    %4998 = vdwg.mxu0
    %4999 = vst [vmem:[#allocation2] sm:$0x3] %v4994
    // Predicated region
    $region38: #{forward.29} parent=1 // pred_check
      _
    $region39: #{forward.29} parent=1 // pred_check_branch
      %5001 = sbr.rel (0) target = $region41
    $region40: #{forward.29} parent=1 // pred_region
      %s5003 = ssub.s32 32, 32
      %5004 = vsyncadd [#allocation3], %s5003
      %s5006 = sshll.u32 [#allocation2], 4
      %s5007 = int_to_ptr.vmem [resolvable:$true] %s5006
      %5009 = dma.vmem_to_hbm [thread:$0]  %s5007, 32, %s9, [#allocation3]
    $region41: #{forward.29} parent=1 // pred_fallthru
      _
    // Predicated region
    $region42: #{forward.29} parent=1 // pred_check
      _
    $region43: #{forward.29} parent=1 // pred_check_branch
      %5011 = sbr.rel (0) target = $region45
    $region44: #{forward.29} parent=1 // pred_region
      %5012 = dma.done [#allocation3], 32
    $region45: #{forward.29} parent=1 // pred_fallthru
      _
    %5013 = vsyncpa [#allocation3], 1

</llo_original>
